<compile_context>
chip_gen: v6e
topology: v6e:2x2x1
jax: 0.10.0
libtpu: 0.0.40
codegen_flags: <defaults>
</compile_context>

<pallas_src>
import jax
import jax.numpy as jnp
import numpy as np
from jax.experimental import pallas as pl
from jax.experimental.pallas import tpu as pltpu

LANE = 128


def _round_up(x, m):
    return (x + m - 1) // m * m


# ---------------------------------------------------------------------------
# Per-generation VMEM budget and strip-height selection
# ---------------------------------------------------------------------------

def _vmem_limit_bytes():
    """VMEM limit derived from the actual chip (v7x 64 MiB vs v5e/v6e 128 MiB)."""
    cap = None
    try:
        cap = int(pltpu.get_tpu_info().vmem_capacity_bytes)
    except Exception:
        cap = None
    if not cap:
        cap = 64 * 1024 * 1024          # conservative fallback (v7x-sized)
    return int(min(cap - 16 * 1024 * 1024, 100 * 1024 * 1024))


def _estimate_strip_vmem(th, w, w2, cinp, cp):
    """Rough upper bound of VMEM used per grid step (double-buffered I/O +
    flat-summed in-kernel temporaries)."""
    th2 = th // 2
    bf, f32 = 2, 4
    io = 2 * ((th2 + 2) * w * cinp * bf          # from_up window
              + (th + 4) * w2 * cp * bf          # skip window
              + th * w2 * cp * bf)               # output strip
    wts = 2 * (2 * cinp * 2 * cp + 27 * cp * cp) * bf
    tmp = ((th2 + 2) * w * cinp * bf             # from_up row concat
           + 2 * (th2 + 2) * w2 * cp * f32       # f32 parity matmul results
           + 2 * (th + 4) * w2 * cp * bf         # y_ext, d_ext
           + 2 * (th + 4) * w2 * cp * bf * 2     # width-shifted copies (worst conv)
           + 2 * (th + 2) * w2 * cp * f32        # conv1 accumulators (y + skip)
           + (th + 2) * w2 * cp * (f32 + bf)     # conv1 output f32 + bf16
           + th * w2 * cp * f32)                 # conv2 accumulator
    return io + wts + tmp


def _pick_tile_h(h2, w, w2, cinp, cp, budget):
    """Largest even strip height that divides 2H and fits the VMEM budget."""
    cands = [t for t in (64, 32, 16, 8, 4, 2) if h2 % t == 0]
    for th in cands:
        if _estimate_strip_vmem(th, w, w2, cinp, cp) <= budget:
            return th
    return cands[-1] if cands else 2


# ---------------------------------------------------------------------------
# In-kernel 3x3 "SAME" conv accumulation: 9 shifted K=C matmuls (no im2col
# lane-concat).  Rows of x_ext lying outside the image must already be zero.
# ---------------------------------------------------------------------------

def _conv3x3_acc(x_ext, w_ref, rows, w2, cp_out):
    """x_ext: (rows+2, w2, cin) bf16.  w_ref: (9, cin, cp_out) bf16, taps
    ordered (dh, dw).  Returns f32 accumulator of shape (rows*w2, cp_out)."""
    cin = x_ext.shape[-1]
    zero_col = jnp.zeros((rows + 2, 1, cin), x_ext.dtype)
    shifted = (
        jnp.concatenate([zero_col, x_ext[:, :w2 - 1, :]], axis=1),   # column q-1
        x_ext,                                                        # column q
        jnp.concatenate([x_ext[:, 1:, :], zero_col], axis=1),         # column q+1
    )
    acc = jnp.zeros((rows * w2, cp_out), jnp.float32)
    for dh in range(3):
        for dw in range(3):
            patch = shifted[dw][dh:dh + rows].reshape(rows * w2, cin)
            acc = acc + jnp.dot(patch, w_ref[dh * 3 + dw],
                                preferred_element_type=jnp.float32)
    return acc


# ---------------------------------------------------------------------------
# Fused kernel: ConvTranspose2d(2,2,s2) + channel-concat + conv3x3+ReLU (x2)
# ---------------------------------------------------------------------------

def _make_fused_kernel(th, w, w2, cinp, cp):
    th2 = th // 2

    def kernel(xu_t_ref, xu_m_ref, xu_b_ref, d_t_ref, d_m_ref, d_b_ref,
               wup_ref, bup_ref, w1y_ref, w1d_ref, b1_ref, w2_ref, b2_ref,
               o_ref):
        r = pl.program_id(1)
        is_top = r == 0
        is_bot = r == pl.num_programs(1) - 1

        # --- transposed conv 2x2/s2 on from_up rows r*th2-1 .. r*th2+th2 ----
        xu = jnp.concatenate([xu_t_ref[0], xu_m_ref[0], xu_b_ref[0]], axis=0)
        xu2 = xu.reshape((th2 + 2) * w, cinp)
        ys = []
        for kh in range(2):                      # one matmul per output-row parity
            yk = jnp.dot(xu2, wup_ref[kh], preferred_element_type=jnp.float32)
            yk = (yk + bup_ref[...]).astype(jnp.bfloat16)   # bf16 before interleave
            ys.append(yk.reshape(th2 + 2, w2, cp))          # lanes (kw, co) -> width
        # row-parity interleave: upsampled rows r*th-2 .. r*th+th+1 (th+4 rows)
        z = jnp.stack(ys, axis=1).reshape(th + 4, w2, cp)

        # zero rows outside the image (SAME padding + clamped halos) via where
        zeros2 = jnp.zeros((2, w2, cp), jnp.bfloat16)
        y_ext = jnp.concatenate(
            [jnp.where(is_top, zeros2, z[:2]),
             z[2:th + 2],
             jnp.where(is_bot, zeros2, z[th + 2:])], axis=0)
        d_ext = jnp.concatenate(
            [jnp.where(is_top, zeros2, d_t_ref[0]),
             d_m_ref[0],
             jnp.where(is_bot, zeros2, d_b_ref[0])], axis=0)

        # --- conv1 3x3 + bias + ReLU on rows r*th-1 .. r*th+th (th+2 rows) ---
        # channel-concat is implicit: separate matmuls for the y / skip halves
        acc1 = (_conv3x3_acc(y_ext, w1y_ref, th + 2, w2, cp)
                + _conv3x3_acc(d_ext, w1d_ref, th + 2, w2, cp))
        h1 = jnp.maximum(acc1 + b1_ref[...], 0.0).reshape(th + 2, w2, cp)

        # conv2's halo rows of h1 that lie outside the image must be zero
        zeros1 = jnp.zeros((1, w2, cp), jnp.float32)
        h1 = jnp.concatenate(
            [jnp.where(is_top, zeros1, h1[:1]),
             h1[1:th + 1],
             jnp.where(is_bot, zeros1, h1[th + 1:])], axis=0).astype(jnp.bfloat16)

        # --- conv2 3x3 + bias + ReLU on rows r*th .. r*th+th-1 ---------------
        acc2 = _conv3x3_acc(h1, w2_ref, th, w2, cp)
        out = jnp.maximum(acc2 + b2_ref[...], 0.0)
        o_ref[0] = out.reshape(th, w2, cp).astype(jnp.bfloat16)

    return kernel


def _fused_upconv_block(xu, xd, prep, *, th, vmem_limit):
    n, h, w, cinp = xu.shape
    _, h2, w2, cp = xd.shape
    th2 = th // 2
    nr = h2 // th
    assert h2 % th == 0 and th % 2 == 0

    # Advisory cost estimate (flops = sum of 2*M*K*N over all strip matmuls).
    flops = n * nr * (
        2 * (2 * (th2 + 2) * w * cinp * (2 * cp))        # upconv
        + 18 * (2 * (th + 2) * w2 * cp * cp)             # conv1 (y + skip halves)
        + 9 * (2 * th * w2 * cp * cp))                   # conv2
    bytes_accessed = (n * (h * w * cinp + 2 * h2 * w2 * cp) * 2
                      + (2 * cinp * 2 * cp + 27 * cp * cp) * 2)
    cost = pl.CostEstimate(flops=int(flops), transcendentals=0,
                           bytes_accessed=int(bytes_accessed))

    kern = _make_fused_kernel(th, w, w2, cinp, cp)
    return pl.pallas_call(
        kern,
        grid=(n, nr),
        in_specs=[
            # from_up: th2-row strip + clamped 1-row halos (zeroed in-kernel)
            pl.BlockSpec((1, 1, w, cinp),
                         lambda bi, r: (bi, jnp.maximum(r * th2 - 1, 0), 0, 0)),
            pl.BlockSpec((1, th2, w, cinp), lambda bi, r: (bi, r, 0, 0)),
            pl.BlockSpec((1, 1, w, cinp),
                         lambda bi, r: (bi, jnp.minimum(r * th2 + th2, h - 1), 0, 0)),
            # from_down skip: th-row strip + clamped 2-row halos (zeroed in-kernel)
            pl.BlockSpec((1, 2, w2, cp),
                         lambda bi, r: (bi, jnp.maximum(r * th2 - 1, 0), 0, 0)),
            pl.BlockSpec((1, th, w2, cp), lambda bi, r: (bi, r, 0, 0)),
            pl.BlockSpec((1, 2, w2, cp),
                         lambda bi, r: (bi, jnp.minimum(r * th2 + th2, h - 1), 0, 0)),
            # weights / biases (constant index, prepared once outside the hot path)
            pl.BlockSpec((2, cinp, 2 * cp), lambda bi, r: (0, 0, 0)),
            pl.BlockSpec((1, 2 * cp), lambda bi, r: (0, 0)),
            pl.BlockSpec((9, cp, cp), lambda bi, r: (0, 0, 0)),
            pl.BlockSpec((9, cp, cp), lambda bi, r: (0, 0, 0)),
            pl.BlockSpec((1, cp), lambda bi, r: (0, 0)),
            pl.BlockSpec((9, cp, cp), lambda bi, r: (0, 0, 0)),
            pl.BlockSpec((1, cp), lambda bi, r: (0, 0)),
        ],
        out_specs=pl.BlockSpec((1, th, w2, cp), lambda bi, r: (bi, r, 0, 0)),
        out_shape=jax.ShapeDtypeStruct((n, h2, w2, cp), jnp.bfloat16),
        compiler_params=pltpu.CompilerParams(
            dimension_semantics=("parallel", "parallel"),
            vmem_limit_bytes=int(vmem_limit)),
        cost_estimate=cost,
    )(xu, xu, xu, xd, xd, xd,
      prep["wup"], prep["bup"], prep["w1y"], prep["w1d"], prep["b1"],
      prep["w2"], prep["b2"])


# ---------------------------------------------------------------------------
# Parameter preparation (done once, outside the hot path)
# ---------------------------------------------------------------------------

def prepare_params(params, in_channels, out_channels):
    cinp = _round_up(in_channels, LANE)
    cp = _round_up(out_channels, LANE)
    pad_c = (0, cp - out_channels)

    # ConvTranspose2d weight (Cin, Cout, kh, kw) -> (kh, Cinp, 2*Cp), lanes (kw, co)
    wup = jnp.transpose(params["up_w"], (2, 3, 0, 1))            # (kh, kw, Cin, Cout)
    wup = jnp.pad(wup, ((0, 0), (0, 0),
                        (0, cinp - in_channels), pad_c))
    wup = jnp.transpose(wup, (0, 2, 1, 3)).reshape(2, cinp, 2 * cp)
    bup = jnp.pad(params["up_b"], pad_c)
    bup = jnp.concatenate([bup, bup]).reshape(1, 2 * cp)

    # conv1 (HWIO 3,3,2*Cout,Cout): split y-half / skip-half, pad, taps -> (9, Cp, Cp)
    w1 = params["w1"]
    w1y = jnp.pad(w1[:, :, :out_channels, :],
                  ((0, 0), (0, 0), pad_c, pad_c)).reshape(9, cp, cp)
    w1d = jnp.pad(w1[:, :, out_channels:, :],
                  ((0, 0), (0, 0), pad_c, pad_c)).reshape(9, cp, cp)
    b1 = jnp.pad(params["b1"], pad_c).reshape(1, cp)

    # conv2 (HWIO 3,3,Cout,Cout) -> (9, Cp, Cp)
    w2p = jnp.pad(params["w2"], ((0, 0), (0, 0), pad_c, pad_c)).reshape(9, cp, cp)
    b2 = jnp.pad(params["b2"], pad_c).reshape(1, cp)

    return {
        "wup": wup.astype(jnp.bfloat16), "bup": bup.astype(jnp.float32),
        "w1y": w1y.astype(jnp.bfloat16), "w1d": w1d.astype(jnp.bfloat16),
        "b1": b1.astype(jnp.float32),
        "w2": w2p.astype(jnp.bfloat16), "b2": b2.astype(jnp.float32),
    }


# ---------------------------------------------------------------------------
# Forward
# ---------------------------------------------------------------------------

def up_conv_forward(from_down, from_up, prep):
    """from_down: (N, Cout, 2H, 2W), from_up: (N, Cin, H, W); returns NCHW f32."""
    n, cin, h, w = from_up.shape
    cout = from_down.shape[1]
    h2, w2 = 2 * h, 2 * w
    cinp = prep["wup"].shape[1]
    cp = prep["b1"].shape[1]

    # One-time layout boundary: NCHW -> NHWC, channel pad to the 128-lane tile, bf16.
    xu = jnp.pad(jnp.transpose(from_up, (0, 2, 3, 1)).astype(jnp.bfloat16),
                 ((0, 0), (0, 0), (0, 0), (0, cinp - cin)))
    xd = jnp.pad(jnp.transpose(from_down, (0, 2, 3, 1)).astype(jnp.bfloat16),
                 ((0, 0), (0, 0), (0, 0), (0, cp - cout)))

    vmem_limit = _vmem_limit_bytes()
    th = _pick_tile_h(h2, w, w2, cinp, cp, int(vmem_limit * 0.6))

    out = _fused_upconv_block(xu, xd, prep, th=th, vmem_limit=vmem_limit)

    # TODO(synk): keep the NHWC / padded-channel layout across decoder blocks to
    # drop this boundary slice + transpose from the hot path.
    return jnp.transpose(out[:, :, :, :cout], (0, 3, 1, 2)).astype(jnp.float32)


# ---------------------------------------------------------------------------
# Pure-JAX reference (f32) for the correctness check
# ---------------------------------------------------------------------------

def reference_forward(from_down, from_up, params):
    up_nhwc = jnp.transpose(from_up, (0, 2, 3, 1))
    down_nhwc = jnp.transpose(from_down, (0, 2, 3, 1))
    n, h, w, _ = up_nhwc.shape
    cout = params["up_w"].shape[1]

    y = jnp.einsum("nijc,cohw->nihjwo", up_nhwc, params["up_w"])
    y = y.reshape(n, 2 * h, 2 * w, cout) + params["up_b"]

    x = jnp.concatenate([y, down_nhwc], axis=-1)
    dn = ("NHWC", "HWIO", "NHWC")
    x = jax.nn.relu(
        jax.lax.conv_general_dilated(x, params["w1"], (1, 1), "SAME",
                                     dimension_numbers=dn) + params["b1"])
    x = jax.nn.relu(
        jax.lax.conv_general_dilated(x, params["w2"], (1, 1), "SAME",
                                     dimension_numbers=dn) + params["b2"])
    return jnp.transpose(x, (0, 3, 1, 2))


# ---------------------------------------------------------------------------
# Main
# ---------------------------------------------------------------------------

if __name__ == "__main__":
    N = 2
    in_channels = 8     # decoder-path channels entering the block
    out_channels = 4
    H = W = 8           # from_up spatial; from_down is 2H x 2W

    key = jax.random.PRNGKey(0)
    k = jax.random.split(key, 8)

    from_up = jax.random.normal(k[0], (N, in_channels, H, W), jnp.float32)
    from_down = jax.random.normal(k[1], (N, out_channels, 2 * H, 2 * W), jnp.float32)

    params = {
        # ConvTranspose2d(in, out, 2, 2): weight (Cin, Cout, 2, 2), bias (Cout,)
        "up_w": jax.random.normal(k[2], (in_channels, out_channels, 2, 2), jnp.float32) * 0.1,
        "up_b": jax.random.normal(k[3], (out_channels,), jnp.float32) * 0.1,
        # conv1: Conv2d(2*out, out, 3, p=1), stored HWIO
        "w1": jax.random.normal(k[4], (3, 3, 2 * out_channels, out_channels), jnp.float32) * 0.1,
        "b1": jax.random.normal(k[5], (out_channels,), jnp.float32) * 0.1,
        # conv2: Conv2d(out, out, 3, p=1), stored HWIO
        "w2": jax.random.normal(k[6], (3, 3, out_channels, out_channels), jnp.float32) * 0.1,
        "b2": jax.random.normal(k[7], (out_channels,), jnp.float32) * 0.1,
    }

    prep = prepare_params(params, in_channels, out_channels)   # hoisted, one-time
    fwd = jax.jit(up_conv_forward)

    out = jax.block_until_ready(fwd(from_down, from_up, prep))

    ref = jax.block_until_ready(reference_forward(from_down, from_up, params))
    np.testing.assert_allclose(np.asarray(out), np.asarray(ref), rtol=2e-2, atol=2e-2)
    assert out.shape == (N, out_channels, 2 * H, 2 * W)

    print("KERNEL_OK")
</pallas_src>

<mosaic_0001>
module attributes {stable_mosaic.version = 11 : i64} {
  func.func @kernel(%arg0: i32, %arg1: i32, %arg2: memref<1x1x8x128xbf16, #tpu.memory_space<vmem>>, %arg3: memref<1x8x8x128xbf16, #tpu.memory_space<vmem>>, %arg4: memref<1x1x8x128xbf16, #tpu.memory_space<vmem>>, %arg5: memref<1x2x16x128xbf16, #tpu.memory_space<vmem>>, %arg6: memref<1x16x16x128xbf16, #tpu.memory_space<vmem>>, %arg7: memref<1x2x16x128xbf16, #tpu.memory_space<vmem>>, %arg8: memref<2x128x256xbf16, #tpu.memory_space<vmem>>, %arg9: memref<1x256xf32, #tpu.memory_space<vmem>>, %arg10: memref<9x128x128xbf16, #tpu.memory_space<vmem>>, %arg11: memref<9x128x128xbf16, #tpu.memory_space<vmem>>, %arg12: memref<1x128xf32, #tpu.memory_space<vmem>>, %arg13: memref<9x128x128xbf16, #tpu.memory_space<vmem>>, %arg14: memref<1x128xf32, #tpu.memory_space<vmem>>, %arg15: memref<1x16x16x128xbf16, #tpu.memory_space<vmem>>) attributes {dimension_semantics = [#tpu.dimension_semantics<parallel>, #tpu.dimension_semantics<parallel>], iteration_bounds = array<i64: 2, 1>, scalar_prefetch = 0 : i64, scratch_operands = 0 : i64, tpu.core_type = #tpu.core_type<tc>, window_params = [{transform_indices = @transform_0, window_bounds = array<i64: 1, 1, 8, 128>}, {transform_indices = @transform_1, window_bounds = array<i64: 1, 8, 8, 128>}, {transform_indices = @transform_2, window_bounds = array<i64: 1, 1, 8, 128>}, {transform_indices = @transform_3, window_bounds = array<i64: 1, 2, 16, 128>}, {transform_indices = @transform_4, window_bounds = array<i64: 1, 16, 16, 128>}, {transform_indices = @transform_5, window_bounds = array<i64: 1, 2, 16, 128>}, {pipeline_mode = #tpu.pipeline_mode<synchronous>, transform_indices = @transform_6, window_bounds = array<i64: 2, 128, 256>}, {pipeline_mode = #tpu.pipeline_mode<synchronous>, transform_indices = @transform_7, window_bounds = array<i64: 1, 256>}, {pipeline_mode = #tpu.pipeline_mode<synchronous>, transform_indices = @transform_8, window_bounds = array<i64: 9, 128, 128>}, {pipeline_mode = #tpu.pipeline_mode<synchronous>, transform_indices = @transform_9, window_bounds = array<i64: 9, 128, 128>}, {pipeline_mode = #tpu.pipeline_mode<synchronous>, transform_indices = @transform_10, window_bounds = array<i64: 1, 128>}, {pipeline_mode = #tpu.pipeline_mode<synchronous>, transform_indices = @transform_11, window_bounds = array<i64: 9, 128, 128>}, {pipeline_mode = #tpu.pipeline_mode<synchronous>, transform_indices = @transform_12, window_bounds = array<i64: 1, 128>}, {transform_indices = @transform_13, window_bounds = array<i64: 1, 16, 16, 128>}]} {
    %c0_i32 = arith.constant 0 : i32
    %0 = arith.cmpi eq, %arg1, %c0_i32 : i32
    %c0_i32_0 = arith.constant 0 : i32
    %1 = arith.cmpi eq, %arg1, %c0_i32_0 : i32
    %c0 = arith.constant 0 : index
    %c0_1 = arith.constant 0 : index
    %c0_2 = arith.constant 0 : index
    %c0_3 = arith.constant 0 : index
    %2 = vector.load %arg2[%c0, %c0_1, %c0_2, %c0_3] : memref<1x1x8x128xbf16, #tpu.memory_space<vmem>>, vector<1x1x8x128xbf16>
    %3 = vector.shape_cast %2 : vector<1x1x8x128xbf16> to vector<1x8x128xbf16>
    %c0_4 = arith.constant 0 : index
    %c0_5 = arith.constant 0 : index
    %c0_6 = arith.constant 0 : index
    %c0_7 = arith.constant 0 : index
    %4 = vector.load %arg3[%c0_4, %c0_5, %c0_6, %c0_7] : memref<1x8x8x128xbf16, #tpu.memory_space<vmem>>, vector<1x8x8x128xbf16>
    %5 = vector.shape_cast %4 : vector<1x8x8x128xbf16> to vector<8x8x128xbf16>
    %c0_8 = arith.constant 0 : index
    %c0_9 = arith.constant 0 : index
    %c0_10 = arith.constant 0 : index
    %c0_11 = arith.constant 0 : index
    %6 = vector.load %arg4[%c0_8, %c0_9, %c0_10, %c0_11] : memref<1x1x8x128xbf16, #tpu.memory_space<vmem>>, vector<1x1x8x128xbf16>
    %7 = vector.shape_cast %6 : vector<1x1x8x128xbf16> to vector<1x8x128xbf16>
    %8 = tpu.concatenate %3, %5, %7 in 0 : vector<1x8x128xbf16>, vector<8x8x128xbf16>, vector<1x8x128xbf16> -> vector<10x8x128xbf16>
    %9 = vector.shape_cast %8 : vector<10x8x128xbf16> to vector<80x128xbf16>
    %c0_12 = arith.constant 0 : index
    %c0_13 = arith.constant 0 : index
    %c0_14 = arith.constant 0 : index
    %10 = vector.load %arg8[%c0_12, %c0_13, %c0_14] : memref<2x128x256xbf16, #tpu.memory_space<vmem>>, vector<1x128x256xbf16>
    %11 = vector.shape_cast %10 : vector<1x128x256xbf16> to vector<128x256xbf16>
    %cst = arith.constant dense<0.000000e+00> : vector<80x256xf32>
    %12 = tpu.matmul %9, %11, %cst {dimension_numbers = #tpu.dot_dimension_numbers<[1], [0], [0], [1], [0, 0, 1, 1], [], []>} : vector<80x128xbf16>, vector<128x256xbf16>, vector<80x256xf32> -> vector<80x256xf32>
    %c0_15 = arith.constant 0 : index
    %c0_16 = arith.constant 0 : index
    %13 = vector.load %arg9[%c0_15, %c0_16] : memref<1x256xf32, #tpu.memory_space<vmem>>, vector<1x256xf32>
    %14 = vector.broadcast %13 : vector<1x256xf32> to vector<80x256xf32>
    %15 = arith.addf %12, %14 : vector<80x256xf32>
    %16 = arith.truncf %15 : vector<80x256xf32> to vector<80x256xbf16>
    %17 = vector.shape_cast %16 : vector<80x256xbf16> to vector<10x16x128xbf16>
    %c1 = arith.constant 1 : index
    %c0_17 = arith.constant 0 : index
    %c0_18 = arith.constant 0 : index
    %18 = vector.load %arg8[%c1, %c0_17, %c0_18] : memref<2x128x256xbf16, #tpu.memory_space<vmem>>, vector<1x128x256xbf16>
    %19 = vector.shape_cast %18 : vector<1x128x256xbf16> to vector<128x256xbf16>
    %cst_19 = arith.constant dense<0.000000e+00> : vector<80x256xf32>
    %20 = tpu.matmul %9, %19, %cst_19 {dimension_numbers = #tpu.dot_dimension_numbers<[1], [0], [0], [1], [0, 0, 1, 1], [], []>} : vector<80x128xbf16>, vector<128x256xbf16>, vector<80x256xf32> -> vector<80x256xf32>
    %c0_20 = arith.constant 0 : index
    %c0_21 = arith.constant 0 : index
    %21 = vector.load %arg9[%c0_20, %c0_21] : memref<1x256xf32, #tpu.memory_space<vmem>>, vector<1x256xf32>
    %22 = vector.broadcast %21 : vector<1x256xf32> to vector<80x256xf32>
    %23 = arith.addf %20, %22 : vector<80x256xf32>
    %24 = arith.truncf %23 : vector<80x256xf32> to vector<80x256xbf16>
    %25 = vector.shape_cast %24 : vector<80x256xbf16> to vector<10x16x128xbf16>
    %26 = vector.shape_cast %17 : vector<10x16x128xbf16> to vector<10x1x16x128xbf16>
    %27 = vector.shape_cast %25 : vector<10x16x128xbf16> to vector<10x1x16x128xbf16>
    %28 = tpu.concatenate %26, %27 in 1 : vector<10x1x16x128xbf16>, vector<10x1x16x128xbf16> -> vector<10x2x16x128xbf16>
    %29 = vector.shape_cast %28 : vector<10x2x16x128xbf16> to vector<20x16x128xbf16>
    %cst_22 = arith.constant 0.000000e+00 : bf16
    %30 = vector.broadcast %cst_22 : bf16 to vector<2x16x128xbf16>
    %31 = vector.extract_strided_slice %29 {offsets = [0, 0, 0], sizes = [2, 16, 128], strides = [1, 1, 1]} : vector<20x16x128xbf16> to vector<2x16x128xbf16>
    %32 = arith.select %0, %30, %31 : vector<2x16x128xbf16>
    %33 = vector.extract_strided_slice %29 {offsets = [2, 0, 0], sizes = [16, 16, 128], strides = [1, 1, 1]} : vector<20x16x128xbf16> to vector<16x16x128xbf16>
    %34 = vector.extract_strided_slice %29 {offsets = [18, 0, 0], sizes = [2, 16, 128], strides = [1, 1, 1]} : vector<20x16x128xbf16> to vector<2x16x128xbf16>
    %35 = arith.select %1, %30, %34 : vector<2x16x128xbf16>
    %36 = tpu.concatenate %32, %33, %35 in 0 : vector<2x16x128xbf16>, vector<16x16x128xbf16>, vector<2x16x128xbf16> -> vector<20x16x128xbf16>
    %c0_23 = arith.constant 0 : index
    %c0_24 = arith.constant 0 : index
    %c0_25 = arith.constant 0 : index
    %c0_26 = arith.constant 0 : index
    %37 = vector.load %arg5[%c0_23, %c0_24, %c0_25, %c0_26] : memref<1x2x16x128xbf16, #tpu.memory_space<vmem>>, vector<1x2x16x128xbf16>
    %38 = vector.shape_cast %37 : vector<1x2x16x128xbf16> to vector<2x16x128xbf16>
    %39 = arith.select %0, %30, %38 : vector<2x16x128xbf16>
    %c0_27 = arith.constant 0 : index
    %c0_28 = arith.constant 0 : index
    %c0_29 = arith.constant 0 : index
    %c0_30 = arith.constant 0 : index
    %40 = vector.load %arg6[%c0_27, %c0_28, %c0_29, %c0_30] : memref<1x16x16x128xbf16, #tpu.memory_space<vmem>>, vector<1x16x16x128xbf16>
    %41 = vector.shape_cast %40 : vector<1x16x16x128xbf16> to vector<16x16x128xbf16>
    %c0_31 = arith.constant 0 : index
    %c0_32 = arith.constant 0 : index
    %c0_33 = arith.constant 0 : index
    %c0_34 = arith.constant 0 : index
    %42 = vector.load %arg7[%c0_31, %c0_32, %c0_33, %c0_34] : memref<1x2x16x128xbf16, #tpu.memory_space<vmem>>, vector<1x2x16x128xbf16>
    %43 = vector.shape_cast %42 : vector<1x2x16x128xbf16> to vector<2x16x128xbf16>
    %44 = arith.select %1, %30, %43 : vector<2x16x128xbf16>
    %45 = tpu.concatenate %39, %41, %44 in 0 : vector<2x16x128xbf16>, vector<16x16x128xbf16>, vector<2x16x128xbf16> -> vector<20x16x128xbf16>
    %cst_35 = arith.constant 0.000000e+00 : bf16
    %46 = vector.broadcast %cst_35 : bf16 to vector<20x1x128xbf16>
    %47 = vector.extract_strided_slice %36 {offsets = [0, 0, 0], sizes = [20, 15, 128], strides = [1, 1, 1]} : vector<20x16x128xbf16> to vector<20x15x128xbf16>
    %48 = tpu.concatenate %46, %47 in 1 : vector<20x1x128xbf16>, vector<20x15x128xbf16> -> vector<20x16x128xbf16>
    %49 = vector.extract_strided_slice %36 {offsets = [0, 1, 0], sizes = [20, 15, 128], strides = [1, 1, 1]} : vector<20x16x128xbf16> to vector<20x15x128xbf16>
    %50 = tpu.concatenate %49, %46 in 1 : vector<20x15x128xbf16>, vector<20x1x128xbf16> -> vector<20x16x128xbf16>
    %cst_36 = arith.constant 0.000000e+00 : f32
    %51 = vector.broadcast %cst_36 : f32 to vector<288x128xf32>
    %52 = vector.extract_strided_slice %48 {offsets = [0, 0, 0], sizes = [18, 16, 128], strides = [1, 1, 1]} : vector<20x16x128xbf16> to vector<18x16x128xbf16>
    %53 = vector.shape_cast %52 : vector<18x16x128xbf16> to vector<288x128xbf16>
    %c0_37 = arith.constant 0 : index
    %c0_38 = arith.constant 0 : index
    %c0_39 = arith.constant 0 : index
    %54 = vector.load %arg10[%c0_37, %c0_38, %c0_39] : memref<9x128x128xbf16, #tpu.memory_space<vmem>>, vector<1x128x128xbf16>
    %55 = vector.shape_cast %54 : vector<1x128x128xbf16> to vector<128x128xbf16>
    %cst_40 = arith.constant dense<0.000000e+00> : vector<288x128xf32>
    %56 = tpu.matmul %53, %55, %cst_40 {dimension_numbers = #tpu.dot_dimension_numbers<[1], [0], [0], [1], [0, 0, 1, 1], [], []>} : vector<288x128xbf16>, vector<128x128xbf16>, vector<288x128xf32> -> vector<288x128xf32>
    %57 = arith.addf %51, %56 : vector<288x128xf32>
    %58 = vector.extract_strided_slice %36 {offsets = [0, 0, 0], sizes = [18, 16, 128], strides = [1, 1, 1]} : vector<20x16x128xbf16> to vector<18x16x128xbf16>
    %59 = vector.shape_cast %58 : vector<18x16x128xbf16> to vector<288x128xbf16>
    %c1_41 = arith.constant 1 : index
    %c0_42 = arith.constant 0 : index
    %c0_43 = arith.constant 0 : index
    %60 = vector.load %arg10[%c1_41, %c0_42, %c0_43] : memref<9x128x128xbf16, #tpu.memory_space<vmem>>, vector<1x128x128xbf16>
    %61 = vector.shape_cast %60 : vector<1x128x128xbf16> to vector<128x128xbf16>
    %cst_44 = arith.constant dense<0.000000e+00> : vector<288x128xf32>
    %62 = tpu.matmul %59, %61, %cst_44 {dimension_numbers = #tpu.dot_dimension_numbers<[1], [0], [0], [1], [0, 0, 1, 1], [], []>} : vector<288x128xbf16>, vector<128x128xbf16>, vector<288x128xf32> -> vector<288x128xf32>
    %63 = arith.addf %57, %62 : vector<288x128xf32>
    %64 = vector.extract_strided_slice %50 {offsets = [0, 0, 0], sizes = [18, 16, 128], strides = [1, 1, 1]} : vector<20x16x128xbf16> to vector<18x16x128xbf16>
    %65 = vector.shape_cast %64 : vector<18x16x128xbf16> to vector<288x128xbf16>
    %c2 = arith.constant 2 : index
    %c0_45 = arith.constant 0 : index
    %c0_46 = arith.constant 0 : index
    %66 = vector.load %arg10[%c2, %c0_45, %c0_46] : memref<9x128x128xbf16, #tpu.memory_space<vmem>>, vector<1x128x128xbf16>
    %67 = vector.shape_cast %66 : vector<1x128x128xbf16> to vector<128x128xbf16>
    %cst_47 = arith.constant dense<0.000000e+00> : vector<288x128xf32>
    %68 = tpu.matmul %65, %67, %cst_47 {dimension_numbers = #tpu.dot_dimension_numbers<[1], [0], [0], [1], [0, 0, 1, 1], [], []>} : vector<288x128xbf16>, vector<128x128xbf16>, vector<288x128xf32> -> vector<288x128xf32>
    %69 = arith.addf %63, %68 : vector<288x128xf32>
    %70 = vector.extract_strided_slice %48 {offsets = [1, 0, 0], sizes = [18, 16, 128], strides = [1, 1, 1]} : vector<20x16x128xbf16> to vector<18x16x128xbf16>
    %71 = vector.shape_cast %70 : vector<18x16x128xbf16> to vector<288x128xbf16>
    %c3 = arith.constant 3 : index
    %c0_48 = arith.constant 0 : index
    %c0_49 = arith.constant 0 : index
    %72 = vector.load %arg10[%c3, %c0_48, %c0_49] : memref<9x128x128xbf16, #tpu.memory_space<vmem>>, vector<1x128x128xbf16>
    %73 = vector.shape_cast %72 : vector<1x128x128xbf16> to vector<128x128xbf16>
    %cst_50 = arith.constant dense<0.000000e+00> : vector<288x128xf32>
    %74 = tpu.matmul %71, %73, %cst_50 {dimension_numbers = #tpu.dot_dimension_numbers<[1], [0], [0], [1], [0, 0, 1, 1], [], []>} : vector<288x128xbf16>, vector<128x128xbf16>, vector<288x128xf32> -> vector<288x128xf32>
    %75 = arith.addf %69, %74 : vector<288x128xf32>
    %76 = vector.extract_strided_slice %36 {offsets = [1, 0, 0], sizes = [18, 16, 128], strides = [1, 1, 1]} : vector<20x16x128xbf16> to vector<18x16x128xbf16>
    %77 = vector.shape_cast %76 : vector<18x16x128xbf16> to vector<288x128xbf16>
    %c4 = arith.constant 4 : index
    %c0_51 = arith.constant 0 : index
    %c0_52 = arith.constant 0 : index
    %78 = vector.load %arg10[%c4, %c0_51, %c0_52] : memref<9x128x128xbf16, #tpu.memory_space<vmem>>, vector<1x128x128xbf16>
    %79 = vector.shape_cast %78 : vector<1x128x128xbf16> to vector<128x128xbf16>
    %cst_53 = arith.constant dense<0.000000e+00> : vector<288x128xf32>
    %80 = tpu.matmul %77, %79, %cst_53 {dimension_numbers = #tpu.dot_dimension_numbers<[1], [0], [0], [1], [0, 0, 1, 1], [], []>} : vector<288x128xbf16>, vector<128x128xbf16>, vector<288x128xf32> -> vector<288x128xf32>
    %81 = arith.addf %75, %80 : vector<288x128xf32>
    %82 = vector.extract_strided_slice %50 {offsets = [1, 0, 0], sizes = [18, 16, 128], strides = [1, 1, 1]} : vector<20x16x128xbf16> to vector<18x16x128xbf16>
    %83 = vector.shape_cast %82 : vector<18x16x128xbf16> to vector<288x128xbf16>
    %c5 = arith.constant 5 : index
    %c0_54 = arith.constant 0 : index
    %c0_55 = arith.constant 0 : index
    %84 = vector.load %arg10[%c5, %c0_54, %c0_55] : memref<9x128x128xbf16, #tpu.memory_space<vmem>>, vector<1x128x128xbf16>
    %85 = vector.shape_cast %84 : vector<1x128x128xbf16> to vector<128x128xbf16>
    %cst_56 = arith.constant dense<0.000000e+00> : vector<288x128xf32>
    %86 = tpu.matmul %83, %85, %cst_56 {dimension_numbers = #tpu.dot_dimension_numbers<[1], [0], [0], [1], [0, 0, 1, 1], [], []>} : vector<288x128xbf16>, vector<128x128xbf16>, vector<288x128xf32> -> vector<288x128xf32>
    %87 = arith.addf %81, %86 : vector<288x128xf32>
    %88 = vector.extract_strided_slice %48 {offsets = [2, 0, 0], sizes = [18, 16, 128], strides = [1, 1, 1]} : vector<20x16x128xbf16> to vector<18x16x128xbf16>
    %89 = vector.shape_cast %88 : vector<18x16x128xbf16> to vector<288x128xbf16>
    %c6 = arith.constant 6 : index
    %c0_57 = arith.constant 0 : index
    %c0_58 = arith.constant 0 : index
    %90 = vector.load %arg10[%c6, %c0_57, %c0_58] : memref<9x128x128xbf16, #tpu.memory_space<vmem>>, vector<1x128x128xbf16>
    %91 = vector.shape_cast %90 : vector<1x128x128xbf16> to vector<128x128xbf16>
    %cst_59 = arith.constant dense<0.000000e+00> : vector<288x128xf32>
    %92 = tpu.matmul %89, %91, %cst_59 {dimension_numbers = #tpu.dot_dimension_numbers<[1], [0], [0], [1], [0, 0, 1, 1], [], []>} : vector<288x128xbf16>, vector<128x128xbf16>, vector<288x128xf32> -> vector<288x128xf32>
    %93 = arith.addf %87, %92 : vector<288x128xf32>
    %94 = vector.extract_strided_slice %36 {offsets = [2, 0, 0], sizes = [18, 16, 128], strides = [1, 1, 1]} : vector<20x16x128xbf16> to vector<18x16x128xbf16>
    %95 = vector.shape_cast %94 : vector<18x16x128xbf16> to vector<288x128xbf16>
    %c7 = arith.constant 7 : index
    %c0_60 = arith.constant 0 : index
    %c0_61 = arith.constant 0 : index
    %96 = vector.load %arg10[%c7, %c0_60, %c0_61] : memref<9x128x128xbf16, #tpu.memory_space<vmem>>, vector<1x128x128xbf16>
    %97 = vector.shape_cast %96 : vector<1x128x128xbf16> to vector<128x128xbf16>
    %cst_62 = arith.constant dense<0.000000e+00> : vector<288x128xf32>
    %98 = tpu.matmul %95, %97, %cst_62 {dimension_numbers = #tpu.dot_dimension_numbers<[1], [0], [0], [1], [0, 0, 1, 1], [], []>} : vector<288x128xbf16>, vector<128x128xbf16>, vector<288x128xf32> -> vector<288x128xf32>
    %99 = arith.addf %93, %98 : vector<288x128xf32>
    %100 = vector.extract_strided_slice %50 {offsets = [2, 0, 0], sizes = [18, 16, 128], strides = [1, 1, 1]} : vector<20x16x128xbf16> to vector<18x16x128xbf16>
    %101 = vector.shape_cast %100 : vector<18x16x128xbf16> to vector<288x128xbf16>
    %c8 = arith.constant 8 : index
    %c0_63 = arith.constant 0 : index
    %c0_64 = arith.constant 0 : index
    %102 = vector.load %arg10[%c8, %c0_63, %c0_64] : memref<9x128x128xbf16, #tpu.memory_space<vmem>>, vector<1x128x128xbf16>
    %103 = vector.shape_cast %102 : vector<1x128x128xbf16> to vector<128x128xbf16>
    %cst_65 = arith.constant dense<0.000000e+00> : vector<288x128xf32>
    %104 = tpu.matmul %101, %103, %cst_65 {dimension_numbers = #tpu.dot_dimension_numbers<[1], [0], [0], [1], [0, 0, 1, 1], [], []>} : vector<288x128xbf16>, vector<128x128xbf16>, vector<288x128xf32> -> vector<288x128xf32>
    %105 = arith.addf %99, %104 : vector<288x128xf32>
    %cst_66 = arith.constant 0.000000e+00 : bf16
    %106 = vector.broadcast %cst_66 : bf16 to vector<20x1x128xbf16>
    %107 = vector.extract_strided_slice %45 {offsets = [0, 0, 0], sizes = [20, 15, 128], strides = [1, 1, 1]} : vector<20x16x128xbf16> to vector<20x15x128xbf16>
    %108 = tpu.concatenate %106, %107 in 1 : vector<20x1x128xbf16>, vector<20x15x128xbf16> -> vector<20x16x128xbf16>
    %109 = vector.extract_strided_slice %45 {offsets = [0, 1, 0], sizes = [20, 15, 128], strides = [1, 1, 1]} : vector<20x16x128xbf16> to vector<20x15x128xbf16>
    %110 = tpu.concatenate %109, %106 in 1 : vector<20x15x128xbf16>, vector<20x1x128xbf16> -> vector<20x16x128xbf16>
    %cst_67 = arith.constant 0.000000e+00 : f32
    %111 = vector.broadcast %cst_67 : f32 to vector<288x128xf32>
    %112 = vector.extract_strided_slice %108 {offsets = [0, 0, 0], sizes = [18, 16, 128], strides = [1, 1, 1]} : vector<20x16x128xbf16> to vector<18x16x128xbf16>
    %113 = vector.shape_cast %112 : vector<18x16x128xbf16> to vector<288x128xbf16>
    %c0_68 = arith.constant 0 : index
    %c0_69 = arith.constant 0 : index
    %c0_70 = arith.constant 0 : index
    %114 = vector.load %arg11[%c0_68, %c0_69, %c0_70] : memref<9x128x128xbf16, #tpu.memory_space<vmem>>, vector<1x128x128xbf16>
    %115 = vector.shape_cast %114 : vector<1x128x128xbf16> to vector<128x128xbf16>
    %cst_71 = arith.constant dense<0.000000e+00> : vector<288x128xf32>
    %116 = tpu.matmul %113, %115, %cst_71 {dimension_numbers = #tpu.dot_dimension_numbers<[1], [0], [0], [1], [0, 0, 1, 1], [], []>} : vector<288x128xbf16>, vector<128x128xbf16>, vector<288x128xf32> -> vector<288x128xf32>
    %117 = arith.addf %111, %116 : vector<288x128xf32>
    %118 = vector.extract_strided_slice %45 {offsets = [0, 0, 0], sizes = [18, 16, 128], strides = [1, 1, 1]} : vector<20x16x128xbf16> to vector<18x16x128xbf16>
    %119 = vector.shape_cast %118 : vector<18x16x128xbf16> to vector<288x128xbf16>
    %c1_72 = arith.constant 1 : index
    %c0_73 = arith.constant 0 : index
    %c0_74 = arith.constant 0 : index
    %120 = vector.load %arg11[%c1_72, %c0_73, %c0_74] : memref<9x128x128xbf16, #tpu.memory_space<vmem>>, vector<1x128x128xbf16>
    %121 = vector.shape_cast %120 : vector<1x128x128xbf16> to vector<128x128xbf16>
    %cst_75 = arith.constant dense<0.000000e+00> : vector<288x128xf32>
    %122 = tpu.matmul %119, %121, %cst_75 {dimension_numbers = #tpu.dot_dimension_numbers<[1], [0], [0], [1], [0, 0, 1, 1], [], []>} : vector<288x128xbf16>, vector<128x128xbf16>, vector<288x128xf32> -> vector<288x128xf32>
    %123 = arith.addf %117, %122 : vector<288x128xf32>
    %124 = vector.extract_strided_slice %110 {offsets = [0, 0, 0], sizes = [18, 16, 128], strides = [1, 1, 1]} : vector<20x16x128xbf16> to vector<18x16x128xbf16>
    %125 = vector.shape_cast %124 : vector<18x16x128xbf16> to vector<288x128xbf16>
    %c2_76 = arith.constant 2 : index
    %c0_77 = arith.constant 0 : index
    %c0_78 = arith.constant 0 : index
    %126 = vector.load %arg11[%c2_76, %c0_77, %c0_78] : memref<9x128x128xbf16, #tpu.memory_space<vmem>>, vector<1x128x128xbf16>
    %127 = vector.shape_cast %126 : vector<1x128x128xbf16> to vector<128x128xbf16>
    %cst_79 = arith.constant dense<0.000000e+00> : vector<288x128xf32>
    %128 = tpu.matmul %125, %127, %cst_79 {dimension_numbers = #tpu.dot_dimension_numbers<[1], [0], [0], [1], [0, 0, 1, 1], [], []>} : vector<288x128xbf16>, vector<128x128xbf16>, vector<288x128xf32> -> vector<288x128xf32>
    %129 = arith.addf %123, %128 : vector<288x128xf32>
    %130 = vector.extract_strided_slice %108 {offsets = [1, 0, 0], sizes = [18, 16, 128], strides = [1, 1, 1]} : vector<20x16x128xbf16> to vector<18x16x128xbf16>
    %131 = vector.shape_cast %130 : vector<18x16x128xbf16> to vector<288x128xbf16>
    %c3_80 = arith.constant 3 : index
    %c0_81 = arith.constant 0 : index
    %c0_82 = arith.constant 0 : index
    %132 = vector.load %arg11[%c3_80, %c0_81, %c0_82] : memref<9x128x128xbf16, #tpu.memory_space<vmem>>, vector<1x128x128xbf16>
    %133 = vector.shape_cast %132 : vector<1x128x128xbf16> to vector<128x128xbf16>
    %cst_83 = arith.constant dense<0.000000e+00> : vector<288x128xf32>
    %134 = tpu.matmul %131, %133, %cst_83 {dimension_numbers = #tpu.dot_dimension_numbers<[1], [0], [0], [1], [0, 0, 1, 1], [], []>} : vector<288x128xbf16>, vector<128x128xbf16>, vector<288x128xf32> -> vector<288x128xf32>
    %135 = arith.addf %129, %134 : vector<288x128xf32>
    %136 = vector.extract_strided_slice %45 {offsets = [1, 0, 0], sizes = [18, 16, 128], strides = [1, 1, 1]} : vector<20x16x128xbf16> to vector<18x16x128xbf16>
    %137 = vector.shape_cast %136 : vector<18x16x128xbf16> to vector<288x128xbf16>
    %c4_84 = arith.constant 4 : index
    %c0_85 = arith.constant 0 : index
    %c0_86 = arith.constant 0 : index
    %138 = vector.load %arg11[%c4_84, %c0_85, %c0_86] : memref<9x128x128xbf16, #tpu.memory_space<vmem>>, vector<1x128x128xbf16>
    %139 = vector.shape_cast %138 : vector<1x128x128xbf16> to vector<128x128xbf16>
    %cst_87 = arith.constant dense<0.000000e+00> : vector<288x128xf32>
    %140 = tpu.matmul %137, %139, %cst_87 {dimension_numbers = #tpu.dot_dimension_numbers<[1], [0], [0], [1], [0, 0, 1, 1], [], []>} : vector<288x128xbf16>, vector<128x128xbf16>, vector<288x128xf32> -> vector<288x128xf32>
    %141 = arith.addf %135, %140 : vector<288x128xf32>
    %142 = vector.extract_strided_slice %110 {offsets = [1, 0, 0], sizes = [18, 16, 128], strides = [1, 1, 1]} : vector<20x16x128xbf16> to vector<18x16x128xbf16>
    %143 = vector.shape_cast %142 : vector<18x16x128xbf16> to vector<288x128xbf16>
    %c5_88 = arith.constant 5 : index
    %c0_89 = arith.constant 0 : index
    %c0_90 = arith.constant 0 : index
    %144 = vector.load %arg11[%c5_88, %c0_89, %c0_90] : memref<9x128x128xbf16, #tpu.memory_space<vmem>>, vector<1x128x128xbf16>
    %145 = vector.shape_cast %144 : vector<1x128x128xbf16> to vector<128x128xbf16>
    %cst_91 = arith.constant dense<0.000000e+00> : vector<288x128xf32>
    %146 = tpu.matmul %143, %145, %cst_91 {dimension_numbers = #tpu.dot_dimension_numbers<[1], [0], [0], [1], [0, 0, 1, 1], [], []>} : vector<288x128xbf16>, vector<128x128xbf16>, vector<288x128xf32> -> vector<288x128xf32>
    %147 = arith.addf %141, %146 : vector<288x128xf32>
    %148 = vector.extract_strided_slice %108 {offsets = [2, 0, 0], sizes = [18, 16, 128], strides = [1, 1, 1]} : vector<20x16x128xbf16> to vector<18x16x128xbf16>
    %149 = vector.shape_cast %148 : vector<18x16x128xbf16> to vector<288x128xbf16>
    %c6_92 = arith.constant 6 : index
    %c0_93 = arith.constant 0 : index
    %c0_94 = arith.constant 0 : index
    %150 = vector.load %arg11[%c6_92, %c0_93, %c0_94] : memref<9x128x128xbf16, #tpu.memory_space<vmem>>, vector<1x128x128xbf16>
    %151 = vector.shape_cast %150 : vector<1x128x128xbf16> to vector<128x128xbf16>
    %cst_95 = arith.constant dense<0.000000e+00> : vector<288x128xf32>
    %152 = tpu.matmul %149, %151, %cst_95 {dimension_numbers = #tpu.dot_dimension_numbers<[1], [0], [0], [1], [0, 0, 1, 1], [], []>} : vector<288x128xbf16>, vector<128x128xbf16>, vector<288x128xf32> -> vector<288x128xf32>
    %153 = arith.addf %147, %152 : vector<288x128xf32>
    %154 = vector.extract_strided_slice %45 {offsets = [2, 0, 0], sizes = [18, 16, 128], strides = [1, 1, 1]} : vector<20x16x128xbf16> to vector<18x16x128xbf16>
    %155 = vector.shape_cast %154 : vector<18x16x128xbf16> to vector<288x128xbf16>
    %c7_96 = arith.constant 7 : index
    %c0_97 = arith.constant 0 : index
    %c0_98 = arith.constant 0 : index
    %156 = vector.load %arg11[%c7_96, %c0_97, %c0_98] : memref<9x128x128xbf16, #tpu.memory_space<vmem>>, vector<1x128x128xbf16>
    %157 = vector.shape_cast %156 : vector<1x128x128xbf16> to vector<128x128xbf16>
    %cst_99 = arith.constant dense<0.000000e+00> : vector<288x128xf32>
    %158 = tpu.matmul %155, %157, %cst_99 {dimension_numbers = #tpu.dot_dimension_numbers<[1], [0], [0], [1], [0, 0, 1, 1], [], []>} : vector<288x128xbf16>, vector<128x128xbf16>, vector<288x128xf32> -> vector<288x128xf32>
    %159 = arith.addf %153, %158 : vector<288x128xf32>
    %160 = vector.extract_strided_slice %110 {offsets = [2, 0, 0], sizes = [18, 16, 128], strides = [1, 1, 1]} : vector<20x16x128xbf16> to vector<18x16x128xbf16>
    %161 = vector.shape_cast %160 : vector<18x16x128xbf16> to vector<288x128xbf16>
    %c8_100 = arith.constant 8 : index
    %c0_101 = arith.constant 0 : index
    %c0_102 = arith.constant 0 : index
    %162 = vector.load %arg11[%c8_100, %c0_101, %c0_102] : memref<9x128x128xbf16, #tpu.memory_space<vmem>>, vector<1x128x128xbf16>
    %163 = vector.shape_cast %162 : vector<1x128x128xbf16> to vector<128x128xbf16>
    %cst_103 = arith.constant dense<0.000000e+00> : vector<288x128xf32>
    %164 = tpu.matmul %161, %163, %cst_103 {dimension_numbers = #tpu.dot_dimension_numbers<[1], [0], [0], [1], [0, 0, 1, 1], [], []>} : vector<288x128xbf16>, vector<128x128xbf16>, vector<288x128xf32> -> vector<288x128xf32>
    %165 = arith.addf %159, %164 : vector<288x128xf32>
    %166 = arith.addf %105, %165 : vector<288x128xf32>
    %c0_104 = arith.constant 0 : index
    %c0_105 = arith.constant 0 : index
    %167 = vector.load %arg12[%c0_104, %c0_105] : memref<1x128xf32, #tpu.memory_space<vmem>>, vector<1x128xf32>
    %168 = vector.broadcast %167 : vector<1x128xf32> to vector<288x128xf32>
    %169 = arith.addf %166, %168 : vector<288x128xf32>
    %cst_106 = arith.constant 0.000000e+00 : f32
    %170 = vector.broadcast %cst_106 : f32 to vector<288x128xf32>
    %171 = arith.maximumf %169, %170 : vector<288x128xf32>
    %172 = vector.shape_cast %171 : vector<288x128xf32> to vector<18x16x128xf32>
    %cst_107 = arith.constant 0.000000e+00 : f32
    %173 = vector.broadcast %cst_107 : f32 to vector<1x16x128xf32>
    %174 = vector.extract_strided_slice %172 {offsets = [0, 0, 0], sizes = [1, 16, 128], strides = [1, 1, 1]} : vector<18x16x128xf32> to vector<1x16x128xf32>
    %175 = arith.select %0, %173, %174 : vector<1x16x128xf32>
    %176 = vector.extract_strided_slice %172 {offsets = [1, 0, 0], sizes = [16, 16, 128], strides = [1, 1, 1]} : vector<18x16x128xf32> to vector<16x16x128xf32>
    %177 = vector.extract_strided_slice %172 {offsets = [17, 0, 0], sizes = [1, 16, 128], strides = [1, 1, 1]} : vector<18x16x128xf32> to vector<1x16x128xf32>
    %178 = arith.select %1, %173, %177 : vector<1x16x128xf32>
    %179 = tpu.concatenate %175, %176, %178 in 0 : vector<1x16x128xf32>, vector<16x16x128xf32>, vector<1x16x128xf32> -> vector<18x16x128xf32>
    %180 = arith.truncf %179 : vector<18x16x128xf32> to vector<18x16x128xbf16>
    %cst_108 = arith.constant 0.000000e+00 : bf16
    %181 = vector.broadcast %cst_108 : bf16 to vector<18x1x128xbf16>
    %182 = vector.extract_strided_slice %180 {offsets = [0, 0, 0], sizes = [18, 15, 128], strides = [1, 1, 1]} : vector<18x16x128xbf16> to vector<18x15x128xbf16>
    %183 = tpu.concatenate %181, %182 in 1 : vector<18x1x128xbf16>, vector<18x15x128xbf16> -> vector<18x16x128xbf16>
    %184 = vector.extract_strided_slice %180 {offsets = [0, 1, 0], sizes = [18, 15, 128], strides = [1, 1, 1]} : vector<18x16x128xbf16> to vector<18x15x128xbf16>
    %185 = tpu.concatenate %184, %181 in 1 : vector<18x15x128xbf16>, vector<18x1x128xbf16> -> vector<18x16x128xbf16>
    %cst_109 = arith.constant 0.000000e+00 : f32
    %186 = vector.broadcast %cst_109 : f32 to vector<256x128xf32>
    %187 = vector.extract_strided_slice %183 {offsets = [0, 0, 0], sizes = [16, 16, 128], strides = [1, 1, 1]} : vector<18x16x128xbf16> to vector<16x16x128xbf16>
    %188 = vector.shape_cast %187 : vector<16x16x128xbf16> to vector<256x128xbf16>
    %c0_110 = arith.constant 0 : index
    %c0_111 = arith.constant 0 : index
    %c0_112 = arith.constant 0 : index
    %189 = vector.load %arg13[%c0_110, %c0_111, %c0_112] : memref<9x128x128xbf16, #tpu.memory_space<vmem>>, vector<1x128x128xbf16>
    %190 = vector.shape_cast %189 : vector<1x128x128xbf16> to vector<128x128xbf16>
    %cst_113 = arith.constant dense<0.000000e+00> : vector<256x128xf32>
    %191 = tpu.matmul %188, %190, %cst_113 {dimension_numbers = #tpu.dot_dimension_numbers<[1], [0], [0], [1], [0, 0, 1, 1], [], []>} : vector<256x128xbf16>, vector<128x128xbf16>, vector<256x128xf32> -> vector<256x128xf32>
    %192 = arith.addf %186, %191 : vector<256x128xf32>
    %193 = vector.extract_strided_slice %180 {offsets = [0, 0, 0], sizes = [16, 16, 128], strides = [1, 1, 1]} : vector<18x16x128xbf16> to vector<16x16x128xbf16>
    %194 = vector.shape_cast %193 : vector<16x16x128xbf16> to vector<256x128xbf16>
    %c1_114 = arith.constant 1 : index
    %c0_115 = arith.constant 0 : index
    %c0_116 = arith.constant 0 : index
    %195 = vector.load %arg13[%c1_114, %c0_115, %c0_116] : memref<9x128x128xbf16, #tpu.memory_space<vmem>>, vector<1x128x128xbf16>
    %196 = vector.shape_cast %195 : vector<1x128x128xbf16> to vector<128x128xbf16>
    %cst_117 = arith.constant dense<0.000000e+00> : vector<256x128xf32>
    %197 = tpu.matmul %194, %196, %cst_117 {dimension_numbers = #tpu.dot_dimension_numbers<[1], [0], [0], [1], [0, 0, 1, 1], [], []>} : vector<256x128xbf16>, vector<128x128xbf16>, vector<256x128xf32> -> vector<256x128xf32>
    %198 = arith.addf %192, %197 : vector<256x128xf32>
    %199 = vector.extract_strided_slice %185 {offsets = [0, 0, 0], sizes = [16, 16, 128], strides = [1, 1, 1]} : vector<18x16x128xbf16> to vector<16x16x128xbf16>
    %200 = vector.shape_cast %199 : vector<16x16x128xbf16> to vector<256x128xbf16>
    %c2_118 = arith.constant 2 : index
    %c0_119 = arith.constant 0 : index
    %c0_120 = arith.constant 0 : index
    %201 = vector.load %arg13[%c2_118, %c0_119, %c0_120] : memref<9x128x128xbf16, #tpu.memory_space<vmem>>, vector<1x128x128xbf16>
    %202 = vector.shape_cast %201 : vector<1x128x128xbf16> to vector<128x128xbf16>
    %cst_121 = arith.constant dense<0.000000e+00> : vector<256x128xf32>
    %203 = tpu.matmul %200, %202, %cst_121 {dimension_numbers = #tpu.dot_dimension_numbers<[1], [0], [0], [1], [0, 0, 1, 1], [], []>} : vector<256x128xbf16>, vector<128x128xbf16>, vector<256x128xf32> -> vector<256x128xf32>
    %204 = arith.addf %198, %203 : vector<256x128xf32>
    %205 = vector.extract_strided_slice %183 {offsets = [1, 0, 0], sizes = [16, 16, 128], strides = [1, 1, 1]} : vector<18x16x128xbf16> to vector<16x16x128xbf16>
    %206 = vector.shape_cast %205 : vector<16x16x128xbf16> to vector<256x128xbf16>
    %c3_122 = arith.constant 3 : index
    %c0_123 = arith.constant 0 : index
    %c0_124 = arith.constant 0 : index
    %207 = vector.load %arg13[%c3_122, %c0_123, %c0_124] : memref<9x128x128xbf16, #tpu.memory_space<vmem>>, vector<1x128x128xbf16>
    %208 = vector.shape_cast %207 : vector<1x128x128xbf16> to vector<128x128xbf16>
    %cst_125 = arith.constant dense<0.000000e+00> : vector<256x128xf32>
    %209 = tpu.matmul %206, %208, %cst_125 {dimension_numbers = #tpu.dot_dimension_numbers<[1], [0], [0], [1], [0, 0, 1, 1], [], []>} : vector<256x128xbf16>, vector<128x128xbf16>, vector<256x128xf32> -> vector<256x128xf32>
    %210 = arith.addf %204, %209 : vector<256x128xf32>
    %211 = vector.extract_strided_slice %180 {offsets = [1, 0, 0], sizes = [16, 16, 128], strides = [1, 1, 1]} : vector<18x16x128xbf16> to vector<16x16x128xbf16>
    %212 = vector.shape_cast %211 : vector<16x16x128xbf16> to vector<256x128xbf16>
    %c4_126 = arith.constant 4 : index
    %c0_127 = arith.constant 0 : index
    %c0_128 = arith.constant 0 : index
    %213 = vector.load %arg13[%c4_126, %c0_127, %c0_128] : memref<9x128x128xbf16, #tpu.memory_space<vmem>>, vector<1x128x128xbf16>
    %214 = vector.shape_cast %213 : vector<1x128x128xbf16> to vector<128x128xbf16>
    %cst_129 = arith.constant dense<0.000000e+00> : vector<256x128xf32>
    %215 = tpu.matmul %212, %214, %cst_129 {dimension_numbers = #tpu.dot_dimension_numbers<[1], [0], [0], [1], [0, 0, 1, 1], [], []>} : vector<256x128xbf16>, vector<128x128xbf16>, vector<256x128xf32> -> vector<256x128xf32>
    %216 = arith.addf %210, %215 : vector<256x128xf32>
    %217 = vector.extract_strided_slice %185 {offsets = [1, 0, 0], sizes = [16, 16, 128], strides = [1, 1, 1]} : vector<18x16x128xbf16> to vector<16x16x128xbf16>
    %218 = vector.shape_cast %217 : vector<16x16x128xbf16> to vector<256x128xbf16>
    %c5_130 = arith.constant 5 : index
    %c0_131 = arith.constant 0 : index
    %c0_132 = arith.constant 0 : index
    %219 = vector.load %arg13[%c5_130, %c0_131, %c0_132] : memref<9x128x128xbf16, #tpu.memory_space<vmem>>, vector<1x128x128xbf16>
    %220 = vector.shape_cast %219 : vector<1x128x128xbf16> to vector<128x128xbf16>
    %cst_133 = arith.constant dense<0.000000e+00> : vector<256x128xf32>
    %221 = tpu.matmul %218, %220, %cst_133 {dimension_numbers = #tpu.dot_dimension_numbers<[1], [0], [0], [1], [0, 0, 1, 1], [], []>} : vector<256x128xbf16>, vector<128x128xbf16>, vector<256x128xf32> -> vector<256x128xf32>
    %222 = arith.addf %216, %221 : vector<256x128xf32>
    %223 = vector.extract_strided_slice %183 {offsets = [2, 0, 0], sizes = [16, 16, 128], strides = [1, 1, 1]} : vector<18x16x128xbf16> to vector<16x16x128xbf16>
    %224 = vector.shape_cast %223 : vector<16x16x128xbf16> to vector<256x128xbf16>
    %c6_134 = arith.constant 6 : index
    %c0_135 = arith.constant 0 : index
    %c0_136 = arith.constant 0 : index
    %225 = vector.load %arg13[%c6_134, %c0_135, %c0_136] : memref<9x128x128xbf16, #tpu.memory_space<vmem>>, vector<1x128x128xbf16>
    %226 = vector.shape_cast %225 : vector<1x128x128xbf16> to vector<128x128xbf16>
    %cst_137 = arith.constant dense<0.000000e+00> : vector<256x128xf32>
    %227 = tpu.matmul %224, %226, %cst_137 {dimension_numbers = #tpu.dot_dimension_numbers<[1], [0], [0], [1], [0, 0, 1, 1], [], []>} : vector<256x128xbf16>, vector<128x128xbf16>, vector<256x128xf32> -> vector<256x128xf32>
    %228 = arith.addf %222, %227 : vector<256x128xf32>
    %229 = vector.extract_strided_slice %180 {offsets = [2, 0, 0], sizes = [16, 16, 128], strides = [1, 1, 1]} : vector<18x16x128xbf16> to vector<16x16x128xbf16>
    %230 = vector.shape_cast %229 : vector<16x16x128xbf16> to vector<256x128xbf16>
    %c7_138 = arith.constant 7 : index
    %c0_139 = arith.constant 0 : index
    %c0_140 = arith.constant 0 : index
    %231 = vector.load %arg13[%c7_138, %c0_139, %c0_140] : memref<9x128x128xbf16, #tpu.memory_space<vmem>>, vector<1x128x128xbf16>
    %232 = vector.shape_cast %231 : vector<1x128x128xbf16> to vector<128x128xbf16>
    %cst_141 = arith.constant dense<0.000000e+00> : vector<256x128xf32>
    %233 = tpu.matmul %230, %232, %cst_141 {dimension_numbers = #tpu.dot_dimension_numbers<[1], [0], [0], [1], [0, 0, 1, 1], [], []>} : vector<256x128xbf16>, vector<128x128xbf16>, vector<256x128xf32> -> vector<256x128xf32>
    %234 = arith.addf %228, %233 : vector<256x128xf32>
    %235 = vector.extract_strided_slice %185 {offsets = [2, 0, 0], sizes = [16, 16, 128], strides = [1, 1, 1]} : vector<18x16x128xbf16> to vector<16x16x128xbf16>
    %236 = vector.shape_cast %235 : vector<16x16x128xbf16> to vector<256x128xbf16>
    %c8_142 = arith.constant 8 : index
    %c0_143 = arith.constant 0 : index
    %c0_144 = arith.constant 0 : index
    %237 = vector.load %arg13[%c8_142, %c0_143, %c0_144] : memref<9x128x128xbf16, #tpu.memory_space<vmem>>, vector<1x128x128xbf16>
    %238 = vector.shape_cast %237 : vector<1x128x128xbf16> to vector<128x128xbf16>
    %cst_145 = arith.constant dense<0.000000e+00> : vector<256x128xf32>
    %239 = tpu.matmul %236, %238, %cst_145 {dimension_numbers = #tpu.dot_dimension_numbers<[1], [0], [0], [1], [0, 0, 1, 1], [], []>} : vector<256x128xbf16>, vector<128x128xbf16>, vector<256x128xf32> -> vector<256x128xf32>
    %240 = arith.addf %234, %239 : vector<256x128xf32>
    %c0_146 = arith.constant 0 : index
    %c0_147 = arith.constant 0 : index
    %241 = vector.load %arg14[%c0_146, %c0_147] : memref<1x128xf32, #tpu.memory_space<vmem>>, vector<1x128xf32>
    %242 = vector.broadcast %241 : vector<1x128xf32> to vector<256x128xf32>
    %243 = arith.addf %240, %242 : vector<256x128xf32>
    %cst_148 = arith.constant 0.000000e+00 : f32
    %244 = vector.broadcast %cst_148 : f32 to vector<256x128xf32>
    %245 = arith.maximumf %243, %244 : vector<256x128xf32>
    %246 = vector.shape_cast %245 : vector<256x128xf32> to vector<16x16x128xf32>
    %247 = arith.truncf %246 : vector<16x16x128xf32> to vector<16x16x128xbf16>
    %c0_149 = arith.constant 0 : index
    %c0_150 = arith.constant 0 : index
    %c0_151 = arith.constant 0 : index
    %c0_152 = arith.constant 0 : index
    %248 = vector.load %arg15[%c0_149, %c0_150, %c0_151, %c0_152] : memref<1x16x16x128xbf16, #tpu.memory_space<vmem>>, vector<1x16x16x128xbf16>
    %249 = vector.shape_cast %248 : vector<1x16x16x128xbf16> to vector<16x16x128xbf16>
    %250 = vector.shape_cast %247 : vector<16x16x128xbf16> to vector<1x16x16x128xbf16>
    tpu.vector_store %arg15[%c0_149, %c0_150, %c0_151, %c0_152], %250 {strides = array<i32>} : memref<1x16x16x128xbf16, #tpu.memory_space<vmem>>, vector<1x16x16x128xbf16>,
    return
  }
  func.func @transform_0(%arg0: i32, %arg1: i32) -> (i32, i32, i32, i32) {
    %c8_i32 = arith.constant 8 : i32
    %0 = arith.muli %arg1, %c8_i32 : i32
    %c1_i32 = arith.constant 1 : i32
    %1 = arith.subi %0, %c1_i32 : i32
    %c0_i32 = arith.constant 0 : i32
    %2 = arith.maxsi %1, %c0_i32 : i32
    %c0_i32_0 = arith.constant 0 : i32
    %c0_i32_1 = arith.constant 0 : i32
    %c0_i32_2 = arith.constant 0 : i32
    return %arg0, %2, %c0_i32_0, %c0_i32_1 : i32, i32, i32, i32
  }
  func.func @transform_1(%arg0: i32, %arg1: i32) -> (i32, i32, i32, i32) {
    %c0_i32 = arith.constant 0 : i32
    %c0_i32_0 = arith.constant 0 : i32
    %c0_i32_1 = arith.constant 0 : i32
    return %arg0, %arg1, %c0_i32, %c0_i32_0 : i32, i32, i32, i32
  }
  func.func @transform_2(%arg0: i32, %arg1: i32) -> (i32, i32, i32, i32) {
    %c8_i32 = arith.constant 8 : i32
    %0 = arith.muli %arg1, %c8_i32 : i32
    %c8_i32_0 = arith.constant 8 : i32
    %1 = arith.addi %0, %c8_i32_0 : i32
    %c7_i32 = arith.constant 7 : i32
    %2 = arith.minsi %1, %c7_i32 : i32
    %c0_i32 = arith.constant 0 : i32
    %c0_i32_1 = arith.constant 0 : i32
    %c0_i32_2 = arith.constant 0 : i32
    return %arg0, %2, %c0_i32, %c0_i32_1 : i32, i32, i32, i32
  }
  func.func @transform_3(%arg0: i32, %arg1: i32) -> (i32, i32, i32, i32) {
    %c8_i32 = arith.constant 8 : i32
    %0 = arith.muli %arg1, %c8_i32 : i32
    %c1_i32 = arith.constant 1 : i32
    %1 = arith.subi %0, %c1_i32 : i32
    %c0_i32 = arith.constant 0 : i32
    %2 = arith.maxsi %1, %c0_i32 : i32
    %c0_i32_0 = arith.constant 0 : i32
    %c0_i32_1 = arith.constant 0 : i32
    %c0_i32_2 = arith.constant 0 : i32
    return %arg0, %2, %c0_i32_0, %c0_i32_1 : i32, i32, i32, i32
  }
  func.func @transform_4(%arg0: i32, %arg1: i32) -> (i32, i32, i32, i32) {
    %c0_i32 = arith.constant 0 : i32
    %c0_i32_0 = arith.constant 0 : i32
    %c0_i32_1 = arith.constant 0 : i32
    return %arg0, %arg1, %c0_i32, %c0_i32_0 : i32, i32, i32, i32
  }
  func.func @transform_5(%arg0: i32, %arg1: i32) -> (i32, i32, i32, i32) {
    %c8_i32 = arith.constant 8 : i32
    %0 = arith.muli %arg1, %c8_i32 : i32
    %c8_i32_0 = arith.constant 8 : i32
    %1 = arith.addi %0, %c8_i32_0 : i32
    %c7_i32 = arith.constant 7 : i32
    %2 = arith.minsi %1, %c7_i32 : i32
    %c0_i32 = arith.constant 0 : i32
    %c0_i32_1 = arith.constant 0 : i32
    %c0_i32_2 = arith.constant 0 : i32
    return %arg0, %2, %c0_i32, %c0_i32_1 : i32, i32, i32, i32
  }
  func.func @transform_6(%arg0: i32, %arg1: i32) -> (i32, i32, i32) {
    %c0_i32 = arith.constant 0 : i32
    %c0_i32_0 = arith.constant 0 : i32
    %c0_i32_1 = arith.constant 0 : i32
    %c0_i32_2 = arith.constant 0 : i32
    return %c0_i32, %c0_i32_0, %c0_i32_1 : i32, i32, i32
  }
  func.func @transform_7(%arg0: i32, %arg1: i32) -> (i32, i32) {
    %c0_i32 = arith.constant 0 : i32
    %c0_i32_0 = arith.constant 0 : i32
    %c0_i32_1 = arith.constant 0 : i32
    return %c0_i32, %c0_i32_0 : i32, i32
  }
  func.func @transform_8(%arg0: i32, %arg1: i32) -> (i32, i32, i32) {
    %c0_i32 = arith.constant 0 : i32
    %c0_i32_0 = arith.constant 0 : i32
    %c0_i32_1 = arith.constant 0 : i32
    %c0_i32_2 = arith.constant 0 : i32
    return %c0_i32, %c0_i32_0, %c0_i32_1 : i32, i32, i32
  }
  func.func @transform_9(%arg0: i32, %arg1: i32) -> (i32, i32, i32) {
    %c0_i32 = arith.constant 0 : i32
    %c0_i32_0 = arith.constant 0 : i32
    %c0_i32_1 = arith.constant 0 : i32
    %c0_i32_2 = arith.constant 0 : i32
    return %c0_i32, %c0_i32_0, %c0_i32_1 : i32, i32, i32
  }
  func.func @transform_10(%arg0: i32, %arg1: i32) -> (i32, i32) {
    %c0_i32 = arith.constant 0 : i32
    %c0_i32_0 = arith.constant 0 : i32
    %c0_i32_1 = arith.constant 0 : i32
    return %c0_i32, %c0_i32_0 : i32, i32
  }
  func.func @transform_11(%arg0: i32, %arg1: i32) -> (i32, i32, i32) {
    %c0_i32 = arith.constant 0 : i32
    %c0_i32_0 = arith.constant 0 : i32
    %c0_i32_1 = arith.constant 0 : i32
    %c0_i32_2 = arith.constant 0 : i32
    return %c0_i32, %c0_i32_0, %c0_i32_1 : i32, i32, i32
  }
  func.func @transform_12(%arg0: i32, %arg1: i32) -> (i32, i32) {
    %c0_i32 = arith.constant 0 : i32
    %c0_i32_0 = arith.constant 0 : i32
    %c0_i32_1 = arith.constant 0 : i32
    return %c0_i32, %c0_i32_0 : i32, i32
  }
  func.func @transform_13(%arg0: i32, %arg1: i32) -> (i32, i32, i32, i32) {
    %c0_i32 = arith.constant 0 : i32
    %c0_i32_0 = arith.constant 0 : i32
    %c0_i32_1 = arith.constant 0 : i32
    return %arg0, %arg1, %c0_i32, %c0_i32_0 : i32, i32, i32, i32
  }
}

</mosaic_0001>

<llo_original>
// kernel: up_conv_forward.1
$region0: #{up_conv_forward.1}
  #allocation0 [shape = 'u32[]', space=smem, size = 0x4, offset = 0x4, fixed_abs, tag = 'smem constant byte address 0x4 - core index']
  #allocation1 [shape = 'u32[144,128]{1,0:T(1,128)}', space=vmem, size = 0x12000, scoped, tag = 'internal scratch']
  %s0 = inlined_call_operand.vmem [shape: bf16[2,8,8,128], index: 0, kind: input, shape index: {}, may-alias: {0,1,2}]
  %s1 = inlined_call_operand.vmem [shape: bf16[2,8,8,128], index: 1, kind: input, shape index: {}, may-alias: {0,1,2}]
  %s2 = inlined_call_operand.vmem [shape: bf16[2,8,8,128], index: 2, kind: input, shape index: {}, may-alias: {0,1,2}]
  %s3 = inlined_call_operand.vmem [shape: bf16[2,16,16,128], index: 3, kind: input, shape index: {}, may-alias: {3,4,5}]
  %s4 = inlined_call_operand.vmem [shape: bf16[2,16,16,128], index: 4, kind: input, shape index: {}, may-alias: {3,4,5}]
  %s5 = inlined_call_operand.vmem [shape: bf16[2,16,16,128], index: 5, kind: input, shape index: {}, may-alias: {3,4,5}]
  %s6 = inlined_call_operand.hbm [shape: bf16[2,128,256], index: 6, kind: input, shape index: {}]
  %s7 = inlined_call_operand.vmem [shape: f32[1,256], index: 7, kind: input, shape index: {}]
  %s8 = inlined_call_operand.vmem [shape: bf16[9,128,128], index: 8, kind: input, shape index: {}]
  %s9 = inlined_call_operand.vmem [shape: bf16[9,128,128], index: 9, kind: input, shape index: {}]
  %s10 = inlined_call_operand.vmem [shape: f32[1,128], index: 10, kind: input, shape index: {}]
  %s11 = inlined_call_operand.hbm [shape: bf16[9,128,128], index: 11, kind: input, shape index: {}]
  %s12 = inlined_call_operand.vmem [shape: f32[1,128], index: 12, kind: input, shape index: {}]
  %s13 = inlined_call_operand.vmem [shape: bf16[2,16,16,128], index: 13, kind: output, shape index: {}]
  %s14 = sld [smem:[#allocation0]]
  $region93: #{up_conv_forward.1} parent=0
    _
  %s16 = ssub.s32 1, %s14
  %s17 = scalar_select 0, %s16, %s14
  $region1: #{up_conv_forward.1} parent=0
    #allocation2 [shape = 'u8[131072]{0}', space=vmem, size = 0x20000, scoped, tag = 'input window, operand 6, single buffered']
    #allocation3 [shape = 's32[2]{0}', space=sflag, size = 0x8, scoped, tag = 'scoped memory for up_conv_forward.1']
    #allocation4 [shape = 'u8[294912]{0}', space=vmem, size = 0x48000, scoped, tag = 'input window, operand 11, single buffered']
    #allocation5 [shape = 's32[1]{0}', space=sflag, size = 0x4, scoped, tag = 'scoped memory for up_conv_forward.1']
    %18 = vsyncpa [#allocation3], 0
    %19 = vsyncpa [#allocation5], 0
    loop: start=0, step=1, limit=4
    $region2: #{up_conv_forward.1} parent=1 // loop_pre_header
      _
    $region3: #{up_conv_forward.1} parent=1 // loop_header
      %s21 = sphi 0, %s25
      %p22 = scmp.ge.s32.totalorder %s21, 4
      %s28 = sphi 0, %s40
      %s29 = sphi 0, %s36
      %s30 = sphi 0, %s28
      %s31 = sphi 0, %s29
      %s32 = sphi 0, %s30
      %s33 = sphi 0, %s31
      %s53 = sphi 0, %s55
      %s56 = sphi 0, %s53
      %s57 = sphi 0, %s56
      %s73 = sphi 0, %s57
      %s81 = sphi 0, %s83
      %s84 = sphi 0, %s81
      %s85 = sphi 0, %s84
      %s101 = sphi 0, %s85
      %s117 = sphi 0, %s119
      %s120 = sphi 0, %s117
      %s121 = sphi 0, %s120
      %s137 = sphi 0, %s121
      %s153 = sphi 0, %s155
      %s156 = sphi 0, %s153
      %s157 = sphi 0, %s156
      %s173 = sphi 0, %s157
      %s181 = sphi 0, %s183
      %s184 = sphi 0, %s181
      %s185 = sphi 0, %s184
      %s201 = sphi 0, %s185
      %s217 = sphi 0, %s219
      %s220 = sphi 0, %s217
      %s221 = sphi 0, %s220
      %s237 = sphi 0, %s221
      %s241 = sphi 0, %s241
      %s243 = sphi 0, %s241
      %s244 = sphi 0, %s243
      %s258 = sphi 0, %s244
      %s262 = sphi 0, %s262
      %s264 = sphi 0, %s262
      %s265 = sphi 0, %s264
      %s279 = sphi 0, %s265
      %s283 = sphi 0, %s283
      %s285 = sphi 0, %s283
      %s286 = sphi 0, %s285
      %s300 = sphi 0, %s286
      %s304 = sphi 0, %s304
      %s306 = sphi 0, %s304
      %s307 = sphi 0, %s306
      %s321 = sphi 0, %s307
      %s325 = sphi 0, %s325
      %s327 = sphi 0, %s325
      %s328 = sphi 0, %s327
      %s342 = sphi 0, %s328
      %s346 = sphi 0, %s346
      %s348 = sphi 0, %s346
      %s349 = sphi 0, %s348
      %s363 = sphi 0, %s349
      %s367 = sphi 0, %s367
      %s369 = sphi 0, %s367
      %s370 = sphi 0, %s369
      %s384 = sphi 0, %s370
      %s392 = sphi 0, %s394
      %s395 = sphi 0, %s392
      %s396 = sphi 0, %s395
      %s412 = sphi 0, %s396
    $region4: #{up_conv_forward.1} parent=1 // loop_header_branch
      %24 = sbr.rel (%p22) target = $region8
    $region5: #{up_conv_forward.1} parent=1 // loop_body
      %s26 = ssub.s32 %s21, 1
      %s27 = ssub.s32 %s21, 2
      %s34 = sadd.s32 1, %s29
      %p35 = scmp.ge.s32.totalorder %s34, 1
      %s36 = scalar_select %p35, 0, %s34
      %s37 = sadd.s32 1, %s28
      %s38 = scalar_select %p35, %s37, %s28
      %p39 = scmp.ge.s32.totalorder %s38, 2
      %s40 = scalar_select %p39, 0, %s38
      %s41 = smul.u32 %s29, 8
      %s42 = ssub.s32 %s41, 1
      %p43 = scmp.gt.s32.totalorder %s42, 0
      %s44 = scalar_select %p43, %s42, 0
      %s45 = smul.u32 %s36, 8
      %s46 = ssub.s32 %s45, 1
      %p47 = scmp.gt.s32.totalorder %s46, 0
      %s48 = scalar_select %p47, %s46, 0
      %s49 = ssub.s32 %s28, %s40
      %s50 = ssub.s32 %s44, %s48
      %s51 = sor.u32 %s49, %s50
      %p52 = scmp.eq.s32.totalorder %s51, 0
      %s54 = sadd.s32 %s53, 1
      %s55 = scalar_select %p52, %s53, %s54
      %p58 = pneg %p52
      %p59 = scmp.eq.s32.totalorder %s21, 1
      %p60 = por %p58, %p59
      %p61 = scmp.ne.s32.totalorder %s53, %s56
      %p62 = scmp.eq.s32.totalorder %s21, 0
      %p63 = por %p61, %p62
      %p64 = scmp.ne.s32.totalorder %s53, %s56
      %p65 = scmp.eq.s32.totalorder %s26, 1
      %p66 = por %p64, %p65
      %p67 = scmp.ne.s32.totalorder %s56, %s57
      %p68 = scmp.eq.s32.totalorder %s26, 0
      %p69 = por %p67, %p68
      %p70 = scmp.ne.s32.totalorder %s56, %s57
      %p71 = scmp.eq.s32.totalorder %s27, 1
      %p72 = por %p70, %p71
      %p74 = scmp.ne.s32.totalorder %s57, %s73
      %p75 = scmp.eq.s32.totalorder %s27, 0
      %p76 = por %p74, %p75
      %s77 = ssub.s32 %s28, %s40
      %s78 = ssub.s32 %s29, %s36
      %s79 = sor.u32 %s77, %s78
      %p80 = scmp.eq.s32.totalorder %s79, 0
      %s82 = sadd.s32 %s81, 1
      %s83 = scalar_select %p80, %s81, %s82
      %p86 = pneg %p80
      %p87 = scmp.eq.s32.totalorder %s21, 1
      %p88 = por %p86, %p87
      %p89 = scmp.ne.s32.totalorder %s81, %s84
      %p90 = scmp.eq.s32.totalorder %s21, 0
      %p91 = por %p89, %p90
      %p92 = scmp.ne.s32.totalorder %s81, %s84
      %p93 = scmp.eq.s32.totalorder %s26, 1
      %p94 = por %p92, %p93
      %p95 = scmp.ne.s32.totalorder %s84, %s85
      %p96 = scmp.eq.s32.totalorder %s26, 0
      %p97 = por %p95, %p96
      %p98 = scmp.ne.s32.totalorder %s84, %s85
      %p99 = scmp.eq.s32.totalorder %s27, 1
      %p100 = por %p98, %p99
      %p102 = scmp.ne.s32.totalorder %s85, %s101
      %p103 = scmp.eq.s32.totalorder %s27, 0
      %p104 = por %p102, %p103
      %s105 = smul.u32 %s29, 8
      %s106 = sadd.s32 %s105, 8
      %p107 = scmp.lt.s32.totalorder %s106, 7
      %s108 = scalar_select %p107, %s106, 7
      %s109 = smul.u32 %s36, 8
      %s110 = sadd.s32 %s109, 8
      %p111 = scmp.lt.s32.totalorder %s110, 7
      %s112 = scalar_select %p111, %s110, 7
      %s113 = ssub.s32 %s28, %s40
      %s114 = ssub.s32 %s108, %s112
      %s115 = sor.u32 %s113, %s114
      %p116 = scmp.eq.s32.totalorder %s115, 0
      %s118 = sadd.s32 %s117, 1
      %s119 = scalar_select %p116, %s117, %s118
      %p122 = pneg %p116
      %p123 = scmp.eq.s32.totalorder %s21, 1
      %p124 = por %p122, %p123
      %p125 = scmp.ne.s32.totalorder %s117, %s120
      %p126 = scmp.eq.s32.totalorder %s21, 0
      %p127 = por %p125, %p126
      %p128 = scmp.ne.s32.totalorder %s117, %s120
      %p129 = scmp.eq.s32.totalorder %s26, 1
      %p130 = por %p128, %p129
      %p131 = scmp.ne.s32.totalorder %s120, %s121
      %p132 = scmp.eq.s32.totalorder %s26, 0
      %p133 = por %p131, %p132
      %p134 = scmp.ne.s32.totalorder %s120, %s121
      %p135 = scmp.eq.s32.totalorder %s27, 1
      %p136 = por %p134, %p135
      %p138 = scmp.ne.s32.totalorder %s121, %s137
      %p139 = scmp.eq.s32.totalorder %s27, 0
      %p140 = por %p138, %p139
      %s141 = smul.u32 %s29, 8
      %s142 = ssub.s32 %s141, 1
      %p143 = scmp.gt.s32.totalorder %s142, 0
      %s144 = scalar_select %p143, %s142, 0
      %s145 = smul.u32 %s36, 8
      %s146 = ssub.s32 %s145, 1
      %p147 = scmp.gt.s32.totalorder %s146, 0
      %s148 = scalar_select %p147, %s146, 0
      %s149 = ssub.s32 %s28, %s40
      %s150 = ssub.s32 %s144, %s148
      %s151 = sor.u32 %s149, %s150
      %p152 = scmp.eq.s32.totalorder %s151, 0
      %s154 = sadd.s32 %s153, 1
      %s155 = scalar_select %p152, %s153, %s154
      %p158 = pneg %p152
      %p159 = scmp.eq.s32.totalorder %s21, 1
      %p160 = por %p158, %p159
      %p161 = scmp.ne.s32.totalorder %s153, %s156
      %p162 = scmp.eq.s32.totalorder %s21, 0
      %p163 = por %p161, %p162
      %p164 = scmp.ne.s32.totalorder %s153, %s156
      %p165 = scmp.eq.s32.totalorder %s26, 1
      %p166 = por %p164, %p165
      %p167 = scmp.ne.s32.totalorder %s156, %s157
      %p168 = scmp.eq.s32.totalorder %s26, 0
      %p169 = por %p167, %p168
      %p170 = scmp.ne.s32.totalorder %s156, %s157
      %p171 = scmp.eq.s32.totalorder %s27, 1
      %p172 = por %p170, %p171
      %p174 = scmp.ne.s32.totalorder %s157, %s173
      %p175 = scmp.eq.s32.totalorder %s27, 0
      %p176 = por %p174, %p175
      %s177 = ssub.s32 %s28, %s40
      %s178 = ssub.s32 %s29, %s36
      %s179 = sor.u32 %s177, %s178
      %p180 = scmp.eq.s32.totalorder %s179, 0
      %s182 = sadd.s32 %s181, 1
      %s183 = scalar_select %p180, %s181, %s182
      %p186 = pneg %p180
      %p187 = scmp.eq.s32.totalorder %s21, 1
      %p188 = por %p186, %p187
      %p189 = scmp.ne.s32.totalorder %s181, %s184
      %p190 = scmp.eq.s32.totalorder %s21, 0
      %p191 = por %p189, %p190
      %p192 = scmp.ne.s32.totalorder %s181, %s184
      %p193 = scmp.eq.s32.totalorder %s26, 1
      %p194 = por %p192, %p193
      %p195 = scmp.ne.s32.totalorder %s184, %s185
      %p196 = scmp.eq.s32.totalorder %s26, 0
      %p197 = por %p195, %p196
      %p198 = scmp.ne.s32.totalorder %s184, %s185
      %p199 = scmp.eq.s32.totalorder %s27, 1
      %p200 = por %p198, %p199
      %p202 = scmp.ne.s32.totalorder %s185, %s201
      %p203 = scmp.eq.s32.totalorder %s27, 0
      %p204 = por %p202, %p203
      %s205 = smul.u32 %s29, 8
      %s206 = sadd.s32 %s205, 8
      %p207 = scmp.lt.s32.totalorder %s206, 7
      %s208 = scalar_select %p207, %s206, 7
      %s209 = smul.u32 %s36, 8
      %s210 = sadd.s32 %s209, 8
      %p211 = scmp.lt.s32.totalorder %s210, 7
      %s212 = scalar_select %p211, %s210, 7
      %s213 = ssub.s32 %s28, %s40
      %s214 = ssub.s32 %s208, %s212
      %s215 = sor.u32 %s213, %s214
      %p216 = scmp.eq.s32.totalorder %s215, 0
      %s218 = sadd.s32 %s217, 1
      %s219 = scalar_select %p216, %s217, %s218
      %p222 = pneg %p216
      %p223 = scmp.eq.s32.totalorder %s21, 1
      %p224 = por %p222, %p223
      %p225 = scmp.ne.s32.totalorder %s217, %s220
      %p226 = scmp.eq.s32.totalorder %s21, 0
      %p227 = por %p225, %p226
      %p228 = scmp.ne.s32.totalorder %s217, %s220
      %p229 = scmp.eq.s32.totalorder %s26, 1
      %p230 = por %p228, %p229
      %p231 = scmp.ne.s32.totalorder %s220, %s221
      %p232 = scmp.eq.s32.totalorder %s26, 0
      %p233 = por %p231, %p232
      %p234 = scmp.ne.s32.totalorder %s220, %s221
      %p235 = scmp.eq.s32.totalorder %s27, 1
      %p236 = por %p234, %p235
      %p238 = scmp.ne.s32.totalorder %s221, %s237
      %p239 = scmp.eq.s32.totalorder %s27, 0
      %p240 = por %p238, %p239
      %s242 = sadd.s32 %s241, 1
      %p245 = scmp.eq.s32.totalorder %s21, 1
      %p246 = scmp.ne.s32.totalorder %s241, %s243
      %p247 = scmp.eq.s32.totalorder %s21, 0
      %p248 = por %p246, %p247
      %p249 = scmp.ne.s32.totalorder %s241, %s243
      %p250 = scmp.eq.s32.totalorder %s26, 1
      %p251 = por %p249, %p250
      %p252 = scmp.ne.s32.totalorder %s243, %s244
      %p253 = scmp.eq.s32.totalorder %s26, 0
      %p254 = por %p252, %p253
      %p255 = scmp.ne.s32.totalorder %s243, %s244
      %p256 = scmp.eq.s32.totalorder %s27, 1
      %p257 = por %p255, %p256
      %p259 = scmp.ne.s32.totalorder %s244, %s258
      %p260 = scmp.eq.s32.totalorder %s27, 0
      %p261 = por %p259, %p260
      %s263 = sadd.s32 %s262, 1
      %p266 = scmp.eq.s32.totalorder %s21, 1
      %p267 = scmp.ne.s32.totalorder %s262, %s264
      %p268 = scmp.eq.s32.totalorder %s21, 0
      %p269 = por %p267, %p268
      %p270 = scmp.ne.s32.totalorder %s262, %s264
      %p271 = scmp.eq.s32.totalorder %s26, 1
      %p272 = por %p270, %p271
      %p273 = scmp.ne.s32.totalorder %s264, %s265
      %p274 = scmp.eq.s32.totalorder %s26, 0
      %p275 = por %p273, %p274
      %p276 = scmp.ne.s32.totalorder %s264, %s265
      %p277 = scmp.eq.s32.totalorder %s27, 1
      %p278 = por %p276, %p277
      %p280 = scmp.ne.s32.totalorder %s265, %s279
      %p281 = scmp.eq.s32.totalorder %s27, 0
      %p282 = por %p280, %p281
      %s284 = sadd.s32 %s283, 1
      %p287 = scmp.eq.s32.totalorder %s21, 1
      %p288 = scmp.ne.s32.totalorder %s283, %s285
      %p289 = scmp.eq.s32.totalorder %s21, 0
      %p290 = por %p288, %p289
      %p291 = scmp.ne.s32.totalorder %s283, %s285
      %p292 = scmp.eq.s32.totalorder %s26, 1
      %p293 = por %p291, %p292
      %p294 = scmp.ne.s32.totalorder %s285, %s286
      %p295 = scmp.eq.s32.totalorder %s26, 0
      %p296 = por %p294, %p295
      %p297 = scmp.ne.s32.totalorder %s285, %s286
      %p298 = scmp.eq.s32.totalorder %s27, 1
      %p299 = por %p297, %p298
      %p301 = scmp.ne.s32.totalorder %s286, %s300
      %p302 = scmp.eq.s32.totalorder %s27, 0
      %p303 = por %p301, %p302
      %s305 = sadd.s32 %s304, 1
      %p308 = scmp.eq.s32.totalorder %s21, 1
      %p309 = scmp.ne.s32.totalorder %s304, %s306
      %p310 = scmp.eq.s32.totalorder %s21, 0
      %p311 = por %p309, %p310
      %p312 = scmp.ne.s32.totalorder %s304, %s306
      %p313 = scmp.eq.s32.totalorder %s26, 1
      %p314 = por %p312, %p313
      %p315 = scmp.ne.s32.totalorder %s306, %s307
      %p316 = scmp.eq.s32.totalorder %s26, 0
      %p317 = por %p315, %p316
      %p318 = scmp.ne.s32.totalorder %s306, %s307
      %p319 = scmp.eq.s32.totalorder %s27, 1
      %p320 = por %p318, %p319
      %p322 = scmp.ne.s32.totalorder %s307, %s321
      %p323 = scmp.eq.s32.totalorder %s27, 0
      %p324 = por %p322, %p323
      %s326 = sadd.s32 %s325, 1
      %p329 = scmp.eq.s32.totalorder %s21, 1
      %p330 = scmp.ne.s32.totalorder %s325, %s327
      %p331 = scmp.eq.s32.totalorder %s21, 0
      %p332 = por %p330, %p331
      %p333 = scmp.ne.s32.totalorder %s325, %s327
      %p334 = scmp.eq.s32.totalorder %s26, 1
      %p335 = por %p333, %p334
      %p336 = scmp.ne.s32.totalorder %s327, %s328
      %p337 = scmp.eq.s32.totalorder %s26, 0
      %p338 = por %p336, %p337
      %p339 = scmp.ne.s32.totalorder %s327, %s328
      %p340 = scmp.eq.s32.totalorder %s27, 1
      %p341 = por %p339, %p340
      %p343 = scmp.ne.s32.totalorder %s328, %s342
      %p344 = scmp.eq.s32.totalorder %s27, 0
      %p345 = por %p343, %p344
      %s347 = sadd.s32 %s346, 1
      %p350 = scmp.eq.s32.totalorder %s21, 1
      %p351 = scmp.ne.s32.totalorder %s346, %s348
      %p352 = scmp.eq.s32.totalorder %s21, 0
      %p353 = por %p351, %p352
      %p354 = scmp.ne.s32.totalorder %s346, %s348
      %p355 = scmp.eq.s32.totalorder %s26, 1
      %p356 = por %p354, %p355
      %p357 = scmp.ne.s32.totalorder %s348, %s349
      %p358 = scmp.eq.s32.totalorder %s26, 0
      %p359 = por %p357, %p358
      %p360 = scmp.ne.s32.totalorder %s348, %s349
      %p361 = scmp.eq.s32.totalorder %s27, 1
      %p362 = por %p360, %p361
      %p364 = scmp.ne.s32.totalorder %s349, %s363
      %p365 = scmp.eq.s32.totalorder %s27, 0
      %p366 = por %p364, %p365
      %s368 = sadd.s32 %s367, 1
      %p371 = scmp.eq.s32.totalorder %s21, 1
      %p372 = scmp.ne.s32.totalorder %s367, %s369
      %p373 = scmp.eq.s32.totalorder %s21, 0
      %p374 = por %p372, %p373
      %p375 = scmp.ne.s32.totalorder %s367, %s369
      %p376 = scmp.eq.s32.totalorder %s26, 1
      %p377 = por %p375, %p376
      %p378 = scmp.ne.s32.totalorder %s369, %s370
      %p379 = scmp.eq.s32.totalorder %s26, 0
      %p380 = por %p378, %p379
      %p381 = scmp.ne.s32.totalorder %s369, %s370
      %p382 = scmp.eq.s32.totalorder %s27, 1
      %p383 = por %p381, %p382
      %p385 = scmp.ne.s32.totalorder %s370, %s384
      %p386 = scmp.eq.s32.totalorder %s27, 0
      %p387 = por %p385, %p386
      %s388 = ssub.s32 %s28, %s40
      %s389 = ssub.s32 %s29, %s36
      %s390 = sor.u32 %s388, %s389
      %p391 = scmp.eq.s32.totalorder %s390, 0
      %s393 = sadd.s32 %s392, 1
      %s394 = scalar_select %p391, %s392, %s393
      %p397 = pneg %p391
      %p398 = scmp.eq.s32.totalorder %s21, 1
      %p399 = por %p397, %p398
      %p400 = scmp.ne.s32.totalorder %s392, %s395
      %p401 = scmp.eq.s32.totalorder %s21, 0
      %p402 = por %p400, %p401
      %p403 = scmp.ne.s32.totalorder %s392, %s395
      %p404 = scmp.eq.s32.totalorder %s26, 1
      %p405 = por %p403, %p404
      %p406 = scmp.ne.s32.totalorder %s395, %s396
      %p407 = scmp.eq.s32.totalorder %s26, 0
      %p408 = por %p406, %p407
      %p409 = scmp.ne.s32.totalorder %s395, %s396
      %p410 = scmp.eq.s32.totalorder %s27, 1
      %p411 = por %p409, %p410
      %p413 = scmp.ne.s32.totalorder %s396, %s412
      %p414 = scmp.eq.s32.totalorder %s27, 0
      %p415 = por %p413, %p414
      %p416 = scmp.le.s32.totalorder 1, %s21
      %p417 = scmp.lt.s32.totalorder %s21, 3
      %p418 = pnand %p416, %p417
      %p419 = pneg %p418
      // Predicated region
      $region9: #{up_conv_forward.1} parent=5 // pred_check
        _
      $region10: #{up_conv_forward.1} parent=5 // pred_check_branch
        %421 = sbr.rel (%p418) target = $region12
      $region11: #{up_conv_forward.1} parent=5 // pred_region
        %s422 = ssub.s32 %s21, 1
        // Predicated region
        $region13: #{up_conv_forward.1} parent=11 // pred_check
          %p423 = pneg %p254
        $region14: #{up_conv_forward.1} parent=11 // pred_check_branch
          %425 = sbr.rel (%p423) target = $region16
        $region15: #{up_conv_forward.1} parent=11 // pred_region
          %s427 = ssub.s32 4096, 4096
          %428 = vsyncadd [#allocation3], %s427
          %s429 = sshll.u32 [#allocation2], 4
          %s430 = int_to_ptr.vmem [resolvable:$true] %s429
          %435 = dma.hbm_to_vmem [thread:$0]  %s6, 4096, %s430, [#allocation3], 128, 128, 8
        $region16: #{up_conv_forward.1} parent=11 // pred_fallthru
          _
        // Predicated region
        $region17: #{up_conv_forward.1} parent=11 // pred_check
          %p436 = pneg %p275
        $region18: #{up_conv_forward.1} parent=11 // pred_check_branch
          %438 = sbr.rel (%p436) target = $region20
        $region19: #{up_conv_forward.1} parent=11 // pred_region
          _
        $region20: #{up_conv_forward.1} parent=11 // pred_fallthru
          _
        // Predicated region
        $region21: #{up_conv_forward.1} parent=11 // pred_check
          %p439 = pneg %p296
        $region22: #{up_conv_forward.1} parent=11 // pred_check_branch
          %441 = sbr.rel (%p439) target = $region24
        $region23: #{up_conv_forward.1} parent=11 // pred_region
          _
        $region24: #{up_conv_forward.1} parent=11 // pred_fallthru
          _
        // Predicated region
        $region25: #{up_conv_forward.1} parent=11 // pred_check
          %p442 = pneg %p317
        $region26: #{up_conv_forward.1} parent=11 // pred_check_branch
          %444 = sbr.rel (%p442) target = $region28
        $region27: #{up_conv_forward.1} parent=11 // pred_region
          _
        $region28: #{up_conv_forward.1} parent=11 // pred_fallthru
          _
        // Predicated region
        $region29: #{up_conv_forward.1} parent=11 // pred_check
          %p445 = pneg %p338
        $region30: #{up_conv_forward.1} parent=11 // pred_check_branch
          %447 = sbr.rel (%p445) target = $region32
        $region31: #{up_conv_forward.1} parent=11 // pred_region
          _
        $region32: #{up_conv_forward.1} parent=11 // pred_fallthru
          _
        // Predicated region
        $region33: #{up_conv_forward.1} parent=11 // pred_check
          %p448 = pneg %p359
        $region34: #{up_conv_forward.1} parent=11 // pred_check_branch
          %450 = sbr.rel (%p448) target = $region36
        $region35: #{up_conv_forward.1} parent=11 // pred_region
          %s452 = ssub.s32 9216, 9216
          %453 = vsyncadd [#allocation5], %s452
          %s454 = sshll.u32 [#allocation4], 4
          %s455 = int_to_ptr.vmem [resolvable:$true] %s454
          %460 = dma.hbm_to_vmem [thread:$0]  %s11, 9216, %s455, [#allocation5], 64, 64, 4
        $region36: #{up_conv_forward.1} parent=11 // pred_fallthru
          _
        // Predicated region
        $region37: #{up_conv_forward.1} parent=11 // pred_check
          %p461 = pneg %p380
        $region38: #{up_conv_forward.1} parent=11 // pred_check_branch
          %463 = sbr.rel (%p461) target = $region40
        $region39: #{up_conv_forward.1} parent=11 // pred_region
          _
        $region40: #{up_conv_forward.1} parent=11 // pred_fallthru
          _
      $region12: #{up_conv_forward.1} parent=5 // pred_fallthru
        _
      %p464 = scmp.lt.s32.totalorder %s21, 2
      // Predicated region
      $region41: #{up_conv_forward.1} parent=5 // pred_check
        %p465 = pneg %p464
      $region42: #{up_conv_forward.1} parent=5 // pred_check_branch
        %467 = sbr.rel (%p465) target = $region44
      $region43: #{up_conv_forward.1} parent=5 // pred_region
        // Predicated region
        $region45: #{up_conv_forward.1} parent=43 // pred_check
          %p468 = pneg %p63
        $region46: #{up_conv_forward.1} parent=43 // pred_check_branch
          %470 = sbr.rel (%p468) target = $region48
        $region47: #{up_conv_forward.1} parent=43 // pred_region
          %s471 = smul.u32 %s29, 8
          %s472 = ssub.s32 %s471, 1
          %p473 = scmp.gt.s32.totalorder %s472, 0
          %s474 = scalar_select %p473, %s472, 0
          %p475 = scmp.lt.s32.totalorder %s28, 1
          %s476 = scalar_select %p475, %s28, 1
          %p477 = scmp.lt.s32.totalorder %s474, 7
          %s478 = scalar_select %p477, %s474, 7
          %s479 = smul.addr %s476, 8
          %s480 = sadd.s32 %s478, %s479
          %s481 = smul.addr %s480, 4
          %s482 = scalar_lea.vmem %s0, %s481
          %s483 = smul.u32 %s29, 8
          %s484 = ssub.s32 %s483, 1
          %p485 = scmp.gt.s32.totalorder %s484, 0
          %s486 = scalar_select %p485, %s484, 0
        $region48: #{up_conv_forward.1} parent=43 // pred_fallthru
          _
        // Predicated region
        $region49: #{up_conv_forward.1} parent=43 // pred_check
          %p487 = pneg %p91
        $region50: #{up_conv_forward.1} parent=43 // pred_check_branch
          %489 = sbr.rel (%p487) target = $region52
        $region51: #{up_conv_forward.1} parent=43 // pred_region
          %s490 = smul.u32 8, %s29
          %p491 = scmp.lt.s32.totalorder %s28, 1
          %s492 = scalar_select %p491, %s28, 1
          %p493 = scmp.lt.s32.totalorder %s490, 7
          %s494 = scalar_select %p493, %s490, 7
          %s495 = smul.addr %s492, 8
          %s496 = sadd.s32 %s494, %s495
          %s497 = smul.addr %s496, 4
          %s498 = scalar_lea.vmem %s1, %s497
          %s499 = smul.u32 8, %s29
        $region52: #{up_conv_forward.1} parent=43 // pred_fallthru
          _
        // Predicated region
        $region53: #{up_conv_forward.1} parent=43 // pred_check
          %p500 = pneg %p127
        $region54: #{up_conv_forward.1} parent=43 // pred_check_branch
          %502 = sbr.rel (%p500) target = $region56
        $region55: #{up_conv_forward.1} parent=43 // pred_region
          %s503 = smul.u32 %s29, 8
          %s504 = sadd.s32 %s503, 8
          %p505 = scmp.lt.s32.totalorder %s504, 7
          %s506 = scalar_select %p505, %s504, 7
          %p507 = scmp.lt.s32.totalorder %s28, 1
          %s508 = scalar_select %p507, %s28, 1
          %p509 = scmp.lt.s32.totalorder %s506, 7
          %s510 = scalar_select %p509, %s506, 7
          %s511 = smul.addr %s508, 8
          %s512 = sadd.s32 %s510, %s511
          %s513 = smul.addr %s512, 4
          %s514 = scalar_lea.vmem %s2, %s513
          %s515 = smul.u32 %s29, 8
          %s516 = sadd.s32 %s515, 8
          %p517 = scmp.lt.s32.totalorder %s516, 7
          %s518 = scalar_select %p517, %s516, 7
        $region56: #{up_conv_forward.1} parent=43 // pred_fallthru
          _
        // Predicated region
        $region57: #{up_conv_forward.1} parent=43 // pred_check
          %p519 = pneg %p163
        $region58: #{up_conv_forward.1} parent=43 // pred_check_branch
          %521 = sbr.rel (%p519) target = $region60
        $region59: #{up_conv_forward.1} parent=43 // pred_region
          %s522 = smul.u32 %s29, 8
          %s523 = ssub.s32 %s522, 1
          %p524 = scmp.gt.s32.totalorder %s523, 0
          %s525 = scalar_select %p524, %s523, 0
          %s526 = smul.u32 2, %s525
          %p527 = scmp.lt.s32.totalorder %s28, 1
          %s528 = scalar_select %p527, %s28, 1
          %p529 = scmp.lt.s32.totalorder %s526, 15
          %s530 = scalar_select %p529, %s526, 15
          %s531 = smul.addr %s530, 2
          %s532 = smul.addr %s528, 32
          %s533 = sadd.s32 %s531, %s532
          %s534 = smul.addr %s533, 4
          %s535 = scalar_lea.vmem %s3, %s534
          %s536 = smul.u32 %s29, 8
          %s537 = ssub.s32 %s536, 1
          %p538 = scmp.gt.s32.totalorder %s537, 0
          %s539 = scalar_select %p538, %s537, 0
          %s540 = smul.u32 2, %s539
        $region60: #{up_conv_forward.1} parent=43 // pred_fallthru
          _
        // Predicated region
        $region61: #{up_conv_forward.1} parent=43 // pred_check
          %p541 = pneg %p191
        $region62: #{up_conv_forward.1} parent=43 // pred_check_branch
          %543 = sbr.rel (%p541) target = $region64
        $region63: #{up_conv_forward.1} parent=43 // pred_region
          %s544 = smul.u32 16, %s29
          %p545 = scmp.lt.s32.totalorder %s28, 1
          %s546 = scalar_select %p545, %s28, 1
          %p547 = scmp.lt.s32.totalorder %s544, 15
          %s548 = scalar_select %p547, %s544, 15
          %s549 = smul.addr %s548, 2
          %s550 = smul.addr %s546, 32
          %s551 = sadd.s32 %s549, %s550
          %s552 = smul.addr %s551, 4
          %s553 = scalar_lea.vmem %s4, %s552
          %s554 = smul.u32 16, %s29
        $region64: #{up_conv_forward.1} parent=43 // pred_fallthru
          _
        // Predicated region
        $region65: #{up_conv_forward.1} parent=43 // pred_check
          %p555 = pneg %p227
        $region66: #{up_conv_forward.1} parent=43 // pred_check_branch
          %557 = sbr.rel (%p555) target = $region68
        $region67: #{up_conv_forward.1} parent=43 // pred_region
          %s558 = smul.u32 %s29, 8
          %s559 = sadd.s32 %s558, 8
          %p560 = scmp.lt.s32.totalorder %s559, 7
          %s561 = scalar_select %p560, %s559, 7
          %s562 = smul.u32 2, %s561
          %p563 = scmp.lt.s32.totalorder %s28, 1
          %s564 = scalar_select %p563, %s28, 1
          %p565 = scmp.lt.s32.totalorder %s562, 15
          %s566 = scalar_select %p565, %s562, 15
          %s567 = smul.addr %s566, 2
          %s568 = smul.addr %s564, 32
          %s569 = sadd.s32 %s567, %s568
          %s570 = smul.addr %s569, 4
          %s571 = scalar_lea.vmem %s5, %s570
          %s572 = smul.u32 %s29, 8
          %s573 = sadd.s32 %s572, 8
          %p574 = scmp.lt.s32.totalorder %s573, 7
          %s575 = scalar_select %p574, %s573, 7
          %s576 = smul.u32 2, %s575
        $region68: #{up_conv_forward.1} parent=43 // pred_fallthru
          _
      $region44: #{up_conv_forward.1} parent=5 // pred_fallthru
        _
      %p577 = scmp.le.s32.totalorder 1, %s21
      %p578 = scmp.lt.s32.totalorder %s21, 3
      %p579 = pnand %p577, %p578
      %p580 = pneg %p579
      // Predicated region
      $region69: #{up_conv_forward.1} parent=5 // pred_check
        _
      $region70: #{up_conv_forward.1} parent=5 // pred_check_branch
        %582 = sbr.rel (%p579) target = $region72
      $region71: #{up_conv_forward.1} parent=5 // pred_region
        %s583 = ssub.s32 %s21, 1
        // Predicated region
        $region73: #{up_conv_forward.1} parent=71 // pred_check
          %p584 = pneg %p254
        $region74: #{up_conv_forward.1} parent=71 // pred_check_branch
          %586 = sbr.rel (%p584) target = $region76
        $region75: #{up_conv_forward.1} parent=71 // pred_region
          %587 = dma.done [#allocation3], 4096
        $region76: #{up_conv_forward.1} parent=71 // pred_fallthru
          _
        // Predicated region
        $region77: #{up_conv_forward.1} parent=71 // pred_check
          %p588 = pneg %p359
        $region78: #{up_conv_forward.1} parent=71 // pred_check_branch
          %590 = sbr.rel (%p588) target = $region80
        $region79: #{up_conv_forward.1} parent=71 // pred_region
          %591 = dma.done [#allocation5], 9216
        $region80: #{up_conv_forward.1} parent=71 // pred_fallthru
          _
        %s592 = smul.u32 %s31, 8
        %s593 = ssub.s32 %s592, 1
        %p594 = scmp.gt.s32.totalorder %s593, 0
        %s595 = scalar_select %p594, %s593, 0
        %p596 = scmp.lt.s32.totalorder %s30, 1
        %s597 = scalar_select %p596, %s30, 1
        %p598 = scmp.lt.s32.totalorder %s595, 7
        %s599 = scalar_select %p598, %s595, 7
        %s600 = smul.addr %s597, 8
        %s601 = sadd.s32 %s599, %s600
        %s602 = smul.addr %s601, 4
        %s603 = scalar_lea.vmem %s0, %s602
        %p604 = pneg %p69
        %p605 = pneg %p66
        %s606 = smul.u32 8, %s31
        %p607 = scmp.lt.s32.totalorder %s30, 1
        %s608 = scalar_select %p607, %s30, 1
        %p609 = scmp.lt.s32.totalorder %s606, 7
        %s610 = scalar_select %p609, %s606, 7
        %s611 = smul.addr %s608, 8
        %s612 = sadd.s32 %s610, %s611
        %s613 = smul.addr %s612, 4
        %s614 = scalar_lea.vmem %s1, %s613
        %p615 = pneg %p97
        %p616 = pneg %p94
        %s617 = smul.u32 %s31, 8
        %s618 = sadd.s32 %s617, 8
        %p619 = scmp.lt.s32.totalorder %s618, 7
        %s620 = scalar_select %p619, %s618, 7
        %p621 = scmp.lt.s32.totalorder %s30, 1
        %s622 = scalar_select %p621, %s30, 1
        %p623 = scmp.lt.s32.totalorder %s620, 7
        %s624 = scalar_select %p623, %s620, 7
        %s625 = smul.addr %s622, 8
        %s626 = sadd.s32 %s624, %s625
        %s627 = smul.addr %s626, 4
        %s628 = scalar_lea.vmem %s2, %s627
        %p629 = pneg %p133
        %p630 = pneg %p130
        %s631 = smul.u32 %s31, 8
        %s632 = ssub.s32 %s631, 1
        %p633 = scmp.gt.s32.totalorder %s632, 0
        %s634 = scalar_select %p633, %s632, 0
        %s635 = smul.u32 2, %s634
        %p636 = scmp.lt.s32.totalorder %s30, 1
        %s637 = scalar_select %p636, %s30, 1
        %p638 = scmp.lt.s32.totalorder %s635, 15
        %s639 = scalar_select %p638, %s635, 15
        %s640 = smul.addr %s639, 2
        %s641 = smul.addr %s637, 32
        %s642 = sadd.s32 %s640, %s641
        %s643 = smul.addr %s642, 4
        %s644 = scalar_lea.vmem %s3, %s643
        %p645 = pneg %p169
        %p646 = pneg %p166
        %s647 = smul.u32 16, %s31
        %p648 = scmp.lt.s32.totalorder %s30, 1
        %s649 = scalar_select %p648, %s30, 1
        %p650 = scmp.lt.s32.totalorder %s647, 15
        %s651 = scalar_select %p650, %s647, 15
        %s652 = smul.addr %s651, 2
        %s653 = smul.addr %s649, 32
        %s654 = sadd.s32 %s652, %s653
        %s655 = smul.addr %s654, 4
        %s656 = scalar_lea.vmem %s4, %s655
        %p657 = pneg %p197
        %p658 = pneg %p194
        %s659 = smul.u32 %s31, 8
        %s660 = sadd.s32 %s659, 8
        %p661 = scmp.lt.s32.totalorder %s660, 7
        %s662 = scalar_select %p661, %s660, 7
        %s663 = smul.u32 2, %s662
        %p664 = scmp.lt.s32.totalorder %s30, 1
        %s665 = scalar_select %p664, %s30, 1
        %p666 = scmp.lt.s32.totalorder %s663, 15
        %s667 = scalar_select %p666, %s663, 15
        %s668 = smul.addr %s667, 2
        %s669 = smul.addr %s665, 32
        %s670 = sadd.s32 %s668, %s669
        %s671 = smul.addr %s670, 4
        %s672 = scalar_lea.vmem %s5, %s671
        %p673 = pneg %p233
        %p674 = pneg %p230
        %p675 = pneg %p254
        %p676 = pneg %p251
        %p677 = pneg %p275
        %p678 = pneg %p272
        %p679 = pneg %p296
        %p680 = pneg %p293
        %p681 = pneg %p317
        %p682 = pneg %p314
        %p683 = pneg %p338
        %p684 = pneg %p335
        %p685 = pneg %p359
        %p686 = pneg %p356
        %p687 = pneg %p380
        %p688 = pneg %p377
        %p689 = pneg %p408
        %p690 = pneg %p405
        %s691 = smul.u32 16, %s31
        %p692 = scmp.lt.s32.totalorder %s30, 1
        %s693 = scalar_select %p692, %s30, 1
        %p694 = scmp.lt.s32.totalorder %s691, 15
        %s695 = scalar_select %p694, %s691, 15
        %s696 = smul.addr %s695, 2
        %s697 = smul.addr %s693, 32
        %s698 = sadd.s32 %s696, %s697
        %s699 = smul.addr %s698, 4
        %s700 = scalar_lea.vmem %s13, %s699
        %s701 = smul.u32 %s31, 8
        %s702 = ssub.s32 %s701, 1
        %p703 = scmp.gt.s32.totalorder %s702, 0
        %s704 = scalar_select %p703, %s702, 0
        %p705 = scmp.lt.s32.totalorder %s30, 1
        %s706 = scalar_select %p705, %s30, 1
        %p707 = scmp.lt.s32.totalorder %s704, 7
        %s708 = scalar_select %p707, %s704, 7
        %s709 = smul.addr %s706, 8
        %s710 = sadd.s32 %s708, %s709
        %s711 = smul.addr %s710, 4
        %s712 = scalar_lea.vmem %s0, %s711
        %s713 = smul.u32 %s31, 8
        %s714 = ssub.s32 %s713, 1
        %p715 = scmp.gt.s32.totalorder %s714, 0
        %s716 = scalar_select %p715, %s714, 0
        %s717 = smul.u32 8, %s31
        %p718 = scmp.lt.s32.totalorder %s30, 1
        %s719 = scalar_select %p718, %s30, 1
        %p720 = scmp.lt.s32.totalorder %s717, 7
        %s721 = scalar_select %p720, %s717, 7
        %s722 = smul.addr %s719, 8
        %s723 = sadd.s32 %s721, %s722
        %s724 = smul.addr %s723, 4
        %s725 = scalar_lea.vmem %s1, %s724
        %s726 = smul.u32 8, %s31
        %s727 = smul.u32 %s31, 8
        %s728 = sadd.s32 %s727, 8
        %p729 = scmp.lt.s32.totalorder %s728, 7
        %s730 = scalar_select %p729, %s728, 7
        %p731 = scmp.lt.s32.totalorder %s30, 1
        %s732 = scalar_select %p731, %s30, 1
        %p733 = scmp.lt.s32.totalorder %s730, 7
        %s734 = scalar_select %p733, %s730, 7
        %s735 = smul.addr %s732, 8
        %s736 = sadd.s32 %s734, %s735
        %s737 = smul.addr %s736, 4
        %s738 = scalar_lea.vmem %s2, %s737
        %s739 = smul.u32 %s31, 8
        %s740 = sadd.s32 %s739, 8
        %p741 = scmp.lt.s32.totalorder %s740, 7
        %s742 = scalar_select %p741, %s740, 7
        %s743 = smul.u32 %s31, 8
        %s744 = ssub.s32 %s743, 1
        %p745 = scmp.gt.s32.totalorder %s744, 0
        %s746 = scalar_select %p745, %s744, 0
        %s747 = smul.u32 2, %s746
        %p748 = scmp.lt.s32.totalorder %s30, 1
        %s749 = scalar_select %p748, %s30, 1
        %p750 = scmp.lt.s32.totalorder %s747, 15
        %s751 = scalar_select %p750, %s747, 15
        %s752 = smul.addr %s751, 2
        %s753 = smul.addr %s749, 32
        %s754 = sadd.s32 %s752, %s753
        %s755 = smul.addr %s754, 4
        %s756 = scalar_lea.vmem %s3, %s755
        %s757 = smul.u32 %s31, 8
        %s758 = ssub.s32 %s757, 1
        %p759 = scmp.gt.s32.totalorder %s758, 0
        %s760 = scalar_select %p759, %s758, 0
        %s761 = smul.u32 2, %s760
        %s762 = smul.u32 16, %s31
        %p763 = scmp.lt.s32.totalorder %s30, 1
        %s764 = scalar_select %p763, %s30, 1
        %p765 = scmp.lt.s32.totalorder %s762, 15
        %s766 = scalar_select %p765, %s762, 15
        %s767 = smul.addr %s766, 2
        %s768 = smul.addr %s764, 32
        %s769 = sadd.s32 %s767, %s768
        %s770 = smul.addr %s769, 4
        %s771 = scalar_lea.vmem %s4, %s770
        %s772 = smul.u32 16, %s31
        %s773 = smul.u32 %s31, 8
        %s774 = sadd.s32 %s773, 8
        %p775 = scmp.lt.s32.totalorder %s774, 7
        %s776 = scalar_select %p775, %s774, 7
        %s777 = smul.u32 2, %s776
        %p778 = scmp.lt.s32.totalorder %s30, 1
        %s779 = scalar_select %p778, %s30, 1
        %p780 = scmp.lt.s32.totalorder %s777, 15
        %s781 = scalar_select %p780, %s777, 15
        %s782 = smul.addr %s781, 2
        %s783 = smul.addr %s779, 32
        %s784 = sadd.s32 %s782, %s783
        %s785 = smul.addr %s784, 4
        %s786 = scalar_lea.vmem %s5, %s785
        %s787 = smul.u32 %s31, 8
        %s788 = sadd.s32 %s787, 8
        %p789 = scmp.lt.s32.totalorder %s788, 7
        %s790 = scalar_select %p789, %s788, 7
        %s791 = smul.u32 2, %s790
        %s792 = smul.u32 16, %s31
        %p793 = scmp.lt.s32.totalorder %s30, 1
        %s794 = scalar_select %p793, %s30, 1
        %p795 = scmp.lt.s32.totalorder %s792, 15
        %s796 = scalar_select %p795, %s792, 15
        %s797 = smul.addr %s796, 2
        %s798 = smul.addr %s794, 32
        %s799 = sadd.s32 %s797, %s798
        %s800 = smul.addr %s799, 4
        %s801 = scalar_lea.vmem %s13, %s800
        %s802 = smul.u32 16, %s31
        %p804 = scmp.eq.s32.totalorder %s31, 0
        %v805 = vld [vmem:[%s712] sm:$0xf]
        %v806 = vld [vmem:[%s725] sm:$0xf]
        %v807 = vld [vmem:[%s725 + $0x4] sm:$0xf]
        %v808 = vld [vmem:[%s725 + $0x8] sm:$0xf]
        %v809 = vld [vmem:[%s725 + $0xc] sm:$0xf]
        %v810 = vld [vmem:[%s725 + $0x10] sm:$0xf]
        %v811 = vld [vmem:[%s725 + $0x14] sm:$0xf]
        %v812 = vld [vmem:[%s725 + $0x18] sm:$0xf]
        %v813 = vld [vmem:[%s725 + $0x1c] sm:$0xf]
        %v814 = vld [vmem:[%s738] sm:$0xf]
        %v815 = vld [vmem:[#allocation2] sm:$0xff]
        %v816 = vld [vmem:[#allocation2 + $0x8] sm:$0xff]
        %v817 = vld [vmem:[#allocation2 + $0x10] sm:$0xff]
        %v818 = vld [vmem:[#allocation2 + $0x18] sm:$0xff]
        %v819 = vld [vmem:[#allocation2 + $0x20] sm:$0xff]
        %v820 = vld [vmem:[#allocation2 + $0x28] sm:$0xff]
        %v821 = vld [vmem:[#allocation2 + $0x30] sm:$0xff]
        %v822 = vld [vmem:[#allocation2 + $0x38] sm:$0xff]
        %v823 = vld [vmem:[#allocation2 + $0x40] sm:$0xff]
        %v824 = vld [vmem:[#allocation2 + $0x48] sm:$0xff]
        %v825 = vld [vmem:[#allocation2 + $0x50] sm:$0xff]
        %v826 = vld [vmem:[#allocation2 + $0x58] sm:$0xff]
        %v827 = vld [vmem:[#allocation2 + $0x60] sm:$0xff]
        %v828 = vld [vmem:[#allocation2 + $0x68] sm:$0xff]
        %v829 = vld [vmem:[#allocation2 + $0x70] sm:$0xff]
        %v830 = vld [vmem:[#allocation2 + $0x78] sm:$0xff]
        %v831 = vld [vmem:[%s7] sm:$0x3]
        %v833 = vlaneseq
        %v834 = vshrl.u32 %v833, 7
        %v835 = vsub.s32 0, %v834
        %v836 = vrot.slane %v831, %v835
        %v837 = vlaneseq
        %v838 = vshrl.u32 %v837, 7
        %v839 = vsub.s32 1, %v838
        %v840 = vrot.slane %v831, %v839
        %v853 = vunpack.c.l.b16 %v805
        %v854 = vunpack.c.l.b16 %v806
        %v855 = vunpack.c.l.b16 %v807
        %v856 = vunpack.c.l.b16 %v808
        %v857 = vunpack.c.l.b16 %v809
        %v858 = vunpack.c.l.b16 %v810
        %v859 = vunpack.c.l.b16 %v811
        %v860 = vunpack.c.l.b16 %v812
        %v861 = vunpack.c.l.b16 %v813
        %v862 = vunpack.c.l.b16 %v814
        %v863 = vpack.c.b16 %v854, %v853
        %v864 = vpack.c.b16 %v856, %v855
        %v865 = vpack.c.b16 %v858, %v857
        %v866 = vpack.c.b16 %v860, %v859
        %v867 = vpack.c.b16 %v862, %v861
        %v889 = vunpack.c.l.b16 %v815
        %v890 = vunpack.c.h.b16 %v815
        %v891 = vunpack.c.l.b16 %v816
        %v892 = vunpack.c.h.b16 %v816
        %v893 = vunpack.c.l.b16 %v817
        %v894 = vunpack.c.h.b16 %v817
        %v895 = vunpack.c.l.b16 %v818
        %v896 = vunpack.c.h.b16 %v818
        %v897 = vunpack.c.l.b16 %v819
        %v898 = vunpack.c.h.b16 %v819
        %v899 = vunpack.c.l.b16 %v820
        %v900 = vunpack.c.h.b16 %v820
        %v901 = vunpack.c.l.b16 %v821
        %v902 = vunpack.c.h.b16 %v821
        %v903 = vunpack.c.l.b16 %v822
        %v904 = vunpack.c.h.b16 %v822
        %v905 = vunpack.c.l.b16 %v823
        %v906 = vunpack.c.h.b16 %v823
        %v907 = vunpack.c.l.b16 %v824
        %v908 = vunpack.c.h.b16 %v824
        %v909 = vunpack.c.l.b16 %v825
        %v910 = vunpack.c.h.b16 %v825
        %v911 = vunpack.c.l.b16 %v826
        %v912 = vunpack.c.h.b16 %v826
        %v913 = vunpack.c.l.b16 %v827
        %v914 = vunpack.c.h.b16 %v827
        %v915 = vunpack.c.l.b16 %v828
        %v916 = vunpack.c.h.b16 %v828
        %v917 = vunpack.c.l.b16 %v829
        %v918 = vunpack.c.h.b16 %v829
        %v919 = vunpack.c.l.b16 %v830
        %v920 = vunpack.c.h.b16 %v830
        %v921 = vpack.c.b16 %v891, %v889
        %v922 = vpack.c.b16 %v892, %v890
        %v923 = vpack.c.b16 %v895, %v893
        %v924 = vpack.c.b16 %v896, %v894
        %v925 = vpack.c.b16 %v899, %v897
        %v926 = vpack.c.b16 %v900, %v898
        %v927 = vpack.c.b16 %v903, %v901
        %v928 = vpack.c.b16 %v904, %v902
        %v929 = vpack.c.b16 %v907, %v905
        %v930 = vpack.c.b16 %v908, %v906
        %v931 = vpack.c.b16 %v911, %v909
        %v932 = vpack.c.b16 %v912, %v910
        %v933 = vpack.c.b16 %v915, %v913
        %v934 = vpack.c.b16 %v916, %v914
        %v935 = vpack.c.b16 %v919, %v917
        %v936 = vpack.c.b16 %v920, %v918
        %953 = vmatprep.subr.bf16.mxu0 %v936
        %954 = vmatpush1.bf16.msra.mxu0 %v935
        %955 = vmatprep.subr.bf16.mxu0 %v934
        %956 = vmatpush1.bf16.msra.mxu0 %v933
        %957 = vmatprep.subr.bf16.mxu0 %v932
        %958 = vmatpush1.bf16.msra.mxu0 %v931
        %959 = vmatprep.subr.bf16.mxu0 %v930
        %960 = vmatpush1.bf16.msra.mxu0 %v929
        %961 = vmatprep.subr.bf16.mxu0 %v928
        %962 = vmatpush1.bf16.msra.mxu0 %v927
        %963 = vmatprep.subr.bf16.mxu0 %v926
        %964 = vmatpush1.bf16.msra.mxu0 %v925
        %965 = vmatprep.subr.bf16.mxu0 %v924
        %966 = vmatpush1.bf16.msra.mxu0 %v923
        %967 = vmatprep.subr.bf16.mxu0 %v922
        %968 = vmatpush1.bf16.msra.mxu0 %v921
        %969 = vmatprep.subr.bf16.mxu0 0
        %970 = vmatpush2.bf16.msra.mxu0 0
        %971 = vmatprep.subr.bf16.mxu0 0
        %972 = vmatpush2.bf16.msra.mxu0 0
        %973 = vmatprep.subr.bf16.mxu0 0
        %974 = vmatpush2.bf16.msra.mxu0 0
        %975 = vmatprep.subr.bf16.mxu0 0
        %976 = vmatpush2.bf16.msra.mxu0 0
        %977 = vmatprep.subr.bf16.mxu0 0
        %978 = vmatpush2.bf16.msra.mxu0 0
        %979 = vmatprep.subr.bf16.mxu0 0
        %980 = vmatpush2.bf16.msra.mxu0 0
        %981 = vmatprep.subr.bf16.mxu0 0
        %982 = vmatpush2.bf16.msra.mxu0 0
        %983 = vmatprep.subr.bf16.mxu0 0
        %984 = vmatpush2.bf16.msra.mxu0 0
        %985 = vmatprep.mubr.bf16.mxu0 0
        %986 = vmatmul.mubr.bf16.gmra.mxu0 %v863
        %v987 = vpop.f32.mrf.mxu0
        %v988 = vadd.f32 %v836, %v987
        %v989 = vpop.f32.mrf.mxu0
        %v990 = vadd.f32 %v840, %v989
        %v991 = vpop.f32.mrf.mxu0
        %v992 = vadd.f32 %v836, %v991
        %v993 = vpop.f32.mrf.mxu0
        %v994 = vadd.f32 %v840, %v993
        %995 = vmatprep.mubr.bf16.mxu0 0
        %996 = vmatmul.mubr.bf16.gmra.mxu0 %v864
        %v997 = vpop.f32.mrf.mxu0
        %v998 = vadd.f32 %v836, %v997
        %v999 = vpop.f32.mrf.mxu0
        %v1000 = vadd.f32 %v840, %v999
        %v1001 = vpop.f32.mrf.mxu0
        %v1002 = vadd.f32 %v836, %v1001
        %v1003 = vpop.f32.mrf.mxu0
        %v1004 = vadd.f32 %v840, %v1003
        %1005 = vmatprep.mubr.bf16.mxu0 0
        %1006 = vmatmul.mubr.bf16.gmra.mxu0 %v865
        %v1007 = vpop.f32.mrf.mxu0
        %v1008 = vadd.f32 %v836, %v1007
        %v1009 = vpop.f32.mrf.mxu0
        %v1010 = vadd.f32 %v840, %v1009
        %v1011 = vpop.f32.mrf.mxu0
        %v1012 = vadd.f32 %v836, %v1011
        %v1013 = vpop.f32.mrf.mxu0
        %v1014 = vadd.f32 %v840, %v1013
        %1015 = vmatprep.mubr.bf16.mxu0 0
        %1016 = vmatmul.mubr.bf16.gmra.mxu0 %v866
        %v1017 = vpop.f32.mrf.mxu0
        %v1018 = vadd.f32 %v836, %v1017
        %v1019 = vpop.f32.mrf.mxu0
        %v1020 = vadd.f32 %v840, %v1019
        %v1021 = vpop.f32.mrf.mxu0
        %v1022 = vadd.f32 %v836, %v1021
        %v1023 = vpop.f32.mrf.mxu0
        %v1024 = vadd.f32 %v840, %v1023
        %1025 = vmatprep.mubr.bf16.mxu0 0
        %1026 = vmatmul.mubr.bf16.gmra.mxu0 %v867
        %v1027 = vpop.f32.mrf.mxu0
        %v1028 = vadd.f32 %v836, %v1027
        %v1029 = vpop.f32.mrf.mxu0
        %v1030 = vadd.f32 %v840, %v1029
        %v1031 = vpop.f32.mrf.mxu0
        %v1032 = vadd.f32 %v836, %v1031
        %v1033 = vpop.f32.mrf.mxu0
        %v1034 = vadd.f32 %v840, %v1033
        %1035 = vdwg.mxu0
        %v1036 = vpack.c.bf16 %v992, %v988
        %v1037 = vpack.c.bf16 %v994, %v990
        %v1038 = vpack.c.bf16 %v1002, %v998
        %v1039 = vpack.c.bf16 %v1004, %v1000
        %v1040 = vpack.c.bf16 %v1012, %v1008
        %v1041 = vpack.c.bf16 %v1014, %v1010
        %v1042 = vpack.c.bf16 %v1022, %v1018
        %v1043 = vpack.c.bf16 %v1024, %v1020
        %v1044 = vpack.c.bf16 %v1032, %v1028
        %v1045 = vpack.c.bf16 %v1034, %v1030
        %s1046 = scalar_lea.vmem [#allocation2], 128
        %v1047 = vld [vmem:[%s1046] sm:$0xff]
        %v1048 = vld [vmem:[%s1046 + $0x8] sm:$0xff]
        %v1049 = vld [vmem:[%s1046 + $0x10] sm:$0xff]
        %v1050 = vld [vmem:[%s1046 + $0x18] sm:$0xff]
        %v1051 = vld [vmem:[%s1046 + $0x20] sm:$0xff]
        %v1052 = vld [vmem:[%s1046 + $0x28] sm:$0xff]
        %v1053 = vld [vmem:[%s1046 + $0x30] sm:$0xff]
        %v1054 = vld [vmem:[%s1046 + $0x38] sm:$0xff]
        %v1055 = vld [vmem:[%s1046 + $0x40] sm:$0xff]
        %v1056 = vld [vmem:[%s1046 + $0x48] sm:$0xff]
        %v1057 = vld [vmem:[%s1046 + $0x50] sm:$0xff]
        %v1058 = vld [vmem:[%s1046 + $0x58] sm:$0xff]
        %v1059 = vld [vmem:[%s1046 + $0x60] sm:$0xff]
        %v1060 = vld [vmem:[%s1046 + $0x68] sm:$0xff]
        %v1061 = vld [vmem:[%s1046 + $0x70] sm:$0xff]
        %v1062 = vld [vmem:[%s1046 + $0x78] sm:$0xff]
        %v1079 = vunpack.c.l.b16 %v1047
        %v1080 = vunpack.c.h.b16 %v1047
        %v1081 = vunpack.c.l.b16 %v1048
        %v1082 = vunpack.c.h.b16 %v1048
        %v1083 = vunpack.c.l.b16 %v1049
        %v1084 = vunpack.c.h.b16 %v1049
        %v1085 = vunpack.c.l.b16 %v1050
        %v1086 = vunpack.c.h.b16 %v1050
        %v1087 = vunpack.c.l.b16 %v1051
        %v1088 = vunpack.c.h.b16 %v1051
        %v1089 = vunpack.c.l.b16 %v1052
        %v1090 = vunpack.c.h.b16 %v1052
        %v1091 = vunpack.c.l.b16 %v1053
        %v1092 = vunpack.c.h.b16 %v1053
        %v1093 = vunpack.c.l.b16 %v1054
        %v1094 = vunpack.c.h.b16 %v1054
        %v1095 = vunpack.c.l.b16 %v1055
        %v1096 = vunpack.c.h.b16 %v1055
        %v1097 = vunpack.c.l.b16 %v1056
        %v1098 = vunpack.c.h.b16 %v1056
        %v1099 = vunpack.c.l.b16 %v1057
        %v1100 = vunpack.c.h.b16 %v1057
        %v1101 = vunpack.c.l.b16 %v1058
        %v1102 = vunpack.c.h.b16 %v1058
        %v1103 = vunpack.c.l.b16 %v1059
        %v1104 = vunpack.c.h.b16 %v1059
        %v1105 = vunpack.c.l.b16 %v1060
        %v1106 = vunpack.c.h.b16 %v1060
        %v1107 = vunpack.c.l.b16 %v1061
        %v1108 = vunpack.c.h.b16 %v1061
        %v1109 = vunpack.c.l.b16 %v1062
        %v1110 = vunpack.c.h.b16 %v1062
        %v1111 = vpack.c.b16 %v1081, %v1079
        %v1112 = vpack.c.b16 %v1082, %v1080
        %v1113 = vpack.c.b16 %v1085, %v1083
        %v1114 = vpack.c.b16 %v1086, %v1084
        %v1115 = vpack.c.b16 %v1089, %v1087
        %v1116 = vpack.c.b16 %v1090, %v1088
        %v1117 = vpack.c.b16 %v1093, %v1091
        %v1118 = vpack.c.b16 %v1094, %v1092
        %v1119 = vpack.c.b16 %v1097, %v1095
        %v1120 = vpack.c.b16 %v1098, %v1096
        %v1121 = vpack.c.b16 %v1101, %v1099
        %v1122 = vpack.c.b16 %v1102, %v1100
        %v1123 = vpack.c.b16 %v1105, %v1103
        %v1124 = vpack.c.b16 %v1106, %v1104
        %v1125 = vpack.c.b16 %v1109, %v1107
        %v1126 = vpack.c.b16 %v1110, %v1108
        %1143 = vmatprep.subr.bf16.mxu0 %v1126
        %1144 = vmatpush1.bf16.msra.mxu0 %v1125
        %1145 = vmatprep.subr.bf16.mxu0 %v1124
        %1146 = vmatpush1.bf16.msra.mxu0 %v1123
        %1147 = vmatprep.subr.bf16.mxu0 %v1122
        %1148 = vmatpush1.bf16.msra.mxu0 %v1121
        %1149 = vmatprep.subr.bf16.mxu0 %v1120
        %1150 = vmatpush1.bf16.msra.mxu0 %v1119
        %1151 = vmatprep.subr.bf16.mxu0 %v1118
        %1152 = vmatpush1.bf16.msra.mxu0 %v1117
        %1153 = vmatprep.subr.bf16.mxu0 %v1116
        %1154 = vmatpush1.bf16.msra.mxu0 %v1115
        %1155 = vmatprep.subr.bf16.mxu0 %v1114
        %1156 = vmatpush1.bf16.msra.mxu0 %v1113
        %1157 = vmatprep.subr.bf16.mxu0 %v1112
        %1158 = vmatpush1.bf16.msra.mxu0 %v1111
        %1159 = vmatprep.subr.bf16.mxu0 0
        %1160 = vmatpush2.bf16.msra.mxu0 0
        %1161 = vmatprep.subr.bf16.mxu0 0
        %1162 = vmatpush2.bf16.msra.mxu0 0
        %1163 = vmatprep.subr.bf16.mxu0 0
        %1164 = vmatpush2.bf16.msra.mxu0 0
        %1165 = vmatprep.subr.bf16.mxu0 0
        %1166 = vmatpush2.bf16.msra.mxu0 0
        %1167 = vmatprep.subr.bf16.mxu0 0
        %1168 = vmatpush2.bf16.msra.mxu0 0
        %1169 = vmatprep.subr.bf16.mxu0 0
        %1170 = vmatpush2.bf16.msra.mxu0 0
        %1171 = vmatprep.subr.bf16.mxu0 0
        %1172 = vmatpush2.bf16.msra.mxu0 0
        %1173 = vmatprep.subr.bf16.mxu0 0
        %1174 = vmatpush2.bf16.msra.mxu0 0
        %1175 = vmatprep.mubr.bf16.mxu0 0
        %1176 = vmatmul.mubr.bf16.gmra.mxu0 %v863
        %v1177 = vpop.f32.mrf.mxu0
        %v1178 = vadd.f32 %v836, %v1177
        %v1179 = vpop.f32.mrf.mxu0
        %v1180 = vadd.f32 %v840, %v1179
        %v1181 = vpop.f32.mrf.mxu0
        %v1182 = vadd.f32 %v836, %v1181
        %v1183 = vpop.f32.mrf.mxu0
        %v1184 = vadd.f32 %v840, %v1183
        %1185 = vmatprep.mubr.bf16.mxu0 0
        %1186 = vmatmul.mubr.bf16.gmra.mxu0 %v864
        %v1187 = vpop.f32.mrf.mxu0
        %v1188 = vadd.f32 %v836, %v1187
        %v1189 = vpop.f32.mrf.mxu0
        %v1190 = vadd.f32 %v840, %v1189
        %v1191 = vpop.f32.mrf.mxu0
        %v1192 = vadd.f32 %v836, %v1191
        %v1193 = vpop.f32.mrf.mxu0
        %v1194 = vadd.f32 %v840, %v1193
        %1195 = vmatprep.mubr.bf16.mxu0 0
        %1196 = vmatmul.mubr.bf16.gmra.mxu0 %v865
        %v1197 = vpop.f32.mrf.mxu0
        %v1198 = vadd.f32 %v836, %v1197
        %v1199 = vpop.f32.mrf.mxu0
        %v1200 = vadd.f32 %v840, %v1199
        %v1201 = vpop.f32.mrf.mxu0
        %v1202 = vadd.f32 %v836, %v1201
        %v1203 = vpop.f32.mrf.mxu0
        %v1204 = vadd.f32 %v840, %v1203
        %1205 = vmatprep.mubr.bf16.mxu0 0
        %1206 = vmatmul.mubr.bf16.gmra.mxu0 %v866
        %v1207 = vpop.f32.mrf.mxu0
        %v1208 = vadd.f32 %v836, %v1207
        %v1209 = vpop.f32.mrf.mxu0
        %v1210 = vadd.f32 %v840, %v1209
        %v1211 = vpop.f32.mrf.mxu0
        %v1212 = vadd.f32 %v836, %v1211
        %v1213 = vpop.f32.mrf.mxu0
        %v1214 = vadd.f32 %v840, %v1213
        %1215 = vmatprep.mubr.bf16.mxu0 0
        %1216 = vmatmul.mubr.bf16.gmra.mxu0 %v867
        %v1217 = vpop.f32.mrf.mxu0
        %v1218 = vadd.f32 %v836, %v1217
        %v1219 = vpop.f32.mrf.mxu0
        %v1220 = vadd.f32 %v840, %v1219
        %v1221 = vpop.f32.mrf.mxu0
        %v1222 = vadd.f32 %v836, %v1221
        %v1223 = vpop.f32.mrf.mxu0
        %v1224 = vadd.f32 %v840, %v1223
        %1225 = vdwg.mxu0
        %v1226 = vpack.c.bf16 %v1182, %v1178
        %v1227 = vpack.c.bf16 %v1184, %v1180
        %v1228 = vpack.c.bf16 %v1192, %v1188
        %v1229 = vpack.c.bf16 %v1194, %v1190
        %v1230 = vpack.c.bf16 %v1202, %v1198
        %v1231 = vpack.c.bf16 %v1204, %v1200
        %v1232 = vpack.c.bf16 %v1212, %v1208
        %v1233 = vpack.c.bf16 %v1214, %v1210
        %v1234 = vpack.c.bf16 %v1222, %v1218
        %v1235 = vpack.c.bf16 %v1224, %v1220
        %v1246 = vunpack.c.l.b16 %v1036
        %v1247 = vunpack.c.l.b16 %v1037
        %v1248 = vunpack.c.h.b16 %v1036
        %v1249 = vunpack.c.h.b16 %v1037
        %v1250 = vunpack.c.l.b16 %v1038
        %v1251 = vunpack.c.l.b16 %v1039
        %v1252 = vunpack.c.h.b16 %v1038
        %v1253 = vunpack.c.h.b16 %v1039
        %v1254 = vunpack.c.l.b16 %v1040
        %v1255 = vunpack.c.l.b16 %v1041
        %v1256 = vunpack.c.h.b16 %v1040
        %v1257 = vunpack.c.h.b16 %v1041
        %v1258 = vunpack.c.l.b16 %v1042
        %v1259 = vunpack.c.l.b16 %v1043
        %v1260 = vunpack.c.h.b16 %v1042
        %v1261 = vunpack.c.h.b16 %v1043
        %v1262 = vunpack.c.l.b16 %v1044
        %v1263 = vunpack.c.l.b16 %v1045
        %v1264 = vunpack.c.h.b16 %v1044
        %v1265 = vunpack.c.h.b16 %v1045
        %v1266 = vpack.i.b16 %v1247, %v1246
        %v1268 = vpack.i.b16 %v1249, %v1248
        %v1270 = vpack.i.b16 %v1251, %v1250
        %v1272 = vpack.i.b16 %v1253, %v1252
        %v1274 = vpack.i.b16 %v1255, %v1254
        %v1276 = vpack.i.b16 %v1257, %v1256
        %v1278 = vpack.i.b16 %v1259, %v1258
        %v1280 = vpack.i.b16 %v1261, %v1260
        %v1282 = vpack.i.b16 %v1263, %v1262
        %v1284 = vpack.i.b16 %v1265, %v1264
        %v1296 = vunpack.c.l.b16 %v1226
        %v1297 = vunpack.c.l.b16 %v1227
        %v1298 = vunpack.c.h.b16 %v1226
        %v1299 = vunpack.c.h.b16 %v1227
        %v1300 = vunpack.c.l.b16 %v1228
        %v1301 = vunpack.c.l.b16 %v1229
        %v1302 = vunpack.c.h.b16 %v1228
        %v1303 = vunpack.c.h.b16 %v1229
        %v1304 = vunpack.c.l.b16 %v1230
        %v1305 = vunpack.c.l.b16 %v1231
        %v1306 = vunpack.c.h.b16 %v1230
        %v1307 = vunpack.c.h.b16 %v1231
        %v1308 = vunpack.c.l.b16 %v1232
        %v1309 = vunpack.c.l.b16 %v1233
        %v1310 = vunpack.c.h.b16 %v1232
        %v1311 = vunpack.c.h.b16 %v1233
        %v1312 = vunpack.c.l.b16 %v1234
        %v1313 = vunpack.c.l.b16 %v1235
        %v1314 = vunpack.c.h.b16 %v1234
        %v1315 = vunpack.c.h.b16 %v1235
        %v1316 = vpack.i.b16 %v1297, %v1296
        %v1318 = vpack.i.b16 %v1299, %v1298
        %v1320 = vpack.i.b16 %v1301, %v1300
        %v1322 = vpack.i.b16 %v1303, %v1302
        %v1324 = vpack.i.b16 %v1305, %v1304
        %v1326 = vpack.i.b16 %v1307, %v1306
        %v1328 = vpack.i.b16 %v1309, %v1308
        %v1330 = vpack.i.b16 %v1311, %v1310
        %v1332 = vpack.i.b16 %v1313, %v1312
        %v1334 = vpack.i.b16 %v1315, %v1314
        %s1336 = scalar_select %p804, 1, 0
        %v1337 = vstv %s1336
        %vm1338 = vcmp.eq.s32.totalorder %v1337, 1
        %v1339 = vsel %vm1338, 0, %v1266
        %v1340 = vsel %vm1338, 0, %v1316
        %v1341 = vsel %vm1338, 0, %v1284
        %v1342 = vsel %vm1338, 0, %v1334
        %v1343 = vld [vmem:[%s756] sm:$0xf]
        %v1344 = vld [vmem:[%s756 + $0x4] sm:$0xf]
        %v1345 = vld [vmem:[%s756 + $0x8] sm:$0xf]
        %v1346 = vld [vmem:[%s756 + $0xc] sm:$0xf]
        %v1347 = vsel %vm1338, 0, %v1343
        %v1348 = vsel %vm1338, 0, %v1344
        %v1349 = vsel %vm1338, 0, %v1345
        %v1350 = vsel %vm1338, 0, %v1346
        %v1351 = vld [vmem:[%s771] sm:$0xf]
        %v1352 = vld [vmem:[%s771 + $0x4] sm:$0xf]
        %v1353 = vld [vmem:[%s771 + $0x8] sm:$0xf]
        %v1354 = vld [vmem:[%s771 + $0xc] sm:$0xf]
        %v1355 = vld [vmem:[%s771 + $0x10] sm:$0xf]
        %v1356 = vld [vmem:[%s771 + $0x14] sm:$0xf]
        %v1357 = vld [vmem:[%s771 + $0x18] sm:$0xf]
        %v1358 = vld [vmem:[%s771 + $0x1c] sm:$0xf]
        %v1359 = vld [vmem:[%s771 + $0x20] sm:$0xf]
        %v1360 = vld [vmem:[%s771 + $0x24] sm:$0xf]
        %v1361 = vld [vmem:[%s771 + $0x28] sm:$0xf]
        %v1362 = vld [vmem:[%s771 + $0x2c] sm:$0xf]
        %v1363 = vld [vmem:[%s771 + $0x30] sm:$0xf]
        %v1364 = vld [vmem:[%s771 + $0x34] sm:$0xf]
        %v1365 = vld [vmem:[%s771 + $0x38] sm:$0xf]
        %v1366 = vld [vmem:[%s771 + $0x3c] sm:$0xf]
        %v1367 = vld [vmem:[%s771 + $0x40] sm:$0xf]
        %v1368 = vld [vmem:[%s771 + $0x44] sm:$0xf]
        %v1369 = vld [vmem:[%s771 + $0x48] sm:$0xf]
        %v1370 = vld [vmem:[%s771 + $0x4c] sm:$0xf]
        %v1371 = vld [vmem:[%s771 + $0x50] sm:$0xf]
        %v1372 = vld [vmem:[%s771 + $0x54] sm:$0xf]
        %v1373 = vld [vmem:[%s771 + $0x58] sm:$0xf]
        %v1374 = vld [vmem:[%s771 + $0x5c] sm:$0xf]
        %v1375 = vld [vmem:[%s771 + $0x60] sm:$0xf]
        %v1376 = vld [vmem:[%s771 + $0x64] sm:$0xf]
        %v1377 = vld [vmem:[%s771 + $0x68] sm:$0xf]
        %v1378 = vld [vmem:[%s771 + $0x6c] sm:$0xf]
        %v1379 = vld [vmem:[%s771 + $0x70] sm:$0xf]
        %v1380 = vld [vmem:[%s771 + $0x74] sm:$0xf]
        %v1381 = vld [vmem:[%s771 + $0x78] sm:$0xf]
        %v1382 = vld [vmem:[%s771 + $0x7c] sm:$0xf]
        %v1383 = vld [vmem:[%s786] sm:$0xf]
        %v1384 = vld [vmem:[%s786 + $0x4] sm:$0xf]
        %v1385 = vld [vmem:[%s786 + $0x8] sm:$0xf]
        %v1386 = vld [vmem:[%s786 + $0xc] sm:$0xf]
        %v1387 = vsel %vm1338, 0, %v1383
        %v1388 = vsel %vm1338, 0, %v1384
        %v1389 = vsel %vm1338, 0, %v1385
        %v1390 = vsel %vm1338, 0, %v1386
        %v1392 = vshrl.u32 %v1339, 16
        %v1394 = vrot.slane %v1392, 7
        %v1395 = vshll.u32 %v1339, 16
        %v1397 = vor.u32 %v1394, %v1395
        %v1399 = vshrl.u32 %v1340, 16
        %v1401 = vrot.slane %v1399, 7
        %v1402 = vshll.u32 %v1340, 16
        %v1404 = vor.u32 %v1401, %v1402
        %v1406 = vshrl.u32 %v1268, 16
        %v1408 = vrot.slane %v1406, 7
        %v1409 = vshll.u32 %v1268, 16
        %v1411 = vor.u32 %v1408, %v1409
        %v1413 = vshrl.u32 %v1318, 16
        %v1415 = vrot.slane %v1413, 7
        %v1416 = vshll.u32 %v1318, 16
        %v1418 = vor.u32 %v1415, %v1416
        %v1420 = vshrl.u32 %v1270, 16
        %v1422 = vrot.slane %v1420, 7
        %v1423 = vshll.u32 %v1270, 16
        %v1425 = vor.u32 %v1422, %v1423
        %v1427 = vshrl.u32 %v1320, 16
        %v1429 = vrot.slane %v1427, 7
        %v1430 = vshll.u32 %v1320, 16
        %v1432 = vor.u32 %v1429, %v1430
        %v1434 = vshrl.u32 %v1272, 16
        %v1436 = vrot.slane %v1434, 7
        %v1437 = vshll.u32 %v1272, 16
        %v1439 = vor.u32 %v1436, %v1437
        %v1441 = vshrl.u32 %v1322, 16
        %v1443 = vrot.slane %v1441, 7
        %v1444 = vshll.u32 %v1322, 16
        %v1446 = vor.u32 %v1443, %v1444
        %v1448 = vshrl.u32 %v1274, 16
        %v1450 = vrot.slane %v1448, 7
        %v1451 = vshll.u32 %v1274, 16
        %v1453 = vor.u32 %v1450, %v1451
        %v1455 = vshrl.u32 %v1324, 16
        %v1457 = vrot.slane %v1455, 7
        %v1458 = vshll.u32 %v1324, 16
        %v1460 = vor.u32 %v1457, %v1458
        %v1462 = vshrl.u32 %v1276, 16
        %v1464 = vrot.slane %v1462, 7
        %v1465 = vshll.u32 %v1276, 16
        %v1467 = vor.u32 %v1464, %v1465
        %v1469 = vshrl.u32 %v1326, 16
        %v1471 = vrot.slane %v1469, 7
        %v1472 = vshll.u32 %v1326, 16
        %v1474 = vor.u32 %v1471, %v1472
        %v1476 = vshrl.u32 %v1278, 16
        %v1478 = vrot.slane %v1476, 7
        %v1479 = vshll.u32 %v1278, 16
        %v1481 = vor.u32 %v1478, %v1479
        %v1483 = vshrl.u32 %v1328, 16
        %v1485 = vrot.slane %v1483, 7
        %v1486 = vshll.u32 %v1328, 16
        %v1488 = vor.u32 %v1485, %v1486
        %v1490 = vshrl.u32 %v1280, 16
        %v1492 = vrot.slane %v1490, 7
        %v1493 = vshll.u32 %v1280, 16
        %v1495 = vor.u32 %v1492, %v1493
        %v1497 = vshrl.u32 %v1330, 16
        %v1499 = vrot.slane %v1497, 7
        %v1500 = vshll.u32 %v1330, 16
        %v1502 = vor.u32 %v1499, %v1500
        %v1504 = vshrl.u32 %v1282, 16
        %v1506 = vrot.slane %v1504, 7
        %v1507 = vshll.u32 %v1282, 16
        %v1509 = vor.u32 %v1506, %v1507
        %v1511 = vshrl.u32 %v1332, 16
        %v1513 = vrot.slane %v1511, 7
        %v1514 = vshll.u32 %v1332, 16
        %v1516 = vor.u32 %v1513, %v1514
        %v1518 = vshrl.u32 %v1341, 16
        %v1520 = vrot.slane %v1518, 7
        %v1521 = vshll.u32 %v1341, 16
        %v1523 = vor.u32 %v1520, %v1521
        %v1525 = vshrl.u32 %v1342, 16
        %v1527 = vrot.slane %v1525, 7
        %v1528 = vshll.u32 %v1342, 16
        %v1530 = vor.u32 %v1527, %v1528
        %vm1551 = vcmask 1040384
        %vm1552 = vsmask.f32 256
        %vm1553 = vmand %vm1551, %vm1552
        %v1554 = vsel %vm1553, 0, %v1397
        %v1555 = vsel %vm1553, 0, %v1404
        %v1556 = vsel %vm1553, 0, %v1411
        %v1557 = vsel %vm1553, 0, %v1418
        %v1558 = vsel %vm1553, 0, %v1425
        %v1559 = vsel %vm1553, 0, %v1432
        %v1560 = vsel %vm1553, 0, %v1439
        %v1561 = vsel %vm1553, 0, %v1446
        %v1562 = vsel %vm1553, 0, %v1453
        %v1563 = vsel %vm1553, 0, %v1460
        %v1564 = vsel %vm1553, 0, %v1467
        %v1565 = vsel %vm1553, 0, %v1474
        %v1566 = vsel %vm1553, 0, %v1481
        %v1567 = vsel %vm1553, 0, %v1488
        %v1568 = vsel %vm1553, 0, %v1495
        %v1569 = vsel %vm1553, 0, %v1502
        %v1570 = vsel %vm1553, 0, %v1509
        %v1571 = vsel %vm1553, 0, %v1516
        %v1572 = vsel %vm1553, 0, %v1523
        %v1573 = vsel %vm1553, 0, %v1530
        %v1574 = vrot.slane %v1395, 1
        %v1575 = vor.u32 %v1392, %v1574
        %v1576 = vrot.slane %v1402, 1
        %v1577 = vor.u32 %v1399, %v1576
        %v1578 = vrot.slane %v1409, 1
        %v1579 = vor.u32 %v1406, %v1578
        %v1580 = vrot.slane %v1416, 1
        %v1581 = vor.u32 %v1413, %v1580
        %v1582 = vrot.slane %v1423, 1
        %v1583 = vor.u32 %v1420, %v1582
        %v1584 = vrot.slane %v1430, 1
        %v1585 = vor.u32 %v1427, %v1584
        %v1586 = vrot.slane %v1437, 1
        %v1587 = vor.u32 %v1434, %v1586
        %v1588 = vrot.slane %v1444, 1
        %v1589 = vor.u32 %v1441, %v1588
        %v1590 = vrot.slane %v1451, 1
        %v1591 = vor.u32 %v1448, %v1590
        %v1592 = vrot.slane %v1458, 1
        %v1593 = vor.u32 %v1455, %v1592
        %v1594 = vrot.slane %v1465, 1
        %v1595 = vor.u32 %v1462, %v1594
        %v1596 = vrot.slane %v1472, 1
        %v1597 = vor.u32 %v1469, %v1596
        %v1598 = vrot.slane %v1479, 1
        %v1599 = vor.u32 %v1476, %v1598
        %v1600 = vrot.slane %v1486, 1
        %v1601 = vor.u32 %v1483, %v1600
        %v1602 = vrot.slane %v1493, 1
        %v1603 = vor.u32 %v1490, %v1602
        %v1604 = vrot.slane %v1500, 1
        %v1605 = vor.u32 %v1497, %v1604
        %v1606 = vrot.slane %v1507, 1
        %v1607 = vor.u32 %v1504, %v1606
        %v1608 = vrot.slane %v1514, 1
        %v1609 = vor.u32 %v1511, %v1608
        %v1610 = vrot.slane %v1521, 1
        %v1611 = vor.u32 %v1518, %v1610
        %v1612 = vrot.slane %v1528, 1
        %v1613 = vor.u32 %v1525, %v1612
        %vm1634 = vcmask 1047552
        %vm1635 = vsmask.f32 7424
        %vm1636 = vmand %vm1634, %vm1635
        %v1637 = vsel %vm1636, %v1575, 0
        %v1638 = vsel %vm1636, %v1577, 0
        %v1639 = vsel %vm1636, %v1579, 0
        %v1640 = vsel %vm1636, %v1581, 0
        %v1641 = vsel %vm1636, %v1583, 0
        %v1642 = vsel %vm1636, %v1585, 0
        %v1643 = vsel %vm1636, %v1587, 0
        %v1644 = vsel %vm1636, %v1589, 0
        %v1645 = vsel %vm1636, %v1591, 0
        %v1646 = vsel %vm1636, %v1593, 0
        %v1647 = vsel %vm1636, %v1595, 0
        %v1648 = vsel %vm1636, %v1597, 0
        %v1649 = vsel %vm1636, %v1599, 0
        %v1650 = vsel %vm1636, %v1601, 0
        %v1651 = vsel %vm1636, %v1603, 0
        %v1652 = vsel %vm1636, %v1605, 0
        %v1653 = vsel %vm1636, %v1607, 0
        %v1654 = vsel %vm1636, %v1609, 0
        %v1655 = vsel %vm1636, %v1611, 0
        %v1656 = vsel %vm1636, %v1613, 0
        %v1657 = vld [vmem:[%s8] sm:$0xf]
        %v1658 = vld [vmem:[%s8 + $0x4] sm:$0xf]
        %v1659 = vld [vmem:[%s8 + $0x8] sm:$0xf]
        %v1660 = vld [vmem:[%s8 + $0xc] sm:$0xf]
        %v1661 = vld [vmem:[%s8 + $0x10] sm:$0xf]
        %v1662 = vld [vmem:[%s8 + $0x14] sm:$0xf]
        %v1663 = vld [vmem:[%s8 + $0x18] sm:$0xf]
        %v1664 = vld [vmem:[%s8 + $0x1c] sm:$0xf]
        %v1665 = vld [vmem:[%s8 + $0x20] sm:$0xf]
        %v1666 = vld [vmem:[%s8 + $0x24] sm:$0xf]
        %v1667 = vld [vmem:[%s8 + $0x28] sm:$0xf]
        %v1668 = vld [vmem:[%s8 + $0x2c] sm:$0xf]
        %v1669 = vld [vmem:[%s8 + $0x30] sm:$0xf]
        %v1670 = vld [vmem:[%s8 + $0x34] sm:$0xf]
        %v1671 = vld [vmem:[%s8 + $0x38] sm:$0xf]
        %v1672 = vld [vmem:[%s8 + $0x3c] sm:$0xf]
        %s1673 = scalar_lea.vmem %s8, 64
        %v1674 = vld [vmem:[%s1673] sm:$0xf]
        %v1675 = vld [vmem:[%s1673 + $0x4] sm:$0xf]
        %v1676 = vld [vmem:[%s1673 + $0x8] sm:$0xf]
        %v1677 = vld [vmem:[%s1673 + $0xc] sm:$0xf]
        %v1678 = vld [vmem:[%s1673 + $0x10] sm:$0xf]
        %v1679 = vld [vmem:[%s1673 + $0x14] sm:$0xf]
        %v1680 = vld [vmem:[%s1673 + $0x18] sm:$0xf]
        %v1681 = vld [vmem:[%s1673 + $0x1c] sm:$0xf]
        %v1682 = vld [vmem:[%s1673 + $0x20] sm:$0xf]
        %v1683 = vld [vmem:[%s1673 + $0x24] sm:$0xf]
        %v1684 = vld [vmem:[%s1673 + $0x28] sm:$0xf]
        %v1685 = vld [vmem:[%s1673 + $0x2c] sm:$0xf]
        %v1686 = vld [vmem:[%s1673 + $0x30] sm:$0xf]
        %v1687 = vld [vmem:[%s1673 + $0x34] sm:$0xf]
        %v1688 = vld [vmem:[%s1673 + $0x38] sm:$0xf]
        %v1689 = vld [vmem:[%s1673 + $0x3c] sm:$0xf]
        %v1706 = vunpack.c.l.b16 %v1674
        %v1707 = vunpack.c.l.b16 %v1675
        %v1708 = vunpack.c.l.b16 %v1676
        %v1709 = vunpack.c.l.b16 %v1677
        %v1710 = vunpack.c.l.b16 %v1678
        %v1711 = vunpack.c.l.b16 %v1679
        %v1712 = vunpack.c.l.b16 %v1680
        %v1713 = vunpack.c.l.b16 %v1681
        %v1714 = vunpack.c.l.b16 %v1682
        %v1715 = vunpack.c.l.b16 %v1683
        %v1716 = vunpack.c.l.b16 %v1684
        %v1717 = vunpack.c.l.b16 %v1685
        %v1718 = vunpack.c.l.b16 %v1686
        %v1719 = vunpack.c.l.b16 %v1687
        %v1720 = vunpack.c.l.b16 %v1688
        %v1721 = vunpack.c.l.b16 %v1689
        %v1722 = vpack.c.b16 %v1707, %v1706
        %v1723 = vpack.c.b16 %v1709, %v1708
        %v1724 = vpack.c.b16 %v1711, %v1710
        %v1725 = vpack.c.b16 %v1713, %v1712
        %v1726 = vpack.c.b16 %v1715, %v1714
        %v1727 = vpack.c.b16 %v1717, %v1716
        %v1728 = vpack.c.b16 %v1719, %v1718
        %v1729 = vpack.c.b16 %v1721, %v1720
        %1738 = vmatprep.subr.bf16.mxu0 0
        %1739 = vmatpush1.bf16.msra.mxu0 %v1729
        %1740 = vmatprep.subr.bf16.mxu0 0
        %1741 = vmatpush1.bf16.msra.mxu0 %v1728
        %1742 = vmatprep.subr.bf16.mxu0 0
        %1743 = vmatpush1.bf16.msra.mxu0 %v1727
        %1744 = vmatprep.subr.bf16.mxu0 0
        %1745 = vmatpush1.bf16.msra.mxu0 %v1726
        %1746 = vmatprep.subr.bf16.mxu0 0
        %1747 = vmatpush1.bf16.msra.mxu0 %v1725
        %1748 = vmatprep.subr.bf16.mxu0 0
        %1749 = vmatpush1.bf16.msra.mxu0 %v1724
        %1750 = vmatprep.subr.bf16.mxu0 0
        %1751 = vmatpush1.bf16.msra.mxu0 %v1723
        %1752 = vmatprep.subr.bf16.mxu0 0
        %1753 = vmatpush1.bf16.msra.mxu0 %v1722
        %1754 = vmatprep.subr.bf16.mxu0 0
        %1755 = vmatpush2.bf16.msra.mxu0 0
        %1756 = vmatprep.subr.bf16.mxu0 0
        %1757 = vmatpush2.bf16.msra.mxu0 0
        %1758 = vmatprep.subr.bf16.mxu0 0
        %1759 = vmatpush2.bf16.msra.mxu0 0
        %1760 = vmatprep.subr.bf16.mxu0 0
        %1761 = vmatpush2.bf16.msra.mxu0 0
        %1762 = vmatprep.subr.bf16.mxu0 0
        %1763 = vmatpush2.bf16.msra.mxu0 0
        %1764 = vmatprep.subr.bf16.mxu0 0
        %1765 = vmatpush2.bf16.msra.mxu0 0
        %1766 = vmatprep.subr.bf16.mxu0 0
        %1767 = vmatpush2.bf16.msra.mxu0 0
        %1768 = vmatprep.subr.bf16.mxu0 0
        %1769 = vmatpush2.bf16.msra.mxu0 0
        %1770 = vmatprep.mubr.bf16.mxu0 0
        %1771 = vmatmul.mubr.bf16.gmra.mxu0 %v1339
        %v1772 = vpop.f32.mrf.mxu0
        %v1773 = vadd.f32 0.0, %v1772
        %v1774 = vpop.f32.mrf.mxu0
        %v1775 = vpop.f32.mrf.mxu0
        %v1776 = vadd.f32 0.0, %v1775
        %v1777 = vpop.f32.mrf.mxu0
        %1778 = vmatprep.mubr.bf16.mxu0 0
        %1779 = vmatmul.mubr.bf16.gmra.mxu0 %v1340
        %v1780 = vpop.f32.mrf.mxu0
        %v1781 = vadd.f32 0.0, %v1780
        %v1782 = vpop.f32.mrf.mxu0
        %v1783 = vpop.f32.mrf.mxu0
        %v1784 = vadd.f32 0.0, %v1783
        %v1785 = vpop.f32.mrf.mxu0
        %1786 = vmatprep.mubr.bf16.mxu0 0
        %1787 = vmatmul.mubr.bf16.gmra.mxu0 %v1268
        %v1788 = vpop.f32.mrf.mxu0
        %v1789 = vadd.f32 0.0, %v1788
        %v1790 = vpop.f32.mrf.mxu0
        %v1791 = vpop.f32.mrf.mxu0
        %v1792 = vadd.f32 0.0, %v1791
        %v1793 = vpop.f32.mrf.mxu0
        %1794 = vmatprep.mubr.bf16.mxu0 0
        %1795 = vmatmul.mubr.bf16.gmra.mxu0 %v1318
        %v1796 = vpop.f32.mrf.mxu0
        %v1797 = vadd.f32 0.0, %v1796
        %v1798 = vpop.f32.mrf.mxu0
        %v1799 = vpop.f32.mrf.mxu0
        %v1800 = vadd.f32 0.0, %v1799
        %v1801 = vpop.f32.mrf.mxu0
        %1802 = vmatprep.mubr.bf16.mxu0 0
        %1803 = vmatmul.mubr.bf16.gmra.mxu0 %v1270
        %v1804 = vpop.f32.mrf.mxu0
        %v1805 = vadd.f32 0.0, %v1804
        %v1806 = vpop.f32.mrf.mxu0
        %v1807 = vpop.f32.mrf.mxu0
        %v1808 = vadd.f32 0.0, %v1807
        %v1809 = vpop.f32.mrf.mxu0
        %1810 = vmatprep.mubr.bf16.mxu0 0
        %1811 = vmatmul.mubr.bf16.gmra.mxu0 %v1320
        %v1812 = vpop.f32.mrf.mxu0
        %v1813 = vadd.f32 0.0, %v1812
        %v1814 = vpop.f32.mrf.mxu0
        %v1815 = vpop.f32.mrf.mxu0
        %v1816 = vadd.f32 0.0, %v1815
        %v1817 = vpop.f32.mrf.mxu0
        %1818 = vmatprep.mubr.bf16.mxu0 0
        %1819 = vmatmul.mubr.bf16.gmra.mxu0 %v1272
        %v1820 = vpop.f32.mrf.mxu0
        %v1821 = vadd.f32 0.0, %v1820
        %v1822 = vpop.f32.mrf.mxu0
        %v1823 = vpop.f32.mrf.mxu0
        %v1824 = vadd.f32 0.0, %v1823
        %v1825 = vpop.f32.mrf.mxu0
        %1826 = vmatprep.mubr.bf16.mxu0 0
        %1827 = vmatmul.mubr.bf16.gmra.mxu0 %v1322
        %v1828 = vpop.f32.mrf.mxu0
        %v1829 = vadd.f32 0.0, %v1828
        %v1830 = vpop.f32.mrf.mxu0
        %v1831 = vpop.f32.mrf.mxu0
        %v1832 = vadd.f32 0.0, %v1831
        %v1833 = vpop.f32.mrf.mxu0
        %1834 = vmatprep.mubr.bf16.mxu0 0
        %1835 = vmatmul.mubr.bf16.gmra.mxu0 %v1274
        %v1836 = vpop.f32.mrf.mxu0
        %v1837 = vadd.f32 0.0, %v1836
        %v1838 = vpop.f32.mrf.mxu0
        %v1839 = vpop.f32.mrf.mxu0
        %v1840 = vadd.f32 0.0, %v1839
        %v1841 = vpop.f32.mrf.mxu0
        %1842 = vmatprep.mubr.bf16.mxu0 0
        %1843 = vmatmul.mubr.bf16.gmra.mxu0 %v1324
        %v1844 = vpop.f32.mrf.mxu0
        %v1845 = vadd.f32 0.0, %v1844
        %v1846 = vpop.f32.mrf.mxu0
        %v1847 = vpop.f32.mrf.mxu0
        %v1848 = vadd.f32 0.0, %v1847
        %v1849 = vpop.f32.mrf.mxu0
        %1850 = vmatprep.mubr.bf16.mxu0 0
        %1851 = vmatmul.mubr.bf16.gmra.mxu0 %v1276
        %v1852 = vpop.f32.mrf.mxu0
        %v1853 = vadd.f32 0.0, %v1852
        %v1854 = vpop.f32.mrf.mxu0
        %v1855 = vpop.f32.mrf.mxu0
        %v1856 = vadd.f32 0.0, %v1855
        %v1857 = vpop.f32.mrf.mxu0
        %1858 = vmatprep.mubr.bf16.mxu0 0
        %1859 = vmatmul.mubr.bf16.gmra.mxu0 %v1326
        %v1860 = vpop.f32.mrf.mxu0
        %v1861 = vadd.f32 0.0, %v1860
        %v1862 = vpop.f32.mrf.mxu0
        %v1863 = vpop.f32.mrf.mxu0
        %v1864 = vadd.f32 0.0, %v1863
        %v1865 = vpop.f32.mrf.mxu0
        %1866 = vmatprep.mubr.bf16.mxu0 0
        %1867 = vmatmul.mubr.bf16.gmra.mxu0 %v1278
        %v1868 = vpop.f32.mrf.mxu0
        %v1869 = vadd.f32 0.0, %v1868
        %v1870 = vpop.f32.mrf.mxu0
        %v1871 = vpop.f32.mrf.mxu0
        %v1872 = vadd.f32 0.0, %v1871
        %v1873 = vpop.f32.mrf.mxu0
        %1874 = vmatprep.mubr.bf16.mxu0 0
        %1875 = vmatmul.mubr.bf16.gmra.mxu0 %v1328
        %v1876 = vpop.f32.mrf.mxu0
        %v1877 = vadd.f32 0.0, %v1876
        %v1878 = vpop.f32.mrf.mxu0
        %v1879 = vpop.f32.mrf.mxu0
        %v1880 = vadd.f32 0.0, %v1879
        %v1881 = vpop.f32.mrf.mxu0
        %1882 = vmatprep.mubr.bf16.mxu0 0
        %1883 = vmatmul.mubr.bf16.gmra.mxu0 %v1280
        %v1884 = vpop.f32.mrf.mxu0
        %v1885 = vadd.f32 0.0, %v1884
        %v1886 = vpop.f32.mrf.mxu0
        %v1887 = vpop.f32.mrf.mxu0
        %v1888 = vadd.f32 0.0, %v1887
        %v1889 = vpop.f32.mrf.mxu0
        %1890 = vmatprep.mubr.bf16.mxu0 0
        %1891 = vmatmul.mubr.bf16.gmra.mxu0 %v1330
        %v1892 = vpop.f32.mrf.mxu0
        %v1893 = vadd.f32 0.0, %v1892
        %v1894 = vpop.f32.mrf.mxu0
        %v1895 = vpop.f32.mrf.mxu0
        %v1896 = vadd.f32 0.0, %v1895
        %v1897 = vpop.f32.mrf.mxu0
        %1898 = vmatprep.mubr.bf16.mxu0 0
        %1899 = vmatmul.mubr.bf16.gmra.mxu0 %v1282
        %v1900 = vpop.f32.mrf.mxu0
        %v1901 = vadd.f32 0.0, %v1900
        %v1902 = vpop.f32.mrf.mxu0
        %v1903 = vpop.f32.mrf.mxu0
        %v1904 = vadd.f32 0.0, %v1903
        %v1905 = vpop.f32.mrf.mxu0
        %1906 = vmatprep.mubr.bf16.mxu0 0
        %1907 = vmatmul.mubr.bf16.gmra.mxu0 %v1332
        %v1908 = vpop.f32.mrf.mxu0
        %v1909 = vadd.f32 0.0, %v1908
        %v1910 = vpop.f32.mrf.mxu0
        %v1911 = vpop.f32.mrf.mxu0
        %v1912 = vadd.f32 0.0, %v1911
        %v1913 = vpop.f32.mrf.mxu0
        %1914 = vdwg.mxu0
        %v1931 = vunpack.c.l.b16 %v1657
        %v1932 = vunpack.c.l.b16 %v1658
        %v1933 = vunpack.c.l.b16 %v1659
        %v1934 = vunpack.c.l.b16 %v1660
        %v1935 = vunpack.c.l.b16 %v1661
        %v1936 = vunpack.c.l.b16 %v1662
        %v1937 = vunpack.c.l.b16 %v1663
        %v1938 = vunpack.c.l.b16 %v1664
        %v1939 = vunpack.c.l.b16 %v1665
        %v1940 = vunpack.c.l.b16 %v1666
        %v1941 = vunpack.c.l.b16 %v1667
        %v1942 = vunpack.c.l.b16 %v1668
        %v1943 = vunpack.c.l.b16 %v1669
        %v1944 = vunpack.c.l.b16 %v1670
        %v1945 = vunpack.c.l.b16 %v1671
        %v1946 = vunpack.c.l.b16 %v1672
        %v1947 = vpack.c.b16 %v1932, %v1931
        %v1948 = vpack.c.b16 %v1934, %v1933
        %v1949 = vpack.c.b16 %v1936, %v1935
        %v1950 = vpack.c.b16 %v1938, %v1937
        %v1951 = vpack.c.b16 %v1940, %v1939
        %v1952 = vpack.c.b16 %v1942, %v1941
        %v1953 = vpack.c.b16 %v1944, %v1943
        %v1954 = vpack.c.b16 %v1946, %v1945
        %1963 = vmatprep.subr.bf16.mxu0 0
        %1964 = vmatpush1.bf16.msra.mxu0 %v1954
        %1965 = vmatprep.subr.bf16.mxu0 0
        %1966 = vmatpush1.bf16.msra.mxu0 %v1953
        %1967 = vmatprep.subr.bf16.mxu0 0
        %1968 = vmatpush1.bf16.msra.mxu0 %v1952
        %1969 = vmatprep.subr.bf16.mxu0 0
        %1970 = vmatpush1.bf16.msra.mxu0 %v1951
        %1971 = vmatprep.subr.bf16.mxu0 0
        %1972 = vmatpush1.bf16.msra.mxu0 %v1950
        %1973 = vmatprep.subr.bf16.mxu0 0
        %1974 = vmatpush1.bf16.msra.mxu0 %v1949
        %1975 = vmatprep.subr.bf16.mxu0 0
        %1976 = vmatpush1.bf16.msra.mxu0 %v1948
        %1977 = vmatprep.subr.bf16.mxu0 0
        %1978 = vmatpush1.bf16.msra.mxu0 %v1947
        %1979 = vmatprep.subr.bf16.mxu0 0
        %1980 = vmatpush2.bf16.msra.mxu0 0
        %1981 = vmatprep.subr.bf16.mxu0 0
        %1982 = vmatpush2.bf16.msra.mxu0 0
        %1983 = vmatprep.subr.bf16.mxu0 0
        %1984 = vmatpush2.bf16.msra.mxu0 0
        %1985 = vmatprep.subr.bf16.mxu0 0
        %1986 = vmatpush2.bf16.msra.mxu0 0
        %1987 = vmatprep.subr.bf16.mxu0 0
        %1988 = vmatpush2.bf16.msra.mxu0 0
        %1989 = vmatprep.subr.bf16.mxu0 0
        %1990 = vmatpush2.bf16.msra.mxu0 0
        %1991 = vmatprep.subr.bf16.mxu0 0
        %1992 = vmatpush2.bf16.msra.mxu0 0
        %1993 = vmatprep.subr.bf16.mxu0 0
        %1994 = vmatpush2.bf16.msra.mxu0 0
        %1995 = vmatprep.mubr.bf16.mxu0 0
        %1996 = vmatmul.mubr.bf16.gmra.mxu0 %v1554
        %v1997 = vpop.f32.mrf.mxu0
        %v1998 = vadd.f32 %v1773, %v1997
        %v1999 = vpop.f32.mrf.mxu0
        %v2000 = vpop.f32.mrf.mxu0
        %v2001 = vadd.f32 %v1776, %v2000
        %v2002 = vpop.f32.mrf.mxu0
        %2003 = vmatprep.mubr.bf16.mxu0 0
        %2004 = vmatmul.mubr.bf16.gmra.mxu0 %v1555
        %v2005 = vpop.f32.mrf.mxu0
        %v2006 = vadd.f32 %v1781, %v2005
        %v2007 = vpop.f32.mrf.mxu0
        %v2008 = vpop.f32.mrf.mxu0
        %v2009 = vadd.f32 %v1784, %v2008
        %v2010 = vpop.f32.mrf.mxu0
        %2011 = vmatprep.mubr.bf16.mxu0 0
        %2012 = vmatmul.mubr.bf16.gmra.mxu0 %v1556
        %v2013 = vpop.f32.mrf.mxu0
        %v2014 = vadd.f32 %v1789, %v2013
        %v2015 = vpop.f32.mrf.mxu0
        %v2016 = vpop.f32.mrf.mxu0
        %v2017 = vadd.f32 %v1792, %v2016
        %v2018 = vpop.f32.mrf.mxu0
        %2019 = vmatprep.mubr.bf16.mxu0 0
        %2020 = vmatmul.mubr.bf16.gmra.mxu0 %v1557
        %v2021 = vpop.f32.mrf.mxu0
        %v2022 = vadd.f32 %v1797, %v2021
        %v2023 = vpop.f32.mrf.mxu0
        %v2024 = vpop.f32.mrf.mxu0
        %v2025 = vadd.f32 %v1800, %v2024
        %v2026 = vpop.f32.mrf.mxu0
        %2027 = vmatprep.mubr.bf16.mxu0 0
        %2028 = vmatmul.mubr.bf16.gmra.mxu0 %v1558
        %v2029 = vpop.f32.mrf.mxu0
        %v2030 = vadd.f32 %v1805, %v2029
        %v2031 = vpop.f32.mrf.mxu0
        %v2032 = vpop.f32.mrf.mxu0
        %v2033 = vadd.f32 %v1808, %v2032
        %v2034 = vpop.f32.mrf.mxu0
        %2035 = vmatprep.mubr.bf16.mxu0 0
        %2036 = vmatmul.mubr.bf16.gmra.mxu0 %v1559
        %v2037 = vpop.f32.mrf.mxu0
        %v2038 = vadd.f32 %v1813, %v2037
        %v2039 = vpop.f32.mrf.mxu0
        %v2040 = vpop.f32.mrf.mxu0
        %v2041 = vadd.f32 %v1816, %v2040
        %v2042 = vpop.f32.mrf.mxu0
        %2043 = vmatprep.mubr.bf16.mxu0 0
        %2044 = vmatmul.mubr.bf16.gmra.mxu0 %v1560
        %v2045 = vpop.f32.mrf.mxu0
        %v2046 = vadd.f32 %v1821, %v2045
        %v2047 = vpop.f32.mrf.mxu0
        %v2048 = vpop.f32.mrf.mxu0
        %v2049 = vadd.f32 %v1824, %v2048
        %v2050 = vpop.f32.mrf.mxu0
        %2051 = vmatprep.mubr.bf16.mxu0 0
        %2052 = vmatmul.mubr.bf16.gmra.mxu0 %v1561
        %v2053 = vpop.f32.mrf.mxu0
        %v2054 = vadd.f32 %v1829, %v2053
        %v2055 = vpop.f32.mrf.mxu0
        %v2056 = vpop.f32.mrf.mxu0
        %v2057 = vadd.f32 %v1832, %v2056
        %v2058 = vpop.f32.mrf.mxu0
        %2059 = vmatprep.mubr.bf16.mxu0 0
        %2060 = vmatmul.mubr.bf16.gmra.mxu0 %v1562
        %v2061 = vpop.f32.mrf.mxu0
        %v2062 = vadd.f32 %v1837, %v2061
        %v2063 = vpop.f32.mrf.mxu0
        %v2064 = vpop.f32.mrf.mxu0
        %v2065 = vadd.f32 %v1840, %v2064
        %v2066 = vpop.f32.mrf.mxu0
        %2067 = vmatprep.mubr.bf16.mxu0 0
        %2068 = vmatmul.mubr.bf16.gmra.mxu0 %v1563
        %v2069 = vpop.f32.mrf.mxu0
        %v2070 = vadd.f32 %v1845, %v2069
        %v2071 = vpop.f32.mrf.mxu0
        %v2072 = vpop.f32.mrf.mxu0
        %v2073 = vadd.f32 %v1848, %v2072
        %v2074 = vpop.f32.mrf.mxu0
        %2075 = vmatprep.mubr.bf16.mxu0 0
        %2076 = vmatmul.mubr.bf16.gmra.mxu0 %v1564
        %v2077 = vpop.f32.mrf.mxu0
        %v2078 = vadd.f32 %v1853, %v2077
        %v2079 = vpop.f32.mrf.mxu0
        %v2080 = vpop.f32.mrf.mxu0
        %v2081 = vadd.f32 %v1856, %v2080
        %v2082 = vpop.f32.mrf.mxu0
        %2083 = vmatprep.mubr.bf16.mxu0 0
        %2084 = vmatmul.mubr.bf16.gmra.mxu0 %v1565
        %v2085 = vpop.f32.mrf.mxu0
        %v2086 = vadd.f32 %v1861, %v2085
        %v2087 = vpop.f32.mrf.mxu0
        %v2088 = vpop.f32.mrf.mxu0
        %v2089 = vadd.f32 %v1864, %v2088
        %v2090 = vpop.f32.mrf.mxu0
        %2091 = vmatprep.mubr.bf16.mxu0 0
        %2092 = vmatmul.mubr.bf16.gmra.mxu0 %v1566
        %v2093 = vpop.f32.mrf.mxu0
        %v2094 = vadd.f32 %v1869, %v2093
        %v2095 = vpop.f32.mrf.mxu0
        %v2096 = vpop.f32.mrf.mxu0
        %v2097 = vadd.f32 %v1872, %v2096
        %v2098 = vpop.f32.mrf.mxu0
        %2099 = vmatprep.mubr.bf16.mxu0 0
        %2100 = vmatmul.mubr.bf16.gmra.mxu0 %v1567
        %v2101 = vpop.f32.mrf.mxu0
        %v2102 = vadd.f32 %v1877, %v2101
        %v2103 = vpop.f32.mrf.mxu0
        %v2104 = vpop.f32.mrf.mxu0
        %v2105 = vadd.f32 %v1880, %v2104
        %v2106 = vpop.f32.mrf.mxu0
        %2107 = vmatprep.mubr.bf16.mxu0 0
        %2108 = vmatmul.mubr.bf16.gmra.mxu0 %v1568
        %v2109 = vpop.f32.mrf.mxu0
        %v2110 = vadd.f32 %v1885, %v2109
        %v2111 = vpop.f32.mrf.mxu0
        %v2112 = vpop.f32.mrf.mxu0
        %v2113 = vadd.f32 %v1888, %v2112
        %v2114 = vpop.f32.mrf.mxu0
        %2115 = vmatprep.mubr.bf16.mxu0 0
        %2116 = vmatmul.mubr.bf16.gmra.mxu0 %v1569
        %v2117 = vpop.f32.mrf.mxu0
        %v2118 = vadd.f32 %v1893, %v2117
        %v2119 = vpop.f32.mrf.mxu0
        %v2120 = vpop.f32.mrf.mxu0
        %v2121 = vadd.f32 %v1896, %v2120
        %v2122 = vpop.f32.mrf.mxu0
        %2123 = vmatprep.mubr.bf16.mxu0 0
        %2124 = vmatmul.mubr.bf16.gmra.mxu0 %v1570
        %v2125 = vpop.f32.mrf.mxu0
        %v2126 = vadd.f32 %v1901, %v2125
        %v2127 = vpop.f32.mrf.mxu0
        %v2128 = vpop.f32.mrf.mxu0
        %v2129 = vadd.f32 %v1904, %v2128
        %v2130 = vpop.f32.mrf.mxu0
        %2131 = vmatprep.mubr.bf16.mxu0 0
        %2132 = vmatmul.mubr.bf16.gmra.mxu0 %v1571
        %v2133 = vpop.f32.mrf.mxu0
        %v2134 = vadd.f32 %v1909, %v2133
        %v2135 = vpop.f32.mrf.mxu0
        %v2136 = vpop.f32.mrf.mxu0
        %v2137 = vadd.f32 %v1912, %v2136
        %v2138 = vpop.f32.mrf.mxu0
        %2139 = vdwg.mxu0
        %s2140 = scalar_lea.vmem %s8, 128
        %v2141 = vld [vmem:[%s2140] sm:$0xf]
        %v2142 = vld [vmem:[%s2140 + $0x4] sm:$0xf]
        %v2143 = vld [vmem:[%s2140 + $0x8] sm:$0xf]
        %v2144 = vld [vmem:[%s2140 + $0xc] sm:$0xf]
        %v2145 = vld [vmem:[%s2140 + $0x10] sm:$0xf]
        %v2146 = vld [vmem:[%s2140 + $0x14] sm:$0xf]
        %v2147 = vld [vmem:[%s2140 + $0x18] sm:$0xf]
        %v2148 = vld [vmem:[%s2140 + $0x1c] sm:$0xf]
        %v2149 = vld [vmem:[%s2140 + $0x20] sm:$0xf]
        %v2150 = vld [vmem:[%s2140 + $0x24] sm:$0xf]
        %v2151 = vld [vmem:[%s2140 + $0x28] sm:$0xf]
        %v2152 = vld [vmem:[%s2140 + $0x2c] sm:$0xf]
        %v2153 = vld [vmem:[%s2140 + $0x30] sm:$0xf]
        %v2154 = vld [vmem:[%s2140 + $0x34] sm:$0xf]
        %v2155 = vld [vmem:[%s2140 + $0x38] sm:$0xf]
        %v2156 = vld [vmem:[%s2140 + $0x3c] sm:$0xf]
        %v2173 = vunpack.c.l.b16 %v2141
        %v2174 = vunpack.c.l.b16 %v2142
        %v2175 = vunpack.c.l.b16 %v2143
        %v2176 = vunpack.c.l.b16 %v2144
        %v2177 = vunpack.c.l.b16 %v2145
        %v2178 = vunpack.c.l.b16 %v2146
        %v2179 = vunpack.c.l.b16 %v2147
        %v2180 = vunpack.c.l.b16 %v2148
        %v2181 = vunpack.c.l.b16 %v2149
        %v2182 = vunpack.c.l.b16 %v2150
        %v2183 = vunpack.c.l.b16 %v2151
        %v2184 = vunpack.c.l.b16 %v2152
        %v2185 = vunpack.c.l.b16 %v2153
        %v2186 = vunpack.c.l.b16 %v2154
        %v2187 = vunpack.c.l.b16 %v2155
        %v2188 = vunpack.c.l.b16 %v2156
        %v2189 = vpack.c.b16 %v2174, %v2173
        %v2190 = vpack.c.b16 %v2176, %v2175
        %v2191 = vpack.c.b16 %v2178, %v2177
        %v2192 = vpack.c.b16 %v2180, %v2179
        %v2193 = vpack.c.b16 %v2182, %v2181
        %v2194 = vpack.c.b16 %v2184, %v2183
        %v2195 = vpack.c.b16 %v2186, %v2185
        %v2196 = vpack.c.b16 %v2188, %v2187
        %2205 = vmatprep.subr.bf16.mxu0 0
        %2206 = vmatpush1.bf16.msra.mxu0 %v2196
        %2207 = vmatprep.subr.bf16.mxu0 0
        %2208 = vmatpush1.bf16.msra.mxu0 %v2195
        %2209 = vmatprep.subr.bf16.mxu0 0
        %2210 = vmatpush1.bf16.msra.mxu0 %v2194
        %2211 = vmatprep.subr.bf16.mxu0 0
        %2212 = vmatpush1.bf16.msra.mxu0 %v2193
        %2213 = vmatprep.subr.bf16.mxu0 0
        %2214 = vmatpush1.bf16.msra.mxu0 %v2192
        %2215 = vmatprep.subr.bf16.mxu0 0
        %2216 = vmatpush1.bf16.msra.mxu0 %v2191
        %2217 = vmatprep.subr.bf16.mxu0 0
        %2218 = vmatpush1.bf16.msra.mxu0 %v2190
        %2219 = vmatprep.subr.bf16.mxu0 0
        %2220 = vmatpush1.bf16.msra.mxu0 %v2189
        %2221 = vmatprep.subr.bf16.mxu0 0
        %2222 = vmatpush2.bf16.msra.mxu0 0
        %2223 = vmatprep.subr.bf16.mxu0 0
        %2224 = vmatpush2.bf16.msra.mxu0 0
        %2225 = vmatprep.subr.bf16.mxu0 0
        %2226 = vmatpush2.bf16.msra.mxu0 0
        %2227 = vmatprep.subr.bf16.mxu0 0
        %2228 = vmatpush2.bf16.msra.mxu0 0
        %2229 = vmatprep.subr.bf16.mxu0 0
        %2230 = vmatpush2.bf16.msra.mxu0 0
        %2231 = vmatprep.subr.bf16.mxu0 0
        %2232 = vmatpush2.bf16.msra.mxu0 0
        %2233 = vmatprep.subr.bf16.mxu0 0
        %2234 = vmatpush2.bf16.msra.mxu0 0
        %2235 = vmatprep.subr.bf16.mxu0 0
        %2236 = vmatpush2.bf16.msra.mxu0 0
        %2237 = vmatprep.mubr.bf16.mxu0 0
        %2238 = vmatmul.mubr.bf16.gmra.mxu0 %v1637
        %v2239 = vpop.f32.mrf.mxu0
        %v2240 = vadd.f32 0.0, %v2239
        %v2241 = vpop.f32.mrf.mxu0
        %v2242 = vpop.f32.mrf.mxu0
        %v2243 = vadd.f32 0.0, %v2242
        %v2244 = vpop.f32.mrf.mxu0
        %2245 = vmatprep.mubr.bf16.mxu0 0
        %2246 = vmatmul.mubr.bf16.gmra.mxu0 %v1638
        %v2247 = vpop.f32.mrf.mxu0
        %v2248 = vadd.f32 0.0, %v2247
        %v2249 = vpop.f32.mrf.mxu0
        %v2250 = vpop.f32.mrf.mxu0
        %v2251 = vadd.f32 0.0, %v2250
        %v2252 = vpop.f32.mrf.mxu0
        %2253 = vmatprep.mubr.bf16.mxu0 0
        %2254 = vmatmul.mubr.bf16.gmra.mxu0 %v1639
        %v2255 = vpop.f32.mrf.mxu0
        %v2256 = vadd.f32 0.0, %v2255
        %v2257 = vpop.f32.mrf.mxu0
        %v2258 = vpop.f32.mrf.mxu0
        %v2259 = vadd.f32 0.0, %v2258
        %v2260 = vpop.f32.mrf.mxu0
        %2261 = vmatprep.mubr.bf16.mxu0 0
        %2262 = vmatmul.mubr.bf16.gmra.mxu0 %v1640
        %v2263 = vpop.f32.mrf.mxu0
        %v2264 = vadd.f32 0.0, %v2263
        %v2265 = vpop.f32.mrf.mxu0
        %v2266 = vpop.f32.mrf.mxu0
        %v2267 = vadd.f32 0.0, %v2266
        %v2268 = vpop.f32.mrf.mxu0
        %2269 = vmatprep.mubr.bf16.mxu0 0
        %2270 = vmatmul.mubr.bf16.gmra.mxu0 %v1641
        %v2271 = vpop.f32.mrf.mxu0
        %v2272 = vadd.f32 0.0, %v2271
        %v2273 = vpop.f32.mrf.mxu0
        %v2274 = vpop.f32.mrf.mxu0
        %v2275 = vadd.f32 0.0, %v2274
        %v2276 = vpop.f32.mrf.mxu0
        %2277 = vmatprep.mubr.bf16.mxu0 0
        %2278 = vmatmul.mubr.bf16.gmra.mxu0 %v1642
        %v2279 = vpop.f32.mrf.mxu0
        %v2280 = vadd.f32 0.0, %v2279
        %v2281 = vpop.f32.mrf.mxu0
        %v2282 = vpop.f32.mrf.mxu0
        %v2283 = vadd.f32 0.0, %v2282
        %v2284 = vpop.f32.mrf.mxu0
        %2285 = vmatprep.mubr.bf16.mxu0 0
        %2286 = vmatmul.mubr.bf16.gmra.mxu0 %v1643
        %v2287 = vpop.f32.mrf.mxu0
        %v2288 = vadd.f32 0.0, %v2287
        %v2289 = vpop.f32.mrf.mxu0
        %v2290 = vpop.f32.mrf.mxu0
        %v2291 = vadd.f32 0.0, %v2290
        %v2292 = vpop.f32.mrf.mxu0
        %2293 = vmatprep.mubr.bf16.mxu0 0
        %2294 = vmatmul.mubr.bf16.gmra.mxu0 %v1644
        %v2295 = vpop.f32.mrf.mxu0
        %v2296 = vadd.f32 0.0, %v2295
        %v2297 = vpop.f32.mrf.mxu0
        %v2298 = vpop.f32.mrf.mxu0
        %v2299 = vadd.f32 0.0, %v2298
        %v2300 = vpop.f32.mrf.mxu0
        %2301 = vmatprep.mubr.bf16.mxu0 0
        %2302 = vmatmul.mubr.bf16.gmra.mxu0 %v1645
        %v2303 = vpop.f32.mrf.mxu0
        %v2304 = vadd.f32 0.0, %v2303
        %v2305 = vpop.f32.mrf.mxu0
        %v2306 = vpop.f32.mrf.mxu0
        %v2307 = vadd.f32 0.0, %v2306
        %v2308 = vpop.f32.mrf.mxu0
        %2309 = vmatprep.mubr.bf16.mxu0 0
        %2310 = vmatmul.mubr.bf16.gmra.mxu0 %v1646
        %v2311 = vpop.f32.mrf.mxu0
        %v2312 = vadd.f32 0.0, %v2311
        %v2313 = vpop.f32.mrf.mxu0
        %v2314 = vpop.f32.mrf.mxu0
        %v2315 = vadd.f32 0.0, %v2314
        %v2316 = vpop.f32.mrf.mxu0
        %2317 = vmatprep.mubr.bf16.mxu0 0
        %2318 = vmatmul.mubr.bf16.gmra.mxu0 %v1647
        %v2319 = vpop.f32.mrf.mxu0
        %v2320 = vadd.f32 0.0, %v2319
        %v2321 = vpop.f32.mrf.mxu0
        %v2322 = vpop.f32.mrf.mxu0
        %v2323 = vadd.f32 0.0, %v2322
        %v2324 = vpop.f32.mrf.mxu0
        %2325 = vmatprep.mubr.bf16.mxu0 0
        %2326 = vmatmul.mubr.bf16.gmra.mxu0 %v1648
        %v2327 = vpop.f32.mrf.mxu0
        %v2328 = vadd.f32 0.0, %v2327
        %v2329 = vpop.f32.mrf.mxu0
        %v2330 = vpop.f32.mrf.mxu0
        %v2331 = vadd.f32 0.0, %v2330
        %v2332 = vpop.f32.mrf.mxu0
        %2333 = vmatprep.mubr.bf16.mxu0 0
        %2334 = vmatmul.mubr.bf16.gmra.mxu0 %v1649
        %v2335 = vpop.f32.mrf.mxu0
        %v2336 = vadd.f32 0.0, %v2335
        %v2337 = vpop.f32.mrf.mxu0
        %v2338 = vpop.f32.mrf.mxu0
        %v2339 = vadd.f32 0.0, %v2338
        %v2340 = vpop.f32.mrf.mxu0
        %2341 = vmatprep.mubr.bf16.mxu0 0
        %2342 = vmatmul.mubr.bf16.gmra.mxu0 %v1650
        %v2343 = vpop.f32.mrf.mxu0
        %v2344 = vadd.f32 0.0, %v2343
        %v2345 = vpop.f32.mrf.mxu0
        %v2346 = vpop.f32.mrf.mxu0
        %v2347 = vadd.f32 0.0, %v2346
        %v2348 = vpop.f32.mrf.mxu0
        %2349 = vmatprep.mubr.bf16.mxu0 0
        %2350 = vmatmul.mubr.bf16.gmra.mxu0 %v1651
        %v2351 = vpop.f32.mrf.mxu0
        %v2352 = vadd.f32 0.0, %v2351
        %v2353 = vpop.f32.mrf.mxu0
        %v2354 = vpop.f32.mrf.mxu0
        %v2355 = vadd.f32 0.0, %v2354
        %v2356 = vpop.f32.mrf.mxu0
        %2357 = vmatprep.mubr.bf16.mxu0 0
        %2358 = vmatmul.mubr.bf16.gmra.mxu0 %v1652
        %v2359 = vpop.f32.mrf.mxu0
        %v2360 = vadd.f32 0.0, %v2359
        %v2361 = vpop.f32.mrf.mxu0
        %v2362 = vpop.f32.mrf.mxu0
        %v2363 = vadd.f32 0.0, %v2362
        %v2364 = vpop.f32.mrf.mxu0
        %2365 = vmatprep.mubr.bf16.mxu0 0
        %2366 = vmatmul.mubr.bf16.gmra.mxu0 %v1653
        %v2367 = vpop.f32.mrf.mxu0
        %v2368 = vadd.f32 0.0, %v2367
        %v2369 = vpop.f32.mrf.mxu0
        %v2370 = vpop.f32.mrf.mxu0
        %v2371 = vadd.f32 0.0, %v2370
        %v2372 = vpop.f32.mrf.mxu0
        %2373 = vmatprep.mubr.bf16.mxu0 0
        %2374 = vmatmul.mubr.bf16.gmra.mxu0 %v1654
        %v2375 = vpop.f32.mrf.mxu0
        %v2376 = vadd.f32 0.0, %v2375
        %v2377 = vpop.f32.mrf.mxu0
        %v2378 = vpop.f32.mrf.mxu0
        %v2379 = vadd.f32 0.0, %v2378
        %v2380 = vpop.f32.mrf.mxu0
        %2381 = vdwg.mxu0
        %v2382 = vadd.f32 %v1998, %v2240
        %v2383 = vadd.f32 %v2001, %v2243
        %v2384 = vadd.f32 %v2006, %v2248
        %v2385 = vadd.f32 %v2009, %v2251
        %v2386 = vadd.f32 %v2014, %v2256
        %v2387 = vadd.f32 %v2017, %v2259
        %v2388 = vadd.f32 %v2022, %v2264
        %v2389 = vadd.f32 %v2025, %v2267
        %v2390 = vadd.f32 %v2030, %v2272
        %v2391 = vadd.f32 %v2033, %v2275
        %v2392 = vadd.f32 %v2038, %v2280
        %v2393 = vadd.f32 %v2041, %v2283
        %v2394 = vadd.f32 %v2046, %v2288
        %v2395 = vadd.f32 %v2049, %v2291
        %v2396 = vadd.f32 %v2054, %v2296
        %v2397 = vadd.f32 %v2057, %v2299
        %v2398 = vadd.f32 %v2062, %v2304
        %v2399 = vadd.f32 %v2065, %v2307
        %v2400 = vadd.f32 %v2070, %v2312
        %v2401 = vadd.f32 %v2073, %v2315
        %v2402 = vadd.f32 %v2078, %v2320
        %v2403 = vadd.f32 %v2081, %v2323
        %v2404 = vadd.f32 %v2086, %v2328
        %v2405 = vadd.f32 %v2089, %v2331
        %v2406 = vadd.f32 %v2094, %v2336
        %v2407 = vadd.f32 %v2097, %v2339
        %v2408 = vadd.f32 %v2102, %v2344
        %v2409 = vadd.f32 %v2105, %v2347
        %v2410 = vadd.f32 %v2110, %v2352
        %v2411 = vadd.f32 %v2113, %v2355
        %v2412 = vadd.f32 %v2118, %v2360
        %v2413 = vadd.f32 %v2121, %v2363
        %v2414 = vadd.f32 %v2126, %v2368
        %v2415 = vadd.f32 %v2129, %v2371
        %v2416 = vadd.f32 %v2134, %v2376
        %v2417 = vadd.f32 %v2137, %v2379
        %s2418 = scalar_lea.vmem %s8, 192
        %v2419 = vld [vmem:[%s2418] sm:$0xf]
        %v2420 = vld [vmem:[%s2418 + $0x4] sm:$0xf]
        %v2421 = vld [vmem:[%s2418 + $0x8] sm:$0xf]
        %v2422 = vld [vmem:[%s2418 + $0xc] sm:$0xf]
        %v2423 = vld [vmem:[%s2418 + $0x10] sm:$0xf]
        %v2424 = vld [vmem:[%s2418 + $0x14] sm:$0xf]
        %v2425 = vld [vmem:[%s2418 + $0x18] sm:$0xf]
        %v2426 = vld [vmem:[%s2418 + $0x1c] sm:$0xf]
        %v2427 = vld [vmem:[%s2418 + $0x20] sm:$0xf]
        %v2428 = vld [vmem:[%s2418 + $0x24] sm:$0xf]
        %v2429 = vld [vmem:[%s2418 + $0x28] sm:$0xf]
        %v2430 = vld [vmem:[%s2418 + $0x2c] sm:$0xf]
        %v2431 = vld [vmem:[%s2418 + $0x30] sm:$0xf]
        %v2432 = vld [vmem:[%s2418 + $0x34] sm:$0xf]
        %v2433 = vld [vmem:[%s2418 + $0x38] sm:$0xf]
        %v2434 = vld [vmem:[%s2418 + $0x3c] sm:$0xf]
        %v2451 = vunpack.c.l.b16 %v2419
        %v2452 = vunpack.c.l.b16 %v2420
        %v2453 = vunpack.c.l.b16 %v2421
        %v2454 = vunpack.c.l.b16 %v2422
        %v2455 = vunpack.c.l.b16 %v2423
        %v2456 = vunpack.c.l.b16 %v2424
        %v2457 = vunpack.c.l.b16 %v2425
        %v2458 = vunpack.c.l.b16 %v2426
        %v2459 = vunpack.c.l.b16 %v2427
        %v2460 = vunpack.c.l.b16 %v2428
        %v2461 = vunpack.c.l.b16 %v2429
        %v2462 = vunpack.c.l.b16 %v2430
        %v2463 = vunpack.c.l.b16 %v2431
        %v2464 = vunpack.c.l.b16 %v2432
        %v2465 = vunpack.c.l.b16 %v2433
        %v2466 = vunpack.c.l.b16 %v2434
        %v2467 = vpack.c.b16 %v2452, %v2451
        %v2468 = vpack.c.b16 %v2454, %v2453
        %v2469 = vpack.c.b16 %v2456, %v2455
        %v2470 = vpack.c.b16 %v2458, %v2457
        %v2471 = vpack.c.b16 %v2460, %v2459
        %v2472 = vpack.c.b16 %v2462, %v2461
        %v2473 = vpack.c.b16 %v2464, %v2463
        %v2474 = vpack.c.b16 %v2466, %v2465
        %2483 = vmatprep.subr.bf16.mxu0 0
        %2484 = vmatpush1.bf16.msra.mxu0 %v2474
        %2485 = vmatprep.subr.bf16.mxu0 0
        %2486 = vmatpush1.bf16.msra.mxu0 %v2473
        %2487 = vmatprep.subr.bf16.mxu0 0
        %2488 = vmatpush1.bf16.msra.mxu0 %v2472
        %2489 = vmatprep.subr.bf16.mxu0 0
        %2490 = vmatpush1.bf16.msra.mxu0 %v2471
        %2491 = vmatprep.subr.bf16.mxu0 0
        %2492 = vmatpush1.bf16.msra.mxu0 %v2470
        %2493 = vmatprep.subr.bf16.mxu0 0
        %2494 = vmatpush1.bf16.msra.mxu0 %v2469
        %2495 = vmatprep.subr.bf16.mxu0 0
        %2496 = vmatpush1.bf16.msra.mxu0 %v2468
        %2497 = vmatprep.subr.bf16.mxu0 0
        %2498 = vmatpush1.bf16.msra.mxu0 %v2467
        %2499 = vmatprep.subr.bf16.mxu0 0
        %2500 = vmatpush2.bf16.msra.mxu0 0
        %2501 = vmatprep.subr.bf16.mxu0 0
        %2502 = vmatpush2.bf16.msra.mxu0 0
        %2503 = vmatprep.subr.bf16.mxu0 0
        %2504 = vmatpush2.bf16.msra.mxu0 0
        %2505 = vmatprep.subr.bf16.mxu0 0
        %2506 = vmatpush2.bf16.msra.mxu0 0
        %2507 = vmatprep.subr.bf16.mxu0 0
        %2508 = vmatpush2.bf16.msra.mxu0 0
        %2509 = vmatprep.subr.bf16.mxu0 0
        %2510 = vmatpush2.bf16.msra.mxu0 0
        %2511 = vmatprep.subr.bf16.mxu0 0
        %2512 = vmatpush2.bf16.msra.mxu0 0
        %2513 = vmatprep.subr.bf16.mxu0 0
        %2514 = vmatpush2.bf16.msra.mxu0 0
        %2515 = vmatprep.mubr.bf16.mxu0 0
        %2516 = vmatmul.mubr.bf16.gmra.mxu0 %v1555
        %v2517 = vpop.f32.mrf.mxu0
        %v2518 = vadd.f32 0.0, %v2517
        %v2519 = vpop.f32.mrf.mxu0
        %v2520 = vpop.f32.mrf.mxu0
        %v2521 = vadd.f32 0.0, %v2520
        %v2522 = vpop.f32.mrf.mxu0
        %2523 = vmatprep.mubr.bf16.mxu0 0
        %2524 = vmatmul.mubr.bf16.gmra.mxu0 %v1556
        %v2525 = vpop.f32.mrf.mxu0
        %v2526 = vadd.f32 0.0, %v2525
        %v2527 = vpop.f32.mrf.mxu0
        %v2528 = vpop.f32.mrf.mxu0
        %v2529 = vadd.f32 0.0, %v2528
        %v2530 = vpop.f32.mrf.mxu0
        %2531 = vmatprep.mubr.bf16.mxu0 0
        %2532 = vmatmul.mubr.bf16.gmra.mxu0 %v1557
        %v2533 = vpop.f32.mrf.mxu0
        %v2534 = vadd.f32 0.0, %v2533
        %v2535 = vpop.f32.mrf.mxu0
        %v2536 = vpop.f32.mrf.mxu0
        %v2537 = vadd.f32 0.0, %v2536
        %v2538 = vpop.f32.mrf.mxu0
        %2539 = vmatprep.mubr.bf16.mxu0 0
        %2540 = vmatmul.mubr.bf16.gmra.mxu0 %v1558
        %v2541 = vpop.f32.mrf.mxu0
        %v2542 = vadd.f32 0.0, %v2541
        %v2543 = vpop.f32.mrf.mxu0
        %v2544 = vpop.f32.mrf.mxu0
        %v2545 = vadd.f32 0.0, %v2544
        %v2546 = vpop.f32.mrf.mxu0
        %2547 = vmatprep.mubr.bf16.mxu0 0
        %2548 = vmatmul.mubr.bf16.gmra.mxu0 %v1559
        %v2549 = vpop.f32.mrf.mxu0
        %v2550 = vadd.f32 0.0, %v2549
        %v2551 = vpop.f32.mrf.mxu0
        %v2552 = vpop.f32.mrf.mxu0
        %v2553 = vadd.f32 0.0, %v2552
        %v2554 = vpop.f32.mrf.mxu0
        %2555 = vmatprep.mubr.bf16.mxu0 0
        %2556 = vmatmul.mubr.bf16.gmra.mxu0 %v1560
        %v2557 = vpop.f32.mrf.mxu0
        %v2558 = vadd.f32 0.0, %v2557
        %v2559 = vpop.f32.mrf.mxu0
        %v2560 = vpop.f32.mrf.mxu0
        %v2561 = vadd.f32 0.0, %v2560
        %v2562 = vpop.f32.mrf.mxu0
        %2563 = vmatprep.mubr.bf16.mxu0 0
        %2564 = vmatmul.mubr.bf16.gmra.mxu0 %v1561
        %v2565 = vpop.f32.mrf.mxu0
        %v2566 = vadd.f32 0.0, %v2565
        %v2567 = vpop.f32.mrf.mxu0
        %v2568 = vpop.f32.mrf.mxu0
        %v2569 = vadd.f32 0.0, %v2568
        %v2570 = vpop.f32.mrf.mxu0
        %2571 = vmatprep.mubr.bf16.mxu0 0
        %2572 = vmatmul.mubr.bf16.gmra.mxu0 %v1562
        %v2573 = vpop.f32.mrf.mxu0
        %v2574 = vadd.f32 0.0, %v2573
        %v2575 = vpop.f32.mrf.mxu0
        %v2576 = vpop.f32.mrf.mxu0
        %v2577 = vadd.f32 0.0, %v2576
        %v2578 = vpop.f32.mrf.mxu0
        %2579 = vmatprep.mubr.bf16.mxu0 0
        %2580 = vmatmul.mubr.bf16.gmra.mxu0 %v1563
        %v2581 = vpop.f32.mrf.mxu0
        %v2582 = vadd.f32 0.0, %v2581
        %v2583 = vpop.f32.mrf.mxu0
        %v2584 = vpop.f32.mrf.mxu0
        %v2585 = vadd.f32 0.0, %v2584
        %v2586 = vpop.f32.mrf.mxu0
        %2587 = vmatprep.mubr.bf16.mxu0 0
        %2588 = vmatmul.mubr.bf16.gmra.mxu0 %v1564
        %v2589 = vpop.f32.mrf.mxu0
        %v2590 = vadd.f32 0.0, %v2589
        %v2591 = vpop.f32.mrf.mxu0
        %v2592 = vpop.f32.mrf.mxu0
        %v2593 = vadd.f32 0.0, %v2592
        %v2594 = vpop.f32.mrf.mxu0
        %2595 = vmatprep.mubr.bf16.mxu0 0
        %2596 = vmatmul.mubr.bf16.gmra.mxu0 %v1565
        %v2597 = vpop.f32.mrf.mxu0
        %v2598 = vadd.f32 0.0, %v2597
        %v2599 = vpop.f32.mrf.mxu0
        %v2600 = vpop.f32.mrf.mxu0
        %v2601 = vadd.f32 0.0, %v2600
        %v2602 = vpop.f32.mrf.mxu0
        %2603 = vmatprep.mubr.bf16.mxu0 0
        %2604 = vmatmul.mubr.bf16.gmra.mxu0 %v1566
        %v2605 = vpop.f32.mrf.mxu0
        %v2606 = vadd.f32 0.0, %v2605
        %v2607 = vpop.f32.mrf.mxu0
        %v2608 = vpop.f32.mrf.mxu0
        %v2609 = vadd.f32 0.0, %v2608
        %v2610 = vpop.f32.mrf.mxu0
        %2611 = vmatprep.mubr.bf16.mxu0 0
        %2612 = vmatmul.mubr.bf16.gmra.mxu0 %v1567
        %v2613 = vpop.f32.mrf.mxu0
        %v2614 = vadd.f32 0.0, %v2613
        %v2615 = vpop.f32.mrf.mxu0
        %v2616 = vpop.f32.mrf.mxu0
        %v2617 = vadd.f32 0.0, %v2616
        %v2618 = vpop.f32.mrf.mxu0
        %2619 = vmatprep.mubr.bf16.mxu0 0
        %2620 = vmatmul.mubr.bf16.gmra.mxu0 %v1568
        %v2621 = vpop.f32.mrf.mxu0
        %v2622 = vadd.f32 0.0, %v2621
        %v2623 = vpop.f32.mrf.mxu0
        %v2624 = vpop.f32.mrf.mxu0
        %v2625 = vadd.f32 0.0, %v2624
        %v2626 = vpop.f32.mrf.mxu0
        %2627 = vmatprep.mubr.bf16.mxu0 0
        %2628 = vmatmul.mubr.bf16.gmra.mxu0 %v1569
        %v2629 = vpop.f32.mrf.mxu0
        %v2630 = vadd.f32 0.0, %v2629
        %v2631 = vpop.f32.mrf.mxu0
        %v2632 = vpop.f32.mrf.mxu0
        %v2633 = vadd.f32 0.0, %v2632
        %v2634 = vpop.f32.mrf.mxu0
        %2635 = vmatprep.mubr.bf16.mxu0 0
        %2636 = vmatmul.mubr.bf16.gmra.mxu0 %v1570
        %v2637 = vpop.f32.mrf.mxu0
        %v2638 = vadd.f32 0.0, %v2637
        %v2639 = vpop.f32.mrf.mxu0
        %v2640 = vpop.f32.mrf.mxu0
        %v2641 = vadd.f32 0.0, %v2640
        %v2642 = vpop.f32.mrf.mxu0
        %2643 = vmatprep.mubr.bf16.mxu0 0
        %2644 = vmatmul.mubr.bf16.gmra.mxu0 %v1571
        %v2645 = vpop.f32.mrf.mxu0
        %v2646 = vadd.f32 0.0, %v2645
        %v2647 = vpop.f32.mrf.mxu0
        %v2648 = vpop.f32.mrf.mxu0
        %v2649 = vadd.f32 0.0, %v2648
        %v2650 = vpop.f32.mrf.mxu0
        %2651 = vmatprep.mubr.bf16.mxu0 0
        %2652 = vmatmul.mubr.bf16.gmra.mxu0 %v1572
        %v2653 = vpop.f32.mrf.mxu0
        %v2654 = vadd.f32 0.0, %v2653
        %v2655 = vpop.f32.mrf.mxu0
        %v2656 = vpop.f32.mrf.mxu0
        %v2657 = vadd.f32 0.0, %v2656
        %v2658 = vpop.f32.mrf.mxu0
        %2659 = vdwg.mxu0
        %v2660 = vadd.f32 %v2382, %v2518
        %v2661 = vadd.f32 %v2383, %v2521
        %v2662 = vadd.f32 %v2384, %v2526
        %v2663 = vadd.f32 %v2385, %v2529
        %v2664 = vadd.f32 %v2386, %v2534
        %v2665 = vadd.f32 %v2387, %v2537
        %v2666 = vadd.f32 %v2388, %v2542
        %v2667 = vadd.f32 %v2389, %v2545
        %v2668 = vadd.f32 %v2390, %v2550
        %v2669 = vadd.f32 %v2391, %v2553
        %v2670 = vadd.f32 %v2392, %v2558
        %v2671 = vadd.f32 %v2393, %v2561
        %v2672 = vadd.f32 %v2394, %v2566
        %v2673 = vadd.f32 %v2395, %v2569
        %v2674 = vadd.f32 %v2396, %v2574
        %v2675 = vadd.f32 %v2397, %v2577
        %v2676 = vadd.f32 %v2398, %v2582
        %v2677 = vadd.f32 %v2399, %v2585
        %v2678 = vadd.f32 %v2400, %v2590
        %v2679 = vadd.f32 %v2401, %v2593
        %v2680 = vadd.f32 %v2402, %v2598
        %v2681 = vadd.f32 %v2403, %v2601
        %v2682 = vadd.f32 %v2404, %v2606
        %v2683 = vadd.f32 %v2405, %v2609
        %v2684 = vadd.f32 %v2406, %v2614
        %v2685 = vadd.f32 %v2407, %v2617
        %v2686 = vadd.f32 %v2408, %v2622
        %v2687 = vadd.f32 %v2409, %v2625
        %v2688 = vadd.f32 %v2410, %v2630
        %v2689 = vadd.f32 %v2411, %v2633
        %v2690 = vadd.f32 %v2412, %v2638
        %v2691 = vadd.f32 %v2413, %v2641
        %v2692 = vadd.f32 %v2414, %v2646
        %v2693 = vadd.f32 %v2415, %v2649
        %v2694 = vadd.f32 %v2416, %v2654
        %v2695 = vadd.f32 %v2417, %v2657
        %s2696 = scalar_lea.vmem %s8, 256
        %v2697 = vld [vmem:[%s2696] sm:$0xf]
        %v2698 = vld [vmem:[%s2696 + $0x4] sm:$0xf]
        %v2699 = vld [vmem:[%s2696 + $0x8] sm:$0xf]
        %v2700 = vld [vmem:[%s2696 + $0xc] sm:$0xf]
        %v2701 = vld [vmem:[%s2696 + $0x10] sm:$0xf]
        %v2702 = vld [vmem:[%s2696 + $0x14] sm:$0xf]
        %v2703 = vld [vmem:[%s2696 + $0x18] sm:$0xf]
        %v2704 = vld [vmem:[%s2696 + $0x1c] sm:$0xf]
        %v2705 = vld [vmem:[%s2696 + $0x20] sm:$0xf]
        %v2706 = vld [vmem:[%s2696 + $0x24] sm:$0xf]
        %v2707 = vld [vmem:[%s2696 + $0x28] sm:$0xf]
        %v2708 = vld [vmem:[%s2696 + $0x2c] sm:$0xf]
        %v2709 = vld [vmem:[%s2696 + $0x30] sm:$0xf]
        %v2710 = vld [vmem:[%s2696 + $0x34] sm:$0xf]
        %v2711 = vld [vmem:[%s2696 + $0x38] sm:$0xf]
        %v2712 = vld [vmem:[%s2696 + $0x3c] sm:$0xf]
        %v2729 = vunpack.c.l.b16 %v2697
        %v2730 = vunpack.c.l.b16 %v2698
        %v2731 = vunpack.c.l.b16 %v2699
        %v2732 = vunpack.c.l.b16 %v2700
        %v2733 = vunpack.c.l.b16 %v2701
        %v2734 = vunpack.c.l.b16 %v2702
        %v2735 = vunpack.c.l.b16 %v2703
        %v2736 = vunpack.c.l.b16 %v2704
        %v2737 = vunpack.c.l.b16 %v2705
        %v2738 = vunpack.c.l.b16 %v2706
        %v2739 = vunpack.c.l.b16 %v2707
        %v2740 = vunpack.c.l.b16 %v2708
        %v2741 = vunpack.c.l.b16 %v2709
        %v2742 = vunpack.c.l.b16 %v2710
        %v2743 = vunpack.c.l.b16 %v2711
        %v2744 = vunpack.c.l.b16 %v2712
        %v2745 = vpack.c.b16 %v2730, %v2729
        %v2746 = vpack.c.b16 %v2732, %v2731
        %v2747 = vpack.c.b16 %v2734, %v2733
        %v2748 = vpack.c.b16 %v2736, %v2735
        %v2749 = vpack.c.b16 %v2738, %v2737
        %v2750 = vpack.c.b16 %v2740, %v2739
        %v2751 = vpack.c.b16 %v2742, %v2741
        %v2752 = vpack.c.b16 %v2744, %v2743
        %2761 = vmatprep.subr.bf16.mxu0 0
        %2762 = vmatpush1.bf16.msra.mxu0 %v2752
        %2763 = vmatprep.subr.bf16.mxu0 0
        %2764 = vmatpush1.bf16.msra.mxu0 %v2751
        %2765 = vmatprep.subr.bf16.mxu0 0
        %2766 = vmatpush1.bf16.msra.mxu0 %v2750
        %2767 = vmatprep.subr.bf16.mxu0 0
        %2768 = vmatpush1.bf16.msra.mxu0 %v2749
        %2769 = vmatprep.subr.bf16.mxu0 0
        %2770 = vmatpush1.bf16.msra.mxu0 %v2748
        %2771 = vmatprep.subr.bf16.mxu0 0
        %2772 = vmatpush1.bf16.msra.mxu0 %v2747
        %2773 = vmatprep.subr.bf16.mxu0 0
        %2774 = vmatpush1.bf16.msra.mxu0 %v2746
        %2775 = vmatprep.subr.bf16.mxu0 0
        %2776 = vmatpush1.bf16.msra.mxu0 %v2745
        %2777 = vmatprep.subr.bf16.mxu0 0
        %2778 = vmatpush2.bf16.msra.mxu0 0
        %2779 = vmatprep.subr.bf16.mxu0 0
        %2780 = vmatpush2.bf16.msra.mxu0 0
        %2781 = vmatprep.subr.bf16.mxu0 0
        %2782 = vmatpush2.bf16.msra.mxu0 0
        %2783 = vmatprep.subr.bf16.mxu0 0
        %2784 = vmatpush2.bf16.msra.mxu0 0
        %2785 = vmatprep.subr.bf16.mxu0 0
        %2786 = vmatpush2.bf16.msra.mxu0 0
        %2787 = vmatprep.subr.bf16.mxu0 0
        %2788 = vmatpush2.bf16.msra.mxu0 0
        %2789 = vmatprep.subr.bf16.mxu0 0
        %2790 = vmatpush2.bf16.msra.mxu0 0
        %2791 = vmatprep.subr.bf16.mxu0 0
        %2792 = vmatpush2.bf16.msra.mxu0 0
        %2793 = vmatprep.mubr.bf16.mxu0 0
        %2794 = vmatmul.mubr.bf16.gmra.mxu0 %v1340
        %v2795 = vpop.f32.mrf.mxu0
        %v2796 = vadd.f32 0.0, %v2795
        %v2797 = vpop.f32.mrf.mxu0
        %v2798 = vpop.f32.mrf.mxu0
        %v2799 = vadd.f32 0.0, %v2798
        %v2800 = vpop.f32.mrf.mxu0
        %2801 = vmatprep.mubr.bf16.mxu0 0
        %2802 = vmatmul.mubr.bf16.gmra.mxu0 %v1268
        %v2803 = vpop.f32.mrf.mxu0
        %v2804 = vadd.f32 0.0, %v2803
        %v2805 = vpop.f32.mrf.mxu0
        %v2806 = vpop.f32.mrf.mxu0
        %v2807 = vadd.f32 0.0, %v2806
        %v2808 = vpop.f32.mrf.mxu0
        %2809 = vmatprep.mubr.bf16.mxu0 0
        %2810 = vmatmul.mubr.bf16.gmra.mxu0 %v1318
        %v2811 = vpop.f32.mrf.mxu0
        %v2812 = vadd.f32 0.0, %v2811
        %v2813 = vpop.f32.mrf.mxu0
        %v2814 = vpop.f32.mrf.mxu0
        %v2815 = vadd.f32 0.0, %v2814
        %v2816 = vpop.f32.mrf.mxu0
        %2817 = vmatprep.mubr.bf16.mxu0 0
        %2818 = vmatmul.mubr.bf16.gmra.mxu0 %v1270
        %v2819 = vpop.f32.mrf.mxu0
        %v2820 = vadd.f32 0.0, %v2819
        %v2821 = vpop.f32.mrf.mxu0
        %v2822 = vpop.f32.mrf.mxu0
        %v2823 = vadd.f32 0.0, %v2822
        %v2824 = vpop.f32.mrf.mxu0
        %2825 = vmatprep.mubr.bf16.mxu0 0
        %2826 = vmatmul.mubr.bf16.gmra.mxu0 %v1320
        %v2827 = vpop.f32.mrf.mxu0
        %v2828 = vadd.f32 0.0, %v2827
        %v2829 = vpop.f32.mrf.mxu0
        %v2830 = vpop.f32.mrf.mxu0
        %v2831 = vadd.f32 0.0, %v2830
        %v2832 = vpop.f32.mrf.mxu0
        %2833 = vmatprep.mubr.bf16.mxu0 0
        %2834 = vmatmul.mubr.bf16.gmra.mxu0 %v1272
        %v2835 = vpop.f32.mrf.mxu0
        %v2836 = vadd.f32 0.0, %v2835
        %v2837 = vpop.f32.mrf.mxu0
        %v2838 = vpop.f32.mrf.mxu0
        %v2839 = vadd.f32 0.0, %v2838
        %v2840 = vpop.f32.mrf.mxu0
        %2841 = vmatprep.mubr.bf16.mxu0 0
        %2842 = vmatmul.mubr.bf16.gmra.mxu0 %v1322
        %v2843 = vpop.f32.mrf.mxu0
        %v2844 = vadd.f32 0.0, %v2843
        %v2845 = vpop.f32.mrf.mxu0
        %v2846 = vpop.f32.mrf.mxu0
        %v2847 = vadd.f32 0.0, %v2846
        %v2848 = vpop.f32.mrf.mxu0
        %2849 = vmatprep.mubr.bf16.mxu0 0
        %2850 = vmatmul.mubr.bf16.gmra.mxu0 %v1274
        %v2851 = vpop.f32.mrf.mxu0
        %v2852 = vadd.f32 0.0, %v2851
        %v2853 = vpop.f32.mrf.mxu0
        %v2854 = vpop.f32.mrf.mxu0
        %v2855 = vadd.f32 0.0, %v2854
        %v2856 = vpop.f32.mrf.mxu0
        %2857 = vmatprep.mubr.bf16.mxu0 0
        %2858 = vmatmul.mubr.bf16.gmra.mxu0 %v1324
        %v2859 = vpop.f32.mrf.mxu0
        %v2860 = vadd.f32 0.0, %v2859
        %v2861 = vpop.f32.mrf.mxu0
        %v2862 = vpop.f32.mrf.mxu0
        %v2863 = vadd.f32 0.0, %v2862
        %v2864 = vpop.f32.mrf.mxu0
        %2865 = vmatprep.mubr.bf16.mxu0 0
        %2866 = vmatmul.mubr.bf16.gmra.mxu0 %v1276
        %v2867 = vpop.f32.mrf.mxu0
        %v2868 = vadd.f32 0.0, %v2867
        %v2869 = vpop.f32.mrf.mxu0
        %v2870 = vpop.f32.mrf.mxu0
        %v2871 = vadd.f32 0.0, %v2870
        %v2872 = vpop.f32.mrf.mxu0
        %2873 = vmatprep.mubr.bf16.mxu0 0
        %2874 = vmatmul.mubr.bf16.gmra.mxu0 %v1326
        %v2875 = vpop.f32.mrf.mxu0
        %v2876 = vadd.f32 0.0, %v2875
        %v2877 = vpop.f32.mrf.mxu0
        %v2878 = vpop.f32.mrf.mxu0
        %v2879 = vadd.f32 0.0, %v2878
        %v2880 = vpop.f32.mrf.mxu0
        %2881 = vmatprep.mubr.bf16.mxu0 0
        %2882 = vmatmul.mubr.bf16.gmra.mxu0 %v1278
        %v2883 = vpop.f32.mrf.mxu0
        %v2884 = vadd.f32 0.0, %v2883
        %v2885 = vpop.f32.mrf.mxu0
        %v2886 = vpop.f32.mrf.mxu0
        %v2887 = vadd.f32 0.0, %v2886
        %v2888 = vpop.f32.mrf.mxu0
        %2889 = vmatprep.mubr.bf16.mxu0 0
        %2890 = vmatmul.mubr.bf16.gmra.mxu0 %v1328
        %v2891 = vpop.f32.mrf.mxu0
        %v2892 = vadd.f32 0.0, %v2891
        %v2893 = vpop.f32.mrf.mxu0
        %v2894 = vpop.f32.mrf.mxu0
        %v2895 = vadd.f32 0.0, %v2894
        %v2896 = vpop.f32.mrf.mxu0
        %2897 = vmatprep.mubr.bf16.mxu0 0
        %2898 = vmatmul.mubr.bf16.gmra.mxu0 %v1280
        %v2899 = vpop.f32.mrf.mxu0
        %v2900 = vadd.f32 0.0, %v2899
        %v2901 = vpop.f32.mrf.mxu0
        %v2902 = vpop.f32.mrf.mxu0
        %v2903 = vadd.f32 0.0, %v2902
        %v2904 = vpop.f32.mrf.mxu0
        %2905 = vmatprep.mubr.bf16.mxu0 0
        %2906 = vmatmul.mubr.bf16.gmra.mxu0 %v1330
        %v2907 = vpop.f32.mrf.mxu0
        %v2908 = vadd.f32 0.0, %v2907
        %v2909 = vpop.f32.mrf.mxu0
        %v2910 = vpop.f32.mrf.mxu0
        %v2911 = vadd.f32 0.0, %v2910
        %v2912 = vpop.f32.mrf.mxu0
        %2913 = vmatprep.mubr.bf16.mxu0 0
        %2914 = vmatmul.mubr.bf16.gmra.mxu0 %v1282
        %v2915 = vpop.f32.mrf.mxu0
        %v2916 = vadd.f32 0.0, %v2915
        %v2917 = vpop.f32.mrf.mxu0
        %v2918 = vpop.f32.mrf.mxu0
        %v2919 = vadd.f32 0.0, %v2918
        %v2920 = vpop.f32.mrf.mxu0
        %2921 = vmatprep.mubr.bf16.mxu0 0
        %2922 = vmatmul.mubr.bf16.gmra.mxu0 %v1332
        %v2923 = vpop.f32.mrf.mxu0
        %v2924 = vadd.f32 0.0, %v2923
        %v2925 = vpop.f32.mrf.mxu0
        %v2926 = vpop.f32.mrf.mxu0
        %v2927 = vadd.f32 0.0, %v2926
        %v2928 = vpop.f32.mrf.mxu0
        %2929 = vmatprep.mubr.bf16.mxu0 0
        %2930 = vmatmul.mubr.bf16.gmra.mxu0 %v1341
        %v2931 = vpop.f32.mrf.mxu0
        %v2932 = vadd.f32 0.0, %v2931
        %v2933 = vpop.f32.mrf.mxu0
        %v2934 = vpop.f32.mrf.mxu0
        %v2935 = vadd.f32 0.0, %v2934
        %v2936 = vpop.f32.mrf.mxu0
        %2937 = vdwg.mxu0
        %v2938 = vadd.f32 %v2660, %v2796
        %v2939 = vadd.f32 %v2661, %v2799
        %v2940 = vadd.f32 %v2662, %v2804
        %v2941 = vadd.f32 %v2663, %v2807
        %v2942 = vadd.f32 %v2664, %v2812
        %v2943 = vadd.f32 %v2665, %v2815
        %v2944 = vadd.f32 %v2666, %v2820
        %v2945 = vadd.f32 %v2667, %v2823
        %v2946 = vadd.f32 %v2668, %v2828
        %v2947 = vadd.f32 %v2669, %v2831
        %v2948 = vadd.f32 %v2670, %v2836
        %v2949 = vadd.f32 %v2671, %v2839
        %v2950 = vadd.f32 %v2672, %v2844
        %v2951 = vadd.f32 %v2673, %v2847
        %v2952 = vadd.f32 %v2674, %v2852
        %v2953 = vadd.f32 %v2675, %v2855
        %v2954 = vadd.f32 %v2676, %v2860
        %v2955 = vadd.f32 %v2677, %v2863
        %v2956 = vadd.f32 %v2678, %v2868
        %v2957 = vadd.f32 %v2679, %v2871
        %v2958 = vadd.f32 %v2680, %v2876
        %v2959 = vadd.f32 %v2681, %v2879
        %v2960 = vadd.f32 %v2682, %v2884
        %v2961 = vadd.f32 %v2683, %v2887
        %v2962 = vadd.f32 %v2684, %v2892
        %v2963 = vadd.f32 %v2685, %v2895
        %v2964 = vadd.f32 %v2686, %v2900
        %v2965 = vadd.f32 %v2687, %v2903
        %v2966 = vadd.f32 %v2688, %v2908
        %v2967 = vadd.f32 %v2689, %v2911
        %v2968 = vadd.f32 %v2690, %v2916
        %v2969 = vadd.f32 %v2691, %v2919
        %v2970 = vadd.f32 %v2692, %v2924
        %v2971 = vadd.f32 %v2693, %v2927
        %v2972 = vadd.f32 %v2694, %v2932
        %v2973 = vadd.f32 %v2695, %v2935
        %s2974 = scalar_lea.vmem %s8, 320
        %v2975 = vld [vmem:[%s2974] sm:$0xf]
        %v2976 = vld [vmem:[%s2974 + $0x4] sm:$0xf]
        %v2977 = vld [vmem:[%s2974 + $0x8] sm:$0xf]
        %v2978 = vld [vmem:[%s2974 + $0xc] sm:$0xf]
        %v2979 = vld [vmem:[%s2974 + $0x10] sm:$0xf]
        %v2980 = vld [vmem:[%s2974 + $0x14] sm:$0xf]
        %v2981 = vld [vmem:[%s2974 + $0x18] sm:$0xf]
        %v2982 = vld [vmem:[%s2974 + $0x1c] sm:$0xf]
        %v2983 = vld [vmem:[%s2974 + $0x20] sm:$0xf]
        %v2984 = vld [vmem:[%s2974 + $0x24] sm:$0xf]
        %v2985 = vld [vmem:[%s2974 + $0x28] sm:$0xf]
        %v2986 = vld [vmem:[%s2974 + $0x2c] sm:$0xf]
        %v2987 = vld [vmem:[%s2974 + $0x30] sm:$0xf]
        %v2988 = vld [vmem:[%s2974 + $0x34] sm:$0xf]
        %v2989 = vld [vmem:[%s2974 + $0x38] sm:$0xf]
        %v2990 = vld [vmem:[%s2974 + $0x3c] sm:$0xf]
        %v3007 = vunpack.c.l.b16 %v2975
        %v3008 = vunpack.c.l.b16 %v2976
        %v3009 = vunpack.c.l.b16 %v2977
        %v3010 = vunpack.c.l.b16 %v2978
        %v3011 = vunpack.c.l.b16 %v2979
        %v3012 = vunpack.c.l.b16 %v2980
        %v3013 = vunpack.c.l.b16 %v2981
        %v3014 = vunpack.c.l.b16 %v2982
        %v3015 = vunpack.c.l.b16 %v2983
        %v3016 = vunpack.c.l.b16 %v2984
        %v3017 = vunpack.c.l.b16 %v2985
        %v3018 = vunpack.c.l.b16 %v2986
        %v3019 = vunpack.c.l.b16 %v2987
        %v3020 = vunpack.c.l.b16 %v2988
        %v3021 = vunpack.c.l.b16 %v2989
        %v3022 = vunpack.c.l.b16 %v2990
        %v3023 = vpack.c.b16 %v3008, %v3007
        %v3024 = vpack.c.b16 %v3010, %v3009
        %v3025 = vpack.c.b16 %v3012, %v3011
        %v3026 = vpack.c.b16 %v3014, %v3013
        %v3027 = vpack.c.b16 %v3016, %v3015
        %v3028 = vpack.c.b16 %v3018, %v3017
        %v3029 = vpack.c.b16 %v3020, %v3019
        %v3030 = vpack.c.b16 %v3022, %v3021
        %3039 = vmatprep.subr.bf16.mxu0 0
        %3040 = vmatpush1.bf16.msra.mxu0 %v3030
        %3041 = vmatprep.subr.bf16.mxu0 0
        %3042 = vmatpush1.bf16.msra.mxu0 %v3029
        %3043 = vmatprep.subr.bf16.mxu0 0
        %3044 = vmatpush1.bf16.msra.mxu0 %v3028
        %3045 = vmatprep.subr.bf16.mxu0 0
        %3046 = vmatpush1.bf16.msra.mxu0 %v3027
        %3047 = vmatprep.subr.bf16.mxu0 0
        %3048 = vmatpush1.bf16.msra.mxu0 %v3026
        %3049 = vmatprep.subr.bf16.mxu0 0
        %3050 = vmatpush1.bf16.msra.mxu0 %v3025
        %3051 = vmatprep.subr.bf16.mxu0 0
        %3052 = vmatpush1.bf16.msra.mxu0 %v3024
        %3053 = vmatprep.subr.bf16.mxu0 0
        %3054 = vmatpush1.bf16.msra.mxu0 %v3023
        %3055 = vmatprep.subr.bf16.mxu0 0
        %3056 = vmatpush2.bf16.msra.mxu0 0
        %3057 = vmatprep.subr.bf16.mxu0 0
        %3058 = vmatpush2.bf16.msra.mxu0 0
        %3059 = vmatprep.subr.bf16.mxu0 0
        %3060 = vmatpush2.bf16.msra.mxu0 0
        %3061 = vmatprep.subr.bf16.mxu0 0
        %3062 = vmatpush2.bf16.msra.mxu0 0
        %3063 = vmatprep.subr.bf16.mxu0 0
        %3064 = vmatpush2.bf16.msra.mxu0 0
        %3065 = vmatprep.subr.bf16.mxu0 0
        %3066 = vmatpush2.bf16.msra.mxu0 0
        %3067 = vmatprep.subr.bf16.mxu0 0
        %3068 = vmatpush2.bf16.msra.mxu0 0
        %3069 = vmatprep.subr.bf16.mxu0 0
        %3070 = vmatpush2.bf16.msra.mxu0 0
        %3071 = vmatprep.mubr.bf16.mxu0 0
        %3072 = vmatmul.mubr.bf16.gmra.mxu0 %v1638
        %v3073 = vpop.f32.mrf.mxu0
        %v3074 = vadd.f32 0.0, %v3073
        %v3075 = vpop.f32.mrf.mxu0
        %v3076 = vpop.f32.mrf.mxu0
        %v3077 = vadd.f32 0.0, %v3076
        %v3078 = vpop.f32.mrf.mxu0
        %3079 = vmatprep.mubr.bf16.mxu0 0
        %3080 = vmatmul.mubr.bf16.gmra.mxu0 %v1639
        %v3081 = vpop.f32.mrf.mxu0
        %v3082 = vadd.f32 0.0, %v3081
        %v3083 = vpop.f32.mrf.mxu0
        %v3084 = vpop.f32.mrf.mxu0
        %v3085 = vadd.f32 0.0, %v3084
        %v3086 = vpop.f32.mrf.mxu0
        %3087 = vmatprep.mubr.bf16.mxu0 0
        %3088 = vmatmul.mubr.bf16.gmra.mxu0 %v1640
        %v3089 = vpop.f32.mrf.mxu0
        %v3090 = vadd.f32 0.0, %v3089
        %v3091 = vpop.f32.mrf.mxu0
        %v3092 = vpop.f32.mrf.mxu0
        %v3093 = vadd.f32 0.0, %v3092
        %v3094 = vpop.f32.mrf.mxu0
        %3095 = vmatprep.mubr.bf16.mxu0 0
        %3096 = vmatmul.mubr.bf16.gmra.mxu0 %v1641
        %v3097 = vpop.f32.mrf.mxu0
        %v3098 = vadd.f32 0.0, %v3097
        %v3099 = vpop.f32.mrf.mxu0
        %v3100 = vpop.f32.mrf.mxu0
        %v3101 = vadd.f32 0.0, %v3100
        %v3102 = vpop.f32.mrf.mxu0
        %3103 = vmatprep.mubr.bf16.mxu0 0
        %3104 = vmatmul.mubr.bf16.gmra.mxu0 %v1642
        %v3105 = vpop.f32.mrf.mxu0
        %v3106 = vadd.f32 0.0, %v3105
        %v3107 = vpop.f32.mrf.mxu0
        %v3108 = vpop.f32.mrf.mxu0
        %v3109 = vadd.f32 0.0, %v3108
        %v3110 = vpop.f32.mrf.mxu0
        %3111 = vmatprep.mubr.bf16.mxu0 0
        %3112 = vmatmul.mubr.bf16.gmra.mxu0 %v1643
        %v3113 = vpop.f32.mrf.mxu0
        %v3114 = vadd.f32 0.0, %v3113
        %v3115 = vpop.f32.mrf.mxu0
        %v3116 = vpop.f32.mrf.mxu0
        %v3117 = vadd.f32 0.0, %v3116
        %v3118 = vpop.f32.mrf.mxu0
        %3119 = vmatprep.mubr.bf16.mxu0 0
        %3120 = vmatmul.mubr.bf16.gmra.mxu0 %v1644
        %v3121 = vpop.f32.mrf.mxu0
        %v3122 = vadd.f32 0.0, %v3121
        %v3123 = vpop.f32.mrf.mxu0
        %v3124 = vpop.f32.mrf.mxu0
        %v3125 = vadd.f32 0.0, %v3124
        %v3126 = vpop.f32.mrf.mxu0
        %3127 = vmatprep.mubr.bf16.mxu0 0
        %3128 = vmatmul.mubr.bf16.gmra.mxu0 %v1645
        %v3129 = vpop.f32.mrf.mxu0
        %v3130 = vadd.f32 0.0, %v3129
        %v3131 = vpop.f32.mrf.mxu0
        %v3132 = vpop.f32.mrf.mxu0
        %v3133 = vadd.f32 0.0, %v3132
        %v3134 = vpop.f32.mrf.mxu0
        %3135 = vmatprep.mubr.bf16.mxu0 0
        %3136 = vmatmul.mubr.bf16.gmra.mxu0 %v1646
        %v3137 = vpop.f32.mrf.mxu0
        %v3138 = vadd.f32 0.0, %v3137
        %v3139 = vpop.f32.mrf.mxu0
        %v3140 = vpop.f32.mrf.mxu0
        %v3141 = vadd.f32 0.0, %v3140
        %v3142 = vpop.f32.mrf.mxu0
        %3143 = vmatprep.mubr.bf16.mxu0 0
        %3144 = vmatmul.mubr.bf16.gmra.mxu0 %v1647
        %v3145 = vpop.f32.mrf.mxu0
        %v3146 = vadd.f32 0.0, %v3145
        %v3147 = vpop.f32.mrf.mxu0
        %v3148 = vpop.f32.mrf.mxu0
        %v3149 = vadd.f32 0.0, %v3148
        %v3150 = vpop.f32.mrf.mxu0
        %3151 = vmatprep.mubr.bf16.mxu0 0
        %3152 = vmatmul.mubr.bf16.gmra.mxu0 %v1648
        %v3153 = vpop.f32.mrf.mxu0
        %v3154 = vadd.f32 0.0, %v3153
        %v3155 = vpop.f32.mrf.mxu0
        %v3156 = vpop.f32.mrf.mxu0
        %v3157 = vadd.f32 0.0, %v3156
        %v3158 = vpop.f32.mrf.mxu0
        %3159 = vmatprep.mubr.bf16.mxu0 0
        %3160 = vmatmul.mubr.bf16.gmra.mxu0 %v1649
        %v3161 = vpop.f32.mrf.mxu0
        %v3162 = vadd.f32 0.0, %v3161
        %v3163 = vpop.f32.mrf.mxu0
        %v3164 = vpop.f32.mrf.mxu0
        %v3165 = vadd.f32 0.0, %v3164
        %v3166 = vpop.f32.mrf.mxu0
        %3167 = vmatprep.mubr.bf16.mxu0 0
        %3168 = vmatmul.mubr.bf16.gmra.mxu0 %v1650
        %v3169 = vpop.f32.mrf.mxu0
        %v3170 = vadd.f32 0.0, %v3169
        %v3171 = vpop.f32.mrf.mxu0
        %v3172 = vpop.f32.mrf.mxu0
        %v3173 = vadd.f32 0.0, %v3172
        %v3174 = vpop.f32.mrf.mxu0
        %3175 = vmatprep.mubr.bf16.mxu0 0
        %3176 = vmatmul.mubr.bf16.gmra.mxu0 %v1651
        %v3177 = vpop.f32.mrf.mxu0
        %v3178 = vadd.f32 0.0, %v3177
        %v3179 = vpop.f32.mrf.mxu0
        %v3180 = vpop.f32.mrf.mxu0
        %v3181 = vadd.f32 0.0, %v3180
        %v3182 = vpop.f32.mrf.mxu0
        %3183 = vmatprep.mubr.bf16.mxu0 0
        %3184 = vmatmul.mubr.bf16.gmra.mxu0 %v1652
        %v3185 = vpop.f32.mrf.mxu0
        %v3186 = vadd.f32 0.0, %v3185
        %v3187 = vpop.f32.mrf.mxu0
        %v3188 = vpop.f32.mrf.mxu0
        %v3189 = vadd.f32 0.0, %v3188
        %v3190 = vpop.f32.mrf.mxu0
        %3191 = vmatprep.mubr.bf16.mxu0 0
        %3192 = vmatmul.mubr.bf16.gmra.mxu0 %v1653
        %v3193 = vpop.f32.mrf.mxu0
        %v3194 = vadd.f32 0.0, %v3193
        %v3195 = vpop.f32.mrf.mxu0
        %v3196 = vpop.f32.mrf.mxu0
        %v3197 = vadd.f32 0.0, %v3196
        %v3198 = vpop.f32.mrf.mxu0
        %3199 = vmatprep.mubr.bf16.mxu0 0
        %3200 = vmatmul.mubr.bf16.gmra.mxu0 %v1654
        %v3201 = vpop.f32.mrf.mxu0
        %v3202 = vadd.f32 0.0, %v3201
        %v3203 = vpop.f32.mrf.mxu0
        %v3204 = vpop.f32.mrf.mxu0
        %v3205 = vadd.f32 0.0, %v3204
        %v3206 = vpop.f32.mrf.mxu0
        %3207 = vmatprep.mubr.bf16.mxu0 0
        %3208 = vmatmul.mubr.bf16.gmra.mxu0 %v1655
        %v3209 = vpop.f32.mrf.mxu0
        %v3210 = vadd.f32 0.0, %v3209
        %v3211 = vpop.f32.mrf.mxu0
        %v3212 = vpop.f32.mrf.mxu0
        %v3213 = vadd.f32 0.0, %v3212
        %v3214 = vpop.f32.mrf.mxu0
        %3215 = vdwg.mxu0
        %v3216 = vadd.f32 %v2938, %v3074
        %v3217 = vadd.f32 %v2939, %v3077
        %v3218 = vadd.f32 %v2940, %v3082
        %v3219 = vadd.f32 %v2941, %v3085
        %v3220 = vadd.f32 %v2942, %v3090
        %v3221 = vadd.f32 %v2943, %v3093
        %v3222 = vadd.f32 %v2944, %v3098
        %v3223 = vadd.f32 %v2945, %v3101
        %v3224 = vadd.f32 %v2946, %v3106
        %v3225 = vadd.f32 %v2947, %v3109
        %v3226 = vadd.f32 %v2948, %v3114
        %v3227 = vadd.f32 %v2949, %v3117
        %v3228 = vadd.f32 %v2950, %v3122
        %v3229 = vadd.f32 %v2951, %v3125
        %v3230 = vadd.f32 %v2952, %v3130
        %v3231 = vadd.f32 %v2953, %v3133
        %v3232 = vadd.f32 %v2954, %v3138
        %v3233 = vadd.f32 %v2955, %v3141
        %v3234 = vadd.f32 %v2956, %v3146
        %v3235 = vadd.f32 %v2957, %v3149
        %v3236 = vadd.f32 %v2958, %v3154
        %v3237 = vadd.f32 %v2959, %v3157
        %v3238 = vadd.f32 %v2960, %v3162
        %v3239 = vadd.f32 %v2961, %v3165
        %v3240 = vadd.f32 %v2962, %v3170
        %v3241 = vadd.f32 %v2963, %v3173
        %v3242 = vadd.f32 %v2964, %v3178
        %v3243 = vadd.f32 %v2965, %v3181
        %v3244 = vadd.f32 %v2966, %v3186
        %v3245 = vadd.f32 %v2967, %v3189
        %v3246 = vadd.f32 %v2968, %v3194
        %v3247 = vadd.f32 %v2969, %v3197
        %v3248 = vadd.f32 %v2970, %v3202
        %v3249 = vadd.f32 %v2971, %v3205
        %v3250 = vadd.f32 %v2972, %v3210
        %v3251 = vadd.f32 %v2973, %v3213
        %s3252 = scalar_lea.vmem %s8, 384
        %v3253 = vld [vmem:[%s3252] sm:$0xf]
        %v3254 = vld [vmem:[%s3252 + $0x4] sm:$0xf]
        %v3255 = vld [vmem:[%s3252 + $0x8] sm:$0xf]
        %v3256 = vld [vmem:[%s3252 + $0xc] sm:$0xf]
        %v3257 = vld [vmem:[%s3252 + $0x10] sm:$0xf]
        %v3258 = vld [vmem:[%s3252 + $0x14] sm:$0xf]
        %v3259 = vld [vmem:[%s3252 + $0x18] sm:$0xf]
        %v3260 = vld [vmem:[%s3252 + $0x1c] sm:$0xf]
        %v3261 = vld [vmem:[%s3252 + $0x20] sm:$0xf]
        %v3262 = vld [vmem:[%s3252 + $0x24] sm:$0xf]
        %v3263 = vld [vmem:[%s3252 + $0x28] sm:$0xf]
        %v3264 = vld [vmem:[%s3252 + $0x2c] sm:$0xf]
        %v3265 = vld [vmem:[%s3252 + $0x30] sm:$0xf]
        %v3266 = vld [vmem:[%s3252 + $0x34] sm:$0xf]
        %v3267 = vld [vmem:[%s3252 + $0x38] sm:$0xf]
        %v3268 = vld [vmem:[%s3252 + $0x3c] sm:$0xf]
        %v3285 = vunpack.c.l.b16 %v3253
        %v3286 = vunpack.c.l.b16 %v3254
        %v3287 = vunpack.c.l.b16 %v3255
        %v3288 = vunpack.c.l.b16 %v3256
        %v3289 = vunpack.c.l.b16 %v3257
        %v3290 = vunpack.c.l.b16 %v3258
        %v3291 = vunpack.c.l.b16 %v3259
        %v3292 = vunpack.c.l.b16 %v3260
        %v3293 = vunpack.c.l.b16 %v3261
        %v3294 = vunpack.c.l.b16 %v3262
        %v3295 = vunpack.c.l.b16 %v3263
        %v3296 = vunpack.c.l.b16 %v3264
        %v3297 = vunpack.c.l.b16 %v3265
        %v3298 = vunpack.c.l.b16 %v3266
        %v3299 = vunpack.c.l.b16 %v3267
        %v3300 = vunpack.c.l.b16 %v3268
        %v3301 = vpack.c.b16 %v3286, %v3285
        %v3302 = vpack.c.b16 %v3288, %v3287
        %v3303 = vpack.c.b16 %v3290, %v3289
        %v3304 = vpack.c.b16 %v3292, %v3291
        %v3305 = vpack.c.b16 %v3294, %v3293
        %v3306 = vpack.c.b16 %v3296, %v3295
        %v3307 = vpack.c.b16 %v3298, %v3297
        %v3308 = vpack.c.b16 %v3300, %v3299
        %3317 = vmatprep.subr.bf16.mxu0 0
        %3318 = vmatpush1.bf16.msra.mxu0 %v3308
        %3319 = vmatprep.subr.bf16.mxu0 0
        %3320 = vmatpush1.bf16.msra.mxu0 %v3307
        %3321 = vmatprep.subr.bf16.mxu0 0
        %3322 = vmatpush1.bf16.msra.mxu0 %v3306
        %3323 = vmatprep.subr.bf16.mxu0 0
        %3324 = vmatpush1.bf16.msra.mxu0 %v3305
        %3325 = vmatprep.subr.bf16.mxu0 0
        %3326 = vmatpush1.bf16.msra.mxu0 %v3304
        %3327 = vmatprep.subr.bf16.mxu0 0
        %3328 = vmatpush1.bf16.msra.mxu0 %v3303
        %3329 = vmatprep.subr.bf16.mxu0 0
        %3330 = vmatpush1.bf16.msra.mxu0 %v3302
        %3331 = vmatprep.subr.bf16.mxu0 0
        %3332 = vmatpush1.bf16.msra.mxu0 %v3301
        %3333 = vmatprep.subr.bf16.mxu0 0
        %3334 = vmatpush2.bf16.msra.mxu0 0
        %3335 = vmatprep.subr.bf16.mxu0 0
        %3336 = vmatpush2.bf16.msra.mxu0 0
        %3337 = vmatprep.subr.bf16.mxu0 0
        %3338 = vmatpush2.bf16.msra.mxu0 0
        %3339 = vmatprep.subr.bf16.mxu0 0
        %3340 = vmatpush2.bf16.msra.mxu0 0
        %3341 = vmatprep.subr.bf16.mxu0 0
        %3342 = vmatpush2.bf16.msra.mxu0 0
        %3343 = vmatprep.subr.bf16.mxu0 0
        %3344 = vmatpush2.bf16.msra.mxu0 0
        %3345 = vmatprep.subr.bf16.mxu0 0
        %3346 = vmatpush2.bf16.msra.mxu0 0
        %3347 = vmatprep.subr.bf16.mxu0 0
        %3348 = vmatpush2.bf16.msra.mxu0 0
        %3349 = vmatprep.mubr.bf16.mxu0 0
        %3350 = vmatmul.mubr.bf16.gmra.mxu0 %v1556
        %v3351 = vpop.f32.mrf.mxu0
        %v3352 = vadd.f32 0.0, %v3351
        %v3353 = vpop.f32.mrf.mxu0
        %v3354 = vpop.f32.mrf.mxu0
        %v3355 = vadd.f32 0.0, %v3354
        %v3356 = vpop.f32.mrf.mxu0
        %3357 = vmatprep.mubr.bf16.mxu0 0
        %3358 = vmatmul.mubr.bf16.gmra.mxu0 %v1557
        %v3359 = vpop.f32.mrf.mxu0
        %v3360 = vadd.f32 0.0, %v3359
        %v3361 = vpop.f32.mrf.mxu0
        %v3362 = vpop.f32.mrf.mxu0
        %v3363 = vadd.f32 0.0, %v3362
        %v3364 = vpop.f32.mrf.mxu0
        %3365 = vmatprep.mubr.bf16.mxu0 0
        %3366 = vmatmul.mubr.bf16.gmra.mxu0 %v1558
        %v3367 = vpop.f32.mrf.mxu0
        %v3368 = vadd.f32 0.0, %v3367
        %v3369 = vpop.f32.mrf.mxu0
        %v3370 = vpop.f32.mrf.mxu0
        %v3371 = vadd.f32 0.0, %v3370
        %v3372 = vpop.f32.mrf.mxu0
        %3373 = vmatprep.mubr.bf16.mxu0 0
        %3374 = vmatmul.mubr.bf16.gmra.mxu0 %v1559
        %v3375 = vpop.f32.mrf.mxu0
        %v3376 = vadd.f32 0.0, %v3375
        %v3377 = vpop.f32.mrf.mxu0
        %v3378 = vpop.f32.mrf.mxu0
        %v3379 = vadd.f32 0.0, %v3378
        %v3380 = vpop.f32.mrf.mxu0
        %3381 = vmatprep.mubr.bf16.mxu0 0
        %3382 = vmatmul.mubr.bf16.gmra.mxu0 %v1560
        %v3383 = vpop.f32.mrf.mxu0
        %v3384 = vadd.f32 0.0, %v3383
        %v3385 = vpop.f32.mrf.mxu0
        %v3386 = vpop.f32.mrf.mxu0
        %v3387 = vadd.f32 0.0, %v3386
        %v3388 = vpop.f32.mrf.mxu0
        %3389 = vmatprep.mubr.bf16.mxu0 0
        %3390 = vmatmul.mubr.bf16.gmra.mxu0 %v1561
        %v3391 = vpop.f32.mrf.mxu0
        %v3392 = vadd.f32 0.0, %v3391
        %v3393 = vpop.f32.mrf.mxu0
        %v3394 = vpop.f32.mrf.mxu0
        %v3395 = vadd.f32 0.0, %v3394
        %v3396 = vpop.f32.mrf.mxu0
        %3397 = vmatprep.mubr.bf16.mxu0 0
        %3398 = vmatmul.mubr.bf16.gmra.mxu0 %v1562
        %v3399 = vpop.f32.mrf.mxu0
        %v3400 = vadd.f32 0.0, %v3399
        %v3401 = vpop.f32.mrf.mxu0
        %v3402 = vpop.f32.mrf.mxu0
        %v3403 = vadd.f32 0.0, %v3402
        %v3404 = vpop.f32.mrf.mxu0
        %3405 = vmatprep.mubr.bf16.mxu0 0
        %3406 = vmatmul.mubr.bf16.gmra.mxu0 %v1563
        %v3407 = vpop.f32.mrf.mxu0
        %v3408 = vadd.f32 0.0, %v3407
        %v3409 = vpop.f32.mrf.mxu0
        %v3410 = vpop.f32.mrf.mxu0
        %v3411 = vadd.f32 0.0, %v3410
        %v3412 = vpop.f32.mrf.mxu0
        %3413 = vmatprep.mubr.bf16.mxu0 0
        %3414 = vmatmul.mubr.bf16.gmra.mxu0 %v1564
        %v3415 = vpop.f32.mrf.mxu0
        %v3416 = vadd.f32 0.0, %v3415
        %v3417 = vpop.f32.mrf.mxu0
        %v3418 = vpop.f32.mrf.mxu0
        %v3419 = vadd.f32 0.0, %v3418
        %v3420 = vpop.f32.mrf.mxu0
        %3421 = vmatprep.mubr.bf16.mxu0 0
        %3422 = vmatmul.mubr.bf16.gmra.mxu0 %v1565
        %v3423 = vpop.f32.mrf.mxu0
        %v3424 = vadd.f32 0.0, %v3423
        %v3425 = vpop.f32.mrf.mxu0
        %v3426 = vpop.f32.mrf.mxu0
        %v3427 = vadd.f32 0.0, %v3426
        %v3428 = vpop.f32.mrf.mxu0
        %3429 = vmatprep.mubr.bf16.mxu0 0
        %3430 = vmatmul.mubr.bf16.gmra.mxu0 %v1566
        %v3431 = vpop.f32.mrf.mxu0
        %v3432 = vadd.f32 0.0, %v3431
        %v3433 = vpop.f32.mrf.mxu0
        %v3434 = vpop.f32.mrf.mxu0
        %v3435 = vadd.f32 0.0, %v3434
        %v3436 = vpop.f32.mrf.mxu0
        %3437 = vmatprep.mubr.bf16.mxu0 0
        %3438 = vmatmul.mubr.bf16.gmra.mxu0 %v1567
        %v3439 = vpop.f32.mrf.mxu0
        %v3440 = vadd.f32 0.0, %v3439
        %v3441 = vpop.f32.mrf.mxu0
        %v3442 = vpop.f32.mrf.mxu0
        %v3443 = vadd.f32 0.0, %v3442
        %v3444 = vpop.f32.mrf.mxu0
        %3445 = vmatprep.mubr.bf16.mxu0 0
        %3446 = vmatmul.mubr.bf16.gmra.mxu0 %v1568
        %v3447 = vpop.f32.mrf.mxu0
        %v3448 = vadd.f32 0.0, %v3447
        %v3449 = vpop.f32.mrf.mxu0
        %v3450 = vpop.f32.mrf.mxu0
        %v3451 = vadd.f32 0.0, %v3450
        %v3452 = vpop.f32.mrf.mxu0
        %3453 = vmatprep.mubr.bf16.mxu0 0
        %3454 = vmatmul.mubr.bf16.gmra.mxu0 %v1569
        %v3455 = vpop.f32.mrf.mxu0
        %v3456 = vadd.f32 0.0, %v3455
        %v3457 = vpop.f32.mrf.mxu0
        %v3458 = vpop.f32.mrf.mxu0
        %v3459 = vadd.f32 0.0, %v3458
        %v3460 = vpop.f32.mrf.mxu0
        %3461 = vmatprep.mubr.bf16.mxu0 0
        %3462 = vmatmul.mubr.bf16.gmra.mxu0 %v1570
        %v3463 = vpop.f32.mrf.mxu0
        %v3464 = vadd.f32 0.0, %v3463
        %v3465 = vpop.f32.mrf.mxu0
        %v3466 = vpop.f32.mrf.mxu0
        %v3467 = vadd.f32 0.0, %v3466
        %v3468 = vpop.f32.mrf.mxu0
        %3469 = vmatprep.mubr.bf16.mxu0 0
        %3470 = vmatmul.mubr.bf16.gmra.mxu0 %v1571
        %v3471 = vpop.f32.mrf.mxu0
        %v3472 = vadd.f32 0.0, %v3471
        %v3473 = vpop.f32.mrf.mxu0
        %v3474 = vpop.f32.mrf.mxu0
        %v3475 = vadd.f32 0.0, %v3474
        %v3476 = vpop.f32.mrf.mxu0
        %3477 = vmatprep.mubr.bf16.mxu0 0
        %3478 = vmatmul.mubr.bf16.gmra.mxu0 %v1572
        %v3479 = vpop.f32.mrf.mxu0
        %v3480 = vadd.f32 0.0, %v3479
        %v3481 = vpop.f32.mrf.mxu0
        %v3482 = vpop.f32.mrf.mxu0
        %v3483 = vadd.f32 0.0, %v3482
        %v3484 = vpop.f32.mrf.mxu0
        %3485 = vmatprep.mubr.bf16.mxu0 0
        %3486 = vmatmul.mubr.bf16.gmra.mxu0 %v1573
        %v3487 = vpop.f32.mrf.mxu0
        %v3488 = vadd.f32 0.0, %v3487
        %v3489 = vpop.f32.mrf.mxu0
        %v3490 = vpop.f32.mrf.mxu0
        %v3491 = vadd.f32 0.0, %v3490
        %v3492 = vpop.f32.mrf.mxu0
        %3493 = vdwg.mxu0
        %v3494 = vadd.f32 %v3216, %v3352
        %v3495 = vadd.f32 %v3217, %v3355
        %v3496 = vadd.f32 %v3218, %v3360
        %v3497 = vadd.f32 %v3219, %v3363
        %v3498 = vadd.f32 %v3220, %v3368
        %v3499 = vadd.f32 %v3221, %v3371
        %v3500 = vadd.f32 %v3222, %v3376
        %v3501 = vadd.f32 %v3223, %v3379
        %v3502 = vadd.f32 %v3224, %v3384
        %v3503 = vadd.f32 %v3225, %v3387
        %v3504 = vadd.f32 %v3226, %v3392
        %v3505 = vadd.f32 %v3227, %v3395
        %v3506 = vadd.f32 %v3228, %v3400
        %v3507 = vadd.f32 %v3229, %v3403
        %v3508 = vadd.f32 %v3230, %v3408
        %v3509 = vadd.f32 %v3231, %v3411
        %v3510 = vadd.f32 %v3232, %v3416
        %v3511 = vadd.f32 %v3233, %v3419
        %v3512 = vadd.f32 %v3234, %v3424
        %v3513 = vadd.f32 %v3235, %v3427
        %v3514 = vadd.f32 %v3236, %v3432
        %v3515 = vadd.f32 %v3237, %v3435
        %v3516 = vadd.f32 %v3238, %v3440
        %v3517 = vadd.f32 %v3239, %v3443
        %v3518 = vadd.f32 %v3240, %v3448
        %v3519 = vadd.f32 %v3241, %v3451
        %v3520 = vadd.f32 %v3242, %v3456
        %v3521 = vadd.f32 %v3243, %v3459
        %v3522 = vadd.f32 %v3244, %v3464
        %v3523 = vadd.f32 %v3245, %v3467
        %v3524 = vadd.f32 %v3246, %v3472
        %v3525 = vadd.f32 %v3247, %v3475
        %v3526 = vadd.f32 %v3248, %v3480
        %v3527 = vadd.f32 %v3249, %v3483
        %v3528 = vadd.f32 %v3250, %v3488
        %v3529 = vadd.f32 %v3251, %v3491
        %s3530 = scalar_lea.vmem %s8, 448
        %v3531 = vld [vmem:[%s3530] sm:$0xf]
        %v3532 = vld [vmem:[%s3530 + $0x4] sm:$0xf]
        %v3533 = vld [vmem:[%s3530 + $0x8] sm:$0xf]
        %v3534 = vld [vmem:[%s3530 + $0xc] sm:$0xf]
        %v3535 = vld [vmem:[%s3530 + $0x10] sm:$0xf]
        %v3536 = vld [vmem:[%s3530 + $0x14] sm:$0xf]
        %v3537 = vld [vmem:[%s3530 + $0x18] sm:$0xf]
        %v3538 = vld [vmem:[%s3530 + $0x1c] sm:$0xf]
        %v3539 = vld [vmem:[%s3530 + $0x20] sm:$0xf]
        %v3540 = vld [vmem:[%s3530 + $0x24] sm:$0xf]
        %v3541 = vld [vmem:[%s3530 + $0x28] sm:$0xf]
        %v3542 = vld [vmem:[%s3530 + $0x2c] sm:$0xf]
        %v3543 = vld [vmem:[%s3530 + $0x30] sm:$0xf]
        %v3544 = vld [vmem:[%s3530 + $0x34] sm:$0xf]
        %v3545 = vld [vmem:[%s3530 + $0x38] sm:$0xf]
        %v3546 = vld [vmem:[%s3530 + $0x3c] sm:$0xf]
        %v3563 = vunpack.c.l.b16 %v3531
        %v3564 = vunpack.c.l.b16 %v3532
        %v3565 = vunpack.c.l.b16 %v3533
        %v3566 = vunpack.c.l.b16 %v3534
        %v3567 = vunpack.c.l.b16 %v3535
        %v3568 = vunpack.c.l.b16 %v3536
        %v3569 = vunpack.c.l.b16 %v3537
        %v3570 = vunpack.c.l.b16 %v3538
        %v3571 = vunpack.c.l.b16 %v3539
        %v3572 = vunpack.c.l.b16 %v3540
        %v3573 = vunpack.c.l.b16 %v3541
        %v3574 = vunpack.c.l.b16 %v3542
        %v3575 = vunpack.c.l.b16 %v3543
        %v3576 = vunpack.c.l.b16 %v3544
        %v3577 = vunpack.c.l.b16 %v3545
        %v3578 = vunpack.c.l.b16 %v3546
        %v3579 = vpack.c.b16 %v3564, %v3563
        %v3580 = vpack.c.b16 %v3566, %v3565
        %v3581 = vpack.c.b16 %v3568, %v3567
        %v3582 = vpack.c.b16 %v3570, %v3569
        %v3583 = vpack.c.b16 %v3572, %v3571
        %v3584 = vpack.c.b16 %v3574, %v3573
        %v3585 = vpack.c.b16 %v3576, %v3575
        %v3586 = vpack.c.b16 %v3578, %v3577
        %3595 = vmatprep.subr.bf16.mxu0 0
        %3596 = vmatpush1.bf16.msra.mxu0 %v3586
        %3597 = vmatprep.subr.bf16.mxu0 0
        %3598 = vmatpush1.bf16.msra.mxu0 %v3585
        %3599 = vmatprep.subr.bf16.mxu0 0
        %3600 = vmatpush1.bf16.msra.mxu0 %v3584
        %3601 = vmatprep.subr.bf16.mxu0 0
        %3602 = vmatpush1.bf16.msra.mxu0 %v3583
        %3603 = vmatprep.subr.bf16.mxu0 0
        %3604 = vmatpush1.bf16.msra.mxu0 %v3582
        %3605 = vmatprep.subr.bf16.mxu0 0
        %3606 = vmatpush1.bf16.msra.mxu0 %v3581
        %3607 = vmatprep.subr.bf16.mxu0 0
        %3608 = vmatpush1.bf16.msra.mxu0 %v3580
        %3609 = vmatprep.subr.bf16.mxu0 0
        %3610 = vmatpush1.bf16.msra.mxu0 %v3579
        %3611 = vmatprep.subr.bf16.mxu0 0
        %3612 = vmatpush2.bf16.msra.mxu0 0
        %3613 = vmatprep.subr.bf16.mxu0 0
        %3614 = vmatpush2.bf16.msra.mxu0 0
        %3615 = vmatprep.subr.bf16.mxu0 0
        %3616 = vmatpush2.bf16.msra.mxu0 0
        %3617 = vmatprep.subr.bf16.mxu0 0
        %3618 = vmatpush2.bf16.msra.mxu0 0
        %3619 = vmatprep.subr.bf16.mxu0 0
        %3620 = vmatpush2.bf16.msra.mxu0 0
        %3621 = vmatprep.subr.bf16.mxu0 0
        %3622 = vmatpush2.bf16.msra.mxu0 0
        %3623 = vmatprep.subr.bf16.mxu0 0
        %3624 = vmatpush2.bf16.msra.mxu0 0
        %3625 = vmatprep.subr.bf16.mxu0 0
        %3626 = vmatpush2.bf16.msra.mxu0 0
        %3627 = vmatprep.mubr.bf16.mxu0 0
        %3628 = vmatmul.mubr.bf16.gmra.mxu0 %v1268
        %v3629 = vpop.f32.mrf.mxu0
        %v3630 = vadd.f32 0.0, %v3629
        %v3631 = vpop.f32.mrf.mxu0
        %v3632 = vpop.f32.mrf.mxu0
        %v3633 = vadd.f32 0.0, %v3632
        %v3634 = vpop.f32.mrf.mxu0
        %3635 = vmatprep.mubr.bf16.mxu0 0
        %3636 = vmatmul.mubr.bf16.gmra.mxu0 %v1318
        %v3637 = vpop.f32.mrf.mxu0
        %v3638 = vadd.f32 0.0, %v3637
        %v3639 = vpop.f32.mrf.mxu0
        %v3640 = vpop.f32.mrf.mxu0
        %v3641 = vadd.f32 0.0, %v3640
        %v3642 = vpop.f32.mrf.mxu0
        %3643 = vmatprep.mubr.bf16.mxu0 0
        %3644 = vmatmul.mubr.bf16.gmra.mxu0 %v1270
        %v3645 = vpop.f32.mrf.mxu0
        %v3646 = vadd.f32 0.0, %v3645
        %v3647 = vpop.f32.mrf.mxu0
        %v3648 = vpop.f32.mrf.mxu0
        %v3649 = vadd.f32 0.0, %v3648
        %v3650 = vpop.f32.mrf.mxu0
        %3651 = vmatprep.mubr.bf16.mxu0 0
        %3652 = vmatmul.mubr.bf16.gmra.mxu0 %v1320
        %v3653 = vpop.f32.mrf.mxu0
        %v3654 = vadd.f32 0.0, %v3653
        %v3655 = vpop.f32.mrf.mxu0
        %v3656 = vpop.f32.mrf.mxu0
        %v3657 = vadd.f32 0.0, %v3656
        %v3658 = vpop.f32.mrf.mxu0
        %3659 = vmatprep.mubr.bf16.mxu0 0
        %3660 = vmatmul.mubr.bf16.gmra.mxu0 %v1272
        %v3661 = vpop.f32.mrf.mxu0
        %v3662 = vadd.f32 0.0, %v3661
        %v3663 = vpop.f32.mrf.mxu0
        %v3664 = vpop.f32.mrf.mxu0
        %v3665 = vadd.f32 0.0, %v3664
        %v3666 = vpop.f32.mrf.mxu0
        %3667 = vmatprep.mubr.bf16.mxu0 0
        %3668 = vmatmul.mubr.bf16.gmra.mxu0 %v1322
        %v3669 = vpop.f32.mrf.mxu0
        %v3670 = vadd.f32 0.0, %v3669
        %v3671 = vpop.f32.mrf.mxu0
        %v3672 = vpop.f32.mrf.mxu0
        %v3673 = vadd.f32 0.0, %v3672
        %v3674 = vpop.f32.mrf.mxu0
        %3675 = vmatprep.mubr.bf16.mxu0 0
        %3676 = vmatmul.mubr.bf16.gmra.mxu0 %v1274
        %v3677 = vpop.f32.mrf.mxu0
        %v3678 = vadd.f32 0.0, %v3677
        %v3679 = vpop.f32.mrf.mxu0
        %v3680 = vpop.f32.mrf.mxu0
        %v3681 = vadd.f32 0.0, %v3680
        %v3682 = vpop.f32.mrf.mxu0
        %3683 = vmatprep.mubr.bf16.mxu0 0
        %3684 = vmatmul.mubr.bf16.gmra.mxu0 %v1324
        %v3685 = vpop.f32.mrf.mxu0
        %v3686 = vadd.f32 0.0, %v3685
        %v3687 = vpop.f32.mrf.mxu0
        %v3688 = vpop.f32.mrf.mxu0
        %v3689 = vadd.f32 0.0, %v3688
        %v3690 = vpop.f32.mrf.mxu0
        %3691 = vmatprep.mubr.bf16.mxu0 0
        %3692 = vmatmul.mubr.bf16.gmra.mxu0 %v1276
        %v3693 = vpop.f32.mrf.mxu0
        %v3694 = vadd.f32 0.0, %v3693
        %v3695 = vpop.f32.mrf.mxu0
        %v3696 = vpop.f32.mrf.mxu0
        %v3697 = vadd.f32 0.0, %v3696
        %v3698 = vpop.f32.mrf.mxu0
        %3699 = vmatprep.mubr.bf16.mxu0 0
        %3700 = vmatmul.mubr.bf16.gmra.mxu0 %v1326
        %v3701 = vpop.f32.mrf.mxu0
        %v3702 = vadd.f32 0.0, %v3701
        %v3703 = vpop.f32.mrf.mxu0
        %v3704 = vpop.f32.mrf.mxu0
        %v3705 = vadd.f32 0.0, %v3704
        %v3706 = vpop.f32.mrf.mxu0
        %3707 = vmatprep.mubr.bf16.mxu0 0
        %3708 = vmatmul.mubr.bf16.gmra.mxu0 %v1278
        %v3709 = vpop.f32.mrf.mxu0
        %v3710 = vadd.f32 0.0, %v3709
        %v3711 = vpop.f32.mrf.mxu0
        %v3712 = vpop.f32.mrf.mxu0
        %v3713 = vadd.f32 0.0, %v3712
        %v3714 = vpop.f32.mrf.mxu0
        %3715 = vmatprep.mubr.bf16.mxu0 0
        %3716 = vmatmul.mubr.bf16.gmra.mxu0 %v1328
        %v3717 = vpop.f32.mrf.mxu0
        %v3718 = vadd.f32 0.0, %v3717
        %v3719 = vpop.f32.mrf.mxu0
        %v3720 = vpop.f32.mrf.mxu0
        %v3721 = vadd.f32 0.0, %v3720
        %v3722 = vpop.f32.mrf.mxu0
        %3723 = vmatprep.mubr.bf16.mxu0 0
        %3724 = vmatmul.mubr.bf16.gmra.mxu0 %v1280
        %v3725 = vpop.f32.mrf.mxu0
        %v3726 = vadd.f32 0.0, %v3725
        %v3727 = vpop.f32.mrf.mxu0
        %v3728 = vpop.f32.mrf.mxu0
        %v3729 = vadd.f32 0.0, %v3728
        %v3730 = vpop.f32.mrf.mxu0
        %3731 = vmatprep.mubr.bf16.mxu0 0
        %3732 = vmatmul.mubr.bf16.gmra.mxu0 %v1330
        %v3733 = vpop.f32.mrf.mxu0
        %v3734 = vadd.f32 0.0, %v3733
        %v3735 = vpop.f32.mrf.mxu0
        %v3736 = vpop.f32.mrf.mxu0
        %v3737 = vadd.f32 0.0, %v3736
        %v3738 = vpop.f32.mrf.mxu0
        %3739 = vmatprep.mubr.bf16.mxu0 0
        %3740 = vmatmul.mubr.bf16.gmra.mxu0 %v1282
        %v3741 = vpop.f32.mrf.mxu0
        %v3742 = vadd.f32 0.0, %v3741
        %v3743 = vpop.f32.mrf.mxu0
        %v3744 = vpop.f32.mrf.mxu0
        %v3745 = vadd.f32 0.0, %v3744
        %v3746 = vpop.f32.mrf.mxu0
        %3747 = vmatprep.mubr.bf16.mxu0 0
        %3748 = vmatmul.mubr.bf16.gmra.mxu0 %v1332
        %v3749 = vpop.f32.mrf.mxu0
        %v3750 = vadd.f32 0.0, %v3749
        %v3751 = vpop.f32.mrf.mxu0
        %v3752 = vpop.f32.mrf.mxu0
        %v3753 = vadd.f32 0.0, %v3752
        %v3754 = vpop.f32.mrf.mxu0
        %3755 = vmatprep.mubr.bf16.mxu0 0
        %3756 = vmatmul.mubr.bf16.gmra.mxu0 %v1341
        %v3757 = vpop.f32.mrf.mxu0
        %v3758 = vadd.f32 0.0, %v3757
        %v3759 = vpop.f32.mrf.mxu0
        %v3760 = vpop.f32.mrf.mxu0
        %v3761 = vadd.f32 0.0, %v3760
        %v3762 = vpop.f32.mrf.mxu0
        %3763 = vmatprep.mubr.bf16.mxu0 0
        %3764 = vmatmul.mubr.bf16.gmra.mxu0 %v1342
        %v3765 = vpop.f32.mrf.mxu0
        %v3766 = vadd.f32 0.0, %v3765
        %v3767 = vpop.f32.mrf.mxu0
        %v3768 = vpop.f32.mrf.mxu0
        %v3769 = vadd.f32 0.0, %v3768
        %v3770 = vpop.f32.mrf.mxu0
        %3771 = vdwg.mxu0
        %v3772 = vadd.f32 %v3494, %v3630
        %v3773 = vadd.f32 %v3495, %v3633
        %v3774 = vadd.f32 %v3496, %v3638
        %v3775 = vadd.f32 %v3497, %v3641
        %v3776 = vadd.f32 %v3498, %v3646
        %v3777 = vadd.f32 %v3499, %v3649
        %v3778 = vadd.f32 %v3500, %v3654
        %v3779 = vadd.f32 %v3501, %v3657
        %v3780 = vadd.f32 %v3502, %v3662
        %v3781 = vadd.f32 %v3503, %v3665
        %v3782 = vadd.f32 %v3504, %v3670
        %v3783 = vadd.f32 %v3505, %v3673
        %v3784 = vadd.f32 %v3506, %v3678
        %v3785 = vadd.f32 %v3507, %v3681
        %v3786 = vadd.f32 %v3508, %v3686
        %v3787 = vadd.f32 %v3509, %v3689
        %v3788 = vadd.f32 %v3510, %v3694
        %v3789 = vadd.f32 %v3511, %v3697
        %v3790 = vadd.f32 %v3512, %v3702
        %v3791 = vadd.f32 %v3513, %v3705
        %v3792 = vadd.f32 %v3514, %v3710
        %v3793 = vadd.f32 %v3515, %v3713
        %v3794 = vadd.f32 %v3516, %v3718
        %v3795 = vadd.f32 %v3517, %v3721
        %v3796 = vadd.f32 %v3518, %v3726
        %v3797 = vadd.f32 %v3519, %v3729
        %v3798 = vadd.f32 %v3520, %v3734
        %v3799 = vadd.f32 %v3521, %v3737
        %v3800 = vadd.f32 %v3522, %v3742
        %v3801 = vadd.f32 %v3523, %v3745
        %v3802 = vadd.f32 %v3524, %v3750
        %v3803 = vadd.f32 %v3525, %v3753
        %v3804 = vadd.f32 %v3526, %v3758
        %v3805 = vadd.f32 %v3527, %v3761
        %v3806 = vadd.f32 %v3528, %v3766
        %v3807 = vadd.f32 %v3529, %v3769
        %s3808 = scalar_lea.vmem %s8, 512
        %v3809 = vld [vmem:[%s3808] sm:$0xf]
        %v3810 = vld [vmem:[%s3808 + $0x4] sm:$0xf]
        %v3811 = vld [vmem:[%s3808 + $0x8] sm:$0xf]
        %v3812 = vld [vmem:[%s3808 + $0xc] sm:$0xf]
        %v3813 = vld [vmem:[%s3808 + $0x10] sm:$0xf]
        %v3814 = vld [vmem:[%s3808 + $0x14] sm:$0xf]
        %v3815 = vld [vmem:[%s3808 + $0x18] sm:$0xf]
        %v3816 = vld [vmem:[%s3808 + $0x1c] sm:$0xf]
        %v3817 = vld [vmem:[%s3808 + $0x20] sm:$0xf]
        %v3818 = vld [vmem:[%s3808 + $0x24] sm:$0xf]
        %v3819 = vld [vmem:[%s3808 + $0x28] sm:$0xf]
        %v3820 = vld [vmem:[%s3808 + $0x2c] sm:$0xf]
        %v3821 = vld [vmem:[%s3808 + $0x30] sm:$0xf]
        %v3822 = vld [vmem:[%s3808 + $0x34] sm:$0xf]
        %v3823 = vld [vmem:[%s3808 + $0x38] sm:$0xf]
        %v3824 = vld [vmem:[%s3808 + $0x3c] sm:$0xf]
        %v3841 = vunpack.c.l.b16 %v3809
        %v3842 = vunpack.c.l.b16 %v3810
        %v3843 = vunpack.c.l.b16 %v3811
        %v3844 = vunpack.c.l.b16 %v3812
        %v3845 = vunpack.c.l.b16 %v3813
        %v3846 = vunpack.c.l.b16 %v3814
        %v3847 = vunpack.c.l.b16 %v3815
        %v3848 = vunpack.c.l.b16 %v3816
        %v3849 = vunpack.c.l.b16 %v3817
        %v3850 = vunpack.c.l.b16 %v3818
        %v3851 = vunpack.c.l.b16 %v3819
        %v3852 = vunpack.c.l.b16 %v3820
        %v3853 = vunpack.c.l.b16 %v3821
        %v3854 = vunpack.c.l.b16 %v3822
        %v3855 = vunpack.c.l.b16 %v3823
        %v3856 = vunpack.c.l.b16 %v3824
        %v3857 = vpack.c.b16 %v3842, %v3841
        %v3858 = vpack.c.b16 %v3844, %v3843
        %v3859 = vpack.c.b16 %v3846, %v3845
        %v3860 = vpack.c.b16 %v3848, %v3847
        %v3861 = vpack.c.b16 %v3850, %v3849
        %v3862 = vpack.c.b16 %v3852, %v3851
        %v3863 = vpack.c.b16 %v3854, %v3853
        %v3864 = vpack.c.b16 %v3856, %v3855
        %3873 = vmatprep.subr.bf16.mxu0 0
        %3874 = vmatpush1.bf16.msra.mxu0 %v3864
        %3875 = vmatprep.subr.bf16.mxu0 0
        %3876 = vmatpush1.bf16.msra.mxu0 %v3863
        %3877 = vmatprep.subr.bf16.mxu0 0
        %3878 = vmatpush1.bf16.msra.mxu0 %v3862
        %3879 = vmatprep.subr.bf16.mxu0 0
        %3880 = vmatpush1.bf16.msra.mxu0 %v3861
        %3881 = vmatprep.subr.bf16.mxu0 0
        %3882 = vmatpush1.bf16.msra.mxu0 %v3860
        %3883 = vmatprep.subr.bf16.mxu0 0
        %3884 = vmatpush1.bf16.msra.mxu0 %v3859
        %3885 = vmatprep.subr.bf16.mxu0 0
        %3886 = vmatpush1.bf16.msra.mxu0 %v3858
        %3887 = vmatprep.subr.bf16.mxu0 0
        %3888 = vmatpush1.bf16.msra.mxu0 %v3857
        %3889 = vmatprep.subr.bf16.mxu0 0
        %3890 = vmatpush2.bf16.msra.mxu0 0
        %3891 = vmatprep.subr.bf16.mxu0 0
        %3892 = vmatpush2.bf16.msra.mxu0 0
        %3893 = vmatprep.subr.bf16.mxu0 0
        %3894 = vmatpush2.bf16.msra.mxu0 0
        %3895 = vmatprep.subr.bf16.mxu0 0
        %3896 = vmatpush2.bf16.msra.mxu0 0
        %3897 = vmatprep.subr.bf16.mxu0 0
        %3898 = vmatpush2.bf16.msra.mxu0 0
        %3899 = vmatprep.subr.bf16.mxu0 0
        %3900 = vmatpush2.bf16.msra.mxu0 0
        %3901 = vmatprep.subr.bf16.mxu0 0
        %3902 = vmatpush2.bf16.msra.mxu0 0
        %3903 = vmatprep.subr.bf16.mxu0 0
        %3904 = vmatpush2.bf16.msra.mxu0 0
        %3905 = vmatprep.mubr.bf16.mxu0 0
        %3906 = vmatmul.mubr.bf16.gmra.mxu0 %v1639
        %v3907 = vpop.f32.mrf.mxu0
        %v3908 = vadd.f32 0.0, %v3907
        %v3909 = vpop.f32.mrf.mxu0
        %v3910 = vpop.f32.mrf.mxu0
        %v3911 = vadd.f32 0.0, %v3910
        %v3912 = vpop.f32.mrf.mxu0
        %3913 = vmatprep.mubr.bf16.mxu0 0
        %3914 = vmatmul.mubr.bf16.gmra.mxu0 %v1640
        %v3915 = vpop.f32.mrf.mxu0
        %v3916 = vadd.f32 0.0, %v3915
        %v3917 = vpop.f32.mrf.mxu0
        %v3918 = vpop.f32.mrf.mxu0
        %v3919 = vadd.f32 0.0, %v3918
        %v3920 = vpop.f32.mrf.mxu0
        %3921 = vmatprep.mubr.bf16.mxu0 0
        %3922 = vmatmul.mubr.bf16.gmra.mxu0 %v1641
        %v3923 = vpop.f32.mrf.mxu0
        %v3924 = vadd.f32 0.0, %v3923
        %v3925 = vpop.f32.mrf.mxu0
        %v3926 = vpop.f32.mrf.mxu0
        %v3927 = vadd.f32 0.0, %v3926
        %v3928 = vpop.f32.mrf.mxu0
        %3929 = vmatprep.mubr.bf16.mxu0 0
        %3930 = vmatmul.mubr.bf16.gmra.mxu0 %v1642
        %v3931 = vpop.f32.mrf.mxu0
        %v3932 = vadd.f32 0.0, %v3931
        %v3933 = vpop.f32.mrf.mxu0
        %v3934 = vpop.f32.mrf.mxu0
        %v3935 = vadd.f32 0.0, %v3934
        %v3936 = vpop.f32.mrf.mxu0
        %3937 = vmatprep.mubr.bf16.mxu0 0
        %3938 = vmatmul.mubr.bf16.gmra.mxu0 %v1643
        %v3939 = vpop.f32.mrf.mxu0
        %v3940 = vadd.f32 0.0, %v3939
        %v3941 = vpop.f32.mrf.mxu0
        %v3942 = vpop.f32.mrf.mxu0
        %v3943 = vadd.f32 0.0, %v3942
        %v3944 = vpop.f32.mrf.mxu0
        %3945 = vmatprep.mubr.bf16.mxu0 0
        %3946 = vmatmul.mubr.bf16.gmra.mxu0 %v1644
        %v3947 = vpop.f32.mrf.mxu0
        %v3948 = vadd.f32 0.0, %v3947
        %v3949 = vpop.f32.mrf.mxu0
        %v3950 = vpop.f32.mrf.mxu0
        %v3951 = vadd.f32 0.0, %v3950
        %v3952 = vpop.f32.mrf.mxu0
        %3953 = vmatprep.mubr.bf16.mxu0 0
        %3954 = vmatmul.mubr.bf16.gmra.mxu0 %v1645
        %v3955 = vpop.f32.mrf.mxu0
        %v3956 = vadd.f32 0.0, %v3955
        %v3957 = vpop.f32.mrf.mxu0
        %v3958 = vpop.f32.mrf.mxu0
        %v3959 = vadd.f32 0.0, %v3958
        %v3960 = vpop.f32.mrf.mxu0
        %3961 = vmatprep.mubr.bf16.mxu0 0
        %3962 = vmatmul.mubr.bf16.gmra.mxu0 %v1646
        %v3963 = vpop.f32.mrf.mxu0
        %v3964 = vadd.f32 0.0, %v3963
        %v3965 = vpop.f32.mrf.mxu0
        %v3966 = vpop.f32.mrf.mxu0
        %v3967 = vadd.f32 0.0, %v3966
        %v3968 = vpop.f32.mrf.mxu0
        %3969 = vmatprep.mubr.bf16.mxu0 0
        %3970 = vmatmul.mubr.bf16.gmra.mxu0 %v1647
        %v3971 = vpop.f32.mrf.mxu0
        %v3972 = vadd.f32 0.0, %v3971
        %v3973 = vpop.f32.mrf.mxu0
        %v3974 = vpop.f32.mrf.mxu0
        %v3975 = vadd.f32 0.0, %v3974
        %v3976 = vpop.f32.mrf.mxu0
        %3977 = vmatprep.mubr.bf16.mxu0 0
        %3978 = vmatmul.mubr.bf16.gmra.mxu0 %v1648
        %v3979 = vpop.f32.mrf.mxu0
        %v3980 = vadd.f32 0.0, %v3979
        %v3981 = vpop.f32.mrf.mxu0
        %v3982 = vpop.f32.mrf.mxu0
        %v3983 = vadd.f32 0.0, %v3982
        %v3984 = vpop.f32.mrf.mxu0
        %3985 = vmatprep.mubr.bf16.mxu0 0
        %3986 = vmatmul.mubr.bf16.gmra.mxu0 %v1649
        %v3987 = vpop.f32.mrf.mxu0
        %v3988 = vadd.f32 0.0, %v3987
        %v3989 = vpop.f32.mrf.mxu0
        %v3990 = vpop.f32.mrf.mxu0
        %v3991 = vadd.f32 0.0, %v3990
        %v3992 = vpop.f32.mrf.mxu0
        %3993 = vmatprep.mubr.bf16.mxu0 0
        %3994 = vmatmul.mubr.bf16.gmra.mxu0 %v1650
        %v3995 = vpop.f32.mrf.mxu0
        %v3996 = vadd.f32 0.0, %v3995
        %v3997 = vpop.f32.mrf.mxu0
        %v3998 = vpop.f32.mrf.mxu0
        %v3999 = vadd.f32 0.0, %v3998
        %v4000 = vpop.f32.mrf.mxu0
        %4001 = vmatprep.mubr.bf16.mxu0 0
        %4002 = vmatmul.mubr.bf16.gmra.mxu0 %v1651
        %v4003 = vpop.f32.mrf.mxu0
        %v4004 = vadd.f32 0.0, %v4003
        %v4005 = vpop.f32.mrf.mxu0
        %v4006 = vpop.f32.mrf.mxu0
        %v4007 = vadd.f32 0.0, %v4006
        %v4008 = vpop.f32.mrf.mxu0
        %4009 = vmatprep.mubr.bf16.mxu0 0
        %4010 = vmatmul.mubr.bf16.gmra.mxu0 %v1652
        %v4011 = vpop.f32.mrf.mxu0
        %v4012 = vadd.f32 0.0, %v4011
        %v4013 = vpop.f32.mrf.mxu0
        %v4014 = vpop.f32.mrf.mxu0
        %v4015 = vadd.f32 0.0, %v4014
        %v4016 = vpop.f32.mrf.mxu0
        %4017 = vmatprep.mubr.bf16.mxu0 0
        %4018 = vmatmul.mubr.bf16.gmra.mxu0 %v1653
        %v4019 = vpop.f32.mrf.mxu0
        %v4020 = vadd.f32 0.0, %v4019
        %v4021 = vpop.f32.mrf.mxu0
        %v4022 = vpop.f32.mrf.mxu0
        %v4023 = vadd.f32 0.0, %v4022
        %v4024 = vpop.f32.mrf.mxu0
        %4025 = vmatprep.mubr.bf16.mxu0 0
        %4026 = vmatmul.mubr.bf16.gmra.mxu0 %v1654
        %v4027 = vpop.f32.mrf.mxu0
        %v4028 = vadd.f32 0.0, %v4027
        %v4029 = vpop.f32.mrf.mxu0
        %v4030 = vpop.f32.mrf.mxu0
        %v4031 = vadd.f32 0.0, %v4030
        %v4032 = vpop.f32.mrf.mxu0
        %4033 = vmatprep.mubr.bf16.mxu0 0
        %4034 = vmatmul.mubr.bf16.gmra.mxu0 %v1655
        %v4035 = vpop.f32.mrf.mxu0
        %v4036 = vadd.f32 0.0, %v4035
        %v4037 = vpop.f32.mrf.mxu0
        %v4038 = vpop.f32.mrf.mxu0
        %v4039 = vadd.f32 0.0, %v4038
        %v4040 = vpop.f32.mrf.mxu0
        %4041 = vmatprep.mubr.bf16.mxu0 0
        %4042 = vmatmul.mubr.bf16.gmra.mxu0 %v1656
        %v4043 = vpop.f32.mrf.mxu0
        %v4044 = vadd.f32 0.0, %v4043
        %v4045 = vpop.f32.mrf.mxu0
        %v4046 = vpop.f32.mrf.mxu0
        %v4047 = vadd.f32 0.0, %v4046
        %v4048 = vpop.f32.mrf.mxu0
        %4049 = vdwg.mxu0
        %v4050 = vadd.f32 %v3772, %v3908
        %v4051 = vadd.f32 %v3773, %v3911
        %v4052 = vadd.f32 %v3774, %v3916
        %v4053 = vadd.f32 %v3775, %v3919
        %v4054 = vadd.f32 %v3776, %v3924
        %v4055 = vadd.f32 %v3777, %v3927
        %v4056 = vadd.f32 %v3778, %v3932
        %v4057 = vadd.f32 %v3779, %v3935
        %v4058 = vadd.f32 %v3780, %v3940
        %v4059 = vadd.f32 %v3781, %v3943
        %v4060 = vadd.f32 %v3782, %v3948
        %v4061 = vadd.f32 %v3783, %v3951
        %v4062 = vadd.f32 %v3784, %v3956
        %v4063 = vadd.f32 %v3785, %v3959
        %v4064 = vadd.f32 %v3786, %v3964
        %v4065 = vadd.f32 %v3787, %v3967
        %v4066 = vadd.f32 %v3788, %v3972
        %v4067 = vadd.f32 %v3789, %v3975
        %v4068 = vadd.f32 %v3790, %v3980
        %v4069 = vadd.f32 %v3791, %v3983
        %v4070 = vadd.f32 %v3792, %v3988
        %v4071 = vadd.f32 %v3793, %v3991
        %v4072 = vadd.f32 %v3794, %v3996
        %v4073 = vadd.f32 %v3795, %v3999
        %v4074 = vadd.f32 %v3796, %v4004
        %v4075 = vadd.f32 %v3797, %v4007
        %v4076 = vadd.f32 %v3798, %v4012
        %v4077 = vadd.f32 %v3799, %v4015
        %v4078 = vadd.f32 %v3800, %v4020
        %v4079 = vadd.f32 %v3801, %v4023
        %v4080 = vadd.f32 %v3802, %v4028
        %v4081 = vadd.f32 %v3803, %v4031
        %v4082 = vadd.f32 %v3804, %v4036
        %v4083 = vadd.f32 %v3805, %v4039
        %v4084 = vadd.f32 %v3806, %v4044
        %v4085 = vadd.f32 %v3807, %v4047
        %v4126 = vunpack.c.l.b16 %v1347
        %v4127 = vunpack.c.l.b16 %v1348
        %v4128 = vunpack.c.l.b16 %v1349
        %v4129 = vunpack.c.l.b16 %v1350
        %v4130 = vunpack.c.l.b16 %v1351
        %v4131 = vunpack.c.l.b16 %v1352
        %v4132 = vunpack.c.l.b16 %v1353
        %v4133 = vunpack.c.l.b16 %v1354
        %v4134 = vunpack.c.l.b16 %v1355
        %v4135 = vunpack.c.l.b16 %v1356
        %v4136 = vunpack.c.l.b16 %v1357
        %v4137 = vunpack.c.l.b16 %v1358
        %v4138 = vunpack.c.l.b16 %v1359
        %v4139 = vunpack.c.l.b16 %v1360
        %v4140 = vunpack.c.l.b16 %v1361
        %v4141 = vunpack.c.l.b16 %v1362
        %v4142 = vunpack.c.l.b16 %v1363
        %v4143 = vunpack.c.l.b16 %v1364
        %v4144 = vunpack.c.l.b16 %v1365
        %v4145 = vunpack.c.l.b16 %v1366
        %v4146 = vunpack.c.l.b16 %v1367
        %v4147 = vunpack.c.l.b16 %v1368
        %v4148 = vunpack.c.l.b16 %v1369
        %v4149 = vunpack.c.l.b16 %v1370
        %v4150 = vunpack.c.l.b16 %v1371
        %v4151 = vunpack.c.l.b16 %v1372
        %v4152 = vunpack.c.l.b16 %v1373
        %v4153 = vunpack.c.l.b16 %v1374
        %v4154 = vunpack.c.l.b16 %v1375
        %v4155 = vunpack.c.l.b16 %v1376
        %v4156 = vunpack.c.l.b16 %v1377
        %v4157 = vunpack.c.l.b16 %v1378
        %v4158 = vunpack.c.l.b16 %v1379
        %v4159 = vunpack.c.l.b16 %v1380
        %v4160 = vunpack.c.l.b16 %v1381
        %v4161 = vunpack.c.l.b16 %v1382
        %v4162 = vunpack.c.l.b16 %v1387
        %v4163 = vunpack.c.l.b16 %v1388
        %v4164 = vunpack.c.l.b16 %v1389
        %v4165 = vunpack.c.l.b16 %v1390
        %v4166 = vpack.c.b16 %v4127, %v4126
        %v4167 = vpack.c.b16 %v4129, %v4128
        %v4168 = vpack.c.b16 %v4131, %v4130
        %v4169 = vpack.c.b16 %v4133, %v4132
        %v4170 = vpack.c.b16 %v4135, %v4134
        %v4171 = vpack.c.b16 %v4137, %v4136
        %v4172 = vpack.c.b16 %v4139, %v4138
        %v4173 = vpack.c.b16 %v4141, %v4140
        %v4174 = vpack.c.b16 %v4143, %v4142
        %v4175 = vpack.c.b16 %v4145, %v4144
        %v4176 = vpack.c.b16 %v4147, %v4146
        %v4177 = vpack.c.b16 %v4149, %v4148
        %v4178 = vpack.c.b16 %v4151, %v4150
        %v4179 = vpack.c.b16 %v4153, %v4152
        %v4180 = vpack.c.b16 %v4155, %v4154
        %v4181 = vpack.c.b16 %v4157, %v4156
        %v4182 = vpack.c.b16 %v4159, %v4158
        %v4183 = vpack.c.b16 %v4161, %v4160
        %v4184 = vpack.c.b16 %v4163, %v4162
        %v4185 = vpack.c.b16 %v4165, %v4164
        %v4187 = vshrl.u32 %v4166, 16
        %v4189 = vrot.slane %v4187, 7
        %v4190 = vshll.u32 %v4166, 16
        %v4192 = vor.u32 %v4189, %v4190
        %v4194 = vshrl.u32 %v4167, 16
        %v4196 = vrot.slane %v4194, 7
        %v4197 = vshll.u32 %v4167, 16
        %v4199 = vor.u32 %v4196, %v4197
        %v4201 = vshrl.u32 %v4168, 16
        %v4203 = vrot.slane %v4201, 7
        %v4204 = vshll.u32 %v4168, 16
        %v4206 = vor.u32 %v4203, %v4204
        %v4208 = vshrl.u32 %v4169, 16
        %v4210 = vrot.slane %v4208, 7
        %v4211 = vshll.u32 %v4169, 16
        %v4213 = vor.u32 %v4210, %v4211
        %v4215 = vshrl.u32 %v4170, 16
        %v4217 = vrot.slane %v4215, 7
        %v4218 = vshll.u32 %v4170, 16
        %v4220 = vor.u32 %v4217, %v4218
        %v4222 = vshrl.u32 %v4171, 16
        %v4224 = vrot.slane %v4222, 7
        %v4225 = vshll.u32 %v4171, 16
        %v4227 = vor.u32 %v4224, %v4225
        %v4229 = vshrl.u32 %v4172, 16
        %v4231 = vrot.slane %v4229, 7
        %v4232 = vshll.u32 %v4172, 16
        %v4234 = vor.u32 %v4231, %v4232
        %v4236 = vshrl.u32 %v4173, 16
        %v4238 = vrot.slane %v4236, 7
        %v4239 = vshll.u32 %v4173, 16
        %v4241 = vor.u32 %v4238, %v4239
        %v4243 = vshrl.u32 %v4174, 16
        %v4245 = vrot.slane %v4243, 7
        %v4246 = vshll.u32 %v4174, 16
        %v4248 = vor.u32 %v4245, %v4246
        %v4250 = vshrl.u32 %v4175, 16
        %v4252 = vrot.slane %v4250, 7
        %v4253 = vshll.u32 %v4175, 16
        %v4255 = vor.u32 %v4252, %v4253
        %v4257 = vshrl.u32 %v4176, 16
        %v4259 = vrot.slane %v4257, 7
        %v4260 = vshll.u32 %v4176, 16
        %v4262 = vor.u32 %v4259, %v4260
        %v4264 = vshrl.u32 %v4177, 16
        %v4266 = vrot.slane %v4264, 7
        %v4267 = vshll.u32 %v4177, 16
        %v4269 = vor.u32 %v4266, %v4267
        %v4271 = vshrl.u32 %v4178, 16
        %v4273 = vrot.slane %v4271, 7
        %v4274 = vshll.u32 %v4178, 16
        %v4276 = vor.u32 %v4273, %v4274
        %v4278 = vshrl.u32 %v4179, 16
        %v4280 = vrot.slane %v4278, 7
        %v4281 = vshll.u32 %v4179, 16
        %v4283 = vor.u32 %v4280, %v4281
        %v4285 = vshrl.u32 %v4180, 16
        %v4287 = vrot.slane %v4285, 7
        %v4288 = vshll.u32 %v4180, 16
        %v4290 = vor.u32 %v4287, %v4288
        %v4292 = vshrl.u32 %v4181, 16
        %v4294 = vrot.slane %v4292, 7
        %v4295 = vshll.u32 %v4181, 16
        %v4297 = vor.u32 %v4294, %v4295
        %v4299 = vshrl.u32 %v4182, 16
        %v4301 = vrot.slane %v4299, 7
        %v4302 = vshll.u32 %v4182, 16
        %v4304 = vor.u32 %v4301, %v4302
        %v4306 = vshrl.u32 %v4183, 16
        %v4308 = vrot.slane %v4306, 7
        %v4309 = vshll.u32 %v4183, 16
        %v4311 = vor.u32 %v4308, %v4309
        %v4313 = vshrl.u32 %v4184, 16
        %v4315 = vrot.slane %v4313, 7
        %v4316 = vshll.u32 %v4184, 16
        %v4318 = vor.u32 %v4315, %v4316
        %v4320 = vshrl.u32 %v4185, 16
        %v4322 = vrot.slane %v4320, 7
        %v4323 = vshll.u32 %v4185, 16
        %v4325 = vor.u32 %v4322, %v4323
        %v4346 = vsel %vm1553, 0, %v4192
        %v4347 = vsel %vm1553, 0, %v4199
        %v4348 = vsel %vm1553, 0, %v4206
        %v4349 = vsel %vm1553, 0, %v4213
        %v4350 = vsel %vm1553, 0, %v4220
        %v4351 = vsel %vm1553, 0, %v4227
        %v4352 = vsel %vm1553, 0, %v4234
        %v4353 = vsel %vm1553, 0, %v4241
        %v4354 = vsel %vm1553, 0, %v4248
        %v4355 = vsel %vm1553, 0, %v4255
        %v4356 = vsel %vm1553, 0, %v4262
        %v4357 = vsel %vm1553, 0, %v4269
        %v4358 = vsel %vm1553, 0, %v4276
        %v4359 = vsel %vm1553, 0, %v4283
        %v4360 = vsel %vm1553, 0, %v4290
        %v4361 = vsel %vm1553, 0, %v4297
        %v4362 = vsel %vm1553, 0, %v4304
        %v4363 = vsel %vm1553, 0, %v4311
        %v4364 = vsel %vm1553, 0, %v4318
        %v4365 = vsel %vm1553, 0, %v4325
        %v4366 = vrot.slane %v4190, 1
        %v4367 = vor.u32 %v4187, %v4366
        %v4368 = vrot.slane %v4197, 1
        %v4369 = vor.u32 %v4194, %v4368
        %v4370 = vrot.slane %v4204, 1
        %v4371 = vor.u32 %v4201, %v4370
        %v4372 = vrot.slane %v4211, 1
        %v4373 = vor.u32 %v4208, %v4372
        %v4374 = vrot.slane %v4218, 1
        %v4375 = vor.u32 %v4215, %v4374
        %v4376 = vrot.slane %v4225, 1
        %v4377 = vor.u32 %v4222, %v4376
        %v4378 = vrot.slane %v4232, 1
        %v4379 = vor.u32 %v4229, %v4378
        %v4380 = vrot.slane %v4239, 1
        %v4381 = vor.u32 %v4236, %v4380
        %v4382 = vrot.slane %v4246, 1
        %v4383 = vor.u32 %v4243, %v4382
        %v4384 = vrot.slane %v4253, 1
        %v4385 = vor.u32 %v4250, %v4384
        %v4386 = vrot.slane %v4260, 1
        %v4387 = vor.u32 %v4257, %v4386
        %v4388 = vrot.slane %v4267, 1
        %v4389 = vor.u32 %v4264, %v4388
        %v4390 = vrot.slane %v4274, 1
        %v4391 = vor.u32 %v4271, %v4390
        %v4392 = vrot.slane %v4281, 1
        %v4393 = vor.u32 %v4278, %v4392
        %v4394 = vrot.slane %v4288, 1
        %v4395 = vor.u32 %v4285, %v4394
        %v4396 = vrot.slane %v4295, 1
        %v4397 = vor.u32 %v4292, %v4396
        %v4398 = vrot.slane %v4302, 1
        %v4399 = vor.u32 %v4299, %v4398
        %v4400 = vrot.slane %v4309, 1
        %v4401 = vor.u32 %v4306, %v4400
        %v4402 = vrot.slane %v4316, 1
        %v4403 = vor.u32 %v4313, %v4402
        %v4404 = vrot.slane %v4323, 1
        %v4405 = vor.u32 %v4320, %v4404
        %v4426 = vsel %vm1636, %v4367, 0
        %v4427 = vsel %vm1636, %v4369, 0
        %v4428 = vsel %vm1636, %v4371, 0
        %v4429 = vsel %vm1636, %v4373, 0
        %v4430 = vsel %vm1636, %v4375, 0
        %v4431 = vsel %vm1636, %v4377, 0
        %v4432 = vsel %vm1636, %v4379, 0
        %v4433 = vsel %vm1636, %v4381, 0
        %v4434 = vsel %vm1636, %v4383, 0
        %v4435 = vsel %vm1636, %v4385, 0
        %v4436 = vsel %vm1636, %v4387, 0
        %v4437 = vsel %vm1636, %v4389, 0
        %v4438 = vsel %vm1636, %v4391, 0
        %v4439 = vsel %vm1636, %v4393, 0
        %v4440 = vsel %vm1636, %v4395, 0
        %v4441 = vsel %vm1636, %v4397, 0
        %v4442 = vsel %vm1636, %v4399, 0
        %v4443 = vsel %vm1636, %v4401, 0
        %v4444 = vsel %vm1636, %v4403, 0
        %v4445 = vsel %vm1636, %v4405, 0
        %v4446 = vld [vmem:[%s9] sm:$0xf]
        %v4447 = vld [vmem:[%s9 + $0x4] sm:$0xf]
        %v4448 = vld [vmem:[%s9 + $0x8] sm:$0xf]
        %v4449 = vld [vmem:[%s9 + $0xc] sm:$0xf]
        %v4450 = vld [vmem:[%s9 + $0x10] sm:$0xf]
        %v4451 = vld [vmem:[%s9 + $0x14] sm:$0xf]
        %v4452 = vld [vmem:[%s9 + $0x18] sm:$0xf]
        %v4453 = vld [vmem:[%s9 + $0x1c] sm:$0xf]
        %v4454 = vld [vmem:[%s9 + $0x20] sm:$0xf]
        %v4455 = vld [vmem:[%s9 + $0x24] sm:$0xf]
        %v4456 = vld [vmem:[%s9 + $0x28] sm:$0xf]
        %v4457 = vld [vmem:[%s9 + $0x2c] sm:$0xf]
        %v4458 = vld [vmem:[%s9 + $0x30] sm:$0xf]
        %v4459 = vld [vmem:[%s9 + $0x34] sm:$0xf]
        %v4460 = vld [vmem:[%s9 + $0x38] sm:$0xf]
        %v4461 = vld [vmem:[%s9 + $0x3c] sm:$0xf]
        %s4462 = scalar_lea.vmem %s9, 64
        %v4463 = vld [vmem:[%s4462] sm:$0xf]
        %v4464 = vld [vmem:[%s4462 + $0x4] sm:$0xf]
        %v4465 = vld [vmem:[%s4462 + $0x8] sm:$0xf]
        %v4466 = vld [vmem:[%s4462 + $0xc] sm:$0xf]
        %v4467 = vld [vmem:[%s4462 + $0x10] sm:$0xf]
        %v4468 = vld [vmem:[%s4462 + $0x14] sm:$0xf]
        %v4469 = vld [vmem:[%s4462 + $0x18] sm:$0xf]
        %v4470 = vld [vmem:[%s4462 + $0x1c] sm:$0xf]
        %v4471 = vld [vmem:[%s4462 + $0x20] sm:$0xf]
        %v4472 = vld [vmem:[%s4462 + $0x24] sm:$0xf]
        %v4473 = vld [vmem:[%s4462 + $0x28] sm:$0xf]
        %v4474 = vld [vmem:[%s4462 + $0x2c] sm:$0xf]
        %v4475 = vld [vmem:[%s4462 + $0x30] sm:$0xf]
        %v4476 = vld [vmem:[%s4462 + $0x34] sm:$0xf]
        %v4477 = vld [vmem:[%s4462 + $0x38] sm:$0xf]
        %v4478 = vld [vmem:[%s4462 + $0x3c] sm:$0xf]
        %v4513 = vunpack.c.l.b16 %v4463
        %v4514 = vunpack.c.l.b16 %v4464
        %v4515 = vunpack.c.l.b16 %v4465
        %v4516 = vunpack.c.l.b16 %v4466
        %v4517 = vunpack.c.l.b16 %v4467
        %v4518 = vunpack.c.l.b16 %v4468
        %v4519 = vunpack.c.l.b16 %v4469
        %v4520 = vunpack.c.l.b16 %v4470
        %v4521 = vunpack.c.l.b16 %v4471
        %v4522 = vunpack.c.l.b16 %v4472
        %v4523 = vunpack.c.l.b16 %v4473
        %v4524 = vunpack.c.l.b16 %v4474
        %v4525 = vunpack.c.l.b16 %v4475
        %v4526 = vunpack.c.l.b16 %v4476
        %v4527 = vunpack.c.l.b16 %v4477
        %v4528 = vunpack.c.l.b16 %v4478
        %v4529 = vpack.c.b16 %v4514, %v4513
        %v4530 = vpack.c.b16 %v4516, %v4515
        %v4531 = vpack.c.b16 %v4518, %v4517
        %v4532 = vpack.c.b16 %v4520, %v4519
        %v4533 = vpack.c.b16 %v4522, %v4521
        %v4534 = vpack.c.b16 %v4524, %v4523
        %v4535 = vpack.c.b16 %v4526, %v4525
        %v4536 = vpack.c.b16 %v4528, %v4527
        %4545 = vmatprep.subr.bf16.mxu0 0
        %4546 = vmatpush1.bf16.msra.mxu0 %v4536
        %4547 = vmatprep.subr.bf16.mxu0 0
        %4548 = vmatpush1.bf16.msra.mxu0 %v4535
        %4549 = vmatprep.subr.bf16.mxu0 0
        %4550 = vmatpush1.bf16.msra.mxu0 %v4534
        %4551 = vmatprep.subr.bf16.mxu0 0
        %4552 = vmatpush1.bf16.msra.mxu0 %v4533
        %4553 = vmatprep.subr.bf16.mxu0 0
        %4554 = vmatpush1.bf16.msra.mxu0 %v4532
        %4555 = vmatprep.subr.bf16.mxu0 0
        %4556 = vmatpush1.bf16.msra.mxu0 %v4531
        %4557 = vmatprep.subr.bf16.mxu0 0
        %4558 = vmatpush1.bf16.msra.mxu0 %v4530
        %4559 = vmatprep.subr.bf16.mxu0 0
        %4560 = vmatpush1.bf16.msra.mxu0 %v4529
        %4561 = vmatprep.subr.bf16.mxu0 0
        %4562 = vmatpush2.bf16.msra.mxu0 0
        %4563 = vmatprep.subr.bf16.mxu0 0
        %4564 = vmatpush2.bf16.msra.mxu0 0
        %4565 = vmatprep.subr.bf16.mxu0 0
        %4566 = vmatpush2.bf16.msra.mxu0 0
        %4567 = vmatprep.subr.bf16.mxu0 0
        %4568 = vmatpush2.bf16.msra.mxu0 0
        %4569 = vmatprep.subr.bf16.mxu0 0
        %4570 = vmatpush2.bf16.msra.mxu0 0
        %4571 = vmatprep.subr.bf16.mxu0 0
        %4572 = vmatpush2.bf16.msra.mxu0 0
        %4573 = vmatprep.subr.bf16.mxu0 0
        %4574 = vmatpush2.bf16.msra.mxu0 0
        %4575 = vmatprep.subr.bf16.mxu0 0
        %4576 = vmatpush2.bf16.msra.mxu0 0
        %4577 = vmatprep.mubr.bf16.mxu0 0
        %4578 = vmatmul.mubr.bf16.gmra.mxu0 %v4166
        %v4579 = vpop.f32.mrf.mxu0
        %v4580 = vadd.f32 0.0, %v4579
        %v4581 = vpop.f32.mrf.mxu0
        %v4582 = vpop.f32.mrf.mxu0
        %v4583 = vadd.f32 0.0, %v4582
        %v4584 = vpop.f32.mrf.mxu0
        %4585 = vmatprep.mubr.bf16.mxu0 0
        %4586 = vmatmul.mubr.bf16.gmra.mxu0 %v4167
        %v4587 = vpop.f32.mrf.mxu0
        %v4588 = vadd.f32 0.0, %v4587
        %v4589 = vpop.f32.mrf.mxu0
        %v4590 = vpop.f32.mrf.mxu0
        %v4591 = vadd.f32 0.0, %v4590
        %v4592 = vpop.f32.mrf.mxu0
        %4593 = vmatprep.mubr.bf16.mxu0 0
        %4594 = vmatmul.mubr.bf16.gmra.mxu0 %v4168
        %v4595 = vpop.f32.mrf.mxu0
        %v4596 = vadd.f32 0.0, %v4595
        %v4597 = vpop.f32.mrf.mxu0
        %v4598 = vpop.f32.mrf.mxu0
        %v4599 = vadd.f32 0.0, %v4598
        %v4600 = vpop.f32.mrf.mxu0
        %4601 = vmatprep.mubr.bf16.mxu0 0
        %4602 = vmatmul.mubr.bf16.gmra.mxu0 %v4169
        %v4603 = vpop.f32.mrf.mxu0
        %v4604 = vadd.f32 0.0, %v4603
        %v4605 = vpop.f32.mrf.mxu0
        %v4606 = vpop.f32.mrf.mxu0
        %v4607 = vadd.f32 0.0, %v4606
        %v4608 = vpop.f32.mrf.mxu0
        %4609 = vmatprep.mubr.bf16.mxu0 0
        %4610 = vmatmul.mubr.bf16.gmra.mxu0 %v4170
        %v4611 = vpop.f32.mrf.mxu0
        %v4612 = vadd.f32 0.0, %v4611
        %v4613 = vpop.f32.mrf.mxu0
        %v4614 = vpop.f32.mrf.mxu0
        %v4615 = vadd.f32 0.0, %v4614
        %v4616 = vpop.f32.mrf.mxu0
        %4617 = vmatprep.mubr.bf16.mxu0 0
        %4618 = vmatmul.mubr.bf16.gmra.mxu0 %v4171
        %v4619 = vpop.f32.mrf.mxu0
        %v4620 = vadd.f32 0.0, %v4619
        %v4621 = vpop.f32.mrf.mxu0
        %v4622 = vpop.f32.mrf.mxu0
        %v4623 = vadd.f32 0.0, %v4622
        %v4624 = vpop.f32.mrf.mxu0
        %4625 = vmatprep.mubr.bf16.mxu0 0
        %4626 = vmatmul.mubr.bf16.gmra.mxu0 %v4172
        %v4627 = vpop.f32.mrf.mxu0
        %v4628 = vadd.f32 0.0, %v4627
        %v4629 = vpop.f32.mrf.mxu0
        %v4630 = vpop.f32.mrf.mxu0
        %v4631 = vadd.f32 0.0, %v4630
        %v4632 = vpop.f32.mrf.mxu0
        %4633 = vmatprep.mubr.bf16.mxu0 0
        %4634 = vmatmul.mubr.bf16.gmra.mxu0 %v4173
        %v4635 = vpop.f32.mrf.mxu0
        %v4636 = vadd.f32 0.0, %v4635
        %v4637 = vpop.f32.mrf.mxu0
        %v4638 = vpop.f32.mrf.mxu0
        %v4639 = vadd.f32 0.0, %v4638
        %v4640 = vpop.f32.mrf.mxu0
        %4641 = vmatprep.mubr.bf16.mxu0 0
        %4642 = vmatmul.mubr.bf16.gmra.mxu0 %v4174
        %v4643 = vpop.f32.mrf.mxu0
        %v4644 = vadd.f32 0.0, %v4643
        %v4645 = vpop.f32.mrf.mxu0
        %v4646 = vpop.f32.mrf.mxu0
        %v4647 = vadd.f32 0.0, %v4646
        %v4648 = vpop.f32.mrf.mxu0
        %4649 = vmatprep.mubr.bf16.mxu0 0
        %4650 = vmatmul.mubr.bf16.gmra.mxu0 %v4175
        %v4651 = vpop.f32.mrf.mxu0
        %v4652 = vadd.f32 0.0, %v4651
        %v4653 = vpop.f32.mrf.mxu0
        %v4654 = vpop.f32.mrf.mxu0
        %v4655 = vadd.f32 0.0, %v4654
        %v4656 = vpop.f32.mrf.mxu0
        %4657 = vmatprep.mubr.bf16.mxu0 0
        %4658 = vmatmul.mubr.bf16.gmra.mxu0 %v4176
        %v4659 = vpop.f32.mrf.mxu0
        %v4660 = vadd.f32 0.0, %v4659
        %v4661 = vpop.f32.mrf.mxu0
        %v4662 = vpop.f32.mrf.mxu0
        %v4663 = vadd.f32 0.0, %v4662
        %v4664 = vpop.f32.mrf.mxu0
        %4665 = vmatprep.mubr.bf16.mxu0 0
        %4666 = vmatmul.mubr.bf16.gmra.mxu0 %v4177
        %v4667 = vpop.f32.mrf.mxu0
        %v4668 = vadd.f32 0.0, %v4667
        %v4669 = vpop.f32.mrf.mxu0
        %v4670 = vpop.f32.mrf.mxu0
        %v4671 = vadd.f32 0.0, %v4670
        %v4672 = vpop.f32.mrf.mxu0
        %4673 = vmatprep.mubr.bf16.mxu0 0
        %4674 = vmatmul.mubr.bf16.gmra.mxu0 %v4178
        %v4675 = vpop.f32.mrf.mxu0
        %v4676 = vadd.f32 0.0, %v4675
        %v4677 = vpop.f32.mrf.mxu0
        %v4678 = vpop.f32.mrf.mxu0
        %v4679 = vadd.f32 0.0, %v4678
        %v4680 = vpop.f32.mrf.mxu0
        %4681 = vmatprep.mubr.bf16.mxu0 0
        %4682 = vmatmul.mubr.bf16.gmra.mxu0 %v4179
        %v4683 = vpop.f32.mrf.mxu0
        %v4684 = vadd.f32 0.0, %v4683
        %v4685 = vpop.f32.mrf.mxu0
        %v4686 = vpop.f32.mrf.mxu0
        %v4687 = vadd.f32 0.0, %v4686
        %v4688 = vpop.f32.mrf.mxu0
        %4689 = vmatprep.mubr.bf16.mxu0 0
        %4690 = vmatmul.mubr.bf16.gmra.mxu0 %v4180
        %v4691 = vpop.f32.mrf.mxu0
        %v4692 = vadd.f32 0.0, %v4691
        %v4693 = vpop.f32.mrf.mxu0
        %v4694 = vpop.f32.mrf.mxu0
        %v4695 = vadd.f32 0.0, %v4694
        %v4696 = vpop.f32.mrf.mxu0
        %4697 = vmatprep.mubr.bf16.mxu0 0
        %4698 = vmatmul.mubr.bf16.gmra.mxu0 %v4181
        %v4699 = vpop.f32.mrf.mxu0
        %v4700 = vadd.f32 0.0, %v4699
        %v4701 = vpop.f32.mrf.mxu0
        %v4702 = vpop.f32.mrf.mxu0
        %v4703 = vadd.f32 0.0, %v4702
        %v4704 = vpop.f32.mrf.mxu0
        %4705 = vmatprep.mubr.bf16.mxu0 0
        %4706 = vmatmul.mubr.bf16.gmra.mxu0 %v4182
        %v4707 = vpop.f32.mrf.mxu0
        %v4708 = vadd.f32 0.0, %v4707
        %v4709 = vpop.f32.mrf.mxu0
        %v4710 = vpop.f32.mrf.mxu0
        %v4711 = vadd.f32 0.0, %v4710
        %v4712 = vpop.f32.mrf.mxu0
        %4713 = vmatprep.mubr.bf16.mxu0 0
        %4714 = vmatmul.mubr.bf16.gmra.mxu0 %v4183
        %v4715 = vpop.f32.mrf.mxu0
        %v4716 = vadd.f32 0.0, %v4715
        %v4717 = vpop.f32.mrf.mxu0
        %v4718 = vpop.f32.mrf.mxu0
        %v4719 = vadd.f32 0.0, %v4718
        %v4720 = vpop.f32.mrf.mxu0
        %4721 = vdwg.mxu0
        %v4738 = vunpack.c.l.b16 %v4446
        %v4739 = vunpack.c.l.b16 %v4447
        %v4740 = vunpack.c.l.b16 %v4448
        %v4741 = vunpack.c.l.b16 %v4449
        %v4742 = vunpack.c.l.b16 %v4450
        %v4743 = vunpack.c.l.b16 %v4451
        %v4744 = vunpack.c.l.b16 %v4452
        %v4745 = vunpack.c.l.b16 %v4453
        %v4746 = vunpack.c.l.b16 %v4454
        %v4747 = vunpack.c.l.b16 %v4455
        %v4748 = vunpack.c.l.b16 %v4456
        %v4749 = vunpack.c.l.b16 %v4457
        %v4750 = vunpack.c.l.b16 %v4458
        %v4751 = vunpack.c.l.b16 %v4459
        %v4752 = vunpack.c.l.b16 %v4460
        %v4753 = vunpack.c.l.b16 %v4461
        %v4754 = vpack.c.b16 %v4739, %v4738
        %v4755 = vpack.c.b16 %v4741, %v4740
        %v4756 = vpack.c.b16 %v4743, %v4742
        %v4757 = vpack.c.b16 %v4745, %v4744
        %v4758 = vpack.c.b16 %v4747, %v4746
        %v4759 = vpack.c.b16 %v4749, %v4748
        %v4760 = vpack.c.b16 %v4751, %v4750
        %v4761 = vpack.c.b16 %v4753, %v4752
        %4770 = vmatprep.subr.bf16.mxu0 0
        %4771 = vmatpush1.bf16.msra.mxu0 %v4761
        %4772 = vmatprep.subr.bf16.mxu0 0
        %4773 = vmatpush1.bf16.msra.mxu0 %v4760
        %4774 = vmatprep.subr.bf16.mxu0 0
        %4775 = vmatpush1.bf16.msra.mxu0 %v4759
        %4776 = vmatprep.subr.bf16.mxu0 0
        %4777 = vmatpush1.bf16.msra.mxu0 %v4758
        %4778 = vmatprep.subr.bf16.mxu0 0
        %4779 = vmatpush1.bf16.msra.mxu0 %v4757
        %4780 = vmatprep.subr.bf16.mxu0 0
        %4781 = vmatpush1.bf16.msra.mxu0 %v4756
        %4782 = vmatprep.subr.bf16.mxu0 0
        %4783 = vmatpush1.bf16.msra.mxu0 %v4755
        %4784 = vmatprep.subr.bf16.mxu0 0
        %4785 = vmatpush1.bf16.msra.mxu0 %v4754
        %4786 = vmatprep.subr.bf16.mxu0 0
        %4787 = vmatpush2.bf16.msra.mxu0 0
        %4788 = vmatprep.subr.bf16.mxu0 0
        %4789 = vmatpush2.bf16.msra.mxu0 0
        %4790 = vmatprep.subr.bf16.mxu0 0
        %4791 = vmatpush2.bf16.msra.mxu0 0
        %4792 = vmatprep.subr.bf16.mxu0 0
        %4793 = vmatpush2.bf16.msra.mxu0 0
        %4794 = vmatprep.subr.bf16.mxu0 0
        %4795 = vmatpush2.bf16.msra.mxu0 0
        %4796 = vmatprep.subr.bf16.mxu0 0
        %4797 = vmatpush2.bf16.msra.mxu0 0
        %4798 = vmatprep.subr.bf16.mxu0 0
        %4799 = vmatpush2.bf16.msra.mxu0 0
        %4800 = vmatprep.subr.bf16.mxu0 0
        %4801 = vmatpush2.bf16.msra.mxu0 0
        %4802 = vmatprep.mubr.bf16.mxu0 0
        %4803 = vmatmul.mubr.bf16.gmra.mxu0 %v4346
        %v4804 = vpop.f32.mrf.mxu0
        %v4805 = vadd.f32 %v4580, %v4804
        %v4806 = vpop.f32.mrf.mxu0
        %v4807 = vpop.f32.mrf.mxu0
        %v4808 = vadd.f32 %v4583, %v4807
        %v4809 = vpop.f32.mrf.mxu0
        %4810 = vmatprep.mubr.bf16.mxu0 0
        %4811 = vmatmul.mubr.bf16.gmra.mxu0 %v4347
        %v4812 = vpop.f32.mrf.mxu0
        %v4813 = vadd.f32 %v4588, %v4812
        %v4814 = vpop.f32.mrf.mxu0
        %v4815 = vpop.f32.mrf.mxu0
        %v4816 = vadd.f32 %v4591, %v4815
        %v4817 = vpop.f32.mrf.mxu0
        %4818 = vmatprep.mubr.bf16.mxu0 0
        %4819 = vmatmul.mubr.bf16.gmra.mxu0 %v4348
        %v4820 = vpop.f32.mrf.mxu0
        %v4821 = vadd.f32 %v4596, %v4820
        %v4822 = vpop.f32.mrf.mxu0
        %v4823 = vpop.f32.mrf.mxu0
        %v4824 = vadd.f32 %v4599, %v4823
        %v4825 = vpop.f32.mrf.mxu0
        %4826 = vmatprep.mubr.bf16.mxu0 0
        %4827 = vmatmul.mubr.bf16.gmra.mxu0 %v4349
        %v4828 = vpop.f32.mrf.mxu0
        %v4829 = vadd.f32 %v4604, %v4828
        %v4830 = vpop.f32.mrf.mxu0
        %v4831 = vpop.f32.mrf.mxu0
        %v4832 = vadd.f32 %v4607, %v4831
        %v4833 = vpop.f32.mrf.mxu0
        %4834 = vmatprep.mubr.bf16.mxu0 0
        %4835 = vmatmul.mubr.bf16.gmra.mxu0 %v4350
        %v4836 = vpop.f32.mrf.mxu0
        %v4837 = vadd.f32 %v4612, %v4836
        %v4838 = vpop.f32.mrf.mxu0
        %v4839 = vpop.f32.mrf.mxu0
        %v4840 = vadd.f32 %v4615, %v4839
        %v4841 = vpop.f32.mrf.mxu0
        %4842 = vmatprep.mubr.bf16.mxu0 0
        %4843 = vmatmul.mubr.bf16.gmra.mxu0 %v4351
        %v4844 = vpop.f32.mrf.mxu0
        %v4845 = vadd.f32 %v4620, %v4844
        %v4846 = vpop.f32.mrf.mxu0
        %v4847 = vpop.f32.mrf.mxu0
        %v4848 = vadd.f32 %v4623, %v4847
        %v4849 = vpop.f32.mrf.mxu0
        %4850 = vmatprep.mubr.bf16.mxu0 0
        %4851 = vmatmul.mubr.bf16.gmra.mxu0 %v4352
        %v4852 = vpop.f32.mrf.mxu0
        %v4853 = vadd.f32 %v4628, %v4852
        %v4854 = vpop.f32.mrf.mxu0
        %v4855 = vpop.f32.mrf.mxu0
        %v4856 = vadd.f32 %v4631, %v4855
        %v4857 = vpop.f32.mrf.mxu0
        %4858 = vmatprep.mubr.bf16.mxu0 0
        %4859 = vmatmul.mubr.bf16.gmra.mxu0 %v4353
        %v4860 = vpop.f32.mrf.mxu0
        %v4861 = vadd.f32 %v4636, %v4860
        %v4862 = vpop.f32.mrf.mxu0
        %v4863 = vpop.f32.mrf.mxu0
        %v4864 = vadd.f32 %v4639, %v4863
        %v4865 = vpop.f32.mrf.mxu0
        %4866 = vmatprep.mubr.bf16.mxu0 0
        %4867 = vmatmul.mubr.bf16.gmra.mxu0 %v4354
        %v4868 = vpop.f32.mrf.mxu0
        %v4869 = vadd.f32 %v4644, %v4868
        %v4870 = vpop.f32.mrf.mxu0
        %v4871 = vpop.f32.mrf.mxu0
        %v4872 = vadd.f32 %v4647, %v4871
        %v4873 = vpop.f32.mrf.mxu0
        %4874 = vmatprep.mubr.bf16.mxu0 0
        %4875 = vmatmul.mubr.bf16.gmra.mxu0 %v4355
        %v4876 = vpop.f32.mrf.mxu0
        %v4877 = vadd.f32 %v4652, %v4876
        %v4878 = vpop.f32.mrf.mxu0
        %v4879 = vpop.f32.mrf.mxu0
        %v4880 = vadd.f32 %v4655, %v4879
        %v4881 = vpop.f32.mrf.mxu0
        %4882 = vmatprep.mubr.bf16.mxu0 0
        %4883 = vmatmul.mubr.bf16.gmra.mxu0 %v4356
        %v4884 = vpop.f32.mrf.mxu0
        %v4885 = vadd.f32 %v4660, %v4884
        %v4886 = vpop.f32.mrf.mxu0
        %v4887 = vpop.f32.mrf.mxu0
        %v4888 = vadd.f32 %v4663, %v4887
        %v4889 = vpop.f32.mrf.mxu0
        %4890 = vmatprep.mubr.bf16.mxu0 0
        %4891 = vmatmul.mubr.bf16.gmra.mxu0 %v4357
        %v4892 = vpop.f32.mrf.mxu0
        %v4893 = vadd.f32 %v4668, %v4892
        %v4894 = vpop.f32.mrf.mxu0
        %v4895 = vpop.f32.mrf.mxu0
        %v4896 = vadd.f32 %v4671, %v4895
        %v4897 = vpop.f32.mrf.mxu0
        %4898 = vmatprep.mubr.bf16.mxu0 0
        %4899 = vmatmul.mubr.bf16.gmra.mxu0 %v4358
        %v4900 = vpop.f32.mrf.mxu0
        %v4901 = vadd.f32 %v4676, %v4900
        %v4902 = vpop.f32.mrf.mxu0
        %v4903 = vpop.f32.mrf.mxu0
        %v4904 = vadd.f32 %v4679, %v4903
        %v4905 = vpop.f32.mrf.mxu0
        %4906 = vmatprep.mubr.bf16.mxu0 0
        %4907 = vmatmul.mubr.bf16.gmra.mxu0 %v4359
        %v4908 = vpop.f32.mrf.mxu0
        %v4909 = vadd.f32 %v4684, %v4908
        %v4910 = vpop.f32.mrf.mxu0
        %v4911 = vpop.f32.mrf.mxu0
        %v4912 = vadd.f32 %v4687, %v4911
        %v4913 = vpop.f32.mrf.mxu0
        %4914 = vmatprep.mubr.bf16.mxu0 0
        %4915 = vmatmul.mubr.bf16.gmra.mxu0 %v4360
        %v4916 = vpop.f32.mrf.mxu0
        %v4917 = vadd.f32 %v4692, %v4916
        %v4918 = vpop.f32.mrf.mxu0
        %v4919 = vpop.f32.mrf.mxu0
        %v4920 = vadd.f32 %v4695, %v4919
        %v4921 = vpop.f32.mrf.mxu0
        %4922 = vmatprep.mubr.bf16.mxu0 0
        %4923 = vmatmul.mubr.bf16.gmra.mxu0 %v4361
        %v4924 = vpop.f32.mrf.mxu0
        %v4925 = vadd.f32 %v4700, %v4924
        %v4926 = vpop.f32.mrf.mxu0
        %v4927 = vpop.f32.mrf.mxu0
        %v4928 = vadd.f32 %v4703, %v4927
        %v4929 = vpop.f32.mrf.mxu0
        %4930 = vmatprep.mubr.bf16.mxu0 0
        %4931 = vmatmul.mubr.bf16.gmra.mxu0 %v4362
        %v4932 = vpop.f32.mrf.mxu0
        %v4933 = vadd.f32 %v4708, %v4932
        %v4934 = vpop.f32.mrf.mxu0
        %v4935 = vpop.f32.mrf.mxu0
        %v4936 = vadd.f32 %v4711, %v4935
        %v4937 = vpop.f32.mrf.mxu0
        %4938 = vmatprep.mubr.bf16.mxu0 0
        %4939 = vmatmul.mubr.bf16.gmra.mxu0 %v4363
        %v4940 = vpop.f32.mrf.mxu0
        %v4941 = vadd.f32 %v4716, %v4940
        %v4942 = vpop.f32.mrf.mxu0
        %v4943 = vpop.f32.mrf.mxu0
        %v4944 = vadd.f32 %v4719, %v4943
        %v4945 = vpop.f32.mrf.mxu0
        %4946 = vdwg.mxu0
        %s4947 = scalar_lea.vmem %s9, 128
        %v4948 = vld [vmem:[%s4947] sm:$0xf]
        %v4949 = vld [vmem:[%s4947 + $0x4] sm:$0xf]
        %v4950 = vld [vmem:[%s4947 + $0x8] sm:$0xf]
        %v4951 = vld [vmem:[%s4947 + $0xc] sm:$0xf]
        %v4952 = vld [vmem:[%s4947 + $0x10] sm:$0xf]
        %v4953 = vld [vmem:[%s4947 + $0x14] sm:$0xf]
        %v4954 = vld [vmem:[%s4947 + $0x18] sm:$0xf]
        %v4955 = vld [vmem:[%s4947 + $0x1c] sm:$0xf]
        %v4956 = vld [vmem:[%s4947 + $0x20] sm:$0xf]
        %v4957 = vld [vmem:[%s4947 + $0x24] sm:$0xf]
        %v4958 = vld [vmem:[%s4947 + $0x28] sm:$0xf]
        %v4959 = vld [vmem:[%s4947 + $0x2c] sm:$0xf]
        %v4960 = vld [vmem:[%s4947 + $0x30] sm:$0xf]
        %v4961 = vld [vmem:[%s4947 + $0x34] sm:$0xf]
        %v4962 = vld [vmem:[%s4947 + $0x38] sm:$0xf]
        %v4963 = vld [vmem:[%s4947 + $0x3c] sm:$0xf]
        %v4980 = vunpack.c.l.b16 %v4948
        %v4981 = vunpack.c.l.b16 %v4949
        %v4982 = vunpack.c.l.b16 %v4950
        %v4983 = vunpack.c.l.b16 %v4951
        %v4984 = vunpack.c.l.b16 %v4952
        %v4985 = vunpack.c.l.b16 %v4953
        %v4986 = vunpack.c.l.b16 %v4954
        %v4987 = vunpack.c.l.b16 %v4955
        %v4988 = vunpack.c.l.b16 %v4956
        %v4989 = vunpack.c.l.b16 %v4957
        %v4990 = vunpack.c.l.b16 %v4958
        %v4991 = vunpack.c.l.b16 %v4959
        %v4992 = vunpack.c.l.b16 %v4960
        %v4993 = vunpack.c.l.b16 %v4961
        %v4994 = vunpack.c.l.b16 %v4962
        %v4995 = vunpack.c.l.b16 %v4963
        %v4996 = vpack.c.b16 %v4981, %v4980
        %v4997 = vpack.c.b16 %v4983, %v4982
        %v4998 = vpack.c.b16 %v4985, %v4984
        %v4999 = vpack.c.b16 %v4987, %v4986
        %v5000 = vpack.c.b16 %v4989, %v4988
        %v5001 = vpack.c.b16 %v4991, %v4990
        %v5002 = vpack.c.b16 %v4993, %v4992
        %v5003 = vpack.c.b16 %v4995, %v4994
        %5012 = vmatprep.subr.bf16.mxu0 0
        %5013 = vmatpush1.bf16.msra.mxu0 %v5003
        %5014 = vmatprep.subr.bf16.mxu0 0
        %5015 = vmatpush1.bf16.msra.mxu0 %v5002
        %5016 = vmatprep.subr.bf16.mxu0 0
        %5017 = vmatpush1.bf16.msra.mxu0 %v5001
        %5018 = vmatprep.subr.bf16.mxu0 0
        %5019 = vmatpush1.bf16.msra.mxu0 %v5000
        %5020 = vmatprep.subr.bf16.mxu0 0
        %5021 = vmatpush1.bf16.msra.mxu0 %v4999
        %5022 = vmatprep.subr.bf16.mxu0 0
        %5023 = vmatpush1.bf16.msra.mxu0 %v4998
        %5024 = vmatprep.subr.bf16.mxu0 0
        %5025 = vmatpush1.bf16.msra.mxu0 %v4997
        %5026 = vmatprep.subr.bf16.mxu0 0
        %5027 = vmatpush1.bf16.msra.mxu0 %v4996
        %5028 = vmatprep.subr.bf16.mxu0 0
        %5029 = vmatpush2.bf16.msra.mxu0 0
        %5030 = vmatprep.subr.bf16.mxu0 0
        %5031 = vmatpush2.bf16.msra.mxu0 0
        %5032 = vmatprep.subr.bf16.mxu0 0
        %5033 = vmatpush2.bf16.msra.mxu0 0
        %5034 = vmatprep.subr.bf16.mxu0 0
        %5035 = vmatpush2.bf16.msra.mxu0 0
        %5036 = vmatprep.subr.bf16.mxu0 0
        %5037 = vmatpush2.bf16.msra.mxu0 0
        %5038 = vmatprep.subr.bf16.mxu0 0
        %5039 = vmatpush2.bf16.msra.mxu0 0
        %5040 = vmatprep.subr.bf16.mxu0 0
        %5041 = vmatpush2.bf16.msra.mxu0 0
        %5042 = vmatprep.subr.bf16.mxu0 0
        %5043 = vmatpush2.bf16.msra.mxu0 0
        %5044 = vmatprep.mubr.bf16.mxu0 0
        %5045 = vmatmul.mubr.bf16.gmra.mxu0 %v4426
        %v5046 = vpop.f32.mrf.mxu0
        %v5047 = vadd.f32 0.0, %v5046
        %v5048 = vpop.f32.mrf.mxu0
        %v5049 = vpop.f32.mrf.mxu0
        %v5050 = vadd.f32 0.0, %v5049
        %v5051 = vpop.f32.mrf.mxu0
        %5052 = vmatprep.mubr.bf16.mxu0 0
        %5053 = vmatmul.mubr.bf16.gmra.mxu0 %v4427
        %v5054 = vpop.f32.mrf.mxu0
        %v5055 = vadd.f32 0.0, %v5054
        %v5056 = vpop.f32.mrf.mxu0
        %v5057 = vpop.f32.mrf.mxu0
        %v5058 = vadd.f32 0.0, %v5057
        %v5059 = vpop.f32.mrf.mxu0
        %5060 = vmatprep.mubr.bf16.mxu0 0
        %5061 = vmatmul.mubr.bf16.gmra.mxu0 %v4428
        %v5062 = vpop.f32.mrf.mxu0
        %v5063 = vadd.f32 0.0, %v5062
        %v5064 = vpop.f32.mrf.mxu0
        %v5065 = vpop.f32.mrf.mxu0
        %v5066 = vadd.f32 0.0, %v5065
        %v5067 = vpop.f32.mrf.mxu0
        %5068 = vmatprep.mubr.bf16.mxu0 0
        %5069 = vmatmul.mubr.bf16.gmra.mxu0 %v4429
        %v5070 = vpop.f32.mrf.mxu0
        %v5071 = vadd.f32 0.0, %v5070
        %v5072 = vpop.f32.mrf.mxu0
        %v5073 = vpop.f32.mrf.mxu0
        %v5074 = vadd.f32 0.0, %v5073
        %v5075 = vpop.f32.mrf.mxu0
        %5076 = vmatprep.mubr.bf16.mxu0 0
        %5077 = vmatmul.mubr.bf16.gmra.mxu0 %v4430
        %v5078 = vpop.f32.mrf.mxu0
        %v5079 = vadd.f32 0.0, %v5078
        %v5080 = vpop.f32.mrf.mxu0
        %v5081 = vpop.f32.mrf.mxu0
        %v5082 = vadd.f32 0.0, %v5081
        %v5083 = vpop.f32.mrf.mxu0
        %5084 = vmatprep.mubr.bf16.mxu0 0
        %5085 = vmatmul.mubr.bf16.gmra.mxu0 %v4431
        %v5086 = vpop.f32.mrf.mxu0
        %v5087 = vadd.f32 0.0, %v5086
        %v5088 = vpop.f32.mrf.mxu0
        %v5089 = vpop.f32.mrf.mxu0
        %v5090 = vadd.f32 0.0, %v5089
        %v5091 = vpop.f32.mrf.mxu0
        %5092 = vmatprep.mubr.bf16.mxu0 0
        %5093 = vmatmul.mubr.bf16.gmra.mxu0 %v4432
        %v5094 = vpop.f32.mrf.mxu0
        %v5095 = vadd.f32 0.0, %v5094
        %v5096 = vpop.f32.mrf.mxu0
        %v5097 = vpop.f32.mrf.mxu0
        %v5098 = vadd.f32 0.0, %v5097
        %v5099 = vpop.f32.mrf.mxu0
        %5100 = vmatprep.mubr.bf16.mxu0 0
        %5101 = vmatmul.mubr.bf16.gmra.mxu0 %v4433
        %v5102 = vpop.f32.mrf.mxu0
        %v5103 = vadd.f32 0.0, %v5102
        %v5104 = vpop.f32.mrf.mxu0
        %v5105 = vpop.f32.mrf.mxu0
        %v5106 = vadd.f32 0.0, %v5105
        %v5107 = vpop.f32.mrf.mxu0
        %5108 = vmatprep.mubr.bf16.mxu0 0
        %5109 = vmatmul.mubr.bf16.gmra.mxu0 %v4434
        %v5110 = vpop.f32.mrf.mxu0
        %v5111 = vadd.f32 0.0, %v5110
        %v5112 = vpop.f32.mrf.mxu0
        %v5113 = vpop.f32.mrf.mxu0
        %v5114 = vadd.f32 0.0, %v5113
        %v5115 = vpop.f32.mrf.mxu0
        %5116 = vmatprep.mubr.bf16.mxu0 0
        %5117 = vmatmul.mubr.bf16.gmra.mxu0 %v4435
        %v5118 = vpop.f32.mrf.mxu0
        %v5119 = vadd.f32 0.0, %v5118
        %v5120 = vpop.f32.mrf.mxu0
        %v5121 = vpop.f32.mrf.mxu0
        %v5122 = vadd.f32 0.0, %v5121
        %v5123 = vpop.f32.mrf.mxu0
        %5124 = vmatprep.mubr.bf16.mxu0 0
        %5125 = vmatmul.mubr.bf16.gmra.mxu0 %v4436
        %v5126 = vpop.f32.mrf.mxu0
        %v5127 = vadd.f32 0.0, %v5126
        %v5128 = vpop.f32.mrf.mxu0
        %v5129 = vpop.f32.mrf.mxu0
        %v5130 = vadd.f32 0.0, %v5129
        %v5131 = vpop.f32.mrf.mxu0
        %5132 = vmatprep.mubr.bf16.mxu0 0
        %5133 = vmatmul.mubr.bf16.gmra.mxu0 %v4437
        %v5134 = vpop.f32.mrf.mxu0
        %v5135 = vadd.f32 0.0, %v5134
        %v5136 = vpop.f32.mrf.mxu0
        %v5137 = vpop.f32.mrf.mxu0
        %v5138 = vadd.f32 0.0, %v5137
        %v5139 = vpop.f32.mrf.mxu0
        %5140 = vmatprep.mubr.bf16.mxu0 0
        %5141 = vmatmul.mubr.bf16.gmra.mxu0 %v4438
        %v5142 = vpop.f32.mrf.mxu0
        %v5143 = vadd.f32 0.0, %v5142
        %v5144 = vpop.f32.mrf.mxu0
        %v5145 = vpop.f32.mrf.mxu0
        %v5146 = vadd.f32 0.0, %v5145
        %v5147 = vpop.f32.mrf.mxu0
        %5148 = vmatprep.mubr.bf16.mxu0 0
        %5149 = vmatmul.mubr.bf16.gmra.mxu0 %v4439
        %v5150 = vpop.f32.mrf.mxu0
        %v5151 = vadd.f32 0.0, %v5150
        %v5152 = vpop.f32.mrf.mxu0
        %v5153 = vpop.f32.mrf.mxu0
        %v5154 = vadd.f32 0.0, %v5153
        %v5155 = vpop.f32.mrf.mxu0
        %5156 = vmatprep.mubr.bf16.mxu0 0
        %5157 = vmatmul.mubr.bf16.gmra.mxu0 %v4440
        %v5158 = vpop.f32.mrf.mxu0
        %v5159 = vadd.f32 0.0, %v5158
        %v5160 = vpop.f32.mrf.mxu0
        %v5161 = vpop.f32.mrf.mxu0
        %v5162 = vadd.f32 0.0, %v5161
        %v5163 = vpop.f32.mrf.mxu0
        %5164 = vmatprep.mubr.bf16.mxu0 0
        %5165 = vmatmul.mubr.bf16.gmra.mxu0 %v4441
        %v5166 = vpop.f32.mrf.mxu0
        %v5167 = vadd.f32 0.0, %v5166
        %v5168 = vpop.f32.mrf.mxu0
        %v5169 = vpop.f32.mrf.mxu0
        %v5170 = vadd.f32 0.0, %v5169
        %v5171 = vpop.f32.mrf.mxu0
        %5172 = vmatprep.mubr.bf16.mxu0 0
        %5173 = vmatmul.mubr.bf16.gmra.mxu0 %v4442
        %v5174 = vpop.f32.mrf.mxu0
        %v5175 = vadd.f32 0.0, %v5174
        %v5176 = vpop.f32.mrf.mxu0
        %v5177 = vpop.f32.mrf.mxu0
        %v5178 = vadd.f32 0.0, %v5177
        %v5179 = vpop.f32.mrf.mxu0
        %5180 = vmatprep.mubr.bf16.mxu0 0
        %5181 = vmatmul.mubr.bf16.gmra.mxu0 %v4443
        %v5182 = vpop.f32.mrf.mxu0
        %v5183 = vadd.f32 0.0, %v5182
        %v5184 = vpop.f32.mrf.mxu0
        %v5185 = vpop.f32.mrf.mxu0
        %v5186 = vadd.f32 0.0, %v5185
        %v5187 = vpop.f32.mrf.mxu0
        %5188 = vdwg.mxu0
        %v5189 = vadd.f32 %v4805, %v5047
        %v5190 = vadd.f32 %v4808, %v5050
        %v5191 = vadd.f32 %v4813, %v5055
        %v5192 = vadd.f32 %v4816, %v5058
        %v5193 = vadd.f32 %v4821, %v5063
        %v5194 = vadd.f32 %v4824, %v5066
        %v5195 = vadd.f32 %v4829, %v5071
        %v5196 = vadd.f32 %v4832, %v5074
        %v5197 = vadd.f32 %v4837, %v5079
        %v5198 = vadd.f32 %v4840, %v5082
        %v5199 = vadd.f32 %v4845, %v5087
        %v5200 = vadd.f32 %v4848, %v5090
        %v5201 = vadd.f32 %v4853, %v5095
        %v5202 = vadd.f32 %v4856, %v5098
        %v5203 = vadd.f32 %v4861, %v5103
        %v5204 = vadd.f32 %v4864, %v5106
        %v5205 = vadd.f32 %v4869, %v5111
        %v5206 = vadd.f32 %v4872, %v5114
        %v5207 = vadd.f32 %v4877, %v5119
        %v5208 = vadd.f32 %v4880, %v5122
        %v5209 = vadd.f32 %v4885, %v5127
        %v5210 = vadd.f32 %v4888, %v5130
        %v5211 = vadd.f32 %v4893, %v5135
        %v5212 = vadd.f32 %v4896, %v5138
        %v5213 = vadd.f32 %v4901, %v5143
        %v5214 = vadd.f32 %v4904, %v5146
        %v5215 = vadd.f32 %v4909, %v5151
        %v5216 = vadd.f32 %v4912, %v5154
        %v5217 = vadd.f32 %v4917, %v5159
        %v5218 = vadd.f32 %v4920, %v5162
        %v5219 = vadd.f32 %v4925, %v5167
        %v5220 = vadd.f32 %v4928, %v5170
        %v5221 = vadd.f32 %v4933, %v5175
        %v5222 = vadd.f32 %v4936, %v5178
        %v5223 = vadd.f32 %v4941, %v5183
        %v5224 = vadd.f32 %v4944, %v5186
        %s5225 = scalar_lea.vmem %s9, 192
        %v5226 = vld [vmem:[%s5225] sm:$0xf]
        %v5227 = vld [vmem:[%s5225 + $0x4] sm:$0xf]
        %v5228 = vld [vmem:[%s5225 + $0x8] sm:$0xf]
        %v5229 = vld [vmem:[%s5225 + $0xc] sm:$0xf]
        %v5230 = vld [vmem:[%s5225 + $0x10] sm:$0xf]
        %v5231 = vld [vmem:[%s5225 + $0x14] sm:$0xf]
        %v5232 = vld [vmem:[%s5225 + $0x18] sm:$0xf]
        %v5233 = vld [vmem:[%s5225 + $0x1c] sm:$0xf]
        %v5234 = vld [vmem:[%s5225 + $0x20] sm:$0xf]
        %v5235 = vld [vmem:[%s5225 + $0x24] sm:$0xf]
        %v5236 = vld [vmem:[%s5225 + $0x28] sm:$0xf]
        %v5237 = vld [vmem:[%s5225 + $0x2c] sm:$0xf]
        %v5238 = vld [vmem:[%s5225 + $0x30] sm:$0xf]
        %v5239 = vld [vmem:[%s5225 + $0x34] sm:$0xf]
        %v5240 = vld [vmem:[%s5225 + $0x38] sm:$0xf]
        %v5241 = vld [vmem:[%s5225 + $0x3c] sm:$0xf]
        %v5258 = vunpack.c.l.b16 %v5226
        %v5259 = vunpack.c.l.b16 %v5227
        %v5260 = vunpack.c.l.b16 %v5228
        %v5261 = vunpack.c.l.b16 %v5229
        %v5262 = vunpack.c.l.b16 %v5230
        %v5263 = vunpack.c.l.b16 %v5231
        %v5264 = vunpack.c.l.b16 %v5232
        %v5265 = vunpack.c.l.b16 %v5233
        %v5266 = vunpack.c.l.b16 %v5234
        %v5267 = vunpack.c.l.b16 %v5235
        %v5268 = vunpack.c.l.b16 %v5236
        %v5269 = vunpack.c.l.b16 %v5237
        %v5270 = vunpack.c.l.b16 %v5238
        %v5271 = vunpack.c.l.b16 %v5239
        %v5272 = vunpack.c.l.b16 %v5240
        %v5273 = vunpack.c.l.b16 %v5241
        %v5274 = vpack.c.b16 %v5259, %v5258
        %v5275 = vpack.c.b16 %v5261, %v5260
        %v5276 = vpack.c.b16 %v5263, %v5262
        %v5277 = vpack.c.b16 %v5265, %v5264
        %v5278 = vpack.c.b16 %v5267, %v5266
        %v5279 = vpack.c.b16 %v5269, %v5268
        %v5280 = vpack.c.b16 %v5271, %v5270
        %v5281 = vpack.c.b16 %v5273, %v5272
        %5290 = vmatprep.subr.bf16.mxu0 0
        %5291 = vmatpush1.bf16.msra.mxu0 %v5281
        %5292 = vmatprep.subr.bf16.mxu0 0
        %5293 = vmatpush1.bf16.msra.mxu0 %v5280
        %5294 = vmatprep.subr.bf16.mxu0 0
        %5295 = vmatpush1.bf16.msra.mxu0 %v5279
        %5296 = vmatprep.subr.bf16.mxu0 0
        %5297 = vmatpush1.bf16.msra.mxu0 %v5278
        %5298 = vmatprep.subr.bf16.mxu0 0
        %5299 = vmatpush1.bf16.msra.mxu0 %v5277
        %5300 = vmatprep.subr.bf16.mxu0 0
        %5301 = vmatpush1.bf16.msra.mxu0 %v5276
        %5302 = vmatprep.subr.bf16.mxu0 0
        %5303 = vmatpush1.bf16.msra.mxu0 %v5275
        %5304 = vmatprep.subr.bf16.mxu0 0
        %5305 = vmatpush1.bf16.msra.mxu0 %v5274
        %5306 = vmatprep.subr.bf16.mxu0 0
        %5307 = vmatpush2.bf16.msra.mxu0 0
        %5308 = vmatprep.subr.bf16.mxu0 0
        %5309 = vmatpush2.bf16.msra.mxu0 0
        %5310 = vmatprep.subr.bf16.mxu0 0
        %5311 = vmatpush2.bf16.msra.mxu0 0
        %5312 = vmatprep.subr.bf16.mxu0 0
        %5313 = vmatpush2.bf16.msra.mxu0 0
        %5314 = vmatprep.subr.bf16.mxu0 0
        %5315 = vmatpush2.bf16.msra.mxu0 0
        %5316 = vmatprep.subr.bf16.mxu0 0
        %5317 = vmatpush2.bf16.msra.mxu0 0
        %5318 = vmatprep.subr.bf16.mxu0 0
        %5319 = vmatpush2.bf16.msra.mxu0 0
        %5320 = vmatprep.subr.bf16.mxu0 0
        %5321 = vmatpush2.bf16.msra.mxu0 0
        %5322 = vmatprep.mubr.bf16.mxu0 0
        %5323 = vmatmul.mubr.bf16.gmra.mxu0 %v4347
        %v5324 = vpop.f32.mrf.mxu0
        %v5325 = vadd.f32 0.0, %v5324
        %v5326 = vpop.f32.mrf.mxu0
        %v5327 = vpop.f32.mrf.mxu0
        %v5328 = vadd.f32 0.0, %v5327
        %v5329 = vpop.f32.mrf.mxu0
        %5330 = vmatprep.mubr.bf16.mxu0 0
        %5331 = vmatmul.mubr.bf16.gmra.mxu0 %v4348
        %v5332 = vpop.f32.mrf.mxu0
        %v5333 = vadd.f32 0.0, %v5332
        %v5334 = vpop.f32.mrf.mxu0
        %v5335 = vpop.f32.mrf.mxu0
        %v5336 = vadd.f32 0.0, %v5335
        %v5337 = vpop.f32.mrf.mxu0
        %5338 = vmatprep.mubr.bf16.mxu0 0
        %5339 = vmatmul.mubr.bf16.gmra.mxu0 %v4349
        %v5340 = vpop.f32.mrf.mxu0
        %v5341 = vadd.f32 0.0, %v5340
        %v5342 = vpop.f32.mrf.mxu0
        %v5343 = vpop.f32.mrf.mxu0
        %v5344 = vadd.f32 0.0, %v5343
        %v5345 = vpop.f32.mrf.mxu0
        %5346 = vmatprep.mubr.bf16.mxu0 0
        %5347 = vmatmul.mubr.bf16.gmra.mxu0 %v4350
        %v5348 = vpop.f32.mrf.mxu0
        %v5349 = vadd.f32 0.0, %v5348
        %v5350 = vpop.f32.mrf.mxu0
        %v5351 = vpop.f32.mrf.mxu0
        %v5352 = vadd.f32 0.0, %v5351
        %v5353 = vpop.f32.mrf.mxu0
        %5354 = vmatprep.mubr.bf16.mxu0 0
        %5355 = vmatmul.mubr.bf16.gmra.mxu0 %v4351
        %v5356 = vpop.f32.mrf.mxu0
        %v5357 = vadd.f32 0.0, %v5356
        %v5358 = vpop.f32.mrf.mxu0
        %v5359 = vpop.f32.mrf.mxu0
        %v5360 = vadd.f32 0.0, %v5359
        %v5361 = vpop.f32.mrf.mxu0
        %5362 = vmatprep.mubr.bf16.mxu0 0
        %5363 = vmatmul.mubr.bf16.gmra.mxu0 %v4352
        %v5364 = vpop.f32.mrf.mxu0
        %v5365 = vadd.f32 0.0, %v5364
        %v5366 = vpop.f32.mrf.mxu0
        %v5367 = vpop.f32.mrf.mxu0
        %v5368 = vadd.f32 0.0, %v5367
        %v5369 = vpop.f32.mrf.mxu0
        %5370 = vmatprep.mubr.bf16.mxu0 0
        %5371 = vmatmul.mubr.bf16.gmra.mxu0 %v4353
        %v5372 = vpop.f32.mrf.mxu0
        %v5373 = vadd.f32 0.0, %v5372
        %v5374 = vpop.f32.mrf.mxu0
        %v5375 = vpop.f32.mrf.mxu0
        %v5376 = vadd.f32 0.0, %v5375
        %v5377 = vpop.f32.mrf.mxu0
        %5378 = vmatprep.mubr.bf16.mxu0 0
        %5379 = vmatmul.mubr.bf16.gmra.mxu0 %v4354
        %v5380 = vpop.f32.mrf.mxu0
        %v5381 = vadd.f32 0.0, %v5380
        %v5382 = vpop.f32.mrf.mxu0
        %v5383 = vpop.f32.mrf.mxu0
        %v5384 = vadd.f32 0.0, %v5383
        %v5385 = vpop.f32.mrf.mxu0
        %5386 = vmatprep.mubr.bf16.mxu0 0
        %5387 = vmatmul.mubr.bf16.gmra.mxu0 %v4355
        %v5388 = vpop.f32.mrf.mxu0
        %v5389 = vadd.f32 0.0, %v5388
        %v5390 = vpop.f32.mrf.mxu0
        %v5391 = vpop.f32.mrf.mxu0
        %v5392 = vadd.f32 0.0, %v5391
        %v5393 = vpop.f32.mrf.mxu0
        %5394 = vmatprep.mubr.bf16.mxu0 0
        %5395 = vmatmul.mubr.bf16.gmra.mxu0 %v4356
        %v5396 = vpop.f32.mrf.mxu0
        %v5397 = vadd.f32 0.0, %v5396
        %v5398 = vpop.f32.mrf.mxu0
        %v5399 = vpop.f32.mrf.mxu0
        %v5400 = vadd.f32 0.0, %v5399
        %v5401 = vpop.f32.mrf.mxu0
        %5402 = vmatprep.mubr.bf16.mxu0 0
        %5403 = vmatmul.mubr.bf16.gmra.mxu0 %v4357
        %v5404 = vpop.f32.mrf.mxu0
        %v5405 = vadd.f32 0.0, %v5404
        %v5406 = vpop.f32.mrf.mxu0
        %v5407 = vpop.f32.mrf.mxu0
        %v5408 = vadd.f32 0.0, %v5407
        %v5409 = vpop.f32.mrf.mxu0
        %5410 = vmatprep.mubr.bf16.mxu0 0
        %5411 = vmatmul.mubr.bf16.gmra.mxu0 %v4358
        %v5412 = vpop.f32.mrf.mxu0
        %v5413 = vadd.f32 0.0, %v5412
        %v5414 = vpop.f32.mrf.mxu0
        %v5415 = vpop.f32.mrf.mxu0
        %v5416 = vadd.f32 0.0, %v5415
        %v5417 = vpop.f32.mrf.mxu0
        %5418 = vmatprep.mubr.bf16.mxu0 0
        %5419 = vmatmul.mubr.bf16.gmra.mxu0 %v4359
        %v5420 = vpop.f32.mrf.mxu0
        %v5421 = vadd.f32 0.0, %v5420
        %v5422 = vpop.f32.mrf.mxu0
        %v5423 = vpop.f32.mrf.mxu0
        %v5424 = vadd.f32 0.0, %v5423
        %v5425 = vpop.f32.mrf.mxu0
        %5426 = vmatprep.mubr.bf16.mxu0 0
        %5427 = vmatmul.mubr.bf16.gmra.mxu0 %v4360
        %v5428 = vpop.f32.mrf.mxu0
        %v5429 = vadd.f32 0.0, %v5428
        %v5430 = vpop.f32.mrf.mxu0
        %v5431 = vpop.f32.mrf.mxu0
        %v5432 = vadd.f32 0.0, %v5431
        %v5433 = vpop.f32.mrf.mxu0
        %5434 = vmatprep.mubr.bf16.mxu0 0
        %5435 = vmatmul.mubr.bf16.gmra.mxu0 %v4361
        %v5436 = vpop.f32.mrf.mxu0
        %v5437 = vadd.f32 0.0, %v5436
        %v5438 = vpop.f32.mrf.mxu0
        %v5439 = vpop.f32.mrf.mxu0
        %v5440 = vadd.f32 0.0, %v5439
        %v5441 = vpop.f32.mrf.mxu0
        %5442 = vmatprep.mubr.bf16.mxu0 0
        %5443 = vmatmul.mubr.bf16.gmra.mxu0 %v4362
        %v5444 = vpop.f32.mrf.mxu0
        %v5445 = vadd.f32 0.0, %v5444
        %v5446 = vpop.f32.mrf.mxu0
        %v5447 = vpop.f32.mrf.mxu0
        %v5448 = vadd.f32 0.0, %v5447
        %v5449 = vpop.f32.mrf.mxu0
        %5450 = vmatprep.mubr.bf16.mxu0 0
        %5451 = vmatmul.mubr.bf16.gmra.mxu0 %v4363
        %v5452 = vpop.f32.mrf.mxu0
        %v5453 = vadd.f32 0.0, %v5452
        %v5454 = vpop.f32.mrf.mxu0
        %v5455 = vpop.f32.mrf.mxu0
        %v5456 = vadd.f32 0.0, %v5455
        %v5457 = vpop.f32.mrf.mxu0
        %5458 = vmatprep.mubr.bf16.mxu0 0
        %5459 = vmatmul.mubr.bf16.gmra.mxu0 %v4364
        %v5460 = vpop.f32.mrf.mxu0
        %v5461 = vadd.f32 0.0, %v5460
        %v5462 = vpop.f32.mrf.mxu0
        %v5463 = vpop.f32.mrf.mxu0
        %v5464 = vadd.f32 0.0, %v5463
        %v5465 = vpop.f32.mrf.mxu0
        %5466 = vdwg.mxu0
        %v5467 = vadd.f32 %v5189, %v5325
        %v5468 = vadd.f32 %v5190, %v5328
        %v5469 = vadd.f32 %v5191, %v5333
        %v5470 = vadd.f32 %v5192, %v5336
        %v5471 = vadd.f32 %v5193, %v5341
        %v5472 = vadd.f32 %v5194, %v5344
        %v5473 = vadd.f32 %v5195, %v5349
        %v5474 = vadd.f32 %v5196, %v5352
        %v5475 = vadd.f32 %v5197, %v5357
        %v5476 = vadd.f32 %v5198, %v5360
        %v5477 = vadd.f32 %v5199, %v5365
        %v5478 = vadd.f32 %v5200, %v5368
        %v5479 = vadd.f32 %v5201, %v5373
        %v5480 = vadd.f32 %v5202, %v5376
        %v5481 = vadd.f32 %v5203, %v5381
        %v5482 = vadd.f32 %v5204, %v5384
        %v5483 = vadd.f32 %v5205, %v5389
        %v5484 = vadd.f32 %v5206, %v5392
        %v5485 = vadd.f32 %v5207, %v5397
        %v5486 = vadd.f32 %v5208, %v5400
        %v5487 = vadd.f32 %v5209, %v5405
        %v5488 = vadd.f32 %v5210, %v5408
        %v5489 = vadd.f32 %v5211, %v5413
        %v5490 = vadd.f32 %v5212, %v5416
        %v5491 = vadd.f32 %v5213, %v5421
        %v5492 = vadd.f32 %v5214, %v5424
        %v5493 = vadd.f32 %v5215, %v5429
        %v5494 = vadd.f32 %v5216, %v5432
        %v5495 = vadd.f32 %v5217, %v5437
        %v5496 = vadd.f32 %v5218, %v5440
        %v5497 = vadd.f32 %v5219, %v5445
        %v5498 = vadd.f32 %v5220, %v5448
        %v5499 = vadd.f32 %v5221, %v5453
        %v5500 = vadd.f32 %v5222, %v5456
        %v5501 = vadd.f32 %v5223, %v5461
        %v5502 = vadd.f32 %v5224, %v5464
        %s5503 = scalar_lea.vmem %s9, 256
        %v5504 = vld [vmem:[%s5503] sm:$0xf]
        %v5505 = vld [vmem:[%s5503 + $0x4] sm:$0xf]
        %v5506 = vld [vmem:[%s5503 + $0x8] sm:$0xf]
        %v5507 = vld [vmem:[%s5503 + $0xc] sm:$0xf]
        %v5508 = vld [vmem:[%s5503 + $0x10] sm:$0xf]
        %v5509 = vld [vmem:[%s5503 + $0x14] sm:$0xf]
        %v5510 = vld [vmem:[%s5503 + $0x18] sm:$0xf]
        %v5511 = vld [vmem:[%s5503 + $0x1c] sm:$0xf]
        %v5512 = vld [vmem:[%s5503 + $0x20] sm:$0xf]
        %v5513 = vld [vmem:[%s5503 + $0x24] sm:$0xf]
        %v5514 = vld [vmem:[%s5503 + $0x28] sm:$0xf]
        %v5515 = vld [vmem:[%s5503 + $0x2c] sm:$0xf]
        %v5516 = vld [vmem:[%s5503 + $0x30] sm:$0xf]
        %v5517 = vld [vmem:[%s5503 + $0x34] sm:$0xf]
        %v5518 = vld [vmem:[%s5503 + $0x38] sm:$0xf]
        %v5519 = vld [vmem:[%s5503 + $0x3c] sm:$0xf]
        %v5537 = vunpack.c.l.b16 %v5504
        %v5538 = vunpack.c.l.b16 %v5505
        %v5539 = vunpack.c.l.b16 %v5506
        %v5540 = vunpack.c.l.b16 %v5507
        %v5541 = vunpack.c.l.b16 %v5508
        %v5542 = vunpack.c.l.b16 %v5509
        %v5543 = vunpack.c.l.b16 %v5510
        %v5544 = vunpack.c.l.b16 %v5511
        %v5545 = vunpack.c.l.b16 %v5512
        %v5546 = vunpack.c.l.b16 %v5513
        %v5547 = vunpack.c.l.b16 %v5514
        %v5548 = vunpack.c.l.b16 %v5515
        %v5549 = vunpack.c.l.b16 %v5516
        %v5550 = vunpack.c.l.b16 %v5517
        %v5551 = vunpack.c.l.b16 %v5518
        %v5552 = vunpack.c.l.b16 %v5519
        %v5553 = vpack.c.b16 %v5538, %v5537
        %v5554 = vpack.c.b16 %v5540, %v5539
        %v5555 = vpack.c.b16 %v5542, %v5541
        %v5556 = vpack.c.b16 %v5544, %v5543
        %v5557 = vpack.c.b16 %v5546, %v5545
        %v5558 = vpack.c.b16 %v5548, %v5547
        %v5559 = vpack.c.b16 %v5550, %v5549
        %v5560 = vpack.c.b16 %v5552, %v5551
        %5569 = vmatprep.subr.bf16.mxu0 0
        %5570 = vmatpush1.bf16.msra.mxu0 %v5560
        %5571 = vmatprep.subr.bf16.mxu0 0
        %5572 = vmatpush1.bf16.msra.mxu0 %v5559
        %5573 = vmatprep.subr.bf16.mxu0 0
        %5574 = vmatpush1.bf16.msra.mxu0 %v5558
        %5575 = vmatprep.subr.bf16.mxu0 0
        %5576 = vmatpush1.bf16.msra.mxu0 %v5557
        %5577 = vmatprep.subr.bf16.mxu0 0
        %5578 = vmatpush1.bf16.msra.mxu0 %v5556
        %5579 = vmatprep.subr.bf16.mxu0 0
        %5580 = vmatpush1.bf16.msra.mxu0 %v5555
        %5581 = vmatprep.subr.bf16.mxu0 0
        %5582 = vmatpush1.bf16.msra.mxu0 %v5554
        %5583 = vmatprep.subr.bf16.mxu0 0
        %5584 = vmatpush1.bf16.msra.mxu0 %v5553
        %5585 = vmatprep.subr.bf16.mxu0 0
        %5586 = vmatpush2.bf16.msra.mxu0 0
        %5587 = vmatprep.subr.bf16.mxu0 0
        %5588 = vmatpush2.bf16.msra.mxu0 0
        %5589 = vmatprep.subr.bf16.mxu0 0
        %5590 = vmatpush2.bf16.msra.mxu0 0
        %5591 = vmatprep.subr.bf16.mxu0 0
        %5592 = vmatpush2.bf16.msra.mxu0 0
        %5593 = vmatprep.subr.bf16.mxu0 0
        %5594 = vmatpush2.bf16.msra.mxu0 0
        %5595 = vmatprep.subr.bf16.mxu0 0
        %5596 = vmatpush2.bf16.msra.mxu0 0
        %5597 = vmatprep.subr.bf16.mxu0 0
        %5598 = vmatpush2.bf16.msra.mxu0 0
        %5599 = vmatprep.subr.bf16.mxu0 0
        %5600 = vmatpush2.bf16.msra.mxu0 0
        %5601 = vmatprep.mubr.bf16.mxu0 0
        %5602 = vmatmul.mubr.bf16.gmra.mxu0 %v4167
        %v5603 = vpop.f32.mrf.mxu0
        %v5604 = vadd.f32 0.0, %v5603
        %v5605 = vpop.f32.mrf.mxu0
        %v5606 = vpop.f32.mrf.mxu0
        %v5607 = vadd.f32 0.0, %v5606
        %v5608 = vpop.f32.mrf.mxu0
        %5609 = vmatprep.mubr.bf16.mxu0 0
        %5610 = vmatmul.mubr.bf16.gmra.mxu0 %v4168
        %v5611 = vpop.f32.mrf.mxu0
        %v5612 = vadd.f32 0.0, %v5611
        %v5613 = vpop.f32.mrf.mxu0
        %v5614 = vpop.f32.mrf.mxu0
        %v5615 = vadd.f32 0.0, %v5614
        %v5616 = vpop.f32.mrf.mxu0
        %5617 = vmatprep.mubr.bf16.mxu0 0
        %5618 = vmatmul.mubr.bf16.gmra.mxu0 %v4169
        %v5619 = vpop.f32.mrf.mxu0
        %v5620 = vadd.f32 0.0, %v5619
        %v5621 = vpop.f32.mrf.mxu0
        %v5622 = vpop.f32.mrf.mxu0
        %v5623 = vadd.f32 0.0, %v5622
        %v5624 = vpop.f32.mrf.mxu0
        %5625 = vmatprep.mubr.bf16.mxu0 0
        %5626 = vmatmul.mubr.bf16.gmra.mxu0 %v4170
        %v5627 = vpop.f32.mrf.mxu0
        %v5628 = vadd.f32 0.0, %v5627
        %v5629 = vpop.f32.mrf.mxu0
        %v5630 = vpop.f32.mrf.mxu0
        %v5631 = vadd.f32 0.0, %v5630
        %v5632 = vpop.f32.mrf.mxu0
        %5633 = vmatprep.mubr.bf16.mxu0 0
        %5634 = vmatmul.mubr.bf16.gmra.mxu0 %v4171
        %v5635 = vpop.f32.mrf.mxu0
        %v5636 = vadd.f32 0.0, %v5635
        %v5637 = vpop.f32.mrf.mxu0
        %v5638 = vpop.f32.mrf.mxu0
        %v5639 = vadd.f32 0.0, %v5638
        %v5640 = vpop.f32.mrf.mxu0
        %5641 = vmatprep.mubr.bf16.mxu0 0
        %5642 = vmatmul.mubr.bf16.gmra.mxu0 %v4172
        %v5643 = vpop.f32.mrf.mxu0
        %v5644 = vadd.f32 0.0, %v5643
        %v5645 = vpop.f32.mrf.mxu0
        %v5646 = vpop.f32.mrf.mxu0
        %v5647 = vadd.f32 0.0, %v5646
        %v5648 = vpop.f32.mrf.mxu0
        %5649 = vmatprep.mubr.bf16.mxu0 0
        %5650 = vmatmul.mubr.bf16.gmra.mxu0 %v4173
        %v5651 = vpop.f32.mrf.mxu0
        %v5652 = vadd.f32 0.0, %v5651
        %v5653 = vpop.f32.mrf.mxu0
        %v5654 = vpop.f32.mrf.mxu0
        %v5655 = vadd.f32 0.0, %v5654
        %v5656 = vpop.f32.mrf.mxu0
        %5657 = vmatprep.mubr.bf16.mxu0 0
        %5658 = vmatmul.mubr.bf16.gmra.mxu0 %v4174
        %v5659 = vpop.f32.mrf.mxu0
        %v5660 = vadd.f32 0.0, %v5659
        %v5661 = vpop.f32.mrf.mxu0
        %v5662 = vpop.f32.mrf.mxu0
        %v5663 = vadd.f32 0.0, %v5662
        %v5664 = vpop.f32.mrf.mxu0
        %5665 = vmatprep.mubr.bf16.mxu0 0
        %5666 = vmatmul.mubr.bf16.gmra.mxu0 %v4175
        %v5667 = vpop.f32.mrf.mxu0
        %v5668 = vadd.f32 0.0, %v5667
        %v5669 = vpop.f32.mrf.mxu0
        %v5670 = vpop.f32.mrf.mxu0
        %v5671 = vadd.f32 0.0, %v5670
        %v5672 = vpop.f32.mrf.mxu0
        %5673 = vmatprep.mubr.bf16.mxu0 0
        %5674 = vmatmul.mubr.bf16.gmra.mxu0 %v4176
        %v5675 = vpop.f32.mrf.mxu0
        %v5676 = vadd.f32 0.0, %v5675
        %v5677 = vpop.f32.mrf.mxu0
        %v5678 = vpop.f32.mrf.mxu0
        %v5679 = vadd.f32 0.0, %v5678
        %v5680 = vpop.f32.mrf.mxu0
        %5681 = vmatprep.mubr.bf16.mxu0 0
        %5682 = vmatmul.mubr.bf16.gmra.mxu0 %v4177
        %v5683 = vpop.f32.mrf.mxu0
        %v5684 = vadd.f32 0.0, %v5683
        %v5685 = vpop.f32.mrf.mxu0
        %v5686 = vpop.f32.mrf.mxu0
        %v5687 = vadd.f32 0.0, %v5686
        %v5688 = vpop.f32.mrf.mxu0
        %5689 = vmatprep.mubr.bf16.mxu0 0
        %5690 = vmatmul.mubr.bf16.gmra.mxu0 %v4178
        %v5691 = vpop.f32.mrf.mxu0
        %v5692 = vadd.f32 0.0, %v5691
        %v5693 = vpop.f32.mrf.mxu0
        %v5694 = vpop.f32.mrf.mxu0
        %v5695 = vadd.f32 0.0, %v5694
        %v5696 = vpop.f32.mrf.mxu0
        %5697 = vmatprep.mubr.bf16.mxu0 0
        %5698 = vmatmul.mubr.bf16.gmra.mxu0 %v4179
        %v5699 = vpop.f32.mrf.mxu0
        %v5700 = vadd.f32 0.0, %v5699
        %v5701 = vpop.f32.mrf.mxu0
        %v5702 = vpop.f32.mrf.mxu0
        %v5703 = vadd.f32 0.0, %v5702
        %v5704 = vpop.f32.mrf.mxu0
        %5705 = vmatprep.mubr.bf16.mxu0 0
        %5706 = vmatmul.mubr.bf16.gmra.mxu0 %v4180
        %v5707 = vpop.f32.mrf.mxu0
        %v5708 = vadd.f32 0.0, %v5707
        %v5709 = vpop.f32.mrf.mxu0
        %v5710 = vpop.f32.mrf.mxu0
        %v5711 = vadd.f32 0.0, %v5710
        %v5712 = vpop.f32.mrf.mxu0
        %5713 = vmatprep.mubr.bf16.mxu0 0
        %5714 = vmatmul.mubr.bf16.gmra.mxu0 %v4181
        %v5715 = vpop.f32.mrf.mxu0
        %v5716 = vadd.f32 0.0, %v5715
        %v5717 = vpop.f32.mrf.mxu0
        %v5718 = vpop.f32.mrf.mxu0
        %v5719 = vadd.f32 0.0, %v5718
        %v5720 = vpop.f32.mrf.mxu0
        %5721 = vmatprep.mubr.bf16.mxu0 0
        %5722 = vmatmul.mubr.bf16.gmra.mxu0 %v4182
        %v5723 = vpop.f32.mrf.mxu0
        %v5724 = vadd.f32 0.0, %v5723
        %v5725 = vpop.f32.mrf.mxu0
        %v5726 = vpop.f32.mrf.mxu0
        %v5727 = vadd.f32 0.0, %v5726
        %v5728 = vpop.f32.mrf.mxu0
        %5729 = vmatprep.mubr.bf16.mxu0 0
        %5730 = vmatmul.mubr.bf16.gmra.mxu0 %v4183
        %v5731 = vpop.f32.mrf.mxu0
        %v5732 = vadd.f32 0.0, %v5731
        %v5733 = vpop.f32.mrf.mxu0
        %v5734 = vpop.f32.mrf.mxu0
        %v5735 = vadd.f32 0.0, %v5734
        %v5736 = vpop.f32.mrf.mxu0
        %5737 = vmatprep.mubr.bf16.mxu0 0
        %5738 = vmatmul.mubr.bf16.gmra.mxu0 %v4184
        %v5739 = vpop.f32.mrf.mxu0
        %v5740 = vadd.f32 0.0, %v5739
        %v5741 = vpop.f32.mrf.mxu0
        %v5742 = vpop.f32.mrf.mxu0
        %v5743 = vadd.f32 0.0, %v5742
        %v5744 = vpop.f32.mrf.mxu0
        %5745 = vdwg.mxu0
        %v5746 = vadd.f32 %v5467, %v5604
        %v5747 = vadd.f32 %v5468, %v5607
        %v5748 = vadd.f32 %v5469, %v5612
        %v5749 = vadd.f32 %v5470, %v5615
        %v5750 = vadd.f32 %v5471, %v5620
        %v5751 = vadd.f32 %v5472, %v5623
        %v5752 = vadd.f32 %v5473, %v5628
        %v5753 = vadd.f32 %v5474, %v5631
        %v5754 = vadd.f32 %v5475, %v5636
        %v5755 = vadd.f32 %v5476, %v5639
        %v5756 = vadd.f32 %v5477, %v5644
        %v5757 = vadd.f32 %v5478, %v5647
        %v5758 = vadd.f32 %v5479, %v5652
        %v5759 = vadd.f32 %v5480, %v5655
        %v5760 = vadd.f32 %v5481, %v5660
        %v5761 = vadd.f32 %v5482, %v5663
        %v5762 = vadd.f32 %v5483, %v5668
        %v5763 = vadd.f32 %v5484, %v5671
        %v5764 = vadd.f32 %v5485, %v5676
        %v5765 = vadd.f32 %v5486, %v5679
        %v5766 = vadd.f32 %v5487, %v5684
        %v5767 = vadd.f32 %v5488, %v5687
        %v5768 = vadd.f32 %v5489, %v5692
        %v5769 = vadd.f32 %v5490, %v5695
        %v5770 = vadd.f32 %v5491, %v5700
        %v5771 = vadd.f32 %v5492, %v5703
        %v5772 = vadd.f32 %v5493, %v5708
        %v5773 = vadd.f32 %v5494, %v5711
        %v5774 = vadd.f32 %v5495, %v5716
        %v5775 = vadd.f32 %v5496, %v5719
        %v5776 = vadd.f32 %v5497, %v5724
        %v5777 = vadd.f32 %v5498, %v5727
        %v5778 = vadd.f32 %v5499, %v5732
        %v5779 = vadd.f32 %v5500, %v5735
        %v5780 = vadd.f32 %v5501, %v5740
        %v5781 = vadd.f32 %v5502, %v5743
        %s5782 = scalar_lea.vmem %s9, 320
        %v5783 = vld [vmem:[%s5782] sm:$0xf]
        %v5784 = vld [vmem:[%s5782 + $0x4] sm:$0xf]
        %v5785 = vld [vmem:[%s5782 + $0x8] sm:$0xf]
        %v5786 = vld [vmem:[%s5782 + $0xc] sm:$0xf]
        %v5787 = vld [vmem:[%s5782 + $0x10] sm:$0xf]
        %v5788 = vld [vmem:[%s5782 + $0x14] sm:$0xf]
        %v5789 = vld [vmem:[%s5782 + $0x18] sm:$0xf]
        %v5790 = vld [vmem:[%s5782 + $0x1c] sm:$0xf]
        %v5791 = vld [vmem:[%s5782 + $0x20] sm:$0xf]
        %v5792 = vld [vmem:[%s5782 + $0x24] sm:$0xf]
        %v5793 = vld [vmem:[%s5782 + $0x28] sm:$0xf]
        %v5794 = vld [vmem:[%s5782 + $0x2c] sm:$0xf]
        %v5795 = vld [vmem:[%s5782 + $0x30] sm:$0xf]
        %v5796 = vld [vmem:[%s5782 + $0x34] sm:$0xf]
        %v5797 = vld [vmem:[%s5782 + $0x38] sm:$0xf]
        %v5798 = vld [vmem:[%s5782 + $0x3c] sm:$0xf]
        %v5815 = vunpack.c.l.b16 %v5783
        %v5816 = vunpack.c.l.b16 %v5784
        %v5817 = vunpack.c.l.b16 %v5785
        %v5818 = vunpack.c.l.b16 %v5786
        %v5819 = vunpack.c.l.b16 %v5787
        %v5820 = vunpack.c.l.b16 %v5788
        %v5821 = vunpack.c.l.b16 %v5789
        %v5822 = vunpack.c.l.b16 %v5790
        %v5823 = vunpack.c.l.b16 %v5791
        %v5824 = vunpack.c.l.b16 %v5792
        %v5825 = vunpack.c.l.b16 %v5793
        %v5826 = vunpack.c.l.b16 %v5794
        %v5827 = vunpack.c.l.b16 %v5795
        %v5828 = vunpack.c.l.b16 %v5796
        %v5829 = vunpack.c.l.b16 %v5797
        %v5830 = vunpack.c.l.b16 %v5798
        %v5831 = vpack.c.b16 %v5816, %v5815
        %v5832 = vpack.c.b16 %v5818, %v5817
        %v5833 = vpack.c.b16 %v5820, %v5819
        %v5834 = vpack.c.b16 %v5822, %v5821
        %v5835 = vpack.c.b16 %v5824, %v5823
        %v5836 = vpack.c.b16 %v5826, %v5825
        %v5837 = vpack.c.b16 %v5828, %v5827
        %v5838 = vpack.c.b16 %v5830, %v5829
        %5847 = vmatprep.subr.bf16.mxu0 0
        %5848 = vmatpush1.bf16.msra.mxu0 %v5838
        %5849 = vmatprep.subr.bf16.mxu0 0
        %5850 = vmatpush1.bf16.msra.mxu0 %v5837
        %5851 = vmatprep.subr.bf16.mxu0 0
        %5852 = vmatpush1.bf16.msra.mxu0 %v5836
        %5853 = vmatprep.subr.bf16.mxu0 0
        %5854 = vmatpush1.bf16.msra.mxu0 %v5835
        %5855 = vmatprep.subr.bf16.mxu0 0
        %5856 = vmatpush1.bf16.msra.mxu0 %v5834
        %5857 = vmatprep.subr.bf16.mxu0 0
        %5858 = vmatpush1.bf16.msra.mxu0 %v5833
        %5859 = vmatprep.subr.bf16.mxu0 0
        %5860 = vmatpush1.bf16.msra.mxu0 %v5832
        %5861 = vmatprep.subr.bf16.mxu0 0
        %5862 = vmatpush1.bf16.msra.mxu0 %v5831
        %5863 = vmatprep.subr.bf16.mxu0 0
        %5864 = vmatpush2.bf16.msra.mxu0 0
        %5865 = vmatprep.subr.bf16.mxu0 0
        %5866 = vmatpush2.bf16.msra.mxu0 0
        %5867 = vmatprep.subr.bf16.mxu0 0
        %5868 = vmatpush2.bf16.msra.mxu0 0
        %5869 = vmatprep.subr.bf16.mxu0 0
        %5870 = vmatpush2.bf16.msra.mxu0 0
        %5871 = vmatprep.subr.bf16.mxu0 0
        %5872 = vmatpush2.bf16.msra.mxu0 0
        %5873 = vmatprep.subr.bf16.mxu0 0
        %5874 = vmatpush2.bf16.msra.mxu0 0
        %5875 = vmatprep.subr.bf16.mxu0 0
        %5876 = vmatpush2.bf16.msra.mxu0 0
        %5877 = vmatprep.subr.bf16.mxu0 0
        %5878 = vmatpush2.bf16.msra.mxu0 0
        %5879 = vmatprep.mubr.bf16.mxu0 0
        %5880 = vmatmul.mubr.bf16.gmra.mxu0 %v4427
        %v5881 = vpop.f32.mrf.mxu0
        %v5882 = vadd.f32 0.0, %v5881
        %v5883 = vpop.f32.mrf.mxu0
        %v5884 = vpop.f32.mrf.mxu0
        %v5885 = vadd.f32 0.0, %v5884
        %v5886 = vpop.f32.mrf.mxu0
        %5887 = vmatprep.mubr.bf16.mxu0 0
        %5888 = vmatmul.mubr.bf16.gmra.mxu0 %v4428
        %v5889 = vpop.f32.mrf.mxu0
        %v5890 = vadd.f32 0.0, %v5889
        %v5891 = vpop.f32.mrf.mxu0
        %v5892 = vpop.f32.mrf.mxu0
        %v5893 = vadd.f32 0.0, %v5892
        %v5894 = vpop.f32.mrf.mxu0
        %5895 = vmatprep.mubr.bf16.mxu0 0
        %5896 = vmatmul.mubr.bf16.gmra.mxu0 %v4429
        %v5897 = vpop.f32.mrf.mxu0
        %v5898 = vadd.f32 0.0, %v5897
        %v5899 = vpop.f32.mrf.mxu0
        %v5900 = vpop.f32.mrf.mxu0
        %v5901 = vadd.f32 0.0, %v5900
        %v5902 = vpop.f32.mrf.mxu0
        %5903 = vmatprep.mubr.bf16.mxu0 0
        %5904 = vmatmul.mubr.bf16.gmra.mxu0 %v4430
        %v5905 = vpop.f32.mrf.mxu0
        %v5906 = vadd.f32 0.0, %v5905
        %v5907 = vpop.f32.mrf.mxu0
        %v5908 = vpop.f32.mrf.mxu0
        %v5909 = vadd.f32 0.0, %v5908
        %v5910 = vpop.f32.mrf.mxu0
        %5911 = vmatprep.mubr.bf16.mxu0 0
        %5912 = vmatmul.mubr.bf16.gmra.mxu0 %v4431
        %v5913 = vpop.f32.mrf.mxu0
        %v5914 = vadd.f32 0.0, %v5913
        %v5915 = vpop.f32.mrf.mxu0
        %v5916 = vpop.f32.mrf.mxu0
        %v5917 = vadd.f32 0.0, %v5916
        %v5918 = vpop.f32.mrf.mxu0
        %5919 = vmatprep.mubr.bf16.mxu0 0
        %5920 = vmatmul.mubr.bf16.gmra.mxu0 %v4432
        %v5921 = vpop.f32.mrf.mxu0
        %v5922 = vadd.f32 0.0, %v5921
        %v5923 = vpop.f32.mrf.mxu0
        %v5924 = vpop.f32.mrf.mxu0
        %v5925 = vadd.f32 0.0, %v5924
        %v5926 = vpop.f32.mrf.mxu0
        %5927 = vmatprep.mubr.bf16.mxu0 0
        %5928 = vmatmul.mubr.bf16.gmra.mxu0 %v4433
        %v5929 = vpop.f32.mrf.mxu0
        %v5930 = vadd.f32 0.0, %v5929
        %v5931 = vpop.f32.mrf.mxu0
        %v5932 = vpop.f32.mrf.mxu0
        %v5933 = vadd.f32 0.0, %v5932
        %v5934 = vpop.f32.mrf.mxu0
        %5935 = vmatprep.mubr.bf16.mxu0 0
        %5936 = vmatmul.mubr.bf16.gmra.mxu0 %v4434
        %v5937 = vpop.f32.mrf.mxu0
        %v5938 = vadd.f32 0.0, %v5937
        %v5939 = vpop.f32.mrf.mxu0
        %v5940 = vpop.f32.mrf.mxu0
        %v5941 = vadd.f32 0.0, %v5940
        %v5942 = vpop.f32.mrf.mxu0
        %5943 = vmatprep.mubr.bf16.mxu0 0
        %5944 = vmatmul.mubr.bf16.gmra.mxu0 %v4435
        %v5945 = vpop.f32.mrf.mxu0
        %v5946 = vadd.f32 0.0, %v5945
        %v5947 = vpop.f32.mrf.mxu0
        %v5948 = vpop.f32.mrf.mxu0
        %v5949 = vadd.f32 0.0, %v5948
        %v5950 = vpop.f32.mrf.mxu0
        %5951 = vmatprep.mubr.bf16.mxu0 0
        %5952 = vmatmul.mubr.bf16.gmra.mxu0 %v4436
        %v5953 = vpop.f32.mrf.mxu0
        %v5954 = vadd.f32 0.0, %v5953
        %v5955 = vpop.f32.mrf.mxu0
        %v5956 = vpop.f32.mrf.mxu0
        %v5957 = vadd.f32 0.0, %v5956
        %v5958 = vpop.f32.mrf.mxu0
        %5959 = vmatprep.mubr.bf16.mxu0 0
        %5960 = vmatmul.mubr.bf16.gmra.mxu0 %v4437
        %v5961 = vpop.f32.mrf.mxu0
        %v5962 = vadd.f32 0.0, %v5961
        %v5963 = vpop.f32.mrf.mxu0
        %v5964 = vpop.f32.mrf.mxu0
        %v5965 = vadd.f32 0.0, %v5964
        %v5966 = vpop.f32.mrf.mxu0
        %5967 = vmatprep.mubr.bf16.mxu0 0
        %5968 = vmatmul.mubr.bf16.gmra.mxu0 %v4438
        %v5969 = vpop.f32.mrf.mxu0
        %v5970 = vadd.f32 0.0, %v5969
        %v5971 = vpop.f32.mrf.mxu0
        %v5972 = vpop.f32.mrf.mxu0
        %v5973 = vadd.f32 0.0, %v5972
        %v5974 = vpop.f32.mrf.mxu0
        %5975 = vmatprep.mubr.bf16.mxu0 0
        %5976 = vmatmul.mubr.bf16.gmra.mxu0 %v4439
        %v5977 = vpop.f32.mrf.mxu0
        %v5978 = vadd.f32 0.0, %v5977
        %v5979 = vpop.f32.mrf.mxu0
        %v5980 = vpop.f32.mrf.mxu0
        %v5981 = vadd.f32 0.0, %v5980
        %v5982 = vpop.f32.mrf.mxu0
        %5983 = vmatprep.mubr.bf16.mxu0 0
        %5984 = vmatmul.mubr.bf16.gmra.mxu0 %v4440
        %v5985 = vpop.f32.mrf.mxu0
        %v5986 = vadd.f32 0.0, %v5985
        %v5987 = vpop.f32.mrf.mxu0
        %v5988 = vpop.f32.mrf.mxu0
        %v5989 = vadd.f32 0.0, %v5988
        %v5990 = vpop.f32.mrf.mxu0
        %5991 = vmatprep.mubr.bf16.mxu0 0
        %5992 = vmatmul.mubr.bf16.gmra.mxu0 %v4441
        %v5993 = vpop.f32.mrf.mxu0
        %v5994 = vadd.f32 0.0, %v5993
        %v5995 = vpop.f32.mrf.mxu0
        %v5996 = vpop.f32.mrf.mxu0
        %v5997 = vadd.f32 0.0, %v5996
        %v5998 = vpop.f32.mrf.mxu0
        %5999 = vmatprep.mubr.bf16.mxu0 0
        %6000 = vmatmul.mubr.bf16.gmra.mxu0 %v4442
        %v6001 = vpop.f32.mrf.mxu0
        %v6002 = vadd.f32 0.0, %v6001
        %v6003 = vpop.f32.mrf.mxu0
        %v6004 = vpop.f32.mrf.mxu0
        %v6005 = vadd.f32 0.0, %v6004
        %v6006 = vpop.f32.mrf.mxu0
        %6007 = vmatprep.mubr.bf16.mxu0 0
        %6008 = vmatmul.mubr.bf16.gmra.mxu0 %v4443
        %v6009 = vpop.f32.mrf.mxu0
        %v6010 = vadd.f32 0.0, %v6009
        %v6011 = vpop.f32.mrf.mxu0
        %v6012 = vpop.f32.mrf.mxu0
        %v6013 = vadd.f32 0.0, %v6012
        %v6014 = vpop.f32.mrf.mxu0
        %6015 = vmatprep.mubr.bf16.mxu0 0
        %6016 = vmatmul.mubr.bf16.gmra.mxu0 %v4444
        %v6017 = vpop.f32.mrf.mxu0
        %v6018 = vadd.f32 0.0, %v6017
        %v6019 = vpop.f32.mrf.mxu0
        %v6020 = vpop.f32.mrf.mxu0
        %v6021 = vadd.f32 0.0, %v6020
        %v6022 = vpop.f32.mrf.mxu0
        %6023 = vdwg.mxu0
        %v6024 = vadd.f32 %v5746, %v5882
        %v6025 = vadd.f32 %v5747, %v5885
        %v6026 = vadd.f32 %v5748, %v5890
        %v6027 = vadd.f32 %v5749, %v5893
        %v6028 = vadd.f32 %v5750, %v5898
        %v6029 = vadd.f32 %v5751, %v5901
        %v6030 = vadd.f32 %v5752, %v5906
        %v6031 = vadd.f32 %v5753, %v5909
        %v6032 = vadd.f32 %v5754, %v5914
        %v6033 = vadd.f32 %v5755, %v5917
        %v6034 = vadd.f32 %v5756, %v5922
        %v6035 = vadd.f32 %v5757, %v5925
        %v6036 = vadd.f32 %v5758, %v5930
        %v6037 = vadd.f32 %v5759, %v5933
        %v6038 = vadd.f32 %v5760, %v5938
        %v6039 = vadd.f32 %v5761, %v5941
        %v6040 = vadd.f32 %v5762, %v5946
        %v6041 = vadd.f32 %v5763, %v5949
        %v6042 = vadd.f32 %v5764, %v5954
        %v6043 = vadd.f32 %v5765, %v5957
        %v6044 = vadd.f32 %v5766, %v5962
        %v6045 = vadd.f32 %v5767, %v5965
        %v6046 = vadd.f32 %v5768, %v5970
        %v6047 = vadd.f32 %v5769, %v5973
        %v6048 = vadd.f32 %v5770, %v5978
        %v6049 = vadd.f32 %v5771, %v5981
        %v6050 = vadd.f32 %v5772, %v5986
        %v6051 = vadd.f32 %v5773, %v5989
        %v6052 = vadd.f32 %v5774, %v5994
        %v6053 = vadd.f32 %v5775, %v5997
        %v6054 = vadd.f32 %v5776, %v6002
        %v6055 = vadd.f32 %v5777, %v6005
        %v6056 = vadd.f32 %v5778, %v6010
        %v6057 = vadd.f32 %v5779, %v6013
        %v6058 = vadd.f32 %v5780, %v6018
        %v6059 = vadd.f32 %v5781, %v6021
        %s6060 = scalar_lea.vmem %s9, 384
        %v6061 = vld [vmem:[%s6060] sm:$0xf]
        %v6062 = vld [vmem:[%s6060 + $0x4] sm:$0xf]
        %v6063 = vld [vmem:[%s6060 + $0x8] sm:$0xf]
        %v6064 = vld [vmem:[%s6060 + $0xc] sm:$0xf]
        %v6065 = vld [vmem:[%s6060 + $0x10] sm:$0xf]
        %v6066 = vld [vmem:[%s6060 + $0x14] sm:$0xf]
        %v6067 = vld [vmem:[%s6060 + $0x18] sm:$0xf]
        %v6068 = vld [vmem:[%s6060 + $0x1c] sm:$0xf]
        %v6069 = vld [vmem:[%s6060 + $0x20] sm:$0xf]
        %v6070 = vld [vmem:[%s6060 + $0x24] sm:$0xf]
        %v6071 = vld [vmem:[%s6060 + $0x28] sm:$0xf]
        %v6072 = vld [vmem:[%s6060 + $0x2c] sm:$0xf]
        %v6073 = vld [vmem:[%s6060 + $0x30] sm:$0xf]
        %v6074 = vld [vmem:[%s6060 + $0x34] sm:$0xf]
        %v6075 = vld [vmem:[%s6060 + $0x38] sm:$0xf]
        %v6076 = vld [vmem:[%s6060 + $0x3c] sm:$0xf]
        %v6093 = vunpack.c.l.b16 %v6061
        %v6094 = vunpack.c.l.b16 %v6062
        %v6095 = vunpack.c.l.b16 %v6063
        %v6096 = vunpack.c.l.b16 %v6064
        %v6097 = vunpack.c.l.b16 %v6065
        %v6098 = vunpack.c.l.b16 %v6066
        %v6099 = vunpack.c.l.b16 %v6067
        %v6100 = vunpack.c.l.b16 %v6068
        %v6101 = vunpack.c.l.b16 %v6069
        %v6102 = vunpack.c.l.b16 %v6070
        %v6103 = vunpack.c.l.b16 %v6071
        %v6104 = vunpack.c.l.b16 %v6072
        %v6105 = vunpack.c.l.b16 %v6073
        %v6106 = vunpack.c.l.b16 %v6074
        %v6107 = vunpack.c.l.b16 %v6075
        %v6108 = vunpack.c.l.b16 %v6076
        %v6109 = vpack.c.b16 %v6094, %v6093
        %v6110 = vpack.c.b16 %v6096, %v6095
        %v6111 = vpack.c.b16 %v6098, %v6097
        %v6112 = vpack.c.b16 %v6100, %v6099
        %v6113 = vpack.c.b16 %v6102, %v6101
        %v6114 = vpack.c.b16 %v6104, %v6103
        %v6115 = vpack.c.b16 %v6106, %v6105
        %v6116 = vpack.c.b16 %v6108, %v6107
        %6125 = vmatprep.subr.bf16.mxu0 0
        %6126 = vmatpush1.bf16.msra.mxu0 %v6116
        %6127 = vmatprep.subr.bf16.mxu0 0
        %6128 = vmatpush1.bf16.msra.mxu0 %v6115
        %6129 = vmatprep.subr.bf16.mxu0 0
        %6130 = vmatpush1.bf16.msra.mxu0 %v6114
        %6131 = vmatprep.subr.bf16.mxu0 0
        %6132 = vmatpush1.bf16.msra.mxu0 %v6113
        %6133 = vmatprep.subr.bf16.mxu0 0
        %6134 = vmatpush1.bf16.msra.mxu0 %v6112
        %6135 = vmatprep.subr.bf16.mxu0 0
        %6136 = vmatpush1.bf16.msra.mxu0 %v6111
        %6137 = vmatprep.subr.bf16.mxu0 0
        %6138 = vmatpush1.bf16.msra.mxu0 %v6110
        %6139 = vmatprep.subr.bf16.mxu0 0
        %6140 = vmatpush1.bf16.msra.mxu0 %v6109
        %6141 = vmatprep.subr.bf16.mxu0 0
        %6142 = vmatpush2.bf16.msra.mxu0 0
        %6143 = vmatprep.subr.bf16.mxu0 0
        %6144 = vmatpush2.bf16.msra.mxu0 0
        %6145 = vmatprep.subr.bf16.mxu0 0
        %6146 = vmatpush2.bf16.msra.mxu0 0
        %6147 = vmatprep.subr.bf16.mxu0 0
        %6148 = vmatpush2.bf16.msra.mxu0 0
        %6149 = vmatprep.subr.bf16.mxu0 0
        %6150 = vmatpush2.bf16.msra.mxu0 0
        %6151 = vmatprep.subr.bf16.mxu0 0
        %6152 = vmatpush2.bf16.msra.mxu0 0
        %6153 = vmatprep.subr.bf16.mxu0 0
        %6154 = vmatpush2.bf16.msra.mxu0 0
        %6155 = vmatprep.subr.bf16.mxu0 0
        %6156 = vmatpush2.bf16.msra.mxu0 0
        %6157 = vmatprep.mubr.bf16.mxu0 0
        %6158 = vmatmul.mubr.bf16.gmra.mxu0 %v4348
        %v6159 = vpop.f32.mrf.mxu0
        %v6160 = vadd.f32 0.0, %v6159
        %v6161 = vpop.f32.mrf.mxu0
        %v6162 = vpop.f32.mrf.mxu0
        %v6163 = vadd.f32 0.0, %v6162
        %v6164 = vpop.f32.mrf.mxu0
        %6165 = vmatprep.mubr.bf16.mxu0 0
        %6166 = vmatmul.mubr.bf16.gmra.mxu0 %v4349
        %v6167 = vpop.f32.mrf.mxu0
        %v6168 = vadd.f32 0.0, %v6167
        %v6169 = vpop.f32.mrf.mxu0
        %v6170 = vpop.f32.mrf.mxu0
        %v6171 = vadd.f32 0.0, %v6170
        %v6172 = vpop.f32.mrf.mxu0
        %6173 = vmatprep.mubr.bf16.mxu0 0
        %6174 = vmatmul.mubr.bf16.gmra.mxu0 %v4350
        %v6175 = vpop.f32.mrf.mxu0
        %v6176 = vadd.f32 0.0, %v6175
        %v6177 = vpop.f32.mrf.mxu0
        %v6178 = vpop.f32.mrf.mxu0
        %v6179 = vadd.f32 0.0, %v6178
        %v6180 = vpop.f32.mrf.mxu0
        %6181 = vmatprep.mubr.bf16.mxu0 0
        %6182 = vmatmul.mubr.bf16.gmra.mxu0 %v4351
        %v6183 = vpop.f32.mrf.mxu0
        %v6184 = vadd.f32 0.0, %v6183
        %v6185 = vpop.f32.mrf.mxu0
        %v6186 = vpop.f32.mrf.mxu0
        %v6187 = vadd.f32 0.0, %v6186
        %v6188 = vpop.f32.mrf.mxu0
        %6189 = vmatprep.mubr.bf16.mxu0 0
        %6190 = vmatmul.mubr.bf16.gmra.mxu0 %v4352
        %v6191 = vpop.f32.mrf.mxu0
        %v6192 = vadd.f32 0.0, %v6191
        %v6193 = vpop.f32.mrf.mxu0
        %v6194 = vpop.f32.mrf.mxu0
        %v6195 = vadd.f32 0.0, %v6194
        %v6196 = vpop.f32.mrf.mxu0
        %6197 = vmatprep.mubr.bf16.mxu0 0
        %6198 = vmatmul.mubr.bf16.gmra.mxu0 %v4353
        %v6199 = vpop.f32.mrf.mxu0
        %v6200 = vadd.f32 0.0, %v6199
        %v6201 = vpop.f32.mrf.mxu0
        %v6202 = vpop.f32.mrf.mxu0
        %v6203 = vadd.f32 0.0, %v6202
        %v6204 = vpop.f32.mrf.mxu0
        %6205 = vmatprep.mubr.bf16.mxu0 0
        %6206 = vmatmul.mubr.bf16.gmra.mxu0 %v4354
        %v6207 = vpop.f32.mrf.mxu0
        %v6208 = vadd.f32 0.0, %v6207
        %v6209 = vpop.f32.mrf.mxu0
        %v6210 = vpop.f32.mrf.mxu0
        %v6211 = vadd.f32 0.0, %v6210
        %v6212 = vpop.f32.mrf.mxu0
        %6213 = vmatprep.mubr.bf16.mxu0 0
        %6214 = vmatmul.mubr.bf16.gmra.mxu0 %v4355
        %v6215 = vpop.f32.mrf.mxu0
        %v6216 = vadd.f32 0.0, %v6215
        %v6217 = vpop.f32.mrf.mxu0
        %v6218 = vpop.f32.mrf.mxu0
        %v6219 = vadd.f32 0.0, %v6218
        %v6220 = vpop.f32.mrf.mxu0
        %6221 = vmatprep.mubr.bf16.mxu0 0
        %6222 = vmatmul.mubr.bf16.gmra.mxu0 %v4356
        %v6223 = vpop.f32.mrf.mxu0
        %v6224 = vadd.f32 0.0, %v6223
        %v6225 = vpop.f32.mrf.mxu0
        %v6226 = vpop.f32.mrf.mxu0
        %v6227 = vadd.f32 0.0, %v6226
        %v6228 = vpop.f32.mrf.mxu0
        %6229 = vmatprep.mubr.bf16.mxu0 0
        %6230 = vmatmul.mubr.bf16.gmra.mxu0 %v4357
        %v6231 = vpop.f32.mrf.mxu0
        %v6232 = vadd.f32 0.0, %v6231
        %v6233 = vpop.f32.mrf.mxu0
        %v6234 = vpop.f32.mrf.mxu0
        %v6235 = vadd.f32 0.0, %v6234
        %v6236 = vpop.f32.mrf.mxu0
        %6237 = vmatprep.mubr.bf16.mxu0 0
        %6238 = vmatmul.mubr.bf16.gmra.mxu0 %v4358
        %v6239 = vpop.f32.mrf.mxu0
        %v6240 = vadd.f32 0.0, %v6239
        %v6241 = vpop.f32.mrf.mxu0
        %v6242 = vpop.f32.mrf.mxu0
        %v6243 = vadd.f32 0.0, %v6242
        %v6244 = vpop.f32.mrf.mxu0
        %6245 = vmatprep.mubr.bf16.mxu0 0
        %6246 = vmatmul.mubr.bf16.gmra.mxu0 %v4359
        %v6247 = vpop.f32.mrf.mxu0
        %v6248 = vadd.f32 0.0, %v6247
        %v6249 = vpop.f32.mrf.mxu0
        %v6250 = vpop.f32.mrf.mxu0
        %v6251 = vadd.f32 0.0, %v6250
        %v6252 = vpop.f32.mrf.mxu0
        %6253 = vmatprep.mubr.bf16.mxu0 0
        %6254 = vmatmul.mubr.bf16.gmra.mxu0 %v4360
        %v6255 = vpop.f32.mrf.mxu0
        %v6256 = vadd.f32 0.0, %v6255
        %v6257 = vpop.f32.mrf.mxu0
        %v6258 = vpop.f32.mrf.mxu0
        %v6259 = vadd.f32 0.0, %v6258
        %v6260 = vpop.f32.mrf.mxu0
        %6261 = vmatprep.mubr.bf16.mxu0 0
        %6262 = vmatmul.mubr.bf16.gmra.mxu0 %v4361
        %v6263 = vpop.f32.mrf.mxu0
        %v6264 = vadd.f32 0.0, %v6263
        %v6265 = vpop.f32.mrf.mxu0
        %v6266 = vpop.f32.mrf.mxu0
        %v6267 = vadd.f32 0.0, %v6266
        %v6268 = vpop.f32.mrf.mxu0
        %6269 = vmatprep.mubr.bf16.mxu0 0
        %6270 = vmatmul.mubr.bf16.gmra.mxu0 %v4362
        %v6271 = vpop.f32.mrf.mxu0
        %v6272 = vadd.f32 0.0, %v6271
        %v6273 = vpop.f32.mrf.mxu0
        %v6274 = vpop.f32.mrf.mxu0
        %v6275 = vadd.f32 0.0, %v6274
        %v6276 = vpop.f32.mrf.mxu0
        %6277 = vmatprep.mubr.bf16.mxu0 0
        %6278 = vmatmul.mubr.bf16.gmra.mxu0 %v4363
        %v6279 = vpop.f32.mrf.mxu0
        %v6280 = vadd.f32 0.0, %v6279
        %v6281 = vpop.f32.mrf.mxu0
        %v6282 = vpop.f32.mrf.mxu0
        %v6283 = vadd.f32 0.0, %v6282
        %v6284 = vpop.f32.mrf.mxu0
        %6285 = vmatprep.mubr.bf16.mxu0 0
        %6286 = vmatmul.mubr.bf16.gmra.mxu0 %v4364
        %v6287 = vpop.f32.mrf.mxu0
        %v6288 = vadd.f32 0.0, %v6287
        %v6289 = vpop.f32.mrf.mxu0
        %v6290 = vpop.f32.mrf.mxu0
        %v6291 = vadd.f32 0.0, %v6290
        %v6292 = vpop.f32.mrf.mxu0
        %6293 = vmatprep.mubr.bf16.mxu0 0
        %6294 = vmatmul.mubr.bf16.gmra.mxu0 %v4365
        %v6295 = vpop.f32.mrf.mxu0
        %v6296 = vadd.f32 0.0, %v6295
        %v6297 = vpop.f32.mrf.mxu0
        %v6298 = vpop.f32.mrf.mxu0
        %v6299 = vadd.f32 0.0, %v6298
        %v6300 = vpop.f32.mrf.mxu0
        %6301 = vdwg.mxu0
        %v6302 = vadd.f32 %v6024, %v6160
        %v6303 = vadd.f32 %v6025, %v6163
        %v6304 = vadd.f32 %v6026, %v6168
        %v6305 = vadd.f32 %v6027, %v6171
        %v6306 = vadd.f32 %v6028, %v6176
        %v6307 = vadd.f32 %v6029, %v6179
        %v6308 = vadd.f32 %v6030, %v6184
        %v6309 = vadd.f32 %v6031, %v6187
        %v6310 = vadd.f32 %v6032, %v6192
        %v6311 = vadd.f32 %v6033, %v6195
        %v6312 = vadd.f32 %v6034, %v6200
        %v6313 = vadd.f32 %v6035, %v6203
        %v6314 = vadd.f32 %v6036, %v6208
        %v6315 = vadd.f32 %v6037, %v6211
        %v6316 = vadd.f32 %v6038, %v6216
        %v6317 = vadd.f32 %v6039, %v6219
        %v6318 = vadd.f32 %v6040, %v6224
        %v6319 = vadd.f32 %v6041, %v6227
        %v6320 = vadd.f32 %v6042, %v6232
        %v6321 = vadd.f32 %v6043, %v6235
        %v6322 = vadd.f32 %v6044, %v6240
        %v6323 = vadd.f32 %v6045, %v6243
        %v6324 = vadd.f32 %v6046, %v6248
        %v6325 = vadd.f32 %v6047, %v6251
        %v6326 = vadd.f32 %v6048, %v6256
        %v6327 = vadd.f32 %v6049, %v6259
        %v6328 = vadd.f32 %v6050, %v6264
        %v6329 = vadd.f32 %v6051, %v6267
        %v6330 = vadd.f32 %v6052, %v6272
        %v6331 = vadd.f32 %v6053, %v6275
        %v6332 = vadd.f32 %v6054, %v6280
        %v6333 = vadd.f32 %v6055, %v6283
        %v6334 = vadd.f32 %v6056, %v6288
        %v6335 = vadd.f32 %v6057, %v6291
        %v6336 = vadd.f32 %v6058, %v6296
        %v6337 = vadd.f32 %v6059, %v6299
        %s6338 = scalar_lea.vmem %s9, 448
        %v6339 = vld [vmem:[%s6338] sm:$0xf]
        %v6340 = vld [vmem:[%s6338 + $0x4] sm:$0xf]
        %v6341 = vld [vmem:[%s6338 + $0x8] sm:$0xf]
        %v6342 = vld [vmem:[%s6338 + $0xc] sm:$0xf]
        %v6343 = vld [vmem:[%s6338 + $0x10] sm:$0xf]
        %v6344 = vld [vmem:[%s6338 + $0x14] sm:$0xf]
        %v6345 = vld [vmem:[%s6338 + $0x18] sm:$0xf]
        %v6346 = vld [vmem:[%s6338 + $0x1c] sm:$0xf]
        %v6347 = vld [vmem:[%s6338 + $0x20] sm:$0xf]
        %v6348 = vld [vmem:[%s6338 + $0x24] sm:$0xf]
        %v6349 = vld [vmem:[%s6338 + $0x28] sm:$0xf]
        %v6350 = vld [vmem:[%s6338 + $0x2c] sm:$0xf]
        %v6351 = vld [vmem:[%s6338 + $0x30] sm:$0xf]
        %v6352 = vld [vmem:[%s6338 + $0x34] sm:$0xf]
        %v6353 = vld [vmem:[%s6338 + $0x38] sm:$0xf]
        %v6354 = vld [vmem:[%s6338 + $0x3c] sm:$0xf]
        %v6372 = vunpack.c.l.b16 %v6339
        %v6373 = vunpack.c.l.b16 %v6340
        %v6374 = vunpack.c.l.b16 %v6341
        %v6375 = vunpack.c.l.b16 %v6342
        %v6376 = vunpack.c.l.b16 %v6343
        %v6377 = vunpack.c.l.b16 %v6344
        %v6378 = vunpack.c.l.b16 %v6345
        %v6379 = vunpack.c.l.b16 %v6346
        %v6380 = vunpack.c.l.b16 %v6347
        %v6381 = vunpack.c.l.b16 %v6348
        %v6382 = vunpack.c.l.b16 %v6349
        %v6383 = vunpack.c.l.b16 %v6350
        %v6384 = vunpack.c.l.b16 %v6351
        %v6385 = vunpack.c.l.b16 %v6352
        %v6386 = vunpack.c.l.b16 %v6353
        %v6387 = vunpack.c.l.b16 %v6354
        %v6388 = vpack.c.b16 %v6373, %v6372
        %v6389 = vpack.c.b16 %v6375, %v6374
        %v6390 = vpack.c.b16 %v6377, %v6376
        %v6391 = vpack.c.b16 %v6379, %v6378
        %v6392 = vpack.c.b16 %v6381, %v6380
        %v6393 = vpack.c.b16 %v6383, %v6382
        %v6394 = vpack.c.b16 %v6385, %v6384
        %v6395 = vpack.c.b16 %v6387, %v6386
        %6404 = vmatprep.subr.bf16.mxu0 0
        %6405 = vmatpush1.bf16.msra.mxu0 %v6395
        %6406 = vmatprep.subr.bf16.mxu0 0
        %6407 = vmatpush1.bf16.msra.mxu0 %v6394
        %6408 = vmatprep.subr.bf16.mxu0 0
        %6409 = vmatpush1.bf16.msra.mxu0 %v6393
        %6410 = vmatprep.subr.bf16.mxu0 0
        %6411 = vmatpush1.bf16.msra.mxu0 %v6392
        %6412 = vmatprep.subr.bf16.mxu0 0
        %6413 = vmatpush1.bf16.msra.mxu0 %v6391
        %6414 = vmatprep.subr.bf16.mxu0 0
        %6415 = vmatpush1.bf16.msra.mxu0 %v6390
        %6416 = vmatprep.subr.bf16.mxu0 0
        %6417 = vmatpush1.bf16.msra.mxu0 %v6389
        %6418 = vmatprep.subr.bf16.mxu0 0
        %6419 = vmatpush1.bf16.msra.mxu0 %v6388
        %6420 = vmatprep.subr.bf16.mxu0 0
        %6421 = vmatpush2.bf16.msra.mxu0 0
        %6422 = vmatprep.subr.bf16.mxu0 0
        %6423 = vmatpush2.bf16.msra.mxu0 0
        %6424 = vmatprep.subr.bf16.mxu0 0
        %6425 = vmatpush2.bf16.msra.mxu0 0
        %6426 = vmatprep.subr.bf16.mxu0 0
        %6427 = vmatpush2.bf16.msra.mxu0 0
        %6428 = vmatprep.subr.bf16.mxu0 0
        %6429 = vmatpush2.bf16.msra.mxu0 0
        %6430 = vmatprep.subr.bf16.mxu0 0
        %6431 = vmatpush2.bf16.msra.mxu0 0
        %6432 = vmatprep.subr.bf16.mxu0 0
        %6433 = vmatpush2.bf16.msra.mxu0 0
        %6434 = vmatprep.subr.bf16.mxu0 0
        %6435 = vmatpush2.bf16.msra.mxu0 0
        %6436 = vmatprep.mubr.bf16.mxu0 0
        %6437 = vmatmul.mubr.bf16.gmra.mxu0 %v4168
        %v6438 = vpop.f32.mrf.mxu0
        %v6439 = vadd.f32 0.0, %v6438
        %v6440 = vpop.f32.mrf.mxu0
        %v6441 = vpop.f32.mrf.mxu0
        %v6442 = vadd.f32 0.0, %v6441
        %v6443 = vpop.f32.mrf.mxu0
        %6444 = vmatprep.mubr.bf16.mxu0 0
        %6445 = vmatmul.mubr.bf16.gmra.mxu0 %v4169
        %v6446 = vpop.f32.mrf.mxu0
        %v6447 = vadd.f32 0.0, %v6446
        %v6448 = vpop.f32.mrf.mxu0
        %v6449 = vpop.f32.mrf.mxu0
        %v6450 = vadd.f32 0.0, %v6449
        %v6451 = vpop.f32.mrf.mxu0
        %6452 = vmatprep.mubr.bf16.mxu0 0
        %6453 = vmatmul.mubr.bf16.gmra.mxu0 %v4170
        %v6454 = vpop.f32.mrf.mxu0
        %v6455 = vadd.f32 0.0, %v6454
        %v6456 = vpop.f32.mrf.mxu0
        %v6457 = vpop.f32.mrf.mxu0
        %v6458 = vadd.f32 0.0, %v6457
        %v6459 = vpop.f32.mrf.mxu0
        %6460 = vmatprep.mubr.bf16.mxu0 0
        %6461 = vmatmul.mubr.bf16.gmra.mxu0 %v4171
        %v6462 = vpop.f32.mrf.mxu0
        %v6463 = vadd.f32 0.0, %v6462
        %v6464 = vpop.f32.mrf.mxu0
        %v6465 = vpop.f32.mrf.mxu0
        %v6466 = vadd.f32 0.0, %v6465
        %v6467 = vpop.f32.mrf.mxu0
        %6468 = vmatprep.mubr.bf16.mxu0 0
        %6469 = vmatmul.mubr.bf16.gmra.mxu0 %v4172
        %v6470 = vpop.f32.mrf.mxu0
        %v6471 = vadd.f32 0.0, %v6470
        %v6472 = vpop.f32.mrf.mxu0
        %v6473 = vpop.f32.mrf.mxu0
        %v6474 = vadd.f32 0.0, %v6473
        %v6475 = vpop.f32.mrf.mxu0
        %6476 = vmatprep.mubr.bf16.mxu0 0
        %6477 = vmatmul.mubr.bf16.gmra.mxu0 %v4173
        %v6478 = vpop.f32.mrf.mxu0
        %v6479 = vadd.f32 0.0, %v6478
        %v6480 = vpop.f32.mrf.mxu0
        %v6481 = vpop.f32.mrf.mxu0
        %v6482 = vadd.f32 0.0, %v6481
        %v6483 = vpop.f32.mrf.mxu0
        %6484 = vmatprep.mubr.bf16.mxu0 0
        %6485 = vmatmul.mubr.bf16.gmra.mxu0 %v4174
        %v6486 = vpop.f32.mrf.mxu0
        %v6487 = vadd.f32 0.0, %v6486
        %v6488 = vpop.f32.mrf.mxu0
        %v6489 = vpop.f32.mrf.mxu0
        %v6490 = vadd.f32 0.0, %v6489
        %v6491 = vpop.f32.mrf.mxu0
        %6492 = vmatprep.mubr.bf16.mxu0 0
        %6493 = vmatmul.mubr.bf16.gmra.mxu0 %v4175
        %v6494 = vpop.f32.mrf.mxu0
        %v6495 = vadd.f32 0.0, %v6494
        %v6496 = vpop.f32.mrf.mxu0
        %v6497 = vpop.f32.mrf.mxu0
        %v6498 = vadd.f32 0.0, %v6497
        %v6499 = vpop.f32.mrf.mxu0
        %6500 = vmatprep.mubr.bf16.mxu0 0
        %6501 = vmatmul.mubr.bf16.gmra.mxu0 %v4176
        %v6502 = vpop.f32.mrf.mxu0
        %v6503 = vadd.f32 0.0, %v6502
        %v6504 = vpop.f32.mrf.mxu0
        %v6505 = vpop.f32.mrf.mxu0
        %v6506 = vadd.f32 0.0, %v6505
        %v6507 = vpop.f32.mrf.mxu0
        %6508 = vmatprep.mubr.bf16.mxu0 0
        %6509 = vmatmul.mubr.bf16.gmra.mxu0 %v4177
        %v6510 = vpop.f32.mrf.mxu0
        %v6511 = vadd.f32 0.0, %v6510
        %v6512 = vpop.f32.mrf.mxu0
        %v6513 = vpop.f32.mrf.mxu0
        %v6514 = vadd.f32 0.0, %v6513
        %v6515 = vpop.f32.mrf.mxu0
        %6516 = vmatprep.mubr.bf16.mxu0 0
        %6517 = vmatmul.mubr.bf16.gmra.mxu0 %v4178
        %v6518 = vpop.f32.mrf.mxu0
        %v6519 = vadd.f32 0.0, %v6518
        %v6520 = vpop.f32.mrf.mxu0
        %v6521 = vpop.f32.mrf.mxu0
        %v6522 = vadd.f32 0.0, %v6521
        %v6523 = vpop.f32.mrf.mxu0
        %6524 = vmatprep.mubr.bf16.mxu0 0
        %6525 = vmatmul.mubr.bf16.gmra.mxu0 %v4179
        %v6526 = vpop.f32.mrf.mxu0
        %v6527 = vadd.f32 0.0, %v6526
        %v6528 = vpop.f32.mrf.mxu0
        %v6529 = vpop.f32.mrf.mxu0
        %v6530 = vadd.f32 0.0, %v6529
        %v6531 = vpop.f32.mrf.mxu0
        %6532 = vmatprep.mubr.bf16.mxu0 0
        %6533 = vmatmul.mubr.bf16.gmra.mxu0 %v4180
        %v6534 = vpop.f32.mrf.mxu0
        %v6535 = vadd.f32 0.0, %v6534
        %v6536 = vpop.f32.mrf.mxu0
        %v6537 = vpop.f32.mrf.mxu0
        %v6538 = vadd.f32 0.0, %v6537
        %v6539 = vpop.f32.mrf.mxu0
        %6540 = vmatprep.mubr.bf16.mxu0 0
        %6541 = vmatmul.mubr.bf16.gmra.mxu0 %v4181
        %v6542 = vpop.f32.mrf.mxu0
        %v6543 = vadd.f32 0.0, %v6542
        %v6544 = vpop.f32.mrf.mxu0
        %v6545 = vpop.f32.mrf.mxu0
        %v6546 = vadd.f32 0.0, %v6545
        %v6547 = vpop.f32.mrf.mxu0
        %6548 = vmatprep.mubr.bf16.mxu0 0
        %6549 = vmatmul.mubr.bf16.gmra.mxu0 %v4182
        %v6550 = vpop.f32.mrf.mxu0
        %v6551 = vadd.f32 0.0, %v6550
        %v6552 = vpop.f32.mrf.mxu0
        %v6553 = vpop.f32.mrf.mxu0
        %v6554 = vadd.f32 0.0, %v6553
        %v6555 = vpop.f32.mrf.mxu0
        %6556 = vmatprep.mubr.bf16.mxu0 0
        %6557 = vmatmul.mubr.bf16.gmra.mxu0 %v4183
        %v6558 = vpop.f32.mrf.mxu0
        %v6559 = vadd.f32 0.0, %v6558
        %v6560 = vpop.f32.mrf.mxu0
        %v6561 = vpop.f32.mrf.mxu0
        %v6562 = vadd.f32 0.0, %v6561
        %v6563 = vpop.f32.mrf.mxu0
        %6564 = vmatprep.mubr.bf16.mxu0 0
        %6565 = vmatmul.mubr.bf16.gmra.mxu0 %v4184
        %v6566 = vpop.f32.mrf.mxu0
        %v6567 = vadd.f32 0.0, %v6566
        %v6568 = vpop.f32.mrf.mxu0
        %v6569 = vpop.f32.mrf.mxu0
        %v6570 = vadd.f32 0.0, %v6569
        %v6571 = vpop.f32.mrf.mxu0
        %6572 = vmatprep.mubr.bf16.mxu0 0
        %6573 = vmatmul.mubr.bf16.gmra.mxu0 %v4185
        %v6574 = vpop.f32.mrf.mxu0
        %v6575 = vadd.f32 0.0, %v6574
        %v6576 = vpop.f32.mrf.mxu0
        %v6577 = vpop.f32.mrf.mxu0
        %v6578 = vadd.f32 0.0, %v6577
        %v6579 = vpop.f32.mrf.mxu0
        %6580 = vdwg.mxu0
        %v6581 = vadd.f32 %v6302, %v6439
        %v6582 = vadd.f32 %v6303, %v6442
        %v6583 = vadd.f32 %v6304, %v6447
        %v6584 = vadd.f32 %v6305, %v6450
        %v6585 = vadd.f32 %v6306, %v6455
        %v6586 = vadd.f32 %v6307, %v6458
        %v6587 = vadd.f32 %v6308, %v6463
        %v6588 = vadd.f32 %v6309, %v6466
        %v6589 = vadd.f32 %v6310, %v6471
        %v6590 = vadd.f32 %v6311, %v6474
        %v6591 = vadd.f32 %v6312, %v6479
        %v6592 = vadd.f32 %v6313, %v6482
        %v6593 = vadd.f32 %v6314, %v6487
        %v6594 = vadd.f32 %v6315, %v6490
        %v6595 = vadd.f32 %v6316, %v6495
        %v6596 = vadd.f32 %v6317, %v6498
        %v6597 = vadd.f32 %v6318, %v6503
        %v6598 = vadd.f32 %v6319, %v6506
        %v6599 = vadd.f32 %v6320, %v6511
        %v6600 = vadd.f32 %v6321, %v6514
        %v6601 = vadd.f32 %v6322, %v6519
        %v6602 = vadd.f32 %v6323, %v6522
        %v6603 = vadd.f32 %v6324, %v6527
        %v6604 = vadd.f32 %v6325, %v6530
        %v6605 = vadd.f32 %v6326, %v6535
        %v6606 = vadd.f32 %v6327, %v6538
        %v6607 = vadd.f32 %v6328, %v6543
        %v6608 = vadd.f32 %v6329, %v6546
        %v6609 = vadd.f32 %v6330, %v6551
        %v6610 = vadd.f32 %v6331, %v6554
        %v6611 = vadd.f32 %v6332, %v6559
        %v6612 = vadd.f32 %v6333, %v6562
        %v6613 = vadd.f32 %v6334, %v6567
        %v6614 = vadd.f32 %v6335, %v6570
        %v6615 = vadd.f32 %v6336, %v6575
        %v6616 = vadd.f32 %v6337, %v6578
        %s6617 = scalar_lea.vmem %s9, 512
        %v6618 = vld [vmem:[%s6617] sm:$0xf]
        %v6619 = vld [vmem:[%s6617 + $0x4] sm:$0xf]
        %v6620 = vld [vmem:[%s6617 + $0x8] sm:$0xf]
        %v6621 = vld [vmem:[%s6617 + $0xc] sm:$0xf]
        %v6622 = vld [vmem:[%s6617 + $0x10] sm:$0xf]
        %v6623 = vld [vmem:[%s6617 + $0x14] sm:$0xf]
        %v6624 = vld [vmem:[%s6617 + $0x18] sm:$0xf]
        %v6625 = vld [vmem:[%s6617 + $0x1c] sm:$0xf]
        %v6626 = vld [vmem:[%s6617 + $0x20] sm:$0xf]
        %v6627 = vld [vmem:[%s6617 + $0x24] sm:$0xf]
        %v6628 = vld [vmem:[%s6617 + $0x28] sm:$0xf]
        %v6629 = vld [vmem:[%s6617 + $0x2c] sm:$0xf]
        %v6630 = vld [vmem:[%s6617 + $0x30] sm:$0xf]
        %v6631 = vld [vmem:[%s6617 + $0x34] sm:$0xf]
        %v6632 = vld [vmem:[%s6617 + $0x38] sm:$0xf]
        %v6633 = vld [vmem:[%s6617 + $0x3c] sm:$0xf]
        %v6650 = vunpack.c.l.b16 %v6618
        %v6651 = vunpack.c.l.b16 %v6619
        %v6652 = vunpack.c.l.b16 %v6620
        %v6653 = vunpack.c.l.b16 %v6621
        %v6654 = vunpack.c.l.b16 %v6622
        %v6655 = vunpack.c.l.b16 %v6623
        %v6656 = vunpack.c.l.b16 %v6624
        %v6657 = vunpack.c.l.b16 %v6625
        %v6658 = vunpack.c.l.b16 %v6626
        %v6659 = vunpack.c.l.b16 %v6627
        %v6660 = vunpack.c.l.b16 %v6628
        %v6661 = vunpack.c.l.b16 %v6629
        %v6662 = vunpack.c.l.b16 %v6630
        %v6663 = vunpack.c.l.b16 %v6631
        %v6664 = vunpack.c.l.b16 %v6632
        %v6665 = vunpack.c.l.b16 %v6633
        %v6666 = vpack.c.b16 %v6651, %v6650
        %v6667 = vpack.c.b16 %v6653, %v6652
        %v6668 = vpack.c.b16 %v6655, %v6654
        %v6669 = vpack.c.b16 %v6657, %v6656
        %v6670 = vpack.c.b16 %v6659, %v6658
        %v6671 = vpack.c.b16 %v6661, %v6660
        %v6672 = vpack.c.b16 %v6663, %v6662
        %v6673 = vpack.c.b16 %v6665, %v6664
        %6682 = vmatprep.subr.bf16.mxu0 0
        %6683 = vmatpush1.bf16.msra.mxu0 %v6673
        %6684 = vmatprep.subr.bf16.mxu0 0
        %6685 = vmatpush1.bf16.msra.mxu0 %v6672
        %6686 = vmatprep.subr.bf16.mxu0 0
        %6687 = vmatpush1.bf16.msra.mxu0 %v6671
        %6688 = vmatprep.subr.bf16.mxu0 0
        %6689 = vmatpush1.bf16.msra.mxu0 %v6670
        %6690 = vmatprep.subr.bf16.mxu0 0
        %6691 = vmatpush1.bf16.msra.mxu0 %v6669
        %6692 = vmatprep.subr.bf16.mxu0 0
        %6693 = vmatpush1.bf16.msra.mxu0 %v6668
        %6694 = vmatprep.subr.bf16.mxu0 0
        %6695 = vmatpush1.bf16.msra.mxu0 %v6667
        %6696 = vmatprep.subr.bf16.mxu0 0
        %6697 = vmatpush1.bf16.msra.mxu0 %v6666
        %6698 = vmatprep.subr.bf16.mxu0 0
        %6699 = vmatpush2.bf16.msra.mxu0 0
        %6700 = vmatprep.subr.bf16.mxu0 0
        %6701 = vmatpush2.bf16.msra.mxu0 0
        %6702 = vmatprep.subr.bf16.mxu0 0
        %6703 = vmatpush2.bf16.msra.mxu0 0
        %6704 = vmatprep.subr.bf16.mxu0 0
        %6705 = vmatpush2.bf16.msra.mxu0 0
        %6706 = vmatprep.subr.bf16.mxu0 0
        %6707 = vmatpush2.bf16.msra.mxu0 0
        %6708 = vmatprep.subr.bf16.mxu0 0
        %6709 = vmatpush2.bf16.msra.mxu0 0
        %6710 = vmatprep.subr.bf16.mxu0 0
        %6711 = vmatpush2.bf16.msra.mxu0 0
        %6712 = vmatprep.subr.bf16.mxu0 0
        %6713 = vmatpush2.bf16.msra.mxu0 0
        %6714 = vmatprep.mubr.bf16.mxu0 0
        %6715 = vmatmul.mubr.bf16.gmra.mxu0 %v4428
        %v6716 = vpop.f32.mrf.mxu0
        %v6717 = vadd.f32 0.0, %v6716
        %v6718 = vpop.f32.mrf.mxu0
        %v6719 = vpop.f32.mrf.mxu0
        %v6720 = vadd.f32 0.0, %v6719
        %v6721 = vpop.f32.mrf.mxu0
        %6722 = vmatprep.mubr.bf16.mxu0 0
        %6723 = vmatmul.mubr.bf16.gmra.mxu0 %v4429
        %v6724 = vpop.f32.mrf.mxu0
        %v6725 = vadd.f32 0.0, %v6724
        %v6726 = vpop.f32.mrf.mxu0
        %v6727 = vpop.f32.mrf.mxu0
        %v6728 = vadd.f32 0.0, %v6727
        %v6729 = vpop.f32.mrf.mxu0
        %6730 = vmatprep.mubr.bf16.mxu0 0
        %6731 = vmatmul.mubr.bf16.gmra.mxu0 %v4430
        %v6732 = vpop.f32.mrf.mxu0
        %v6733 = vadd.f32 0.0, %v6732
        %v6734 = vpop.f32.mrf.mxu0
        %v6735 = vpop.f32.mrf.mxu0
        %v6736 = vadd.f32 0.0, %v6735
        %v6737 = vpop.f32.mrf.mxu0
        %6738 = vmatprep.mubr.bf16.mxu0 0
        %6739 = vmatmul.mubr.bf16.gmra.mxu0 %v4431
        %v6740 = vpop.f32.mrf.mxu0
        %v6741 = vadd.f32 0.0, %v6740
        %v6742 = vpop.f32.mrf.mxu0
        %v6743 = vpop.f32.mrf.mxu0
        %v6744 = vadd.f32 0.0, %v6743
        %v6745 = vpop.f32.mrf.mxu0
        %6746 = vmatprep.mubr.bf16.mxu0 0
        %6747 = vmatmul.mubr.bf16.gmra.mxu0 %v4432
        %v6748 = vpop.f32.mrf.mxu0
        %v6749 = vadd.f32 0.0, %v6748
        %v6750 = vpop.f32.mrf.mxu0
        %v6751 = vpop.f32.mrf.mxu0
        %v6752 = vadd.f32 0.0, %v6751
        %v6753 = vpop.f32.mrf.mxu0
        %6754 = vmatprep.mubr.bf16.mxu0 0
        %6755 = vmatmul.mubr.bf16.gmra.mxu0 %v4433
        %v6756 = vpop.f32.mrf.mxu0
        %v6757 = vadd.f32 0.0, %v6756
        %v6758 = vpop.f32.mrf.mxu0
        %v6759 = vpop.f32.mrf.mxu0
        %v6760 = vadd.f32 0.0, %v6759
        %v6761 = vpop.f32.mrf.mxu0
        %6762 = vmatprep.mubr.bf16.mxu0 0
        %6763 = vmatmul.mubr.bf16.gmra.mxu0 %v4434
        %v6764 = vpop.f32.mrf.mxu0
        %v6765 = vadd.f32 0.0, %v6764
        %v6766 = vpop.f32.mrf.mxu0
        %v6767 = vpop.f32.mrf.mxu0
        %v6768 = vadd.f32 0.0, %v6767
        %v6769 = vpop.f32.mrf.mxu0
        %6770 = vmatprep.mubr.bf16.mxu0 0
        %6771 = vmatmul.mubr.bf16.gmra.mxu0 %v4435
        %v6772 = vpop.f32.mrf.mxu0
        %v6773 = vadd.f32 0.0, %v6772
        %v6774 = vpop.f32.mrf.mxu0
        %v6775 = vpop.f32.mrf.mxu0
        %v6776 = vadd.f32 0.0, %v6775
        %v6777 = vpop.f32.mrf.mxu0
        %6778 = vmatprep.mubr.bf16.mxu0 0
        %6779 = vmatmul.mubr.bf16.gmra.mxu0 %v4436
        %v6780 = vpop.f32.mrf.mxu0
        %v6781 = vadd.f32 0.0, %v6780
        %v6782 = vpop.f32.mrf.mxu0
        %v6783 = vpop.f32.mrf.mxu0
        %v6784 = vadd.f32 0.0, %v6783
        %v6785 = vpop.f32.mrf.mxu0
        %6786 = vmatprep.mubr.bf16.mxu0 0
        %6787 = vmatmul.mubr.bf16.gmra.mxu0 %v4437
        %v6788 = vpop.f32.mrf.mxu0
        %v6789 = vadd.f32 0.0, %v6788
        %v6790 = vpop.f32.mrf.mxu0
        %v6791 = vpop.f32.mrf.mxu0
        %v6792 = vadd.f32 0.0, %v6791
        %v6793 = vpop.f32.mrf.mxu0
        %6794 = vmatprep.mubr.bf16.mxu0 0
        %6795 = vmatmul.mubr.bf16.gmra.mxu0 %v4438
        %v6796 = vpop.f32.mrf.mxu0
        %v6797 = vadd.f32 0.0, %v6796
        %v6798 = vpop.f32.mrf.mxu0
        %v6799 = vpop.f32.mrf.mxu0
        %v6800 = vadd.f32 0.0, %v6799
        %v6801 = vpop.f32.mrf.mxu0
        %6802 = vmatprep.mubr.bf16.mxu0 0
        %6803 = vmatmul.mubr.bf16.gmra.mxu0 %v4439
        %v6804 = vpop.f32.mrf.mxu0
        %v6805 = vadd.f32 0.0, %v6804
        %v6806 = vpop.f32.mrf.mxu0
        %v6807 = vpop.f32.mrf.mxu0
        %v6808 = vadd.f32 0.0, %v6807
        %v6809 = vpop.f32.mrf.mxu0
        %6810 = vmatprep.mubr.bf16.mxu0 0
        %6811 = vmatmul.mubr.bf16.gmra.mxu0 %v4440
        %v6812 = vpop.f32.mrf.mxu0
        %v6813 = vadd.f32 0.0, %v6812
        %v6814 = vpop.f32.mrf.mxu0
        %v6815 = vpop.f32.mrf.mxu0
        %v6816 = vadd.f32 0.0, %v6815
        %v6817 = vpop.f32.mrf.mxu0
        %6818 = vmatprep.mubr.bf16.mxu0 0
        %6819 = vmatmul.mubr.bf16.gmra.mxu0 %v4441
        %v6820 = vpop.f32.mrf.mxu0
        %v6821 = vadd.f32 0.0, %v6820
        %v6822 = vpop.f32.mrf.mxu0
        %v6823 = vpop.f32.mrf.mxu0
        %v6824 = vadd.f32 0.0, %v6823
        %v6825 = vpop.f32.mrf.mxu0
        %6826 = vmatprep.mubr.bf16.mxu0 0
        %6827 = vmatmul.mubr.bf16.gmra.mxu0 %v4442
        %v6828 = vpop.f32.mrf.mxu0
        %v6829 = vadd.f32 0.0, %v6828
        %v6830 = vpop.f32.mrf.mxu0
        %v6831 = vpop.f32.mrf.mxu0
        %v6832 = vadd.f32 0.0, %v6831
        %v6833 = vpop.f32.mrf.mxu0
        %6834 = vmatprep.mubr.bf16.mxu0 0
        %6835 = vmatmul.mubr.bf16.gmra.mxu0 %v4443
        %v6836 = vpop.f32.mrf.mxu0
        %v6837 = vadd.f32 0.0, %v6836
        %v6838 = vpop.f32.mrf.mxu0
        %v6839 = vpop.f32.mrf.mxu0
        %v6840 = vadd.f32 0.0, %v6839
        %v6841 = vpop.f32.mrf.mxu0
        %6842 = vmatprep.mubr.bf16.mxu0 0
        %6843 = vmatmul.mubr.bf16.gmra.mxu0 %v4444
        %v6844 = vpop.f32.mrf.mxu0
        %v6845 = vadd.f32 0.0, %v6844
        %v6846 = vpop.f32.mrf.mxu0
        %v6847 = vpop.f32.mrf.mxu0
        %v6848 = vadd.f32 0.0, %v6847
        %v6849 = vpop.f32.mrf.mxu0
        %6850 = vmatprep.mubr.bf16.mxu0 0
        %6851 = vmatmul.mubr.bf16.gmra.mxu0 %v4445
        %v6852 = vpop.f32.mrf.mxu0
        %v6853 = vadd.f32 0.0, %v6852
        %v6854 = vpop.f32.mrf.mxu0
        %v6855 = vpop.f32.mrf.mxu0
        %v6856 = vadd.f32 0.0, %v6855
        %v6857 = vpop.f32.mrf.mxu0
        %6858 = vdwg.mxu0
        %v6859 = vadd.f32 %v6581, %v6717
        %v6860 = vadd.f32 %v6582, %v6720
        %v6861 = vadd.f32 %v6583, %v6725
        %v6862 = vadd.f32 %v6584, %v6728
        %v6863 = vadd.f32 %v6585, %v6733
        %v6864 = vadd.f32 %v6586, %v6736
        %v6865 = vadd.f32 %v6587, %v6741
        %v6866 = vadd.f32 %v6588, %v6744
        %v6867 = vadd.f32 %v6589, %v6749
        %v6868 = vadd.f32 %v6590, %v6752
        %v6869 = vadd.f32 %v6591, %v6757
        %v6870 = vadd.f32 %v6592, %v6760
        %v6871 = vadd.f32 %v6593, %v6765
        %v6872 = vadd.f32 %v6594, %v6768
        %v6873 = vadd.f32 %v6595, %v6773
        %v6874 = vadd.f32 %v6596, %v6776
        %v6875 = vadd.f32 %v6597, %v6781
        %v6876 = vadd.f32 %v6598, %v6784
        %v6877 = vadd.f32 %v6599, %v6789
        %v6878 = vadd.f32 %v6600, %v6792
        %v6879 = vadd.f32 %v6601, %v6797
        %v6880 = vadd.f32 %v6602, %v6800
        %v6881 = vadd.f32 %v6603, %v6805
        %v6882 = vadd.f32 %v6604, %v6808
        %v6883 = vadd.f32 %v6605, %v6813
        %v6884 = vadd.f32 %v6606, %v6816
        %v6885 = vadd.f32 %v6607, %v6821
        %v6886 = vadd.f32 %v6608, %v6824
        %v6887 = vadd.f32 %v6609, %v6829
        %v6888 = vadd.f32 %v6610, %v6832
        %v6889 = vadd.f32 %v6611, %v6837
        %v6890 = vadd.f32 %v6612, %v6840
        %v6891 = vadd.f32 %v6613, %v6845
        %v6892 = vadd.f32 %v6614, %v6848
        %v6893 = vadd.f32 %v6615, %v6853
        %v6894 = vadd.f32 %v6616, %v6856
        %v6895 = vadd.f32 %v4050, %v6859
        %v6896 = vadd.f32 %v4051, %v6860
        %v6897 = vadd.f32 %v4052, %v6861
        %v6898 = vadd.f32 %v4053, %v6862
        %v6899 = vadd.f32 %v4054, %v6863
        %v6900 = vadd.f32 %v4055, %v6864
        %v6901 = vadd.f32 %v4056, %v6865
        %v6902 = vadd.f32 %v4057, %v6866
        %v6903 = vadd.f32 %v4058, %v6867
        %v6904 = vadd.f32 %v4059, %v6868
        %v6905 = vadd.f32 %v4060, %v6869
        %v6906 = vadd.f32 %v4061, %v6870
        %v6907 = vadd.f32 %v4062, %v6871
        %v6908 = vadd.f32 %v4063, %v6872
        %v6909 = vadd.f32 %v4064, %v6873
        %v6910 = vadd.f32 %v4065, %v6874
        %v6911 = vadd.f32 %v4066, %v6875
        %v6912 = vadd.f32 %v4067, %v6876
        %v6913 = vadd.f32 %v4068, %v6877
        %v6914 = vadd.f32 %v4069, %v6878
        %v6915 = vadd.f32 %v4070, %v6879
        %v6916 = vadd.f32 %v4071, %v6880
        %v6917 = vadd.f32 %v4072, %v6881
        %v6918 = vadd.f32 %v4073, %v6882
        %v6919 = vadd.f32 %v4074, %v6883
        %v6920 = vadd.f32 %v4075, %v6884
        %v6921 = vadd.f32 %v4076, %v6885
        %v6922 = vadd.f32 %v4077, %v6886
        %v6923 = vadd.f32 %v4078, %v6887
        %v6924 = vadd.f32 %v4079, %v6888
        %v6925 = vadd.f32 %v4080, %v6889
        %v6926 = vadd.f32 %v4081, %v6890
        %v6927 = vadd.f32 %v4082, %v6891
        %v6928 = vadd.f32 %v4083, %v6892
        %v6929 = vadd.f32 %v4084, %v6893
        %v6930 = vadd.f32 %v4085, %v6894
        %v6931 = vld [vmem:[%s10] sm:$0x1]
        %v6933 = vlaneseq
        %v6934 = vshrl.u32 %v6933, 7
        %v6935 = vsub.s32 0, %v6934
        %v6936 = vrot.slane %v6931, %v6935
        %v6938 = vadd.f32 %v6895, %v6936
        %v6939 = vadd.f32 %v6896, %v6936
        %v6940 = vadd.f32 %v6897, %v6936
        %v6941 = vadd.f32 %v6898, %v6936
        %v6942 = vadd.f32 %v6899, %v6936
        %v6943 = vadd.f32 %v6900, %v6936
        %v6944 = vadd.f32 %v6901, %v6936
        %v6945 = vadd.f32 %v6902, %v6936
        %v6946 = vadd.f32 %v6903, %v6936
        %v6947 = vadd.f32 %v6904, %v6936
        %v6948 = vadd.f32 %v6905, %v6936
        %v6949 = vadd.f32 %v6906, %v6936
        %v6950 = vadd.f32 %v6907, %v6936
        %v6951 = vadd.f32 %v6908, %v6936
        %v6952 = vadd.f32 %v6909, %v6936
        %v6953 = vadd.f32 %v6910, %v6936
        %v6954 = vadd.f32 %v6911, %v6936
        %v6955 = vadd.f32 %v6912, %v6936
        %v6956 = vadd.f32 %v6913, %v6936
        %v6957 = vadd.f32 %v6914, %v6936
        %v6958 = vadd.f32 %v6915, %v6936
        %v6959 = vadd.f32 %v6916, %v6936
        %v6960 = vadd.f32 %v6917, %v6936
        %v6961 = vadd.f32 %v6918, %v6936
        %v6962 = vadd.f32 %v6919, %v6936
        %v6963 = vadd.f32 %v6920, %v6936
        %v6964 = vadd.f32 %v6921, %v6936
        %v6965 = vadd.f32 %v6922, %v6936
        %v6966 = vadd.f32 %v6923, %v6936
        %v6967 = vadd.f32 %v6924, %v6936
        %v6968 = vadd.f32 %v6925, %v6936
        %v6969 = vadd.f32 %v6926, %v6936
        %v6970 = vadd.f32 %v6927, %v6936
        %v6971 = vadd.f32 %v6928, %v6936
        %v6972 = vadd.f32 %v6929, %v6936
        %v6973 = vadd.f32 %v6930, %v6936
        %v6974 = vmax.f32 %v6938, 0.0
        %v6975 = vmax.f32 %v6939, 0.0
        %v6976 = vmax.f32 %v6940, 0.0
        %v6977 = vmax.f32 %v6941, 0.0
        %v6978 = vmax.f32 %v6942, 0.0
        %v6979 = vmax.f32 %v6943, 0.0
        %v6980 = vmax.f32 %v6944, 0.0
        %v6981 = vmax.f32 %v6945, 0.0
        %v6982 = vmax.f32 %v6946, 0.0
        %v6983 = vmax.f32 %v6947, 0.0
        %v6984 = vmax.f32 %v6948, 0.0
        %v6985 = vmax.f32 %v6949, 0.0
        %v6986 = vmax.f32 %v6950, 0.0
        %v6987 = vmax.f32 %v6951, 0.0
        %v6988 = vmax.f32 %v6952, 0.0
        %v6989 = vmax.f32 %v6953, 0.0
        %v6990 = vmax.f32 %v6954, 0.0
        %v6991 = vmax.f32 %v6955, 0.0
        %v6992 = vmax.f32 %v6956, 0.0
        %v6993 = vmax.f32 %v6957, 0.0
        %v6994 = vmax.f32 %v6958, 0.0
        %v6995 = vmax.f32 %v6959, 0.0
        %v6996 = vmax.f32 %v6960, 0.0
        %v6997 = vmax.f32 %v6961, 0.0
        %v6998 = vmax.f32 %v6962, 0.0
        %v6999 = vmax.f32 %v6963, 0.0
        %v7000 = vmax.f32 %v6964, 0.0
        %v7001 = vmax.f32 %v6965, 0.0
        %v7002 = vmax.f32 %v6966, 0.0
        %v7003 = vmax.f32 %v6967, 0.0
        %v7004 = vmax.f32 %v6968, 0.0
        %v7005 = vmax.f32 %v6969, 0.0
        %v7006 = vmax.f32 %v6970, 0.0
        %v7007 = vmax.f32 %v6971, 0.0
        %v7008 = vmax.f32 %v6972, 0.0
        %v7009 = vmax.f32 %v6973, 0.0
        %v7010 = vsel %vm1338, 0.0, %v6974
        %v7011 = vsel %vm1338, 0.0, %v6975
        %v7012 = vsel %vm1338, 0.0, %v7008
        %v7013 = vsel %vm1338, 0.0, %v7009
        %v7014 = vpack.c.bf16 %v7011, %v7010
        %v7015 = vpack.c.bf16 %v6977, %v6976
        %v7016 = vpack.c.bf16 %v6979, %v6978
        %v7017 = vpack.c.bf16 %v6981, %v6980
        %v7018 = vpack.c.bf16 %v6983, %v6982
        %v7019 = vpack.c.bf16 %v6985, %v6984
        %v7020 = vpack.c.bf16 %v6987, %v6986
        %v7021 = vpack.c.bf16 %v6989, %v6988
        %v7022 = vpack.c.bf16 %v6991, %v6990
        %v7023 = vpack.c.bf16 %v6993, %v6992
        %v7024 = vpack.c.bf16 %v6995, %v6994
        %v7025 = vpack.c.bf16 %v6997, %v6996
        %v7026 = vpack.c.bf16 %v6999, %v6998
        %v7027 = vpack.c.bf16 %v7001, %v7000
        %v7028 = vpack.c.bf16 %v7003, %v7002
        %v7029 = vpack.c.bf16 %v7005, %v7004
        %v7030 = vpack.c.bf16 %v7007, %v7006
        %v7031 = vpack.c.bf16 %v7013, %v7012
        %v7033 = vshrl.u32 %v7014, 16
        %v7035 = vrot.slane %v7033, 7
        %v7036 = vshll.u32 %v7014, 16
        %v7038 = vor.u32 %v7035, %v7036
        %v7040 = vshrl.u32 %v7015, 16
        %v7042 = vrot.slane %v7040, 7
        %v7043 = vshll.u32 %v7015, 16
        %v7045 = vor.u32 %v7042, %v7043
        %v7047 = vshrl.u32 %v7016, 16
        %v7049 = vrot.slane %v7047, 7
        %v7050 = vshll.u32 %v7016, 16
        %v7052 = vor.u32 %v7049, %v7050
        %v7054 = vshrl.u32 %v7017, 16
        %v7056 = vrot.slane %v7054, 7
        %v7057 = vshll.u32 %v7017, 16
        %v7059 = vor.u32 %v7056, %v7057
        %v7061 = vshrl.u32 %v7018, 16
        %v7063 = vrot.slane %v7061, 7
        %v7064 = vshll.u32 %v7018, 16
        %v7066 = vor.u32 %v7063, %v7064
        %v7068 = vshrl.u32 %v7019, 16
        %v7070 = vrot.slane %v7068, 7
        %v7071 = vshll.u32 %v7019, 16
        %v7073 = vor.u32 %v7070, %v7071
        %v7075 = vshrl.u32 %v7020, 16
        %v7077 = vrot.slane %v7075, 7
        %v7078 = vshll.u32 %v7020, 16
        %v7080 = vor.u32 %v7077, %v7078
        %v7082 = vshrl.u32 %v7021, 16
        %v7084 = vrot.slane %v7082, 7
        %v7085 = vshll.u32 %v7021, 16
        %v7087 = vor.u32 %v7084, %v7085
        %v7089 = vshrl.u32 %v7022, 16
        %v7091 = vrot.slane %v7089, 7
        %v7092 = vshll.u32 %v7022, 16
        %v7094 = vor.u32 %v7091, %v7092
        %v7096 = vshrl.u32 %v7023, 16
        %v7098 = vrot.slane %v7096, 7
        %v7099 = vshll.u32 %v7023, 16
        %v7101 = vor.u32 %v7098, %v7099
        %v7103 = vshrl.u32 %v7024, 16
        %v7105 = vrot.slane %v7103, 7
        %v7106 = vshll.u32 %v7024, 16
        %v7108 = vor.u32 %v7105, %v7106
        %v7110 = vshrl.u32 %v7025, 16
        %v7112 = vrot.slane %v7110, 7
        %v7113 = vshll.u32 %v7025, 16
        %v7115 = vor.u32 %v7112, %v7113
        %v7117 = vshrl.u32 %v7026, 16
        %v7119 = vrot.slane %v7117, 7
        %v7120 = vshll.u32 %v7026, 16
        %v7122 = vor.u32 %v7119, %v7120
        %v7124 = vshrl.u32 %v7027, 16
        %v7126 = vrot.slane %v7124, 7
        %v7127 = vshll.u32 %v7027, 16
        %v7129 = vor.u32 %v7126, %v7127
        %v7131 = vshrl.u32 %v7028, 16
        %v7133 = vrot.slane %v7131, 7
        %v7134 = vshll.u32 %v7028, 16
        %v7136 = vor.u32 %v7133, %v7134
        %v7138 = vshrl.u32 %v7029, 16
        %v7140 = vrot.slane %v7138, 7
        %v7141 = vshll.u32 %v7029, 16
        %v7143 = vor.u32 %v7140, %v7141
        %v7145 = vshrl.u32 %v7030, 16
        %v7147 = vrot.slane %v7145, 7
        %v7148 = vshll.u32 %v7030, 16
        %v7150 = vor.u32 %v7147, %v7148
        %v7152 = vshrl.u32 %v7031, 16
        %v7154 = vrot.slane %v7152, 7
        %v7155 = vshll.u32 %v7031, 16
        %v7157 = vor.u32 %v7154, %v7155
        %v7176 = vsel %vm1553, 0, %v7038
        %v7177 = vsel %vm1553, 0, %v7045
        %v7178 = vsel %vm1553, 0, %v7052
        %v7179 = vsel %vm1553, 0, %v7059
        %v7180 = vsel %vm1553, 0, %v7066
        %v7181 = vsel %vm1553, 0, %v7073
        %v7182 = vsel %vm1553, 0, %v7080
        %v7183 = vsel %vm1553, 0, %v7087
        %v7184 = vsel %vm1553, 0, %v7094
        %v7185 = vsel %vm1553, 0, %v7101
        %v7186 = vsel %vm1553, 0, %v7108
        %v7187 = vsel %vm1553, 0, %v7115
        %v7188 = vsel %vm1553, 0, %v7122
        %v7189 = vsel %vm1553, 0, %v7129
        %v7190 = vsel %vm1553, 0, %v7136
        %v7191 = vsel %vm1553, 0, %v7143
        %v7192 = vsel %vm1553, 0, %v7150
        %v7193 = vsel %vm1553, 0, %v7157
        %v7194 = vrot.slane %v7036, 1
        %v7195 = vor.u32 %v7033, %v7194
        %v7196 = vrot.slane %v7043, 1
        %v7197 = vor.u32 %v7040, %v7196
        %v7198 = vrot.slane %v7050, 1
        %v7199 = vor.u32 %v7047, %v7198
        %v7200 = vrot.slane %v7057, 1
        %v7201 = vor.u32 %v7054, %v7200
        %v7202 = vrot.slane %v7064, 1
        %v7203 = vor.u32 %v7061, %v7202
        %v7204 = vrot.slane %v7071, 1
        %v7205 = vor.u32 %v7068, %v7204
        %v7206 = vrot.slane %v7078, 1
        %v7207 = vor.u32 %v7075, %v7206
        %v7208 = vrot.slane %v7085, 1
        %v7209 = vor.u32 %v7082, %v7208
        %v7210 = vrot.slane %v7092, 1
        %v7211 = vor.u32 %v7089, %v7210
        %v7212 = vrot.slane %v7099, 1
        %v7213 = vor.u32 %v7096, %v7212
        %v7214 = vrot.slane %v7106, 1
        %v7215 = vor.u32 %v7103, %v7214
        %v7216 = vrot.slane %v7113, 1
        %v7217 = vor.u32 %v7110, %v7216
        %v7218 = vrot.slane %v7120, 1
        %v7219 = vor.u32 %v7117, %v7218
        %v7220 = vrot.slane %v7127, 1
        %v7221 = vor.u32 %v7124, %v7220
        %v7222 = vrot.slane %v7134, 1
        %v7223 = vor.u32 %v7131, %v7222
        %v7224 = vrot.slane %v7141, 1
        %v7225 = vor.u32 %v7138, %v7224
        %v7226 = vrot.slane %v7148, 1
        %v7227 = vor.u32 %v7145, %v7226
        %v7228 = vrot.slane %v7155, 1
        %v7229 = vor.u32 %v7152, %v7228
        %v7248 = vsel %vm1636, %v7195, 0
        %v7249 = vsel %vm1636, %v7197, 0
        %v7250 = vsel %vm1636, %v7199, 0
        %v7251 = vsel %vm1636, %v7201, 0
        %v7252 = vsel %vm1636, %v7203, 0
        %v7253 = vsel %vm1636, %v7205, 0
        %v7254 = vsel %vm1636, %v7207, 0
        %v7255 = vsel %vm1636, %v7209, 0
        %v7256 = vsel %vm1636, %v7211, 0
        %v7257 = vsel %vm1636, %v7213, 0
        %v7258 = vsel %vm1636, %v7215, 0
        %v7259 = vsel %vm1636, %v7217, 0
        %v7260 = vsel %vm1636, %v7219, 0
        %v7261 = vsel %vm1636, %v7221, 0
        %v7262 = vsel %vm1636, %v7223, 0
        %v7263 = vsel %vm1636, %v7225, 0
        %v7264 = vsel %vm1636, %v7227, 0
        %v7265 = vsel %vm1636, %v7229, 0
        %v7266 = vld [vmem:[#allocation4] sm:$0xf]
        %v7267 = vld [vmem:[#allocation4 + $0x4] sm:$0xf]
        %v7268 = vld [vmem:[#allocation4 + $0x8] sm:$0xf]
        %v7269 = vld [vmem:[#allocation4 + $0xc] sm:$0xf]
        %v7270 = vld [vmem:[#allocation4 + $0x10] sm:$0xf]
        %v7271 = vld [vmem:[#allocation4 + $0x14] sm:$0xf]
        %v7272 = vld [vmem:[#allocation4 + $0x18] sm:$0xf]
        %v7273 = vld [vmem:[#allocation4 + $0x1c] sm:$0xf]
        %v7274 = vld [vmem:[#allocation4 + $0x20] sm:$0xf]
        %v7275 = vld [vmem:[#allocation4 + $0x24] sm:$0xf]
        %v7276 = vld [vmem:[#allocation4 + $0x28] sm:$0xf]
        %v7277 = vld [vmem:[#allocation4 + $0x2c] sm:$0xf]
        %v7278 = vld [vmem:[#allocation4 + $0x30] sm:$0xf]
        %v7279 = vld [vmem:[#allocation4 + $0x34] sm:$0xf]
        %v7280 = vld [vmem:[#allocation4 + $0x38] sm:$0xf]
        %v7281 = vld [vmem:[#allocation4 + $0x3c] sm:$0xf]
        %s7282 = scalar_lea.vmem [#allocation4], 64
        %v7283 = vld [vmem:[%s7282] sm:$0xf]
        %v7284 = vld [vmem:[%s7282 + $0x4] sm:$0xf]
        %v7285 = vld [vmem:[%s7282 + $0x8] sm:$0xf]
        %v7286 = vld [vmem:[%s7282 + $0xc] sm:$0xf]
        %v7287 = vld [vmem:[%s7282 + $0x10] sm:$0xf]
        %v7288 = vld [vmem:[%s7282 + $0x14] sm:$0xf]
        %v7289 = vld [vmem:[%s7282 + $0x18] sm:$0xf]
        %v7290 = vld [vmem:[%s7282 + $0x1c] sm:$0xf]
        %v7291 = vld [vmem:[%s7282 + $0x20] sm:$0xf]
        %v7292 = vld [vmem:[%s7282 + $0x24] sm:$0xf]
        %v7293 = vld [vmem:[%s7282 + $0x28] sm:$0xf]
        %v7294 = vld [vmem:[%s7282 + $0x2c] sm:$0xf]
        %v7295 = vld [vmem:[%s7282 + $0x30] sm:$0xf]
        %v7296 = vld [vmem:[%s7282 + $0x34] sm:$0xf]
        %v7297 = vld [vmem:[%s7282 + $0x38] sm:$0xf]
        %v7298 = vld [vmem:[%s7282 + $0x3c] sm:$0xf]
        %v7315 = vunpack.c.l.b16 %v7283
        %v7316 = vunpack.c.l.b16 %v7284
        %v7317 = vunpack.c.l.b16 %v7285
        %v7318 = vunpack.c.l.b16 %v7286
        %v7319 = vunpack.c.l.b16 %v7287
        %v7320 = vunpack.c.l.b16 %v7288
        %v7321 = vunpack.c.l.b16 %v7289
        %v7322 = vunpack.c.l.b16 %v7290
        %v7323 = vunpack.c.l.b16 %v7291
        %v7324 = vunpack.c.l.b16 %v7292
        %v7325 = vunpack.c.l.b16 %v7293
        %v7326 = vunpack.c.l.b16 %v7294
        %v7327 = vunpack.c.l.b16 %v7295
        %v7328 = vunpack.c.l.b16 %v7296
        %v7329 = vunpack.c.l.b16 %v7297
        %v7330 = vunpack.c.l.b16 %v7298
        %v7331 = vpack.c.b16 %v7316, %v7315
        %v7332 = vpack.c.b16 %v7318, %v7317
        %v7333 = vpack.c.b16 %v7320, %v7319
        %v7334 = vpack.c.b16 %v7322, %v7321
        %v7335 = vpack.c.b16 %v7324, %v7323
        %v7336 = vpack.c.b16 %v7326, %v7325
        %v7337 = vpack.c.b16 %v7328, %v7327
        %v7338 = vpack.c.b16 %v7330, %v7329
        %7347 = vmatprep.subr.bf16.mxu0 0
        %7348 = vmatpush1.bf16.msra.mxu0 %v7338
        %7349 = vmatprep.subr.bf16.mxu0 0
        %7350 = vmatpush1.bf16.msra.mxu0 %v7337
        %7351 = vmatprep.subr.bf16.mxu0 0
        %7352 = vmatpush1.bf16.msra.mxu0 %v7336
        %7353 = vmatprep.subr.bf16.mxu0 0
        %7354 = vmatpush1.bf16.msra.mxu0 %v7335
        %7355 = vmatprep.subr.bf16.mxu0 0
        %7356 = vmatpush1.bf16.msra.mxu0 %v7334
        %7357 = vmatprep.subr.bf16.mxu0 0
        %7358 = vmatpush1.bf16.msra.mxu0 %v7333
        %7359 = vmatprep.subr.bf16.mxu0 0
        %7360 = vmatpush1.bf16.msra.mxu0 %v7332
        %7361 = vmatprep.subr.bf16.mxu0 0
        %7362 = vmatpush1.bf16.msra.mxu0 %v7331
        %7363 = vmatprep.subr.bf16.mxu0 0
        %7364 = vmatpush2.bf16.msra.mxu0 0
        %7365 = vmatprep.subr.bf16.mxu0 0
        %7366 = vmatpush2.bf16.msra.mxu0 0
        %7367 = vmatprep.subr.bf16.mxu0 0
        %7368 = vmatpush2.bf16.msra.mxu0 0
        %7369 = vmatprep.subr.bf16.mxu0 0
        %7370 = vmatpush2.bf16.msra.mxu0 0
        %7371 = vmatprep.subr.bf16.mxu0 0
        %7372 = vmatpush2.bf16.msra.mxu0 0
        %7373 = vmatprep.subr.bf16.mxu0 0
        %7374 = vmatpush2.bf16.msra.mxu0 0
        %7375 = vmatprep.subr.bf16.mxu0 0
        %7376 = vmatpush2.bf16.msra.mxu0 0
        %7377 = vmatprep.subr.bf16.mxu0 0
        %7378 = vmatpush2.bf16.msra.mxu0 0
        %7379 = vmatprep.mubr.bf16.mxu0 0
        %7380 = vmatmul.mubr.bf16.gmra.mxu0 %v7014
        %v7381 = vpop.f32.mrf.mxu0
        %v7382 = vadd.f32 0.0, %v7381
        %v7383 = vpop.f32.mrf.mxu0
        %v7384 = vpop.f32.mrf.mxu0
        %v7385 = vadd.f32 0.0, %v7384
        %v7386 = vpop.f32.mrf.mxu0
        %7387 = vmatprep.mubr.bf16.mxu0 0
        %7388 = vmatmul.mubr.bf16.gmra.mxu0 %v7015
        %v7389 = vpop.f32.mrf.mxu0
        %v7390 = vadd.f32 0.0, %v7389
        %v7391 = vpop.f32.mrf.mxu0
        %v7392 = vpop.f32.mrf.mxu0
        %v7393 = vadd.f32 0.0, %v7392
        %v7394 = vpop.f32.mrf.mxu0
        %7395 = vmatprep.mubr.bf16.mxu0 0
        %7396 = vmatmul.mubr.bf16.gmra.mxu0 %v7016
        %v7397 = vpop.f32.mrf.mxu0
        %v7398 = vadd.f32 0.0, %v7397
        %v7399 = vpop.f32.mrf.mxu0
        %v7400 = vpop.f32.mrf.mxu0
        %v7401 = vadd.f32 0.0, %v7400
        %v7402 = vpop.f32.mrf.mxu0
        %7403 = vmatprep.mubr.bf16.mxu0 0
        %7404 = vmatmul.mubr.bf16.gmra.mxu0 %v7017
        %v7405 = vpop.f32.mrf.mxu0
        %v7406 = vadd.f32 0.0, %v7405
        %v7407 = vpop.f32.mrf.mxu0
        %v7408 = vpop.f32.mrf.mxu0
        %v7409 = vadd.f32 0.0, %v7408
        %v7410 = vpop.f32.mrf.mxu0
        %7411 = vmatprep.mubr.bf16.mxu0 0
        %7412 = vmatmul.mubr.bf16.gmra.mxu0 %v7018
        %v7413 = vpop.f32.mrf.mxu0
        %v7414 = vadd.f32 0.0, %v7413
        %v7415 = vpop.f32.mrf.mxu0
        %v7416 = vpop.f32.mrf.mxu0
        %v7417 = vadd.f32 0.0, %v7416
        %v7418 = vpop.f32.mrf.mxu0
        %7419 = vmatprep.mubr.bf16.mxu0 0
        %7420 = vmatmul.mubr.bf16.gmra.mxu0 %v7019
        %v7421 = vpop.f32.mrf.mxu0
        %v7422 = vadd.f32 0.0, %v7421
        %v7423 = vpop.f32.mrf.mxu0
        %v7424 = vpop.f32.mrf.mxu0
        %v7425 = vadd.f32 0.0, %v7424
        %v7426 = vpop.f32.mrf.mxu0
        %7427 = vmatprep.mubr.bf16.mxu0 0
        %7428 = vmatmul.mubr.bf16.gmra.mxu0 %v7020
        %v7429 = vpop.f32.mrf.mxu0
        %v7430 = vadd.f32 0.0, %v7429
        %v7431 = vpop.f32.mrf.mxu0
        %v7432 = vpop.f32.mrf.mxu0
        %v7433 = vadd.f32 0.0, %v7432
        %v7434 = vpop.f32.mrf.mxu0
        %7435 = vmatprep.mubr.bf16.mxu0 0
        %7436 = vmatmul.mubr.bf16.gmra.mxu0 %v7021
        %v7437 = vpop.f32.mrf.mxu0
        %v7438 = vadd.f32 0.0, %v7437
        %v7439 = vpop.f32.mrf.mxu0
        %v7440 = vpop.f32.mrf.mxu0
        %v7441 = vadd.f32 0.0, %v7440
        %v7442 = vpop.f32.mrf.mxu0
        %7443 = vmatprep.mubr.bf16.mxu0 0
        %7444 = vmatmul.mubr.bf16.gmra.mxu0 %v7022
        %v7445 = vpop.f32.mrf.mxu0
        %v7446 = vadd.f32 0.0, %v7445
        %v7447 = vpop.f32.mrf.mxu0
        %v7448 = vpop.f32.mrf.mxu0
        %v7449 = vadd.f32 0.0, %v7448
        %v7450 = vpop.f32.mrf.mxu0
        %7451 = vmatprep.mubr.bf16.mxu0 0
        %7452 = vmatmul.mubr.bf16.gmra.mxu0 %v7023
        %v7453 = vpop.f32.mrf.mxu0
        %v7454 = vadd.f32 0.0, %v7453
        %v7455 = vpop.f32.mrf.mxu0
        %v7456 = vpop.f32.mrf.mxu0
        %v7457 = vadd.f32 0.0, %v7456
        %v7458 = vpop.f32.mrf.mxu0
        %7459 = vmatprep.mubr.bf16.mxu0 0
        %7460 = vmatmul.mubr.bf16.gmra.mxu0 %v7024
        %v7461 = vpop.f32.mrf.mxu0
        %v7462 = vadd.f32 0.0, %v7461
        %v7463 = vpop.f32.mrf.mxu0
        %v7464 = vpop.f32.mrf.mxu0
        %v7465 = vadd.f32 0.0, %v7464
        %v7466 = vpop.f32.mrf.mxu0
        %7467 = vmatprep.mubr.bf16.mxu0 0
        %7468 = vmatmul.mubr.bf16.gmra.mxu0 %v7025
        %v7469 = vpop.f32.mrf.mxu0
        %v7470 = vadd.f32 0.0, %v7469
        %v7471 = vpop.f32.mrf.mxu0
        %v7472 = vpop.f32.mrf.mxu0
        %v7473 = vadd.f32 0.0, %v7472
        %v7474 = vpop.f32.mrf.mxu0
        %7475 = vmatprep.mubr.bf16.mxu0 0
        %7476 = vmatmul.mubr.bf16.gmra.mxu0 %v7026
        %v7477 = vpop.f32.mrf.mxu0
        %v7478 = vadd.f32 0.0, %v7477
        %v7479 = vpop.f32.mrf.mxu0
        %v7480 = vpop.f32.mrf.mxu0
        %v7481 = vadd.f32 0.0, %v7480
        %v7482 = vpop.f32.mrf.mxu0
        %7483 = vmatprep.mubr.bf16.mxu0 0
        %7484 = vmatmul.mubr.bf16.gmra.mxu0 %v7027
        %v7485 = vpop.f32.mrf.mxu0
        %v7486 = vadd.f32 0.0, %v7485
        %v7487 = vpop.f32.mrf.mxu0
        %v7488 = vpop.f32.mrf.mxu0
        %v7489 = vadd.f32 0.0, %v7488
        %v7490 = vpop.f32.mrf.mxu0
        %7491 = vmatprep.mubr.bf16.mxu0 0
        %7492 = vmatmul.mubr.bf16.gmra.mxu0 %v7028
        %v7493 = vpop.f32.mrf.mxu0
        %v7494 = vadd.f32 0.0, %v7493
        %v7495 = vpop.f32.mrf.mxu0
        %v7496 = vpop.f32.mrf.mxu0
        %v7497 = vadd.f32 0.0, %v7496
        %v7498 = vpop.f32.mrf.mxu0
        %7499 = vmatprep.mubr.bf16.mxu0 0
        %7500 = vmatmul.mubr.bf16.gmra.mxu0 %v7029
        %v7501 = vpop.f32.mrf.mxu0
        %v7502 = vadd.f32 0.0, %v7501
        %v7503 = vpop.f32.mrf.mxu0
        %v7504 = vpop.f32.mrf.mxu0
        %v7505 = vadd.f32 0.0, %v7504
        %v7506 = vpop.f32.mrf.mxu0
        %7507 = vdwg.mxu0
        %v7524 = vunpack.c.l.b16 %v7266
        %v7525 = vunpack.c.l.b16 %v7267
        %v7526 = vunpack.c.l.b16 %v7268
        %v7527 = vunpack.c.l.b16 %v7269
        %v7528 = vunpack.c.l.b16 %v7270
        %v7529 = vunpack.c.l.b16 %v7271
        %v7530 = vunpack.c.l.b16 %v7272
        %v7531 = vunpack.c.l.b16 %v7273
        %v7532 = vunpack.c.l.b16 %v7274
        %v7533 = vunpack.c.l.b16 %v7275
        %v7534 = vunpack.c.l.b16 %v7276
        %v7535 = vunpack.c.l.b16 %v7277
        %v7536 = vunpack.c.l.b16 %v7278
        %v7537 = vunpack.c.l.b16 %v7279
        %v7538 = vunpack.c.l.b16 %v7280
        %v7539 = vunpack.c.l.b16 %v7281
        %v7540 = vpack.c.b16 %v7525, %v7524
        %v7541 = vpack.c.b16 %v7527, %v7526
        %v7542 = vpack.c.b16 %v7529, %v7528
        %v7543 = vpack.c.b16 %v7531, %v7530
        %v7544 = vpack.c.b16 %v7533, %v7532
        %v7545 = vpack.c.b16 %v7535, %v7534
        %v7546 = vpack.c.b16 %v7537, %v7536
        %v7547 = vpack.c.b16 %v7539, %v7538
        %7556 = vmatprep.subr.bf16.mxu0 0
        %7557 = vmatpush1.bf16.msra.mxu0 %v7547
        %7558 = vmatprep.subr.bf16.mxu0 0
        %7559 = vmatpush1.bf16.msra.mxu0 %v7546
        %7560 = vmatprep.subr.bf16.mxu0 0
        %7561 = vmatpush1.bf16.msra.mxu0 %v7545
        %7562 = vmatprep.subr.bf16.mxu0 0
        %7563 = vmatpush1.bf16.msra.mxu0 %v7544
        %7564 = vmatprep.subr.bf16.mxu0 0
        %7565 = vmatpush1.bf16.msra.mxu0 %v7543
        %7566 = vmatprep.subr.bf16.mxu0 0
        %7567 = vmatpush1.bf16.msra.mxu0 %v7542
        %7568 = vmatprep.subr.bf16.mxu0 0
        %7569 = vmatpush1.bf16.msra.mxu0 %v7541
        %7570 = vmatprep.subr.bf16.mxu0 0
        %7571 = vmatpush1.bf16.msra.mxu0 %v7540
        %7572 = vmatprep.subr.bf16.mxu0 0
        %7573 = vmatpush2.bf16.msra.mxu0 0
        %7574 = vmatprep.subr.bf16.mxu0 0
        %7575 = vmatpush2.bf16.msra.mxu0 0
        %7576 = vmatprep.subr.bf16.mxu0 0
        %7577 = vmatpush2.bf16.msra.mxu0 0
        %7578 = vmatprep.subr.bf16.mxu0 0
        %7579 = vmatpush2.bf16.msra.mxu0 0
        %7580 = vmatprep.subr.bf16.mxu0 0
        %7581 = vmatpush2.bf16.msra.mxu0 0
        %7582 = vmatprep.subr.bf16.mxu0 0
        %7583 = vmatpush2.bf16.msra.mxu0 0
        %7584 = vmatprep.subr.bf16.mxu0 0
        %7585 = vmatpush2.bf16.msra.mxu0 0
        %7586 = vmatprep.subr.bf16.mxu0 0
        %7587 = vmatpush2.bf16.msra.mxu0 0
        %7588 = vmatprep.mubr.bf16.mxu0 0
        %7589 = vmatmul.mubr.bf16.gmra.mxu0 %v7176
        %v7590 = vpop.f32.mrf.mxu0
        %v7591 = vadd.f32 %v7382, %v7590
        %v7592 = vpop.f32.mrf.mxu0
        %v7593 = vpop.f32.mrf.mxu0
        %v7594 = vadd.f32 %v7385, %v7593
        %v7595 = vpop.f32.mrf.mxu0
        %7596 = vmatprep.mubr.bf16.mxu0 0
        %7597 = vmatmul.mubr.bf16.gmra.mxu0 %v7177
        %v7598 = vpop.f32.mrf.mxu0
        %v7599 = vadd.f32 %v7390, %v7598
        %v7600 = vpop.f32.mrf.mxu0
        %v7601 = vpop.f32.mrf.mxu0
        %v7602 = vadd.f32 %v7393, %v7601
        %v7603 = vpop.f32.mrf.mxu0
        %7604 = vmatprep.mubr.bf16.mxu0 0
        %7605 = vmatmul.mubr.bf16.gmra.mxu0 %v7178
        %v7606 = vpop.f32.mrf.mxu0
        %v7607 = vadd.f32 %v7398, %v7606
        %v7608 = vpop.f32.mrf.mxu0
        %v7609 = vpop.f32.mrf.mxu0
        %v7610 = vadd.f32 %v7401, %v7609
        %v7611 = vpop.f32.mrf.mxu0
        %7612 = vmatprep.mubr.bf16.mxu0 0
        %7613 = vmatmul.mubr.bf16.gmra.mxu0 %v7179
        %v7614 = vpop.f32.mrf.mxu0
        %v7615 = vadd.f32 %v7406, %v7614
        %v7616 = vpop.f32.mrf.mxu0
        %v7617 = vpop.f32.mrf.mxu0
        %v7618 = vadd.f32 %v7409, %v7617
        %v7619 = vpop.f32.mrf.mxu0
        %7620 = vmatprep.mubr.bf16.mxu0 0
        %7621 = vmatmul.mubr.bf16.gmra.mxu0 %v7180
        %v7622 = vpop.f32.mrf.mxu0
        %v7623 = vadd.f32 %v7414, %v7622
        %v7624 = vpop.f32.mrf.mxu0
        %v7625 = vpop.f32.mrf.mxu0
        %v7626 = vadd.f32 %v7417, %v7625
        %v7627 = vpop.f32.mrf.mxu0
        %7628 = vmatprep.mubr.bf16.mxu0 0
        %7629 = vmatmul.mubr.bf16.gmra.mxu0 %v7181
        %v7630 = vpop.f32.mrf.mxu0
        %v7631 = vadd.f32 %v7422, %v7630
        %v7632 = vpop.f32.mrf.mxu0
        %v7633 = vpop.f32.mrf.mxu0
        %v7634 = vadd.f32 %v7425, %v7633
        %v7635 = vpop.f32.mrf.mxu0
        %7636 = vmatprep.mubr.bf16.mxu0 0
        %7637 = vmatmul.mubr.bf16.gmra.mxu0 %v7182
        %v7638 = vpop.f32.mrf.mxu0
        %v7639 = vadd.f32 %v7430, %v7638
        %v7640 = vpop.f32.mrf.mxu0
        %v7641 = vpop.f32.mrf.mxu0
        %v7642 = vadd.f32 %v7433, %v7641
        %v7643 = vpop.f32.mrf.mxu0
        %7644 = vmatprep.mubr.bf16.mxu0 0
        %7645 = vmatmul.mubr.bf16.gmra.mxu0 %v7183
        %v7646 = vpop.f32.mrf.mxu0
        %v7647 = vadd.f32 %v7438, %v7646
        %v7648 = vpop.f32.mrf.mxu0
        %v7649 = vpop.f32.mrf.mxu0
        %v7650 = vadd.f32 %v7441, %v7649
        %v7651 = vpop.f32.mrf.mxu0
        %7652 = vmatprep.mubr.bf16.mxu0 0
        %7653 = vmatmul.mubr.bf16.gmra.mxu0 %v7184
        %v7654 = vpop.f32.mrf.mxu0
        %v7655 = vadd.f32 %v7446, %v7654
        %v7656 = vpop.f32.mrf.mxu0
        %v7657 = vpop.f32.mrf.mxu0
        %v7658 = vadd.f32 %v7449, %v7657
        %v7659 = vpop.f32.mrf.mxu0
        %7660 = vmatprep.mubr.bf16.mxu0 0
        %7661 = vmatmul.mubr.bf16.gmra.mxu0 %v7185
        %v7662 = vpop.f32.mrf.mxu0
        %v7663 = vadd.f32 %v7454, %v7662
        %v7664 = vpop.f32.mrf.mxu0
        %v7665 = vpop.f32.mrf.mxu0
        %v7666 = vadd.f32 %v7457, %v7665
        %v7667 = vpop.f32.mrf.mxu0
        %7668 = vmatprep.mubr.bf16.mxu0 0
        %7669 = vmatmul.mubr.bf16.gmra.mxu0 %v7186
        %v7670 = vpop.f32.mrf.mxu0
        %v7671 = vadd.f32 %v7462, %v7670
        %v7672 = vpop.f32.mrf.mxu0
        %v7673 = vpop.f32.mrf.mxu0
        %v7674 = vadd.f32 %v7465, %v7673
        %v7675 = vpop.f32.mrf.mxu0
        %7676 = vmatprep.mubr.bf16.mxu0 0
        %7677 = vmatmul.mubr.bf16.gmra.mxu0 %v7187
        %v7678 = vpop.f32.mrf.mxu0
        %v7679 = vadd.f32 %v7470, %v7678
        %v7680 = vpop.f32.mrf.mxu0
        %v7681 = vpop.f32.mrf.mxu0
        %v7682 = vadd.f32 %v7473, %v7681
        %v7683 = vpop.f32.mrf.mxu0
        %7684 = vmatprep.mubr.bf16.mxu0 0
        %7685 = vmatmul.mubr.bf16.gmra.mxu0 %v7188
        %v7686 = vpop.f32.mrf.mxu0
        %v7687 = vadd.f32 %v7478, %v7686
        %v7688 = vpop.f32.mrf.mxu0
        %v7689 = vpop.f32.mrf.mxu0
        %v7690 = vadd.f32 %v7481, %v7689
        %v7691 = vpop.f32.mrf.mxu0
        %7692 = vmatprep.mubr.bf16.mxu0 0
        %7693 = vmatmul.mubr.bf16.gmra.mxu0 %v7189
        %v7694 = vpop.f32.mrf.mxu0
        %v7695 = vadd.f32 %v7486, %v7694
        %v7696 = vpop.f32.mrf.mxu0
        %v7697 = vpop.f32.mrf.mxu0
        %v7698 = vadd.f32 %v7489, %v7697
        %v7699 = vpop.f32.mrf.mxu0
        %7700 = vmatprep.mubr.bf16.mxu0 0
        %7701 = vmatmul.mubr.bf16.gmra.mxu0 %v7190
        %v7702 = vpop.f32.mrf.mxu0
        %v7703 = vadd.f32 %v7494, %v7702
        %v7704 = vpop.f32.mrf.mxu0
        %v7705 = vpop.f32.mrf.mxu0
        %v7706 = vadd.f32 %v7497, %v7705
        %v7707 = vpop.f32.mrf.mxu0
        %7708 = vmatprep.mubr.bf16.mxu0 0
        %7709 = vmatmul.mubr.bf16.gmra.mxu0 %v7191
        %v7710 = vpop.f32.mrf.mxu0
        %v7711 = vadd.f32 %v7502, %v7710
        %v7712 = vpop.f32.mrf.mxu0
        %v7713 = vpop.f32.mrf.mxu0
        %v7714 = vadd.f32 %v7505, %v7713
        %v7715 = vpop.f32.mrf.mxu0
        %7716 = vdwg.mxu0
        %s7717 = scalar_lea.vmem [#allocation4], 128
        %v7718 = vld [vmem:[%s7717] sm:$0xf]
        %v7719 = vld [vmem:[%s7717 + $0x4] sm:$0xf]
        %v7720 = vld [vmem:[%s7717 + $0x8] sm:$0xf]
        %v7721 = vld [vmem:[%s7717 + $0xc] sm:$0xf]
        %v7722 = vld [vmem:[%s7717 + $0x10] sm:$0xf]
        %v7723 = vld [vmem:[%s7717 + $0x14] sm:$0xf]
        %v7724 = vld [vmem:[%s7717 + $0x18] sm:$0xf]
        %v7725 = vld [vmem:[%s7717 + $0x1c] sm:$0xf]
        %v7726 = vld [vmem:[%s7717 + $0x20] sm:$0xf]
        %v7727 = vld [vmem:[%s7717 + $0x24] sm:$0xf]
        %v7728 = vld [vmem:[%s7717 + $0x28] sm:$0xf]
        %v7729 = vld [vmem:[%s7717 + $0x2c] sm:$0xf]
        %v7730 = vld [vmem:[%s7717 + $0x30] sm:$0xf]
        %v7731 = vld [vmem:[%s7717 + $0x34] sm:$0xf]
        %v7732 = vld [vmem:[%s7717 + $0x38] sm:$0xf]
        %v7733 = vld [vmem:[%s7717 + $0x3c] sm:$0xf]
        %v7750 = vunpack.c.l.b16 %v7718
        %v7751 = vunpack.c.l.b16 %v7719
        %v7752 = vunpack.c.l.b16 %v7720
        %v7753 = vunpack.c.l.b16 %v7721
        %v7754 = vunpack.c.l.b16 %v7722
        %v7755 = vunpack.c.l.b16 %v7723
        %v7756 = vunpack.c.l.b16 %v7724
        %v7757 = vunpack.c.l.b16 %v7725
        %v7758 = vunpack.c.l.b16 %v7726
        %v7759 = vunpack.c.l.b16 %v7727
        %v7760 = vunpack.c.l.b16 %v7728
        %v7761 = vunpack.c.l.b16 %v7729
        %v7762 = vunpack.c.l.b16 %v7730
        %v7763 = vunpack.c.l.b16 %v7731
        %v7764 = vunpack.c.l.b16 %v7732
        %v7765 = vunpack.c.l.b16 %v7733
        %v7766 = vpack.c.b16 %v7751, %v7750
        %v7767 = vpack.c.b16 %v7753, %v7752
        %v7768 = vpack.c.b16 %v7755, %v7754
        %v7769 = vpack.c.b16 %v7757, %v7756
        %v7770 = vpack.c.b16 %v7759, %v7758
        %v7771 = vpack.c.b16 %v7761, %v7760
        %v7772 = vpack.c.b16 %v7763, %v7762
        %v7773 = vpack.c.b16 %v7765, %v7764
        %7782 = vmatprep.subr.bf16.mxu0 0
        %7783 = vmatpush1.bf16.msra.mxu0 %v7773
        %7784 = vmatprep.subr.bf16.mxu0 0
        %7785 = vmatpush1.bf16.msra.mxu0 %v7772
        %7786 = vmatprep.subr.bf16.mxu0 0
        %7787 = vmatpush1.bf16.msra.mxu0 %v7771
        %7788 = vmatprep.subr.bf16.mxu0 0
        %7789 = vmatpush1.bf16.msra.mxu0 %v7770
        %7790 = vmatprep.subr.bf16.mxu0 0
        %7791 = vmatpush1.bf16.msra.mxu0 %v7769
        %7792 = vmatprep.subr.bf16.mxu0 0
        %7793 = vmatpush1.bf16.msra.mxu0 %v7768
        %7794 = vmatprep.subr.bf16.mxu0 0
        %7795 = vmatpush1.bf16.msra.mxu0 %v7767
        %7796 = vmatprep.subr.bf16.mxu0 0
        %7797 = vmatpush1.bf16.msra.mxu0 %v7766
        %7798 = vmatprep.subr.bf16.mxu0 0
        %7799 = vmatpush2.bf16.msra.mxu0 0
        %7800 = vmatprep.subr.bf16.mxu0 0
        %7801 = vmatpush2.bf16.msra.mxu0 0
        %7802 = vmatprep.subr.bf16.mxu0 0
        %7803 = vmatpush2.bf16.msra.mxu0 0
        %7804 = vmatprep.subr.bf16.mxu0 0
        %7805 = vmatpush2.bf16.msra.mxu0 0
        %7806 = vmatprep.subr.bf16.mxu0 0
        %7807 = vmatpush2.bf16.msra.mxu0 0
        %7808 = vmatprep.subr.bf16.mxu0 0
        %7809 = vmatpush2.bf16.msra.mxu0 0
        %7810 = vmatprep.subr.bf16.mxu0 0
        %7811 = vmatpush2.bf16.msra.mxu0 0
        %7812 = vmatprep.subr.bf16.mxu0 0
        %7813 = vmatpush2.bf16.msra.mxu0 0
        %7814 = vmatprep.mubr.bf16.mxu0 0
        %7815 = vmatmul.mubr.bf16.gmra.mxu0 %v7248
        %v7816 = vpop.f32.mrf.mxu0
        %v7817 = vadd.f32 0.0, %v7816
        %v7818 = vpop.f32.mrf.mxu0
        %v7819 = vpop.f32.mrf.mxu0
        %v7820 = vadd.f32 0.0, %v7819
        %v7821 = vpop.f32.mrf.mxu0
        %7822 = vmatprep.mubr.bf16.mxu0 0
        %7823 = vmatmul.mubr.bf16.gmra.mxu0 %v7249
        %v7824 = vpop.f32.mrf.mxu0
        %v7825 = vadd.f32 0.0, %v7824
        %v7826 = vpop.f32.mrf.mxu0
        %v7827 = vpop.f32.mrf.mxu0
        %v7828 = vadd.f32 0.0, %v7827
        %v7829 = vpop.f32.mrf.mxu0
        %7830 = vmatprep.mubr.bf16.mxu0 0
        %7831 = vmatmul.mubr.bf16.gmra.mxu0 %v7250
        %v7832 = vpop.f32.mrf.mxu0
        %v7833 = vadd.f32 0.0, %v7832
        %v7834 = vpop.f32.mrf.mxu0
        %v7835 = vpop.f32.mrf.mxu0
        %v7836 = vadd.f32 0.0, %v7835
        %v7837 = vpop.f32.mrf.mxu0
        %7838 = vmatprep.mubr.bf16.mxu0 0
        %7839 = vmatmul.mubr.bf16.gmra.mxu0 %v7251
        %v7840 = vpop.f32.mrf.mxu0
        %v7841 = vadd.f32 0.0, %v7840
        %v7842 = vpop.f32.mrf.mxu0
        %v7843 = vpop.f32.mrf.mxu0
        %v7844 = vadd.f32 0.0, %v7843
        %v7845 = vpop.f32.mrf.mxu0
        %7846 = vmatprep.mubr.bf16.mxu0 0
        %7847 = vmatmul.mubr.bf16.gmra.mxu0 %v7252
        %v7848 = vpop.f32.mrf.mxu0
        %v7849 = vadd.f32 0.0, %v7848
        %v7850 = vpop.f32.mrf.mxu0
        %v7851 = vpop.f32.mrf.mxu0
        %v7852 = vadd.f32 0.0, %v7851
        %v7853 = vpop.f32.mrf.mxu0
        %7854 = vmatprep.mubr.bf16.mxu0 0
        %7855 = vmatmul.mubr.bf16.gmra.mxu0 %v7253
        %v7856 = vpop.f32.mrf.mxu0
        %v7857 = vadd.f32 0.0, %v7856
        %v7858 = vpop.f32.mrf.mxu0
        %v7859 = vpop.f32.mrf.mxu0
        %v7860 = vadd.f32 0.0, %v7859
        %v7861 = vpop.f32.mrf.mxu0
        %7862 = vmatprep.mubr.bf16.mxu0 0
        %7863 = vmatmul.mubr.bf16.gmra.mxu0 %v7254
        %v7864 = vpop.f32.mrf.mxu0
        %v7865 = vadd.f32 0.0, %v7864
        %v7866 = vpop.f32.mrf.mxu0
        %v7867 = vpop.f32.mrf.mxu0
        %v7868 = vadd.f32 0.0, %v7867
        %v7869 = vpop.f32.mrf.mxu0
        %7870 = vmatprep.mubr.bf16.mxu0 0
        %7871 = vmatmul.mubr.bf16.gmra.mxu0 %v7255
        %v7872 = vpop.f32.mrf.mxu0
        %v7873 = vadd.f32 0.0, %v7872
        %v7874 = vpop.f32.mrf.mxu0
        %v7875 = vpop.f32.mrf.mxu0
        %v7876 = vadd.f32 0.0, %v7875
        %v7877 = vpop.f32.mrf.mxu0
        %7878 = vmatprep.mubr.bf16.mxu0 0
        %7879 = vmatmul.mubr.bf16.gmra.mxu0 %v7256
        %v7880 = vpop.f32.mrf.mxu0
        %v7881 = vadd.f32 0.0, %v7880
        %v7882 = vpop.f32.mrf.mxu0
        %v7883 = vpop.f32.mrf.mxu0
        %v7884 = vadd.f32 0.0, %v7883
        %v7885 = vpop.f32.mrf.mxu0
        %7886 = vmatprep.mubr.bf16.mxu0 0
        %7887 = vmatmul.mubr.bf16.gmra.mxu0 %v7257
        %v7888 = vpop.f32.mrf.mxu0
        %v7889 = vadd.f32 0.0, %v7888
        %v7890 = vpop.f32.mrf.mxu0
        %v7891 = vpop.f32.mrf.mxu0
        %v7892 = vadd.f32 0.0, %v7891
        %v7893 = vpop.f32.mrf.mxu0
        %7894 = vmatprep.mubr.bf16.mxu0 0
        %7895 = vmatmul.mubr.bf16.gmra.mxu0 %v7258
        %v7896 = vpop.f32.mrf.mxu0
        %v7897 = vadd.f32 0.0, %v7896
        %v7898 = vpop.f32.mrf.mxu0
        %v7899 = vpop.f32.mrf.mxu0
        %v7900 = vadd.f32 0.0, %v7899
        %v7901 = vpop.f32.mrf.mxu0
        %7902 = vmatprep.mubr.bf16.mxu0 0
        %7903 = vmatmul.mubr.bf16.gmra.mxu0 %v7259
        %v7904 = vpop.f32.mrf.mxu0
        %v7905 = vadd.f32 0.0, %v7904
        %v7906 = vpop.f32.mrf.mxu0
        %v7907 = vpop.f32.mrf.mxu0
        %v7908 = vadd.f32 0.0, %v7907
        %v7909 = vpop.f32.mrf.mxu0
        %7910 = vmatprep.mubr.bf16.mxu0 0
        %7911 = vmatmul.mubr.bf16.gmra.mxu0 %v7260
        %v7912 = vpop.f32.mrf.mxu0
        %v7913 = vadd.f32 0.0, %v7912
        %v7914 = vpop.f32.mrf.mxu0
        %v7915 = vpop.f32.mrf.mxu0
        %v7916 = vadd.f32 0.0, %v7915
        %v7917 = vpop.f32.mrf.mxu0
        %7918 = vmatprep.mubr.bf16.mxu0 0
        %7919 = vmatmul.mubr.bf16.gmra.mxu0 %v7261
        %v7920 = vpop.f32.mrf.mxu0
        %v7921 = vadd.f32 0.0, %v7920
        %v7922 = vpop.f32.mrf.mxu0
        %v7923 = vpop.f32.mrf.mxu0
        %v7924 = vadd.f32 0.0, %v7923
        %v7925 = vpop.f32.mrf.mxu0
        %7926 = vmatprep.mubr.bf16.mxu0 0
        %7927 = vmatmul.mubr.bf16.gmra.mxu0 %v7262
        %v7928 = vpop.f32.mrf.mxu0
        %v7929 = vadd.f32 0.0, %v7928
        %v7930 = vpop.f32.mrf.mxu0
        %v7931 = vpop.f32.mrf.mxu0
        %v7932 = vadd.f32 0.0, %v7931
        %v7933 = vpop.f32.mrf.mxu0
        %7934 = vmatprep.mubr.bf16.mxu0 0
        %7935 = vmatmul.mubr.bf16.gmra.mxu0 %v7263
        %v7936 = vpop.f32.mrf.mxu0
        %v7937 = vadd.f32 0.0, %v7936
        %v7938 = vpop.f32.mrf.mxu0
        %v7939 = vpop.f32.mrf.mxu0
        %v7940 = vadd.f32 0.0, %v7939
        %v7941 = vpop.f32.mrf.mxu0
        %7942 = vdwg.mxu0
        %v7943 = vadd.f32 %v7591, %v7817
        %v7944 = vadd.f32 %v7594, %v7820
        %v7945 = vadd.f32 %v7599, %v7825
        %v7946 = vadd.f32 %v7602, %v7828
        %v7947 = vadd.f32 %v7607, %v7833
        %v7948 = vadd.f32 %v7610, %v7836
        %v7949 = vadd.f32 %v7615, %v7841
        %v7950 = vadd.f32 %v7618, %v7844
        %v7951 = vadd.f32 %v7623, %v7849
        %v7952 = vadd.f32 %v7626, %v7852
        %v7953 = vadd.f32 %v7631, %v7857
        %v7954 = vadd.f32 %v7634, %v7860
        %v7955 = vadd.f32 %v7639, %v7865
        %v7956 = vadd.f32 %v7642, %v7868
        %v7957 = vadd.f32 %v7647, %v7873
        %v7958 = vadd.f32 %v7650, %v7876
        %v7959 = vadd.f32 %v7655, %v7881
        %v7960 = vadd.f32 %v7658, %v7884
        %v7961 = vadd.f32 %v7663, %v7889
        %v7962 = vadd.f32 %v7666, %v7892
        %v7963 = vadd.f32 %v7671, %v7897
        %v7964 = vadd.f32 %v7674, %v7900
        %v7965 = vadd.f32 %v7679, %v7905
        %v7966 = vadd.f32 %v7682, %v7908
        %v7967 = vadd.f32 %v7687, %v7913
        %v7968 = vadd.f32 %v7690, %v7916
        %v7969 = vadd.f32 %v7695, %v7921
        %v7970 = vadd.f32 %v7698, %v7924
        %v7971 = vadd.f32 %v7703, %v7929
        %v7972 = vadd.f32 %v7706, %v7932
        %v7973 = vadd.f32 %v7711, %v7937
        %v7974 = vadd.f32 %v7714, %v7940
        %s7975 = scalar_lea.vmem [#allocation4], 192
        %v7976 = vld [vmem:[%s7975] sm:$0xf]
        %v7977 = vld [vmem:[%s7975 + $0x4] sm:$0xf]
        %v7978 = vld [vmem:[%s7975 + $0x8] sm:$0xf]
        %v7979 = vld [vmem:[%s7975 + $0xc] sm:$0xf]
        %v7980 = vld [vmem:[%s7975 + $0x10] sm:$0xf]
        %v7981 = vld [vmem:[%s7975 + $0x14] sm:$0xf]
        %v7982 = vld [vmem:[%s7975 + $0x18] sm:$0xf]
        %v7983 = vld [vmem:[%s7975 + $0x1c] sm:$0xf]
        %v7984 = vld [vmem:[%s7975 + $0x20] sm:$0xf]
        %v7985 = vld [vmem:[%s7975 + $0x24] sm:$0xf]
        %v7986 = vld [vmem:[%s7975 + $0x28] sm:$0xf]
        %v7987 = vld [vmem:[%s7975 + $0x2c] sm:$0xf]
        %v7988 = vld [vmem:[%s7975 + $0x30] sm:$0xf]
        %v7989 = vld [vmem:[%s7975 + $0x34] sm:$0xf]
        %v7990 = vld [vmem:[%s7975 + $0x38] sm:$0xf]
        %v7991 = vld [vmem:[%s7975 + $0x3c] sm:$0xf]
        %v8008 = vunpack.c.l.b16 %v7976
        %v8009 = vunpack.c.l.b16 %v7977
        %v8010 = vunpack.c.l.b16 %v7978
        %v8011 = vunpack.c.l.b16 %v7979
        %v8012 = vunpack.c.l.b16 %v7980
        %v8013 = vunpack.c.l.b16 %v7981
        %v8014 = vunpack.c.l.b16 %v7982
        %v8015 = vunpack.c.l.b16 %v7983
        %v8016 = vunpack.c.l.b16 %v7984
        %v8017 = vunpack.c.l.b16 %v7985
        %v8018 = vunpack.c.l.b16 %v7986
        %v8019 = vunpack.c.l.b16 %v7987
        %v8020 = vunpack.c.l.b16 %v7988
        %v8021 = vunpack.c.l.b16 %v7989
        %v8022 = vunpack.c.l.b16 %v7990
        %v8023 = vunpack.c.l.b16 %v7991
        %v8024 = vpack.c.b16 %v8009, %v8008
        %v8025 = vpack.c.b16 %v8011, %v8010
        %v8026 = vpack.c.b16 %v8013, %v8012
        %v8027 = vpack.c.b16 %v8015, %v8014
        %v8028 = vpack.c.b16 %v8017, %v8016
        %v8029 = vpack.c.b16 %v8019, %v8018
        %v8030 = vpack.c.b16 %v8021, %v8020
        %v8031 = vpack.c.b16 %v8023, %v8022
        %8040 = vmatprep.subr.bf16.mxu0 0
        %8041 = vmatpush1.bf16.msra.mxu0 %v8031
        %8042 = vmatprep.subr.bf16.mxu0 0
        %8043 = vmatpush1.bf16.msra.mxu0 %v8030
        %8044 = vmatprep.subr.bf16.mxu0 0
        %8045 = vmatpush1.bf16.msra.mxu0 %v8029
        %8046 = vmatprep.subr.bf16.mxu0 0
        %8047 = vmatpush1.bf16.msra.mxu0 %v8028
        %8048 = vmatprep.subr.bf16.mxu0 0
        %8049 = vmatpush1.bf16.msra.mxu0 %v8027
        %8050 = vmatprep.subr.bf16.mxu0 0
        %8051 = vmatpush1.bf16.msra.mxu0 %v8026
        %8052 = vmatprep.subr.bf16.mxu0 0
        %8053 = vmatpush1.bf16.msra.mxu0 %v8025
        %8054 = vmatprep.subr.bf16.mxu0 0
        %8055 = vmatpush1.bf16.msra.mxu0 %v8024
        %8056 = vmatprep.subr.bf16.mxu0 0
        %8057 = vmatpush2.bf16.msra.mxu0 0
        %8058 = vmatprep.subr.bf16.mxu0 0
        %8059 = vmatpush2.bf16.msra.mxu0 0
        %8060 = vmatprep.subr.bf16.mxu0 0
        %8061 = vmatpush2.bf16.msra.mxu0 0
        %8062 = vmatprep.subr.bf16.mxu0 0
        %8063 = vmatpush2.bf16.msra.mxu0 0
        %8064 = vmatprep.subr.bf16.mxu0 0
        %8065 = vmatpush2.bf16.msra.mxu0 0
        %8066 = vmatprep.subr.bf16.mxu0 0
        %8067 = vmatpush2.bf16.msra.mxu0 0
        %8068 = vmatprep.subr.bf16.mxu0 0
        %8069 = vmatpush2.bf16.msra.mxu0 0
        %8070 = vmatprep.subr.bf16.mxu0 0
        %8071 = vmatpush2.bf16.msra.mxu0 0
        %8072 = vmatprep.mubr.bf16.mxu0 0
        %8073 = vmatmul.mubr.bf16.gmra.mxu0 %v7177
        %v8074 = vpop.f32.mrf.mxu0
        %v8075 = vadd.f32 0.0, %v8074
        %v8076 = vpop.f32.mrf.mxu0
        %v8077 = vpop.f32.mrf.mxu0
        %v8078 = vadd.f32 0.0, %v8077
        %v8079 = vpop.f32.mrf.mxu0
        %8080 = vmatprep.mubr.bf16.mxu0 0
        %8081 = vmatmul.mubr.bf16.gmra.mxu0 %v7178
        %v8082 = vpop.f32.mrf.mxu0
        %v8083 = vadd.f32 0.0, %v8082
        %v8084 = vpop.f32.mrf.mxu0
        %v8085 = vpop.f32.mrf.mxu0
        %v8086 = vadd.f32 0.0, %v8085
        %v8087 = vpop.f32.mrf.mxu0
        %8088 = vmatprep.mubr.bf16.mxu0 0
        %8089 = vmatmul.mubr.bf16.gmra.mxu0 %v7179
        %v8090 = vpop.f32.mrf.mxu0
        %v8091 = vadd.f32 0.0, %v8090
        %v8092 = vpop.f32.mrf.mxu0
        %v8093 = vpop.f32.mrf.mxu0
        %v8094 = vadd.f32 0.0, %v8093
        %v8095 = vpop.f32.mrf.mxu0
        %8096 = vmatprep.mubr.bf16.mxu0 0
        %8097 = vmatmul.mubr.bf16.gmra.mxu0 %v7180
        %v8098 = vpop.f32.mrf.mxu0
        %v8099 = vadd.f32 0.0, %v8098
        %v8100 = vpop.f32.mrf.mxu0
        %v8101 = vpop.f32.mrf.mxu0
        %v8102 = vadd.f32 0.0, %v8101
        %v8103 = vpop.f32.mrf.mxu0
        %8104 = vmatprep.mubr.bf16.mxu0 0
        %8105 = vmatmul.mubr.bf16.gmra.mxu0 %v7181
        %v8106 = vpop.f32.mrf.mxu0
        %v8107 = vadd.f32 0.0, %v8106
        %v8108 = vpop.f32.mrf.mxu0
        %v8109 = vpop.f32.mrf.mxu0
        %v8110 = vadd.f32 0.0, %v8109
        %v8111 = vpop.f32.mrf.mxu0
        %8112 = vmatprep.mubr.bf16.mxu0 0
        %8113 = vmatmul.mubr.bf16.gmra.mxu0 %v7182
        %v8114 = vpop.f32.mrf.mxu0
        %v8115 = vadd.f32 0.0, %v8114
        %v8116 = vpop.f32.mrf.mxu0
        %v8117 = vpop.f32.mrf.mxu0
        %v8118 = vadd.f32 0.0, %v8117
        %v8119 = vpop.f32.mrf.mxu0
        %8120 = vmatprep.mubr.bf16.mxu0 0
        %8121 = vmatmul.mubr.bf16.gmra.mxu0 %v7183
        %v8122 = vpop.f32.mrf.mxu0
        %v8123 = vadd.f32 0.0, %v8122
        %v8124 = vpop.f32.mrf.mxu0
        %v8125 = vpop.f32.mrf.mxu0
        %v8126 = vadd.f32 0.0, %v8125
        %v8127 = vpop.f32.mrf.mxu0
        %8128 = vmatprep.mubr.bf16.mxu0 0
        %8129 = vmatmul.mubr.bf16.gmra.mxu0 %v7184
        %v8130 = vpop.f32.mrf.mxu0
        %v8131 = vadd.f32 0.0, %v8130
        %v8132 = vpop.f32.mrf.mxu0
        %v8133 = vpop.f32.mrf.mxu0
        %v8134 = vadd.f32 0.0, %v8133
        %v8135 = vpop.f32.mrf.mxu0
        %8136 = vmatprep.mubr.bf16.mxu0 0
        %8137 = vmatmul.mubr.bf16.gmra.mxu0 %v7185
        %v8138 = vpop.f32.mrf.mxu0
        %v8139 = vadd.f32 0.0, %v8138
        %v8140 = vpop.f32.mrf.mxu0
        %v8141 = vpop.f32.mrf.mxu0
        %v8142 = vadd.f32 0.0, %v8141
        %v8143 = vpop.f32.mrf.mxu0
        %8144 = vmatprep.mubr.bf16.mxu0 0
        %8145 = vmatmul.mubr.bf16.gmra.mxu0 %v7186
        %v8146 = vpop.f32.mrf.mxu0
        %v8147 = vadd.f32 0.0, %v8146
        %v8148 = vpop.f32.mrf.mxu0
        %v8149 = vpop.f32.mrf.mxu0
        %v8150 = vadd.f32 0.0, %v8149
        %v8151 = vpop.f32.mrf.mxu0
        %8152 = vmatprep.mubr.bf16.mxu0 0
        %8153 = vmatmul.mubr.bf16.gmra.mxu0 %v7187
        %v8154 = vpop.f32.mrf.mxu0
        %v8155 = vadd.f32 0.0, %v8154
        %v8156 = vpop.f32.mrf.mxu0
        %v8157 = vpop.f32.mrf.mxu0
        %v8158 = vadd.f32 0.0, %v8157
        %v8159 = vpop.f32.mrf.mxu0
        %8160 = vmatprep.mubr.bf16.mxu0 0
        %8161 = vmatmul.mubr.bf16.gmra.mxu0 %v7188
        %v8162 = vpop.f32.mrf.mxu0
        %v8163 = vadd.f32 0.0, %v8162
        %v8164 = vpop.f32.mrf.mxu0
        %v8165 = vpop.f32.mrf.mxu0
        %v8166 = vadd.f32 0.0, %v8165
        %v8167 = vpop.f32.mrf.mxu0
        %8168 = vmatprep.mubr.bf16.mxu0 0
        %8169 = vmatmul.mubr.bf16.gmra.mxu0 %v7189
        %v8170 = vpop.f32.mrf.mxu0
        %v8171 = vadd.f32 0.0, %v8170
        %v8172 = vpop.f32.mrf.mxu0
        %v8173 = vpop.f32.mrf.mxu0
        %v8174 = vadd.f32 0.0, %v8173
        %v8175 = vpop.f32.mrf.mxu0
        %8176 = vmatprep.mubr.bf16.mxu0 0
        %8177 = vmatmul.mubr.bf16.gmra.mxu0 %v7190
        %v8178 = vpop.f32.mrf.mxu0
        %v8179 = vadd.f32 0.0, %v8178
        %v8180 = vpop.f32.mrf.mxu0
        %v8181 = vpop.f32.mrf.mxu0
        %v8182 = vadd.f32 0.0, %v8181
        %v8183 = vpop.f32.mrf.mxu0
        %8184 = vmatprep.mubr.bf16.mxu0 0
        %8185 = vmatmul.mubr.bf16.gmra.mxu0 %v7191
        %v8186 = vpop.f32.mrf.mxu0
        %v8187 = vadd.f32 0.0, %v8186
        %v8188 = vpop.f32.mrf.mxu0
        %v8189 = vpop.f32.mrf.mxu0
        %v8190 = vadd.f32 0.0, %v8189
        %v8191 = vpop.f32.mrf.mxu0
        %8192 = vmatprep.mubr.bf16.mxu0 0
        %8193 = vmatmul.mubr.bf16.gmra.mxu0 %v7192
        %v8194 = vpop.f32.mrf.mxu0
        %v8195 = vadd.f32 0.0, %v8194
        %v8196 = vpop.f32.mrf.mxu0
        %v8197 = vpop.f32.mrf.mxu0
        %v8198 = vadd.f32 0.0, %v8197
        %v8199 = vpop.f32.mrf.mxu0
        %8200 = vdwg.mxu0
        %v8201 = vadd.f32 %v7943, %v8075
        %v8202 = vadd.f32 %v7944, %v8078
        %v8203 = vadd.f32 %v7945, %v8083
        %v8204 = vadd.f32 %v7946, %v8086
        %v8205 = vadd.f32 %v7947, %v8091
        %v8206 = vadd.f32 %v7948, %v8094
        %v8207 = vadd.f32 %v7949, %v8099
        %v8208 = vadd.f32 %v7950, %v8102
        %v8209 = vadd.f32 %v7951, %v8107
        %v8210 = vadd.f32 %v7952, %v8110
        %v8211 = vadd.f32 %v7953, %v8115
        %v8212 = vadd.f32 %v7954, %v8118
        %v8213 = vadd.f32 %v7955, %v8123
        %v8214 = vadd.f32 %v7956, %v8126
        %v8215 = vadd.f32 %v7957, %v8131
        %v8216 = vadd.f32 %v7958, %v8134
        %v8217 = vadd.f32 %v7959, %v8139
        %v8218 = vadd.f32 %v7960, %v8142
        %v8219 = vadd.f32 %v7961, %v8147
        %v8220 = vadd.f32 %v7962, %v8150
        %v8221 = vadd.f32 %v7963, %v8155
        %v8222 = vadd.f32 %v7964, %v8158
        %v8223 = vadd.f32 %v7965, %v8163
        %v8224 = vadd.f32 %v7966, %v8166
        %v8225 = vadd.f32 %v7967, %v8171
        %v8226 = vadd.f32 %v7968, %v8174
        %v8227 = vadd.f32 %v7969, %v8179
        %v8228 = vadd.f32 %v7970, %v8182
        %v8229 = vadd.f32 %v7971, %v8187
        %v8230 = vadd.f32 %v7972, %v8190
        %v8231 = vadd.f32 %v7973, %v8195
        %v8232 = vadd.f32 %v7974, %v8198
        %s8233 = scalar_lea.vmem [#allocation4], 256
        %v8234 = vld [vmem:[%s8233] sm:$0xf]
        %v8235 = vld [vmem:[%s8233 + $0x4] sm:$0xf]
        %v8236 = vld [vmem:[%s8233 + $0x8] sm:$0xf]
        %v8237 = vld [vmem:[%s8233 + $0xc] sm:$0xf]
        %v8238 = vld [vmem:[%s8233 + $0x10] sm:$0xf]
        %v8239 = vld [vmem:[%s8233 + $0x14] sm:$0xf]
        %v8240 = vld [vmem:[%s8233 + $0x18] sm:$0xf]
        %v8241 = vld [vmem:[%s8233 + $0x1c] sm:$0xf]
        %v8242 = vld [vmem:[%s8233 + $0x20] sm:$0xf]
        %v8243 = vld [vmem:[%s8233 + $0x24] sm:$0xf]
        %v8244 = vld [vmem:[%s8233 + $0x28] sm:$0xf]
        %v8245 = vld [vmem:[%s8233 + $0x2c] sm:$0xf]
        %v8246 = vld [vmem:[%s8233 + $0x30] sm:$0xf]
        %v8247 = vld [vmem:[%s8233 + $0x34] sm:$0xf]
        %v8248 = vld [vmem:[%s8233 + $0x38] sm:$0xf]
        %v8249 = vld [vmem:[%s8233 + $0x3c] sm:$0xf]
        %v8266 = vunpack.c.l.b16 %v8234
        %v8267 = vunpack.c.l.b16 %v8235
        %v8268 = vunpack.c.l.b16 %v8236
        %v8269 = vunpack.c.l.b16 %v8237
        %v8270 = vunpack.c.l.b16 %v8238
        %v8271 = vunpack.c.l.b16 %v8239
        %v8272 = vunpack.c.l.b16 %v8240
        %v8273 = vunpack.c.l.b16 %v8241
        %v8274 = vunpack.c.l.b16 %v8242
        %v8275 = vunpack.c.l.b16 %v8243
        %v8276 = vunpack.c.l.b16 %v8244
        %v8277 = vunpack.c.l.b16 %v8245
        %v8278 = vunpack.c.l.b16 %v8246
        %v8279 = vunpack.c.l.b16 %v8247
        %v8280 = vunpack.c.l.b16 %v8248
        %v8281 = vunpack.c.l.b16 %v8249
        %v8282 = vpack.c.b16 %v8267, %v8266
        %v8283 = vpack.c.b16 %v8269, %v8268
        %v8284 = vpack.c.b16 %v8271, %v8270
        %v8285 = vpack.c.b16 %v8273, %v8272
        %v8286 = vpack.c.b16 %v8275, %v8274
        %v8287 = vpack.c.b16 %v8277, %v8276
        %v8288 = vpack.c.b16 %v8279, %v8278
        %v8289 = vpack.c.b16 %v8281, %v8280
        %8298 = vmatprep.subr.bf16.mxu0 0
        %8299 = vmatpush1.bf16.msra.mxu0 %v8289
        %8300 = vmatprep.subr.bf16.mxu0 0
        %8301 = vmatpush1.bf16.msra.mxu0 %v8288
        %8302 = vmatprep.subr.bf16.mxu0 0
        %8303 = vmatpush1.bf16.msra.mxu0 %v8287
        %8304 = vmatprep.subr.bf16.mxu0 0
        %8305 = vmatpush1.bf16.msra.mxu0 %v8286
        %8306 = vmatprep.subr.bf16.mxu0 0
        %8307 = vmatpush1.bf16.msra.mxu0 %v8285
        %8308 = vmatprep.subr.bf16.mxu0 0
        %8309 = vmatpush1.bf16.msra.mxu0 %v8284
        %8310 = vmatprep.subr.bf16.mxu0 0
        %8311 = vmatpush1.bf16.msra.mxu0 %v8283
        %8312 = vmatprep.subr.bf16.mxu0 0
        %8313 = vmatpush1.bf16.msra.mxu0 %v8282
        %8314 = vmatprep.subr.bf16.mxu0 0
        %8315 = vmatpush2.bf16.msra.mxu0 0
        %8316 = vmatprep.subr.bf16.mxu0 0
        %8317 = vmatpush2.bf16.msra.mxu0 0
        %8318 = vmatprep.subr.bf16.mxu0 0
        %8319 = vmatpush2.bf16.msra.mxu0 0
        %8320 = vmatprep.subr.bf16.mxu0 0
        %8321 = vmatpush2.bf16.msra.mxu0 0
        %8322 = vmatprep.subr.bf16.mxu0 0
        %8323 = vmatpush2.bf16.msra.mxu0 0
        %8324 = vmatprep.subr.bf16.mxu0 0
        %8325 = vmatpush2.bf16.msra.mxu0 0
        %8326 = vmatprep.subr.bf16.mxu0 0
        %8327 = vmatpush2.bf16.msra.mxu0 0
        %8328 = vmatprep.subr.bf16.mxu0 0
        %8329 = vmatpush2.bf16.msra.mxu0 0
        %8330 = vmatprep.mubr.bf16.mxu0 0
        %8331 = vmatmul.mubr.bf16.gmra.mxu0 %v7015
        %v8332 = vpop.f32.mrf.mxu0
        %v8333 = vadd.f32 0.0, %v8332
        %v8334 = vpop.f32.mrf.mxu0
        %v8335 = vpop.f32.mrf.mxu0
        %v8336 = vadd.f32 0.0, %v8335
        %v8337 = vpop.f32.mrf.mxu0
        %8338 = vmatprep.mubr.bf16.mxu0 0
        %8339 = vmatmul.mubr.bf16.gmra.mxu0 %v7016
        %v8340 = vpop.f32.mrf.mxu0
        %v8341 = vadd.f32 0.0, %v8340
        %v8342 = vpop.f32.mrf.mxu0
        %v8343 = vpop.f32.mrf.mxu0
        %v8344 = vadd.f32 0.0, %v8343
        %v8345 = vpop.f32.mrf.mxu0
        %8346 = vmatprep.mubr.bf16.mxu0 0
        %8347 = vmatmul.mubr.bf16.gmra.mxu0 %v7017
        %v8348 = vpop.f32.mrf.mxu0
        %v8349 = vadd.f32 0.0, %v8348
        %v8350 = vpop.f32.mrf.mxu0
        %v8351 = vpop.f32.mrf.mxu0
        %v8352 = vadd.f32 0.0, %v8351
        %v8353 = vpop.f32.mrf.mxu0
        %8354 = vmatprep.mubr.bf16.mxu0 0
        %8355 = vmatmul.mubr.bf16.gmra.mxu0 %v7018
        %v8356 = vpop.f32.mrf.mxu0
        %v8357 = vadd.f32 0.0, %v8356
        %v8358 = vpop.f32.mrf.mxu0
        %v8359 = vpop.f32.mrf.mxu0
        %v8360 = vadd.f32 0.0, %v8359
        %v8361 = vpop.f32.mrf.mxu0
        %8362 = vmatprep.mubr.bf16.mxu0 0
        %8363 = vmatmul.mubr.bf16.gmra.mxu0 %v7019
        %v8364 = vpop.f32.mrf.mxu0
        %v8365 = vadd.f32 0.0, %v8364
        %v8366 = vpop.f32.mrf.mxu0
        %v8367 = vpop.f32.mrf.mxu0
        %v8368 = vadd.f32 0.0, %v8367
        %v8369 = vpop.f32.mrf.mxu0
        %8370 = vmatprep.mubr.bf16.mxu0 0
        %8371 = vmatmul.mubr.bf16.gmra.mxu0 %v7020
        %v8372 = vpop.f32.mrf.mxu0
        %v8373 = vadd.f32 0.0, %v8372
        %v8374 = vpop.f32.mrf.mxu0
        %v8375 = vpop.f32.mrf.mxu0
        %v8376 = vadd.f32 0.0, %v8375
        %v8377 = vpop.f32.mrf.mxu0
        %8378 = vmatprep.mubr.bf16.mxu0 0
        %8379 = vmatmul.mubr.bf16.gmra.mxu0 %v7021
        %v8380 = vpop.f32.mrf.mxu0
        %v8381 = vadd.f32 0.0, %v8380
        %v8382 = vpop.f32.mrf.mxu0
        %v8383 = vpop.f32.mrf.mxu0
        %v8384 = vadd.f32 0.0, %v8383
        %v8385 = vpop.f32.mrf.mxu0
        %8386 = vmatprep.mubr.bf16.mxu0 0
        %8387 = vmatmul.mubr.bf16.gmra.mxu0 %v7022
        %v8388 = vpop.f32.mrf.mxu0
        %v8389 = vadd.f32 0.0, %v8388
        %v8390 = vpop.f32.mrf.mxu0
        %v8391 = vpop.f32.mrf.mxu0
        %v8392 = vadd.f32 0.0, %v8391
        %v8393 = vpop.f32.mrf.mxu0
        %8394 = vmatprep.mubr.bf16.mxu0 0
        %8395 = vmatmul.mubr.bf16.gmra.mxu0 %v7023
        %v8396 = vpop.f32.mrf.mxu0
        %v8397 = vadd.f32 0.0, %v8396
        %v8398 = vpop.f32.mrf.mxu0
        %v8399 = vpop.f32.mrf.mxu0
        %v8400 = vadd.f32 0.0, %v8399
        %v8401 = vpop.f32.mrf.mxu0
        %8402 = vmatprep.mubr.bf16.mxu0 0
        %8403 = vmatmul.mubr.bf16.gmra.mxu0 %v7024
        %v8404 = vpop.f32.mrf.mxu0
        %v8405 = vadd.f32 0.0, %v8404
        %v8406 = vpop.f32.mrf.mxu0
        %v8407 = vpop.f32.mrf.mxu0
        %v8408 = vadd.f32 0.0, %v8407
        %v8409 = vpop.f32.mrf.mxu0
        %8410 = vmatprep.mubr.bf16.mxu0 0
        %8411 = vmatmul.mubr.bf16.gmra.mxu0 %v7025
        %v8412 = vpop.f32.mrf.mxu0
        %v8413 = vadd.f32 0.0, %v8412
        %v8414 = vpop.f32.mrf.mxu0
        %v8415 = vpop.f32.mrf.mxu0
        %v8416 = vadd.f32 0.0, %v8415
        %v8417 = vpop.f32.mrf.mxu0
        %8418 = vmatprep.mubr.bf16.mxu0 0
        %8419 = vmatmul.mubr.bf16.gmra.mxu0 %v7026
        %v8420 = vpop.f32.mrf.mxu0
        %v8421 = vadd.f32 0.0, %v8420
        %v8422 = vpop.f32.mrf.mxu0
        %v8423 = vpop.f32.mrf.mxu0
        %v8424 = vadd.f32 0.0, %v8423
        %v8425 = vpop.f32.mrf.mxu0
        %8426 = vmatprep.mubr.bf16.mxu0 0
        %8427 = vmatmul.mubr.bf16.gmra.mxu0 %v7027
        %v8428 = vpop.f32.mrf.mxu0
        %v8429 = vadd.f32 0.0, %v8428
        %v8430 = vpop.f32.mrf.mxu0
        %v8431 = vpop.f32.mrf.mxu0
        %v8432 = vadd.f32 0.0, %v8431
        %v8433 = vpop.f32.mrf.mxu0
        %8434 = vmatprep.mubr.bf16.mxu0 0
        %8435 = vmatmul.mubr.bf16.gmra.mxu0 %v7028
        %v8436 = vpop.f32.mrf.mxu0
        %v8437 = vadd.f32 0.0, %v8436
        %v8438 = vpop.f32.mrf.mxu0
        %v8439 = vpop.f32.mrf.mxu0
        %v8440 = vadd.f32 0.0, %v8439
        %v8441 = vpop.f32.mrf.mxu0
        %8442 = vmatprep.mubr.bf16.mxu0 0
        %8443 = vmatmul.mubr.bf16.gmra.mxu0 %v7029
        %v8444 = vpop.f32.mrf.mxu0
        %v8445 = vadd.f32 0.0, %v8444
        %v8446 = vpop.f32.mrf.mxu0
        %v8447 = vpop.f32.mrf.mxu0
        %v8448 = vadd.f32 0.0, %v8447
        %v8449 = vpop.f32.mrf.mxu0
        %8450 = vmatprep.mubr.bf16.mxu0 0
        %8451 = vmatmul.mubr.bf16.gmra.mxu0 %v7030
        %v8452 = vpop.f32.mrf.mxu0
        %v8453 = vadd.f32 0.0, %v8452
        %v8454 = vpop.f32.mrf.mxu0
        %v8455 = vpop.f32.mrf.mxu0
        %v8456 = vadd.f32 0.0, %v8455
        %v8457 = vpop.f32.mrf.mxu0
        %8458 = vdwg.mxu0
        %v8459 = vadd.f32 %v8201, %v8333
        %v8460 = vadd.f32 %v8202, %v8336
        %v8461 = vadd.f32 %v8203, %v8341
        %v8462 = vadd.f32 %v8204, %v8344
        %v8463 = vadd.f32 %v8205, %v8349
        %v8464 = vadd.f32 %v8206, %v8352
        %v8465 = vadd.f32 %v8207, %v8357
        %v8466 = vadd.f32 %v8208, %v8360
        %v8467 = vadd.f32 %v8209, %v8365
        %v8468 = vadd.f32 %v8210, %v8368
        %v8469 = vadd.f32 %v8211, %v8373
        %v8470 = vadd.f32 %v8212, %v8376
        %v8471 = vadd.f32 %v8213, %v8381
        %v8472 = vadd.f32 %v8214, %v8384
        %v8473 = vadd.f32 %v8215, %v8389
        %v8474 = vadd.f32 %v8216, %v8392
        %v8475 = vadd.f32 %v8217, %v8397
        %v8476 = vadd.f32 %v8218, %v8400
        %v8477 = vadd.f32 %v8219, %v8405
        %v8478 = vadd.f32 %v8220, %v8408
        %v8479 = vadd.f32 %v8221, %v8413
        %v8480 = vadd.f32 %v8222, %v8416
        %v8481 = vadd.f32 %v8223, %v8421
        %v8482 = vadd.f32 %v8224, %v8424
        %v8483 = vadd.f32 %v8225, %v8429
        %v8484 = vadd.f32 %v8226, %v8432
        %v8485 = vadd.f32 %v8227, %v8437
        %v8486 = vadd.f32 %v8228, %v8440
        %v8487 = vadd.f32 %v8229, %v8445
        %v8488 = vadd.f32 %v8230, %v8448
        %v8489 = vadd.f32 %v8231, %v8453
        %v8490 = vadd.f32 %v8232, %v8456
        %s8491 = scalar_lea.vmem [#allocation4], 320
        %v8492 = vld [vmem:[%s8491] sm:$0xf]
        %v8493 = vld [vmem:[%s8491 + $0x4] sm:$0xf]
        %v8494 = vld [vmem:[%s8491 + $0x8] sm:$0xf]
        %v8495 = vld [vmem:[%s8491 + $0xc] sm:$0xf]
        %v8496 = vld [vmem:[%s8491 + $0x10] sm:$0xf]
        %v8497 = vld [vmem:[%s8491 + $0x14] sm:$0xf]
        %v8498 = vld [vmem:[%s8491 + $0x18] sm:$0xf]
        %v8499 = vld [vmem:[%s8491 + $0x1c] sm:$0xf]
        %v8500 = vld [vmem:[%s8491 + $0x20] sm:$0xf]
        %v8501 = vld [vmem:[%s8491 + $0x24] sm:$0xf]
        %v8502 = vld [vmem:[%s8491 + $0x28] sm:$0xf]
        %v8503 = vld [vmem:[%s8491 + $0x2c] sm:$0xf]
        %v8504 = vld [vmem:[%s8491 + $0x30] sm:$0xf]
        %v8505 = vld [vmem:[%s8491 + $0x34] sm:$0xf]
        %v8506 = vld [vmem:[%s8491 + $0x38] sm:$0xf]
        %v8507 = vld [vmem:[%s8491 + $0x3c] sm:$0xf]
        %v8524 = vunpack.c.l.b16 %v8492
        %v8525 = vunpack.c.l.b16 %v8493
        %v8526 = vunpack.c.l.b16 %v8494
        %v8527 = vunpack.c.l.b16 %v8495
        %v8528 = vunpack.c.l.b16 %v8496
        %v8529 = vunpack.c.l.b16 %v8497
        %v8530 = vunpack.c.l.b16 %v8498
        %v8531 = vunpack.c.l.b16 %v8499
        %v8532 = vunpack.c.l.b16 %v8500
        %v8533 = vunpack.c.l.b16 %v8501
        %v8534 = vunpack.c.l.b16 %v8502
        %v8535 = vunpack.c.l.b16 %v8503
        %v8536 = vunpack.c.l.b16 %v8504
        %v8537 = vunpack.c.l.b16 %v8505
        %v8538 = vunpack.c.l.b16 %v8506
        %v8539 = vunpack.c.l.b16 %v8507
        %v8540 = vpack.c.b16 %v8525, %v8524
        %v8541 = vpack.c.b16 %v8527, %v8526
        %v8542 = vpack.c.b16 %v8529, %v8528
        %v8543 = vpack.c.b16 %v8531, %v8530
        %v8544 = vpack.c.b16 %v8533, %v8532
        %v8545 = vpack.c.b16 %v8535, %v8534
        %v8546 = vpack.c.b16 %v8537, %v8536
        %v8547 = vpack.c.b16 %v8539, %v8538
        %8556 = vmatprep.subr.bf16.mxu0 0
        %8557 = vmatpush1.bf16.msra.mxu0 %v8547
        %8558 = vmatprep.subr.bf16.mxu0 0
        %8559 = vmatpush1.bf16.msra.mxu0 %v8546
        %8560 = vmatprep.subr.bf16.mxu0 0
        %8561 = vmatpush1.bf16.msra.mxu0 %v8545
        %8562 = vmatprep.subr.bf16.mxu0 0
        %8563 = vmatpush1.bf16.msra.mxu0 %v8544
        %8564 = vmatprep.subr.bf16.mxu0 0
        %8565 = vmatpush1.bf16.msra.mxu0 %v8543
        %8566 = vmatprep.subr.bf16.mxu0 0
        %8567 = vmatpush1.bf16.msra.mxu0 %v8542
        %8568 = vmatprep.subr.bf16.mxu0 0
        %8569 = vmatpush1.bf16.msra.mxu0 %v8541
        %8570 = vmatprep.subr.bf16.mxu0 0
        %8571 = vmatpush1.bf16.msra.mxu0 %v8540
        %8572 = vmatprep.subr.bf16.mxu0 0
        %8573 = vmatpush2.bf16.msra.mxu0 0
        %8574 = vmatprep.subr.bf16.mxu0 0
        %8575 = vmatpush2.bf16.msra.mxu0 0
        %8576 = vmatprep.subr.bf16.mxu0 0
        %8577 = vmatpush2.bf16.msra.mxu0 0
        %8578 = vmatprep.subr.bf16.mxu0 0
        %8579 = vmatpush2.bf16.msra.mxu0 0
        %8580 = vmatprep.subr.bf16.mxu0 0
        %8581 = vmatpush2.bf16.msra.mxu0 0
        %8582 = vmatprep.subr.bf16.mxu0 0
        %8583 = vmatpush2.bf16.msra.mxu0 0
        %8584 = vmatprep.subr.bf16.mxu0 0
        %8585 = vmatpush2.bf16.msra.mxu0 0
        %8586 = vmatprep.subr.bf16.mxu0 0
        %8587 = vmatpush2.bf16.msra.mxu0 0
        %8588 = vmatprep.mubr.bf16.mxu0 0
        %8589 = vmatmul.mubr.bf16.gmra.mxu0 %v7249
        %v8590 = vpop.f32.mrf.mxu0
        %v8591 = vadd.f32 0.0, %v8590
        %v8592 = vpop.f32.mrf.mxu0
        %v8593 = vpop.f32.mrf.mxu0
        %v8594 = vadd.f32 0.0, %v8593
        %v8595 = vpop.f32.mrf.mxu0
        %8596 = vmatprep.mubr.bf16.mxu0 0
        %8597 = vmatmul.mubr.bf16.gmra.mxu0 %v7250
        %v8598 = vpop.f32.mrf.mxu0
        %v8599 = vadd.f32 0.0, %v8598
        %v8600 = vpop.f32.mrf.mxu0
        %v8601 = vpop.f32.mrf.mxu0
        %v8602 = vadd.f32 0.0, %v8601
        %v8603 = vpop.f32.mrf.mxu0
        %8604 = vmatprep.mubr.bf16.mxu0 0
        %8605 = vmatmul.mubr.bf16.gmra.mxu0 %v7251
        %v8606 = vpop.f32.mrf.mxu0
        %v8607 = vadd.f32 0.0, %v8606
        %v8608 = vpop.f32.mrf.mxu0
        %v8609 = vpop.f32.mrf.mxu0
        %v8610 = vadd.f32 0.0, %v8609
        %v8611 = vpop.f32.mrf.mxu0
        %8612 = vmatprep.mubr.bf16.mxu0 0
        %8613 = vmatmul.mubr.bf16.gmra.mxu0 %v7252
        %v8614 = vpop.f32.mrf.mxu0
        %v8615 = vadd.f32 0.0, %v8614
        %v8616 = vpop.f32.mrf.mxu0
        %v8617 = vpop.f32.mrf.mxu0
        %v8618 = vadd.f32 0.0, %v8617
        %v8619 = vpop.f32.mrf.mxu0
        %8620 = vmatprep.mubr.bf16.mxu0 0
        %8621 = vmatmul.mubr.bf16.gmra.mxu0 %v7253
        %v8622 = vpop.f32.mrf.mxu0
        %v8623 = vadd.f32 0.0, %v8622
        %v8624 = vpop.f32.mrf.mxu0
        %v8625 = vpop.f32.mrf.mxu0
        %v8626 = vadd.f32 0.0, %v8625
        %v8627 = vpop.f32.mrf.mxu0
        %8628 = vmatprep.mubr.bf16.mxu0 0
        %8629 = vmatmul.mubr.bf16.gmra.mxu0 %v7254
        %v8630 = vpop.f32.mrf.mxu0
        %v8631 = vadd.f32 0.0, %v8630
        %v8632 = vpop.f32.mrf.mxu0
        %v8633 = vpop.f32.mrf.mxu0
        %v8634 = vadd.f32 0.0, %v8633
        %v8635 = vpop.f32.mrf.mxu0
        %8636 = vmatprep.mubr.bf16.mxu0 0
        %8637 = vmatmul.mubr.bf16.gmra.mxu0 %v7255
        %v8638 = vpop.f32.mrf.mxu0
        %v8639 = vadd.f32 0.0, %v8638
        %v8640 = vpop.f32.mrf.mxu0
        %v8641 = vpop.f32.mrf.mxu0
        %v8642 = vadd.f32 0.0, %v8641
        %v8643 = vpop.f32.mrf.mxu0
        %8644 = vmatprep.mubr.bf16.mxu0 0
        %8645 = vmatmul.mubr.bf16.gmra.mxu0 %v7256
        %v8646 = vpop.f32.mrf.mxu0
        %v8647 = vadd.f32 0.0, %v8646
        %v8648 = vpop.f32.mrf.mxu0
        %v8649 = vpop.f32.mrf.mxu0
        %v8650 = vadd.f32 0.0, %v8649
        %v8651 = vpop.f32.mrf.mxu0
        %8652 = vmatprep.mubr.bf16.mxu0 0
        %8653 = vmatmul.mubr.bf16.gmra.mxu0 %v7257
        %v8654 = vpop.f32.mrf.mxu0
        %v8655 = vadd.f32 0.0, %v8654
        %v8656 = vpop.f32.mrf.mxu0
        %v8657 = vpop.f32.mrf.mxu0
        %v8658 = vadd.f32 0.0, %v8657
        %v8659 = vpop.f32.mrf.mxu0
        %8660 = vmatprep.mubr.bf16.mxu0 0
        %8661 = vmatmul.mubr.bf16.gmra.mxu0 %v7258
        %v8662 = vpop.f32.mrf.mxu0
        %v8663 = vadd.f32 0.0, %v8662
        %v8664 = vpop.f32.mrf.mxu0
        %v8665 = vpop.f32.mrf.mxu0
        %v8666 = vadd.f32 0.0, %v8665
        %v8667 = vpop.f32.mrf.mxu0
        %8668 = vmatprep.mubr.bf16.mxu0 0
        %8669 = vmatmul.mubr.bf16.gmra.mxu0 %v7259
        %v8670 = vpop.f32.mrf.mxu0
        %v8671 = vadd.f32 0.0, %v8670
        %v8672 = vpop.f32.mrf.mxu0
        %v8673 = vpop.f32.mrf.mxu0
        %v8674 = vadd.f32 0.0, %v8673
        %v8675 = vpop.f32.mrf.mxu0
        %8676 = vmatprep.mubr.bf16.mxu0 0
        %8677 = vmatmul.mubr.bf16.gmra.mxu0 %v7260
        %v8678 = vpop.f32.mrf.mxu0
        %v8679 = vadd.f32 0.0, %v8678
        %v8680 = vpop.f32.mrf.mxu0
        %v8681 = vpop.f32.mrf.mxu0
        %v8682 = vadd.f32 0.0, %v8681
        %v8683 = vpop.f32.mrf.mxu0
        %8684 = vmatprep.mubr.bf16.mxu0 0
        %8685 = vmatmul.mubr.bf16.gmra.mxu0 %v7261
        %v8686 = vpop.f32.mrf.mxu0
        %v8687 = vadd.f32 0.0, %v8686
        %v8688 = vpop.f32.mrf.mxu0
        %v8689 = vpop.f32.mrf.mxu0
        %v8690 = vadd.f32 0.0, %v8689
        %v8691 = vpop.f32.mrf.mxu0
        %8692 = vmatprep.mubr.bf16.mxu0 0
        %8693 = vmatmul.mubr.bf16.gmra.mxu0 %v7262
        %v8694 = vpop.f32.mrf.mxu0
        %v8695 = vadd.f32 0.0, %v8694
        %v8696 = vpop.f32.mrf.mxu0
        %v8697 = vpop.f32.mrf.mxu0
        %v8698 = vadd.f32 0.0, %v8697
        %v8699 = vpop.f32.mrf.mxu0
        %8700 = vmatprep.mubr.bf16.mxu0 0
        %8701 = vmatmul.mubr.bf16.gmra.mxu0 %v7263
        %v8702 = vpop.f32.mrf.mxu0
        %v8703 = vadd.f32 0.0, %v8702
        %v8704 = vpop.f32.mrf.mxu0
        %v8705 = vpop.f32.mrf.mxu0
        %v8706 = vadd.f32 0.0, %v8705
        %v8707 = vpop.f32.mrf.mxu0
        %8708 = vmatprep.mubr.bf16.mxu0 0
        %8709 = vmatmul.mubr.bf16.gmra.mxu0 %v7264
        %v8710 = vpop.f32.mrf.mxu0
        %v8711 = vadd.f32 0.0, %v8710
        %v8712 = vpop.f32.mrf.mxu0
        %v8713 = vpop.f32.mrf.mxu0
        %v8714 = vadd.f32 0.0, %v8713
        %v8715 = vpop.f32.mrf.mxu0
        %8716 = vdwg.mxu0
        %v8717 = vadd.f32 %v8459, %v8591
        %v8718 = vadd.f32 %v8460, %v8594
        %v8719 = vadd.f32 %v8461, %v8599
        %v8720 = vadd.f32 %v8462, %v8602
        %v8721 = vadd.f32 %v8463, %v8607
        %v8722 = vadd.f32 %v8464, %v8610
        %v8723 = vadd.f32 %v8465, %v8615
        %v8724 = vadd.f32 %v8466, %v8618
        %v8725 = vadd.f32 %v8467, %v8623
        %v8726 = vadd.f32 %v8468, %v8626
        %v8727 = vadd.f32 %v8469, %v8631
        %v8728 = vadd.f32 %v8470, %v8634
        %v8729 = vadd.f32 %v8471, %v8639
        %v8730 = vadd.f32 %v8472, %v8642
        %v8731 = vadd.f32 %v8473, %v8647
        %v8732 = vadd.f32 %v8474, %v8650
        %v8733 = vadd.f32 %v8475, %v8655
        %v8734 = vadd.f32 %v8476, %v8658
        %v8735 = vadd.f32 %v8477, %v8663
        %v8736 = vadd.f32 %v8478, %v8666
        %v8737 = vadd.f32 %v8479, %v8671
        %v8738 = vadd.f32 %v8480, %v8674
        %v8739 = vadd.f32 %v8481, %v8679
        %v8740 = vadd.f32 %v8482, %v8682
        %v8741 = vadd.f32 %v8483, %v8687
        %v8742 = vadd.f32 %v8484, %v8690
        %v8743 = vadd.f32 %v8485, %v8695
        %v8744 = vadd.f32 %v8486, %v8698
        %v8745 = vadd.f32 %v8487, %v8703
        %v8746 = vadd.f32 %v8488, %v8706
        %v8747 = vadd.f32 %v8489, %v8711
        %v8748 = vadd.f32 %v8490, %v8714
        %s8749 = scalar_lea.vmem [#allocation4], 384
        %v8750 = vld [vmem:[%s8749] sm:$0xf]
        %v8751 = vld [vmem:[%s8749 + $0x4] sm:$0xf]
        %v8752 = vld [vmem:[%s8749 + $0x8] sm:$0xf]
        %v8753 = vld [vmem:[%s8749 + $0xc] sm:$0xf]
        %v8754 = vld [vmem:[%s8749 + $0x10] sm:$0xf]
        %v8755 = vld [vmem:[%s8749 + $0x14] sm:$0xf]
        %v8756 = vld [vmem:[%s8749 + $0x18] sm:$0xf]
        %v8757 = vld [vmem:[%s8749 + $0x1c] sm:$0xf]
        %v8758 = vld [vmem:[%s8749 + $0x20] sm:$0xf]
        %v8759 = vld [vmem:[%s8749 + $0x24] sm:$0xf]
        %v8760 = vld [vmem:[%s8749 + $0x28] sm:$0xf]
        %v8761 = vld [vmem:[%s8749 + $0x2c] sm:$0xf]
        %v8762 = vld [vmem:[%s8749 + $0x30] sm:$0xf]
        %v8763 = vld [vmem:[%s8749 + $0x34] sm:$0xf]
        %v8764 = vld [vmem:[%s8749 + $0x38] sm:$0xf]
        %v8765 = vld [vmem:[%s8749 + $0x3c] sm:$0xf]
        %v8782 = vunpack.c.l.b16 %v8750
        %v8783 = vunpack.c.l.b16 %v8751
        %v8784 = vunpack.c.l.b16 %v8752
        %v8785 = vunpack.c.l.b16 %v8753
        %v8786 = vunpack.c.l.b16 %v8754
        %v8787 = vunpack.c.l.b16 %v8755
        %v8788 = vunpack.c.l.b16 %v8756
        %v8789 = vunpack.c.l.b16 %v8757
        %v8790 = vunpack.c.l.b16 %v8758
        %v8791 = vunpack.c.l.b16 %v8759
        %v8792 = vunpack.c.l.b16 %v8760
        %v8793 = vunpack.c.l.b16 %v8761
        %v8794 = vunpack.c.l.b16 %v8762
        %v8795 = vunpack.c.l.b16 %v8763
        %v8796 = vunpack.c.l.b16 %v8764
        %v8797 = vunpack.c.l.b16 %v8765
        %v8798 = vpack.c.b16 %v8783, %v8782
        %v8799 = vpack.c.b16 %v8785, %v8784
        %v8800 = vpack.c.b16 %v8787, %v8786
        %v8801 = vpack.c.b16 %v8789, %v8788
        %v8802 = vpack.c.b16 %v8791, %v8790
        %v8803 = vpack.c.b16 %v8793, %v8792
        %v8804 = vpack.c.b16 %v8795, %v8794
        %v8805 = vpack.c.b16 %v8797, %v8796
        %8814 = vmatprep.subr.bf16.mxu0 0
        %8815 = vmatpush1.bf16.msra.mxu0 %v8805
        %8816 = vmatprep.subr.bf16.mxu0 0
        %8817 = vmatpush1.bf16.msra.mxu0 %v8804
        %8818 = vmatprep.subr.bf16.mxu0 0
        %8819 = vmatpush1.bf16.msra.mxu0 %v8803
        %8820 = vmatprep.subr.bf16.mxu0 0
        %8821 = vmatpush1.bf16.msra.mxu0 %v8802
        %8822 = vmatprep.subr.bf16.mxu0 0
        %8823 = vmatpush1.bf16.msra.mxu0 %v8801
        %8824 = vmatprep.subr.bf16.mxu0 0
        %8825 = vmatpush1.bf16.msra.mxu0 %v8800
        %8826 = vmatprep.subr.bf16.mxu0 0
        %8827 = vmatpush1.bf16.msra.mxu0 %v8799
        %8828 = vmatprep.subr.bf16.mxu0 0
        %8829 = vmatpush1.bf16.msra.mxu0 %v8798
        %8830 = vmatprep.subr.bf16.mxu0 0
        %8831 = vmatpush2.bf16.msra.mxu0 0
        %8832 = vmatprep.subr.bf16.mxu0 0
        %8833 = vmatpush2.bf16.msra.mxu0 0
        %8834 = vmatprep.subr.bf16.mxu0 0
        %8835 = vmatpush2.bf16.msra.mxu0 0
        %8836 = vmatprep.subr.bf16.mxu0 0
        %8837 = vmatpush2.bf16.msra.mxu0 0
        %8838 = vmatprep.subr.bf16.mxu0 0
        %8839 = vmatpush2.bf16.msra.mxu0 0
        %8840 = vmatprep.subr.bf16.mxu0 0
        %8841 = vmatpush2.bf16.msra.mxu0 0
        %8842 = vmatprep.subr.bf16.mxu0 0
        %8843 = vmatpush2.bf16.msra.mxu0 0
        %8844 = vmatprep.subr.bf16.mxu0 0
        %8845 = vmatpush2.bf16.msra.mxu0 0
        %8846 = vmatprep.mubr.bf16.mxu0 0
        %8847 = vmatmul.mubr.bf16.gmra.mxu0 %v7178
        %v8848 = vpop.f32.mrf.mxu0
        %v8849 = vadd.f32 0.0, %v8848
        %v8850 = vpop.f32.mrf.mxu0
        %v8851 = vpop.f32.mrf.mxu0
        %v8852 = vadd.f32 0.0, %v8851
        %v8853 = vpop.f32.mrf.mxu0
        %8854 = vmatprep.mubr.bf16.mxu0 0
        %8855 = vmatmul.mubr.bf16.gmra.mxu0 %v7179
        %v8856 = vpop.f32.mrf.mxu0
        %v8857 = vadd.f32 0.0, %v8856
        %v8858 = vpop.f32.mrf.mxu0
        %v8859 = vpop.f32.mrf.mxu0
        %v8860 = vadd.f32 0.0, %v8859
        %v8861 = vpop.f32.mrf.mxu0
        %8862 = vmatprep.mubr.bf16.mxu0 0
        %8863 = vmatmul.mubr.bf16.gmra.mxu0 %v7180
        %v8864 = vpop.f32.mrf.mxu0
        %v8865 = vadd.f32 0.0, %v8864
        %v8866 = vpop.f32.mrf.mxu0
        %v8867 = vpop.f32.mrf.mxu0
        %v8868 = vadd.f32 0.0, %v8867
        %v8869 = vpop.f32.mrf.mxu0
        %8870 = vmatprep.mubr.bf16.mxu0 0
        %8871 = vmatmul.mubr.bf16.gmra.mxu0 %v7181
        %v8872 = vpop.f32.mrf.mxu0
        %v8873 = vadd.f32 0.0, %v8872
        %v8874 = vpop.f32.mrf.mxu0
        %v8875 = vpop.f32.mrf.mxu0
        %v8876 = vadd.f32 0.0, %v8875
        %v8877 = vpop.f32.mrf.mxu0
        %8878 = vmatprep.mubr.bf16.mxu0 0
        %8879 = vmatmul.mubr.bf16.gmra.mxu0 %v7182
        %v8880 = vpop.f32.mrf.mxu0
        %v8881 = vadd.f32 0.0, %v8880
        %v8882 = vpop.f32.mrf.mxu0
        %v8883 = vpop.f32.mrf.mxu0
        %v8884 = vadd.f32 0.0, %v8883
        %v8885 = vpop.f32.mrf.mxu0
        %8886 = vmatprep.mubr.bf16.mxu0 0
        %8887 = vmatmul.mubr.bf16.gmra.mxu0 %v7183
        %v8888 = vpop.f32.mrf.mxu0
        %v8889 = vadd.f32 0.0, %v8888
        %v8890 = vpop.f32.mrf.mxu0
        %v8891 = vpop.f32.mrf.mxu0
        %v8892 = vadd.f32 0.0, %v8891
        %v8893 = vpop.f32.mrf.mxu0
        %8894 = vmatprep.mubr.bf16.mxu0 0
        %8895 = vmatmul.mubr.bf16.gmra.mxu0 %v7184
        %v8896 = vpop.f32.mrf.mxu0
        %v8897 = vadd.f32 0.0, %v8896
        %v8898 = vpop.f32.mrf.mxu0
        %v8899 = vpop.f32.mrf.mxu0
        %v8900 = vadd.f32 0.0, %v8899
        %v8901 = vpop.f32.mrf.mxu0
        %8902 = vmatprep.mubr.bf16.mxu0 0
        %8903 = vmatmul.mubr.bf16.gmra.mxu0 %v7185
        %v8904 = vpop.f32.mrf.mxu0
        %v8905 = vadd.f32 0.0, %v8904
        %v8906 = vpop.f32.mrf.mxu0
        %v8907 = vpop.f32.mrf.mxu0
        %v8908 = vadd.f32 0.0, %v8907
        %v8909 = vpop.f32.mrf.mxu0
        %8910 = vmatprep.mubr.bf16.mxu0 0
        %8911 = vmatmul.mubr.bf16.gmra.mxu0 %v7186
        %v8912 = vpop.f32.mrf.mxu0
        %v8913 = vadd.f32 0.0, %v8912
        %v8914 = vpop.f32.mrf.mxu0
        %v8915 = vpop.f32.mrf.mxu0
        %v8916 = vadd.f32 0.0, %v8915
        %v8917 = vpop.f32.mrf.mxu0
        %8918 = vmatprep.mubr.bf16.mxu0 0
        %8919 = vmatmul.mubr.bf16.gmra.mxu0 %v7187
        %v8920 = vpop.f32.mrf.mxu0
        %v8921 = vadd.f32 0.0, %v8920
        %v8922 = vpop.f32.mrf.mxu0
        %v8923 = vpop.f32.mrf.mxu0
        %v8924 = vadd.f32 0.0, %v8923
        %v8925 = vpop.f32.mrf.mxu0
        %8926 = vmatprep.mubr.bf16.mxu0 0
        %8927 = vmatmul.mubr.bf16.gmra.mxu0 %v7188
        %v8928 = vpop.f32.mrf.mxu0
        %v8929 = vadd.f32 0.0, %v8928
        %v8930 = vpop.f32.mrf.mxu0
        %v8931 = vpop.f32.mrf.mxu0
        %v8932 = vadd.f32 0.0, %v8931
        %v8933 = vpop.f32.mrf.mxu0
        %8934 = vmatprep.mubr.bf16.mxu0 0
        %8935 = vmatmul.mubr.bf16.gmra.mxu0 %v7189
        %v8936 = vpop.f32.mrf.mxu0
        %v8937 = vadd.f32 0.0, %v8936
        %v8938 = vpop.f32.mrf.mxu0
        %v8939 = vpop.f32.mrf.mxu0
        %v8940 = vadd.f32 0.0, %v8939
        %v8941 = vpop.f32.mrf.mxu0
        %8942 = vmatprep.mubr.bf16.mxu0 0
        %8943 = vmatmul.mubr.bf16.gmra.mxu0 %v7190
        %v8944 = vpop.f32.mrf.mxu0
        %v8945 = vadd.f32 0.0, %v8944
        %v8946 = vpop.f32.mrf.mxu0
        %v8947 = vpop.f32.mrf.mxu0
        %v8948 = vadd.f32 0.0, %v8947
        %v8949 = vpop.f32.mrf.mxu0
        %8950 = vmatprep.mubr.bf16.mxu0 0
        %8951 = vmatmul.mubr.bf16.gmra.mxu0 %v7191
        %v8952 = vpop.f32.mrf.mxu0
        %v8953 = vadd.f32 0.0, %v8952
        %v8954 = vpop.f32.mrf.mxu0
        %v8955 = vpop.f32.mrf.mxu0
        %v8956 = vadd.f32 0.0, %v8955
        %v8957 = vpop.f32.mrf.mxu0
        %8958 = vmatprep.mubr.bf16.mxu0 0
        %8959 = vmatmul.mubr.bf16.gmra.mxu0 %v7192
        %v8960 = vpop.f32.mrf.mxu0
        %v8961 = vadd.f32 0.0, %v8960
        %v8962 = vpop.f32.mrf.mxu0
        %v8963 = vpop.f32.mrf.mxu0
        %v8964 = vadd.f32 0.0, %v8963
        %v8965 = vpop.f32.mrf.mxu0
        %8966 = vmatprep.mubr.bf16.mxu0 0
        %8967 = vmatmul.mubr.bf16.gmra.mxu0 %v7193
        %v8968 = vpop.f32.mrf.mxu0
        %v8969 = vadd.f32 0.0, %v8968
        %v8970 = vpop.f32.mrf.mxu0
        %v8971 = vpop.f32.mrf.mxu0
        %v8972 = vadd.f32 0.0, %v8971
        %v8973 = vpop.f32.mrf.mxu0
        %8974 = vdwg.mxu0
        %v8975 = vadd.f32 %v8717, %v8849
        %v8976 = vadd.f32 %v8718, %v8852
        %v8977 = vadd.f32 %v8719, %v8857
        %v8978 = vadd.f32 %v8720, %v8860
        %v8979 = vadd.f32 %v8721, %v8865
        %v8980 = vadd.f32 %v8722, %v8868
        %v8981 = vadd.f32 %v8723, %v8873
        %v8982 = vadd.f32 %v8724, %v8876
        %v8983 = vadd.f32 %v8725, %v8881
        %v8984 = vadd.f32 %v8726, %v8884
        %v8985 = vadd.f32 %v8727, %v8889
        %v8986 = vadd.f32 %v8728, %v8892
        %v8987 = vadd.f32 %v8729, %v8897
        %v8988 = vadd.f32 %v8730, %v8900
        %v8989 = vadd.f32 %v8731, %v8905
        %v8990 = vadd.f32 %v8732, %v8908
        %v8991 = vadd.f32 %v8733, %v8913
        %v8992 = vadd.f32 %v8734, %v8916
        %v8993 = vadd.f32 %v8735, %v8921
        %v8994 = vadd.f32 %v8736, %v8924
        %v8995 = vadd.f32 %v8737, %v8929
        %v8996 = vadd.f32 %v8738, %v8932
        %v8997 = vadd.f32 %v8739, %v8937
        %v8998 = vadd.f32 %v8740, %v8940
        %v8999 = vadd.f32 %v8741, %v8945
        %v9000 = vadd.f32 %v8742, %v8948
        %v9001 = vadd.f32 %v8743, %v8953
        %v9002 = vadd.f32 %v8744, %v8956
        %v9003 = vadd.f32 %v8745, %v8961
        %v9004 = vadd.f32 %v8746, %v8964
        %v9005 = vadd.f32 %v8747, %v8969
        %v9006 = vadd.f32 %v8748, %v8972
        %s9007 = scalar_lea.vmem [#allocation4], 448
        %v9008 = vld [vmem:[%s9007] sm:$0xf]
        %v9009 = vld [vmem:[%s9007 + $0x4] sm:$0xf]
        %v9010 = vld [vmem:[%s9007 + $0x8] sm:$0xf]
        %v9011 = vld [vmem:[%s9007 + $0xc] sm:$0xf]
        %v9012 = vld [vmem:[%s9007 + $0x10] sm:$0xf]
        %v9013 = vld [vmem:[%s9007 + $0x14] sm:$0xf]
        %v9014 = vld [vmem:[%s9007 + $0x18] sm:$0xf]
        %v9015 = vld [vmem:[%s9007 + $0x1c] sm:$0xf]
        %v9016 = vld [vmem:[%s9007 + $0x20] sm:$0xf]
        %v9017 = vld [vmem:[%s9007 + $0x24] sm:$0xf]
        %v9018 = vld [vmem:[%s9007 + $0x28] sm:$0xf]
        %v9019 = vld [vmem:[%s9007 + $0x2c] sm:$0xf]
        %v9020 = vld [vmem:[%s9007 + $0x30] sm:$0xf]
        %v9021 = vld [vmem:[%s9007 + $0x34] sm:$0xf]
        %v9022 = vld [vmem:[%s9007 + $0x38] sm:$0xf]
        %v9023 = vld [vmem:[%s9007 + $0x3c] sm:$0xf]
        %v9040 = vunpack.c.l.b16 %v9008
        %v9041 = vunpack.c.l.b16 %v9009
        %v9042 = vunpack.c.l.b16 %v9010
        %v9043 = vunpack.c.l.b16 %v9011
        %v9044 = vunpack.c.l.b16 %v9012
        %v9045 = vunpack.c.l.b16 %v9013
        %v9046 = vunpack.c.l.b16 %v9014
        %v9047 = vunpack.c.l.b16 %v9015
        %v9048 = vunpack.c.l.b16 %v9016
        %v9049 = vunpack.c.l.b16 %v9017
        %v9050 = vunpack.c.l.b16 %v9018
        %v9051 = vunpack.c.l.b16 %v9019
        %v9052 = vunpack.c.l.b16 %v9020
        %v9053 = vunpack.c.l.b16 %v9021
        %v9054 = vunpack.c.l.b16 %v9022
        %v9055 = vunpack.c.l.b16 %v9023
        %v9056 = vpack.c.b16 %v9041, %v9040
        %v9057 = vpack.c.b16 %v9043, %v9042
        %v9058 = vpack.c.b16 %v9045, %v9044
        %v9059 = vpack.c.b16 %v9047, %v9046
        %v9060 = vpack.c.b16 %v9049, %v9048
        %v9061 = vpack.c.b16 %v9051, %v9050
        %v9062 = vpack.c.b16 %v9053, %v9052
        %v9063 = vpack.c.b16 %v9055, %v9054
        %9072 = vmatprep.subr.bf16.mxu0 0
        %9073 = vmatpush1.bf16.msra.mxu0 %v9063
        %9074 = vmatprep.subr.bf16.mxu0 0
        %9075 = vmatpush1.bf16.msra.mxu0 %v9062
        %9076 = vmatprep.subr.bf16.mxu0 0
        %9077 = vmatpush1.bf16.msra.mxu0 %v9061
        %9078 = vmatprep.subr.bf16.mxu0 0
        %9079 = vmatpush1.bf16.msra.mxu0 %v9060
        %9080 = vmatprep.subr.bf16.mxu0 0
        %9081 = vmatpush1.bf16.msra.mxu0 %v9059
        %9082 = vmatprep.subr.bf16.mxu0 0
        %9083 = vmatpush1.bf16.msra.mxu0 %v9058
        %9084 = vmatprep.subr.bf16.mxu0 0
        %9085 = vmatpush1.bf16.msra.mxu0 %v9057
        %9086 = vmatprep.subr.bf16.mxu0 0
        %9087 = vmatpush1.bf16.msra.mxu0 %v9056
        %9088 = vmatprep.subr.bf16.mxu0 0
        %9089 = vmatpush2.bf16.msra.mxu0 0
        %9090 = vmatprep.subr.bf16.mxu0 0
        %9091 = vmatpush2.bf16.msra.mxu0 0
        %9092 = vmatprep.subr.bf16.mxu0 0
        %9093 = vmatpush2.bf16.msra.mxu0 0
        %9094 = vmatprep.subr.bf16.mxu0 0
        %9095 = vmatpush2.bf16.msra.mxu0 0
        %9096 = vmatprep.subr.bf16.mxu0 0
        %9097 = vmatpush2.bf16.msra.mxu0 0
        %9098 = vmatprep.subr.bf16.mxu0 0
        %9099 = vmatpush2.bf16.msra.mxu0 0
        %9100 = vmatprep.subr.bf16.mxu0 0
        %9101 = vmatpush2.bf16.msra.mxu0 0
        %9102 = vmatprep.subr.bf16.mxu0 0
        %9103 = vmatpush2.bf16.msra.mxu0 0
        %9104 = vmatprep.mubr.bf16.mxu0 0
        %9105 = vmatmul.mubr.bf16.gmra.mxu0 %v7016
        %v9106 = vpop.f32.mrf.mxu0
        %v9107 = vadd.f32 0.0, %v9106
        %v9108 = vpop.f32.mrf.mxu0
        %v9109 = vpop.f32.mrf.mxu0
        %v9110 = vadd.f32 0.0, %v9109
        %v9111 = vpop.f32.mrf.mxu0
        %9112 = vmatprep.mubr.bf16.mxu0 0
        %9113 = vmatmul.mubr.bf16.gmra.mxu0 %v7017
        %v9114 = vpop.f32.mrf.mxu0
        %v9115 = vadd.f32 0.0, %v9114
        %v9116 = vpop.f32.mrf.mxu0
        %v9117 = vpop.f32.mrf.mxu0
        %v9118 = vadd.f32 0.0, %v9117
        %v9119 = vpop.f32.mrf.mxu0
        %9120 = vmatprep.mubr.bf16.mxu0 0
        %9121 = vmatmul.mubr.bf16.gmra.mxu0 %v7018
        %v9122 = vpop.f32.mrf.mxu0
        %v9123 = vadd.f32 0.0, %v9122
        %v9124 = vpop.f32.mrf.mxu0
        %v9125 = vpop.f32.mrf.mxu0
        %v9126 = vadd.f32 0.0, %v9125
        %v9127 = vpop.f32.mrf.mxu0
        %9128 = vmatprep.mubr.bf16.mxu0 0
        %9129 = vmatmul.mubr.bf16.gmra.mxu0 %v7019
        %v9130 = vpop.f32.mrf.mxu0
        %v9131 = vadd.f32 0.0, %v9130
        %v9132 = vpop.f32.mrf.mxu0
        %v9133 = vpop.f32.mrf.mxu0
        %v9134 = vadd.f32 0.0, %v9133
        %v9135 = vpop.f32.mrf.mxu0
        %9136 = vmatprep.mubr.bf16.mxu0 0
        %9137 = vmatmul.mubr.bf16.gmra.mxu0 %v7020
        %v9138 = vpop.f32.mrf.mxu0
        %v9139 = vadd.f32 0.0, %v9138
        %v9140 = vpop.f32.mrf.mxu0
        %v9141 = vpop.f32.mrf.mxu0
        %v9142 = vadd.f32 0.0, %v9141
        %v9143 = vpop.f32.mrf.mxu0
        %9144 = vmatprep.mubr.bf16.mxu0 0
        %9145 = vmatmul.mubr.bf16.gmra.mxu0 %v7021
        %v9146 = vpop.f32.mrf.mxu0
        %v9147 = vadd.f32 0.0, %v9146
        %v9148 = vpop.f32.mrf.mxu0
        %v9149 = vpop.f32.mrf.mxu0
        %v9150 = vadd.f32 0.0, %v9149
        %v9151 = vpop.f32.mrf.mxu0
        %9152 = vmatprep.mubr.bf16.mxu0 0
        %9153 = vmatmul.mubr.bf16.gmra.mxu0 %v7022
        %v9154 = vpop.f32.mrf.mxu0
        %v9155 = vadd.f32 0.0, %v9154
        %v9156 = vpop.f32.mrf.mxu0
        %v9157 = vpop.f32.mrf.mxu0
        %v9158 = vadd.f32 0.0, %v9157
        %v9159 = vpop.f32.mrf.mxu0
        %9160 = vmatprep.mubr.bf16.mxu0 0
        %9161 = vmatmul.mubr.bf16.gmra.mxu0 %v7023
        %v9162 = vpop.f32.mrf.mxu0
        %v9163 = vadd.f32 0.0, %v9162
        %v9164 = vpop.f32.mrf.mxu0
        %v9165 = vpop.f32.mrf.mxu0
        %v9166 = vadd.f32 0.0, %v9165
        %v9167 = vpop.f32.mrf.mxu0
        %9168 = vmatprep.mubr.bf16.mxu0 0
        %9169 = vmatmul.mubr.bf16.gmra.mxu0 %v7024
        %v9170 = vpop.f32.mrf.mxu0
        %v9171 = vadd.f32 0.0, %v9170
        %v9172 = vpop.f32.mrf.mxu0
        %v9173 = vpop.f32.mrf.mxu0
        %v9174 = vadd.f32 0.0, %v9173
        %v9175 = vpop.f32.mrf.mxu0
        %9176 = vmatprep.mubr.bf16.mxu0 0
        %9177 = vmatmul.mubr.bf16.gmra.mxu0 %v7025
        %v9178 = vpop.f32.mrf.mxu0
        %v9179 = vadd.f32 0.0, %v9178
        %v9180 = vpop.f32.mrf.mxu0
        %v9181 = vpop.f32.mrf.mxu0
        %v9182 = vadd.f32 0.0, %v9181
        %v9183 = vpop.f32.mrf.mxu0
        %9184 = vmatprep.mubr.bf16.mxu0 0
        %9185 = vmatmul.mubr.bf16.gmra.mxu0 %v7026
        %v9186 = vpop.f32.mrf.mxu0
        %v9187 = vadd.f32 0.0, %v9186
        %v9188 = vpop.f32.mrf.mxu0
        %v9189 = vpop.f32.mrf.mxu0
        %v9190 = vadd.f32 0.0, %v9189
        %v9191 = vpop.f32.mrf.mxu0
        %9192 = vmatprep.mubr.bf16.mxu0 0
        %9193 = vmatmul.mubr.bf16.gmra.mxu0 %v7027
        %v9194 = vpop.f32.mrf.mxu0
        %v9195 = vadd.f32 0.0, %v9194
        %v9196 = vpop.f32.mrf.mxu0
        %v9197 = vpop.f32.mrf.mxu0
        %v9198 = vadd.f32 0.0, %v9197
        %v9199 = vpop.f32.mrf.mxu0
        %9200 = vmatprep.mubr.bf16.mxu0 0
        %9201 = vmatmul.mubr.bf16.gmra.mxu0 %v7028
        %v9202 = vpop.f32.mrf.mxu0
        %v9203 = vadd.f32 0.0, %v9202
        %v9204 = vpop.f32.mrf.mxu0
        %v9205 = vpop.f32.mrf.mxu0
        %v9206 = vadd.f32 0.0, %v9205
        %v9207 = vpop.f32.mrf.mxu0
        %9208 = vmatprep.mubr.bf16.mxu0 0
        %9209 = vmatmul.mubr.bf16.gmra.mxu0 %v7029
        %v9210 = vpop.f32.mrf.mxu0
        %v9211 = vadd.f32 0.0, %v9210
        %v9212 = vpop.f32.mrf.mxu0
        %v9213 = vpop.f32.mrf.mxu0
        %v9214 = vadd.f32 0.0, %v9213
        %v9215 = vpop.f32.mrf.mxu0
        %9216 = vmatprep.mubr.bf16.mxu0 0
        %9217 = vmatmul.mubr.bf16.gmra.mxu0 %v7030
        %v9218 = vpop.f32.mrf.mxu0
        %v9219 = vadd.f32 0.0, %v9218
        %v9220 = vpop.f32.mrf.mxu0
        %v9221 = vpop.f32.mrf.mxu0
        %v9222 = vadd.f32 0.0, %v9221
        %v9223 = vpop.f32.mrf.mxu0
        %9224 = vmatprep.mubr.bf16.mxu0 0
        %9225 = vmatmul.mubr.bf16.gmra.mxu0 %v7031
        %v9226 = vpop.f32.mrf.mxu0
        %v9227 = vadd.f32 0.0, %v9226
        %v9228 = vpop.f32.mrf.mxu0
        %v9229 = vpop.f32.mrf.mxu0
        %v9230 = vadd.f32 0.0, %v9229
        %v9231 = vpop.f32.mrf.mxu0
        %9232 = vdwg.mxu0
        %v9233 = vadd.f32 %v8975, %v9107
        %v9234 = vadd.f32 %v8976, %v9110
        %v9235 = vadd.f32 %v8977, %v9115
        %v9236 = vadd.f32 %v8978, %v9118
        %v9237 = vadd.f32 %v8979, %v9123
        %v9238 = vadd.f32 %v8980, %v9126
        %v9239 = vadd.f32 %v8981, %v9131
        %v9240 = vadd.f32 %v8982, %v9134
        %v9241 = vadd.f32 %v8983, %v9139
        %v9242 = vadd.f32 %v8984, %v9142
        %v9243 = vadd.f32 %v8985, %v9147
        %v9244 = vadd.f32 %v8986, %v9150
        %v9245 = vadd.f32 %v8987, %v9155
        %v9246 = vadd.f32 %v8988, %v9158
        %v9247 = vadd.f32 %v8989, %v9163
        %v9248 = vadd.f32 %v8990, %v9166
        %v9249 = vadd.f32 %v8991, %v9171
        %v9250 = vadd.f32 %v8992, %v9174
        %v9251 = vadd.f32 %v8993, %v9179
        %v9252 = vadd.f32 %v8994, %v9182
        %v9253 = vadd.f32 %v8995, %v9187
        %v9254 = vadd.f32 %v8996, %v9190
        %v9255 = vadd.f32 %v8997, %v9195
        %v9256 = vadd.f32 %v8998, %v9198
        %v9257 = vadd.f32 %v8999, %v9203
        %v9258 = vadd.f32 %v9000, %v9206
        %v9259 = vadd.f32 %v9001, %v9211
        %v9260 = vadd.f32 %v9002, %v9214
        %v9261 = vadd.f32 %v9003, %v9219
        %v9262 = vadd.f32 %v9004, %v9222
        %v9263 = vadd.f32 %v9005, %v9227
        %v9264 = vadd.f32 %v9006, %v9230
        %s9265 = scalar_lea.vmem [#allocation4], 512
        %v9266 = vld [vmem:[%s9265] sm:$0xf]
        %v9267 = vld [vmem:[%s9265 + $0x4] sm:$0xf]
        %v9268 = vld [vmem:[%s9265 + $0x8] sm:$0xf]
        %v9269 = vld [vmem:[%s9265 + $0xc] sm:$0xf]
        %v9270 = vld [vmem:[%s9265 + $0x10] sm:$0xf]
        %v9271 = vld [vmem:[%s9265 + $0x14] sm:$0xf]
        %v9272 = vld [vmem:[%s9265 + $0x18] sm:$0xf]
        %v9273 = vld [vmem:[%s9265 + $0x1c] sm:$0xf]
        %v9274 = vld [vmem:[%s9265 + $0x20] sm:$0xf]
        %v9275 = vld [vmem:[%s9265 + $0x24] sm:$0xf]
        %v9276 = vld [vmem:[%s9265 + $0x28] sm:$0xf]
        %v9277 = vld [vmem:[%s9265 + $0x2c] sm:$0xf]
        %v9278 = vld [vmem:[%s9265 + $0x30] sm:$0xf]
        %v9279 = vld [vmem:[%s9265 + $0x34] sm:$0xf]
        %v9280 = vld [vmem:[%s9265 + $0x38] sm:$0xf]
        %v9281 = vld [vmem:[%s9265 + $0x3c] sm:$0xf]
        %v9298 = vunpack.c.l.b16 %v9266
        %v9299 = vunpack.c.l.b16 %v9267
        %v9300 = vunpack.c.l.b16 %v9268
        %v9301 = vunpack.c.l.b16 %v9269
        %v9302 = vunpack.c.l.b16 %v9270
        %v9303 = vunpack.c.l.b16 %v9271
        %v9304 = vunpack.c.l.b16 %v9272
        %v9305 = vunpack.c.l.b16 %v9273
        %v9306 = vunpack.c.l.b16 %v9274
        %v9307 = vunpack.c.l.b16 %v9275
        %v9308 = vunpack.c.l.b16 %v9276
        %v9309 = vunpack.c.l.b16 %v9277
        %v9310 = vunpack.c.l.b16 %v9278
        %v9311 = vunpack.c.l.b16 %v9279
        %v9312 = vunpack.c.l.b16 %v9280
        %v9313 = vunpack.c.l.b16 %v9281
        %v9314 = vpack.c.b16 %v9299, %v9298
        %v9315 = vpack.c.b16 %v9301, %v9300
        %v9316 = vpack.c.b16 %v9303, %v9302
        %v9317 = vpack.c.b16 %v9305, %v9304
        %v9318 = vpack.c.b16 %v9307, %v9306
        %v9319 = vpack.c.b16 %v9309, %v9308
        %v9320 = vpack.c.b16 %v9311, %v9310
        %v9321 = vpack.c.b16 %v9313, %v9312
        %9330 = vmatprep.subr.bf16.mxu0 0
        %9331 = vmatpush1.bf16.msra.mxu0 %v9321
        %9332 = vmatprep.subr.bf16.mxu0 0
        %9333 = vmatpush1.bf16.msra.mxu0 %v9320
        %9334 = vmatprep.subr.bf16.mxu0 0
        %9335 = vmatpush1.bf16.msra.mxu0 %v9319
        %9336 = vmatprep.subr.bf16.mxu0 0
        %9337 = vmatpush1.bf16.msra.mxu0 %v9318
        %9338 = vmatprep.subr.bf16.mxu0 0
        %9339 = vmatpush1.bf16.msra.mxu0 %v9317
        %9340 = vmatprep.subr.bf16.mxu0 0
        %9341 = vmatpush1.bf16.msra.mxu0 %v9316
        %9342 = vmatprep.subr.bf16.mxu0 0
        %9343 = vmatpush1.bf16.msra.mxu0 %v9315
        %9344 = vmatprep.subr.bf16.mxu0 0
        %9345 = vmatpush1.bf16.msra.mxu0 %v9314
        %9346 = vmatprep.subr.bf16.mxu0 0
        %9347 = vmatpush2.bf16.msra.mxu0 0
        %9348 = vmatprep.subr.bf16.mxu0 0
        %9349 = vmatpush2.bf16.msra.mxu0 0
        %9350 = vmatprep.subr.bf16.mxu0 0
        %9351 = vmatpush2.bf16.msra.mxu0 0
        %9352 = vmatprep.subr.bf16.mxu0 0
        %9353 = vmatpush2.bf16.msra.mxu0 0
        %9354 = vmatprep.subr.bf16.mxu0 0
        %9355 = vmatpush2.bf16.msra.mxu0 0
        %9356 = vmatprep.subr.bf16.mxu0 0
        %9357 = vmatpush2.bf16.msra.mxu0 0
        %9358 = vmatprep.subr.bf16.mxu0 0
        %9359 = vmatpush2.bf16.msra.mxu0 0
        %9360 = vmatprep.subr.bf16.mxu0 0
        %9361 = vmatpush2.bf16.msra.mxu0 0
        %9362 = vmatprep.mubr.bf16.mxu0 0
        %9363 = vmatmul.mubr.bf16.gmra.mxu0 %v7250
        %v9364 = vpop.f32.mrf.mxu0
        %v9365 = vadd.f32 0.0, %v9364
        %v9366 = vpop.f32.mrf.mxu0
        %v9367 = vpop.f32.mrf.mxu0
        %v9368 = vadd.f32 0.0, %v9367
        %v9369 = vpop.f32.mrf.mxu0
        %9370 = vmatprep.mubr.bf16.mxu0 0
        %9371 = vmatmul.mubr.bf16.gmra.mxu0 %v7251
        %v9372 = vpop.f32.mrf.mxu0
        %v9373 = vadd.f32 0.0, %v9372
        %v9374 = vpop.f32.mrf.mxu0
        %v9375 = vpop.f32.mrf.mxu0
        %v9376 = vadd.f32 0.0, %v9375
        %v9377 = vpop.f32.mrf.mxu0
        %9378 = vmatprep.mubr.bf16.mxu0 0
        %9379 = vmatmul.mubr.bf16.gmra.mxu0 %v7252
        %v9380 = vpop.f32.mrf.mxu0
        %v9381 = vadd.f32 0.0, %v9380
        %v9382 = vpop.f32.mrf.mxu0
        %v9383 = vpop.f32.mrf.mxu0
        %v9384 = vadd.f32 0.0, %v9383
        %v9385 = vpop.f32.mrf.mxu0
        %9386 = vmatprep.mubr.bf16.mxu0 0
        %9387 = vmatmul.mubr.bf16.gmra.mxu0 %v7253
        %v9388 = vpop.f32.mrf.mxu0
        %v9389 = vadd.f32 0.0, %v9388
        %v9390 = vpop.f32.mrf.mxu0
        %v9391 = vpop.f32.mrf.mxu0
        %v9392 = vadd.f32 0.0, %v9391
        %v9393 = vpop.f32.mrf.mxu0
        %9394 = vmatprep.mubr.bf16.mxu0 0
        %9395 = vmatmul.mubr.bf16.gmra.mxu0 %v7254
        %v9396 = vpop.f32.mrf.mxu0
        %v9397 = vadd.f32 0.0, %v9396
        %v9398 = vpop.f32.mrf.mxu0
        %v9399 = vpop.f32.mrf.mxu0
        %v9400 = vadd.f32 0.0, %v9399
        %v9401 = vpop.f32.mrf.mxu0
        %9402 = vmatprep.mubr.bf16.mxu0 0
        %9403 = vmatmul.mubr.bf16.gmra.mxu0 %v7255
        %v9404 = vpop.f32.mrf.mxu0
        %v9405 = vadd.f32 0.0, %v9404
        %v9406 = vpop.f32.mrf.mxu0
        %v9407 = vpop.f32.mrf.mxu0
        %v9408 = vadd.f32 0.0, %v9407
        %v9409 = vpop.f32.mrf.mxu0
        %9410 = vmatprep.mubr.bf16.mxu0 0
        %9411 = vmatmul.mubr.bf16.gmra.mxu0 %v7256
        %v9412 = vpop.f32.mrf.mxu0
        %v9413 = vadd.f32 0.0, %v9412
        %v9414 = vpop.f32.mrf.mxu0
        %v9415 = vpop.f32.mrf.mxu0
        %v9416 = vadd.f32 0.0, %v9415
        %v9417 = vpop.f32.mrf.mxu0
        %9418 = vmatprep.mubr.bf16.mxu0 0
        %9419 = vmatmul.mubr.bf16.gmra.mxu0 %v7257
        %v9420 = vpop.f32.mrf.mxu0
        %v9421 = vadd.f32 0.0, %v9420
        %v9422 = vpop.f32.mrf.mxu0
        %v9423 = vpop.f32.mrf.mxu0
        %v9424 = vadd.f32 0.0, %v9423
        %v9425 = vpop.f32.mrf.mxu0
        %9426 = vmatprep.mubr.bf16.mxu0 0
        %9427 = vmatmul.mubr.bf16.gmra.mxu0 %v7258
        %v9428 = vpop.f32.mrf.mxu0
        %v9429 = vadd.f32 0.0, %v9428
        %v9430 = vpop.f32.mrf.mxu0
        %v9431 = vpop.f32.mrf.mxu0
        %v9432 = vadd.f32 0.0, %v9431
        %v9433 = vpop.f32.mrf.mxu0
        %9434 = vmatprep.mubr.bf16.mxu0 0
        %9435 = vmatmul.mubr.bf16.gmra.mxu0 %v7259
        %v9436 = vpop.f32.mrf.mxu0
        %v9437 = vadd.f32 0.0, %v9436
        %v9438 = vpop.f32.mrf.mxu0
        %v9439 = vpop.f32.mrf.mxu0
        %v9440 = vadd.f32 0.0, %v9439
        %v9441 = vpop.f32.mrf.mxu0
        %9442 = vmatprep.mubr.bf16.mxu0 0
        %9443 = vmatmul.mubr.bf16.gmra.mxu0 %v7260
        %v9444 = vpop.f32.mrf.mxu0
        %v9445 = vadd.f32 0.0, %v9444
        %v9446 = vpop.f32.mrf.mxu0
        %v9447 = vpop.f32.mrf.mxu0
        %v9448 = vadd.f32 0.0, %v9447
        %v9449 = vpop.f32.mrf.mxu0
        %9450 = vmatprep.mubr.bf16.mxu0 0
        %9451 = vmatmul.mubr.bf16.gmra.mxu0 %v7261
        %v9452 = vpop.f32.mrf.mxu0
        %v9453 = vadd.f32 0.0, %v9452
        %v9454 = vpop.f32.mrf.mxu0
        %v9455 = vpop.f32.mrf.mxu0
        %v9456 = vadd.f32 0.0, %v9455
        %v9457 = vpop.f32.mrf.mxu0
        %9458 = vmatprep.mubr.bf16.mxu0 0
        %9459 = vmatmul.mubr.bf16.gmra.mxu0 %v7262
        %v9460 = vpop.f32.mrf.mxu0
        %v9461 = vadd.f32 0.0, %v9460
        %v9462 = vpop.f32.mrf.mxu0
        %v9463 = vpop.f32.mrf.mxu0
        %v9464 = vadd.f32 0.0, %v9463
        %v9465 = vpop.f32.mrf.mxu0
        %9466 = vmatprep.mubr.bf16.mxu0 0
        %9467 = vmatmul.mubr.bf16.gmra.mxu0 %v7263
        %v9468 = vpop.f32.mrf.mxu0
        %v9469 = vadd.f32 0.0, %v9468
        %v9470 = vpop.f32.mrf.mxu0
        %v9471 = vpop.f32.mrf.mxu0
        %v9472 = vadd.f32 0.0, %v9471
        %v9473 = vpop.f32.mrf.mxu0
        %9474 = vmatprep.mubr.bf16.mxu0 0
        %9475 = vmatmul.mubr.bf16.gmra.mxu0 %v7264
        %v9476 = vpop.f32.mrf.mxu0
        %v9477 = vadd.f32 0.0, %v9476
        %v9478 = vpop.f32.mrf.mxu0
        %v9479 = vpop.f32.mrf.mxu0
        %v9480 = vadd.f32 0.0, %v9479
        %v9481 = vpop.f32.mrf.mxu0
        %9482 = vmatprep.mubr.bf16.mxu0 0
        %9483 = vmatmul.mubr.bf16.gmra.mxu0 %v7265
        %v9484 = vpop.f32.mrf.mxu0
        %v9485 = vadd.f32 0.0, %v9484
        %v9486 = vpop.f32.mrf.mxu0
        %v9487 = vpop.f32.mrf.mxu0
        %v9488 = vadd.f32 0.0, %v9487
        %v9489 = vpop.f32.mrf.mxu0
        %9490 = vdwg.mxu0
        %v9491 = vadd.f32 %v9233, %v9365
        %v9492 = vadd.f32 %v9234, %v9368
        %v9493 = vadd.f32 %v9235, %v9373
        %v9494 = vadd.f32 %v9236, %v9376
        %v9495 = vadd.f32 %v9237, %v9381
        %v9496 = vadd.f32 %v9238, %v9384
        %v9497 = vadd.f32 %v9239, %v9389
        %v9498 = vadd.f32 %v9240, %v9392
        %v9499 = vadd.f32 %v9241, %v9397
        %v9500 = vadd.f32 %v9242, %v9400
        %v9501 = vadd.f32 %v9243, %v9405
        %v9502 = vadd.f32 %v9244, %v9408
        %v9503 = vadd.f32 %v9245, %v9413
        %v9504 = vadd.f32 %v9246, %v9416
        %v9505 = vadd.f32 %v9247, %v9421
        %v9506 = vadd.f32 %v9248, %v9424
        %v9507 = vadd.f32 %v9249, %v9429
        %v9508 = vadd.f32 %v9250, %v9432
        %v9509 = vadd.f32 %v9251, %v9437
        %v9510 = vadd.f32 %v9252, %v9440
        %v9511 = vadd.f32 %v9253, %v9445
        %v9512 = vadd.f32 %v9254, %v9448
        %v9513 = vadd.f32 %v9255, %v9453
        %v9514 = vadd.f32 %v9256, %v9456
        %v9515 = vadd.f32 %v9257, %v9461
        %v9516 = vadd.f32 %v9258, %v9464
        %v9517 = vadd.f32 %v9259, %v9469
        %v9518 = vadd.f32 %v9260, %v9472
        %v9519 = vadd.f32 %v9261, %v9477
        %v9520 = vadd.f32 %v9262, %v9480
        %v9521 = vadd.f32 %v9263, %v9485
        %v9522 = vadd.f32 %v9264, %v9488
        %v9523 = vld [vmem:[%s12] sm:$0x1]
        %v9525 = vlaneseq
        %v9526 = vshrl.u32 %v9525, 7
        %v9527 = vsub.s32 0, %v9526
        %v9528 = vrot.slane %v9523, %v9527
        %v9530 = vadd.f32 %v9491, %v9528
        %v9531 = vadd.f32 %v9492, %v9528
        %v9532 = vadd.f32 %v9493, %v9528
        %v9533 = vadd.f32 %v9494, %v9528
        %v9534 = vadd.f32 %v9495, %v9528
        %v9535 = vadd.f32 %v9496, %v9528
        %v9536 = vadd.f32 %v9497, %v9528
        %v9537 = vadd.f32 %v9498, %v9528
        %v9538 = vadd.f32 %v9499, %v9528
        %v9539 = vadd.f32 %v9500, %v9528
        %v9540 = vadd.f32 %v9501, %v9528
        %v9541 = vadd.f32 %v9502, %v9528
        %v9542 = vadd.f32 %v9503, %v9528
        %v9543 = vadd.f32 %v9504, %v9528
        %v9544 = vadd.f32 %v9505, %v9528
        %v9545 = vadd.f32 %v9506, %v9528
        %v9546 = vadd.f32 %v9507, %v9528
        %v9547 = vadd.f32 %v9508, %v9528
        %v9548 = vadd.f32 %v9509, %v9528
        %v9549 = vadd.f32 %v9510, %v9528
        %v9550 = vadd.f32 %v9511, %v9528
        %v9551 = vadd.f32 %v9512, %v9528
        %v9552 = vadd.f32 %v9513, %v9528
        %v9553 = vadd.f32 %v9514, %v9528
        %v9554 = vadd.f32 %v9515, %v9528
        %v9555 = vadd.f32 %v9516, %v9528
        %v9556 = vadd.f32 %v9517, %v9528
        %v9557 = vadd.f32 %v9518, %v9528
        %v9558 = vadd.f32 %v9519, %v9528
        %v9559 = vadd.f32 %v9520, %v9528
        %v9560 = vadd.f32 %v9521, %v9528
        %v9561 = vadd.f32 %v9522, %v9528
        %v9562 = vmax.f32 %v9530, 0.0
        %v9563 = vmax.f32 %v9531, 0.0
        %v9564 = vmax.f32 %v9532, 0.0
        %v9565 = vmax.f32 %v9533, 0.0
        %v9566 = vmax.f32 %v9534, 0.0
        %v9567 = vmax.f32 %v9535, 0.0
        %v9568 = vmax.f32 %v9536, 0.0
        %v9569 = vmax.f32 %v9537, 0.0
        %v9570 = vmax.f32 %v9538, 0.0
        %v9571 = vmax.f32 %v9539, 0.0
        %v9572 = vmax.f32 %v9540, 0.0
        %v9573 = vmax.f32 %v9541, 0.0
        %v9574 = vmax.f32 %v9542, 0.0
        %v9575 = vmax.f32 %v9543, 0.0
        %v9576 = vmax.f32 %v9544, 0.0
        %v9577 = vmax.f32 %v9545, 0.0
        %v9578 = vmax.f32 %v9546, 0.0
        %v9579 = vmax.f32 %v9547, 0.0
        %v9580 = vmax.f32 %v9548, 0.0
        %v9581 = vmax.f32 %v9549, 0.0
        %v9582 = vmax.f32 %v9550, 0.0
        %v9583 = vmax.f32 %v9551, 0.0
        %v9584 = vmax.f32 %v9552, 0.0
        %v9585 = vmax.f32 %v9553, 0.0
        %v9586 = vmax.f32 %v9554, 0.0
        %v9587 = vmax.f32 %v9555, 0.0
        %v9588 = vmax.f32 %v9556, 0.0
        %v9589 = vmax.f32 %v9557, 0.0
        %v9590 = vmax.f32 %v9558, 0.0
        %v9591 = vmax.f32 %v9559, 0.0
        %v9592 = vmax.f32 %v9560, 0.0
        %v9593 = vmax.f32 %v9561, 0.0
        %v9594 = vpack.c.bf16 %v9563, %v9562
        %v9595 = vpack.c.bf16 %v9565, %v9564
        %v9596 = vpack.c.bf16 %v9567, %v9566
        %v9597 = vpack.c.bf16 %v9569, %v9568
        %v9598 = vpack.c.bf16 %v9571, %v9570
        %v9599 = vpack.c.bf16 %v9573, %v9572
        %v9600 = vpack.c.bf16 %v9575, %v9574
        %v9601 = vpack.c.bf16 %v9577, %v9576
        %v9602 = vpack.c.bf16 %v9579, %v9578
        %v9603 = vpack.c.bf16 %v9581, %v9580
        %v9604 = vpack.c.bf16 %v9583, %v9582
        %v9605 = vpack.c.bf16 %v9585, %v9584
        %v9606 = vpack.c.bf16 %v9587, %v9586
        %v9607 = vpack.c.bf16 %v9589, %v9588
        %v9608 = vpack.c.bf16 %v9591, %v9590
        %v9609 = vpack.c.bf16 %v9593, %v9592
        %v9626 = vunpack.c.l.b16 %v9594
        %v9627 = vunpack.c.h.b16 %v9594
        %v9628 = vunpack.c.l.b16 %v9595
        %v9629 = vunpack.c.h.b16 %v9595
        %v9630 = vunpack.c.l.b16 %v9596
        %v9631 = vunpack.c.h.b16 %v9596
        %v9632 = vunpack.c.l.b16 %v9597
        %v9633 = vunpack.c.h.b16 %v9597
        %v9634 = vunpack.c.l.b16 %v9598
        %v9635 = vunpack.c.h.b16 %v9598
        %v9636 = vunpack.c.l.b16 %v9599
        %v9637 = vunpack.c.h.b16 %v9599
        %v9638 = vunpack.c.l.b16 %v9600
        %v9639 = vunpack.c.h.b16 %v9600
        %v9640 = vunpack.c.l.b16 %v9601
        %v9641 = vunpack.c.h.b16 %v9601
        %v9642 = vunpack.c.l.b16 %v9602
        %v9643 = vunpack.c.h.b16 %v9602
        %v9644 = vunpack.c.l.b16 %v9603
        %v9645 = vunpack.c.h.b16 %v9603
        %v9646 = vunpack.c.l.b16 %v9604
        %v9647 = vunpack.c.h.b16 %v9604
        %v9648 = vunpack.c.l.b16 %v9605
        %v9649 = vunpack.c.h.b16 %v9605
        %v9650 = vunpack.c.l.b16 %v9606
        %v9651 = vunpack.c.h.b16 %v9606
        %v9652 = vunpack.c.l.b16 %v9607
        %v9653 = vunpack.c.h.b16 %v9607
        %v9654 = vunpack.c.l.b16 %v9608
        %v9655 = vunpack.c.h.b16 %v9608
        %v9656 = vunpack.c.l.b16 %v9609
        %v9657 = vunpack.c.h.b16 %v9609
        %v9658 = vpack.c.b16 %v9626, %v9626
        %v9659 = vpack.c.b16 %v9627, %v9627
        %v9660 = vpack.c.b16 %v9628, %v9628
        %v9661 = vpack.c.b16 %v9629, %v9629
        %v9662 = vpack.c.b16 %v9630, %v9630
        %v9663 = vpack.c.b16 %v9631, %v9631
        %v9664 = vpack.c.b16 %v9632, %v9632
        %v9665 = vpack.c.b16 %v9633, %v9633
        %v9666 = vpack.c.b16 %v9634, %v9634
        %v9667 = vpack.c.b16 %v9635, %v9635
        %v9668 = vpack.c.b16 %v9636, %v9636
        %v9669 = vpack.c.b16 %v9637, %v9637
        %v9670 = vpack.c.b16 %v9638, %v9638
        %v9671 = vpack.c.b16 %v9639, %v9639
        %v9672 = vpack.c.b16 %v9640, %v9640
        %v9673 = vpack.c.b16 %v9641, %v9641
        %v9674 = vpack.c.b16 %v9642, %v9642
        %v9675 = vpack.c.b16 %v9643, %v9643
        %v9676 = vpack.c.b16 %v9644, %v9644
        %v9677 = vpack.c.b16 %v9645, %v9645
        %v9678 = vpack.c.b16 %v9646, %v9646
        %v9679 = vpack.c.b16 %v9647, %v9647
        %v9680 = vpack.c.b16 %v9648, %v9648
        %v9681 = vpack.c.b16 %v9649, %v9649
        %v9682 = vpack.c.b16 %v9650, %v9650
        %v9683 = vpack.c.b16 %v9651, %v9651
        %v9684 = vpack.c.b16 %v9652, %v9652
        %v9685 = vpack.c.b16 %v9653, %v9653
        %v9686 = vpack.c.b16 %v9654, %v9654
        %v9687 = vpack.c.b16 %v9655, %v9655
        %v9688 = vpack.c.b16 %v9656, %v9656
        %v9689 = vpack.c.b16 %v9657, %v9657
        %9722 = vst [vmem:[%s801] sm:$0xf] %v9658
        %9723 = vst [vmem:[%s801 + $0x4] sm:$0xf] %v9659
        %9724 = vst [vmem:[%s801 + $0x8] sm:$0xf] %v9660
        %9725 = vst [vmem:[%s801 + $0xc] sm:$0xf] %v9661
        %9726 = vst [vmem:[%s801 + $0x10] sm:$0xf] %v9662
        %9727 = vst [vmem:[%s801 + $0x14] sm:$0xf] %v9663
        %9728 = vst [vmem:[%s801 + $0x18] sm:$0xf] %v9664
        %9729 = vst [vmem:[%s801 + $0x1c] sm:$0xf] %v9665
        %9730 = vst [vmem:[%s801 + $0x20] sm:$0xf] %v9666
        %9731 = vst [vmem:[%s801 + $0x24] sm:$0xf] %v9667
        %9732 = vst [vmem:[%s801 + $0x28] sm:$0xf] %v9668
        %9733 = vst [vmem:[%s801 + $0x2c] sm:$0xf] %v9669
        %9734 = vst [vmem:[%s801 + $0x30] sm:$0xf] %v9670
        %9735 = vst [vmem:[%s801 + $0x34] sm:$0xf] %v9671
        %9736 = vst [vmem:[%s801 + $0x38] sm:$0xf] %v9672
        %9737 = vst [vmem:[%s801 + $0x3c] sm:$0xf] %v9673
        %9738 = vst [vmem:[%s801 + $0x40] sm:$0xf] %v9674
        %9739 = vst [vmem:[%s801 + $0x44] sm:$0xf] %v9675
        %9740 = vst [vmem:[%s801 + $0x48] sm:$0xf] %v9676
        %9741 = vst [vmem:[%s801 + $0x4c] sm:$0xf] %v9677
        %9742 = vst [vmem:[%s801 + $0x50] sm:$0xf] %v9678
        %9743 = vst [vmem:[%s801 + $0x54] sm:$0xf] %v9679
        %9744 = vst [vmem:[%s801 + $0x58] sm:$0xf] %v9680
        %9745 = vst [vmem:[%s801 + $0x5c] sm:$0xf] %v9681
        %9746 = vst [vmem:[%s801 + $0x60] sm:$0xf] %v9682
        %9747 = vst [vmem:[%s801 + $0x64] sm:$0xf] %v9683
        %9748 = vst [vmem:[%s801 + $0x68] sm:$0xf] %v9684
        %9749 = vst [vmem:[%s801 + $0x6c] sm:$0xf] %v9685
        %9750 = vst [vmem:[%s801 + $0x70] sm:$0xf] %v9686
        %9751 = vst [vmem:[%s801 + $0x74] sm:$0xf] %v9687
        %9752 = vst [vmem:[%s801 + $0x78] sm:$0xf] %v9688
        %9753 = vst [vmem:[%s801 + $0x7c] sm:$0xf] %v9689
        %s9754 = smul.u32 16, %s31
        %p9755 = scmp.lt.s32.totalorder %s30, 1
        %s9756 = scalar_select %p9755, %s30, 1
        %p9757 = scmp.lt.s32.totalorder %s9754, 15
        %s9758 = scalar_select %p9757, %s9754, 15
        %s9759 = smul.addr %s9758, 2
        %s9760 = smul.addr %s9756, 32
        %s9761 = sadd.s32 %s9759, %s9760
        %s9762 = smul.addr %s9761, 4
        %s9763 = scalar_lea.vmem %s13, %s9762
        // Predicated region
        $region81: #{up_conv_forward.1} parent=71 // pred_check
          %p9764 = pneg %p405
        $region82: #{up_conv_forward.1} parent=71 // pred_check_branch
          %9766 = sbr.rel (%p9764) target = $region84
        $region83: #{up_conv_forward.1} parent=71 // pred_region
          %s9767 = smul.u32 16, %s31
        $region84: #{up_conv_forward.1} parent=71 // pred_fallthru
          _
      $region72: #{up_conv_forward.1} parent=5 // pred_fallthru
        _
      %p9768 = scmp.le.s32.totalorder 2, %s21
      // Predicated region
      $region85: #{up_conv_forward.1} parent=5 // pred_check
        %p9769 = pneg %p9768
      $region86: #{up_conv_forward.1} parent=5 // pred_check_branch
        %9771 = sbr.rel (%p9769) target = $region88
      $region87: #{up_conv_forward.1} parent=5 // pred_region
        %s9772 = ssub.s32 %s21, 2
        // Predicated region
        $region89: #{up_conv_forward.1} parent=87 // pred_check
          %p9773 = pneg %p411
        $region90: #{up_conv_forward.1} parent=87 // pred_check_branch
          %9775 = sbr.rel (%p9773) target = $region92
        $region91: #{up_conv_forward.1} parent=87 // pred_region
          %s9776 = smul.u32 16, %s33
          %p9777 = scmp.lt.s32.totalorder %s32, 1
          %s9778 = scalar_select %p9777, %s32, 1
          %p9779 = scmp.lt.s32.totalorder %s9776, 15
          %s9780 = scalar_select %p9779, %s9776, 15
          %s9781 = smul.addr %s9780, 2
          %s9782 = smul.addr %s9778, 32
          %s9783 = sadd.s32 %s9781, %s9782
          %s9784 = smul.addr %s9783, 4
          %s9785 = scalar_lea.vmem %s13, %s9784
        $region92: #{up_conv_forward.1} parent=87 // pred_fallthru
          _
      $region88: #{up_conv_forward.1} parent=5 // pred_fallthru
        _
    $region6: #{up_conv_forward.1} parent=1 // loop_footer
      %s25 = sadd.s32 1, %s21
    $region7: #{up_conv_forward.1} parent=1 // loop_footer_branch
      %20 = sbr.rel target = $region3
    $region8: #{up_conv_forward.1} parent=1 // loop_exit
      _
    %9786 = vsyncpa [#allocation3], 1
    %s9787 = scalar_lea.sflag [#allocation3], 1
    %9788 = vsyncpa %s9787, 1
    %9789 = vsyncpa [#allocation5], 1

</llo_original>
